<compile_context>
chip_gen: v7x
topology: tpu7x:2x2x1
jax: 0.10.0
libtpu: 0.0.40
codegen_flags: <defaults>
</compile_context>

<pallas_src>
import jax
import jax.numpy as jnp
from jax.experimental import pallas as pl
from jax.experimental.pallas import tpu as pltpu


# --------------------------------------------------------------------------------------
# helpers
# --------------------------------------------------------------------------------------
def _round_up(a, m):
    return -(-a // m) * m


def _vmem_bytes(shape, itemsize):
    """Conservative VMEM footprint of one block: minor two dims padded to (8, 128)."""
    lead = 1
    for d in shape[:-2]:
        lead *= d
    return lead * _round_up(shape[-2], 8) * _round_up(shape[-1], 128) * itemsize


def _chip_vmem_capacity():
    """Per-core VMEM bytes; conservative 64 MiB (v7x) if the query is unavailable."""
    try:
        info = pltpu.get_tpu_info()
        for attr in ("vmem_capacity_bytes", "vmem_size_bytes", "vmem_bytes"):
            cap = getattr(info, attr, None)
            if cap:
                return int(cap)
    except Exception:
        pass
    return 64 << 20


def _pick_tile_cout(C, itemsize, weight_budget):
    """Cout tile: full C if the tap-major weight slab is modest, else a 128/256-multiple tile."""
    if C % 128 != 0:
        return C  # small / odd channel counts: single (lane padded) tile
    if 9 * C * C * itemsize <= weight_budget:
        return C
    for tn in (512, 384, 256, 128):
        if C % tn == 0 and 9 * C * tn * itemsize <= weight_budget:
            return tn
    return 128


def _plan_tiles(C, H, W, in_itemsize, out_itemsize, tile_h, tile_cout, single_buffer):
    """Pick (tile_h, tile_cout, vmem_limit_bytes) with a generation-aware VMEM budget."""
    row_w = W + 2
    pad_rows = (H + 3) * row_w
    cap = _chip_vmem_capacity()
    budget = cap - max(8 << 20, cap // 8)          # leave headroom for compiler scratch
    n_buf = 1 if single_buffer else 2

    if tile_cout is None:
        tn = _pick_tile_cout(C, in_itemsize, budget // 4)
    else:
        tn = tile_cout
        assert C % tn == 0 and (tn == C or tn % 128 == 0), (C, tn)

    fixed = (n_buf * _vmem_bytes((1, pad_rows, C), in_itemsize)      # resident padded image
             + n_buf * _vmem_bytes((9, C, tn), in_itemsize)          # tap-major weight tile
             + n_buf * _vmem_bytes((1, tn), 4))                      # f32 bias tile

    def need_for(th):
        out_blk = _vmem_bytes((4, th * row_w, tn), out_itemsize)     # (1,2,2,th*row,tn) block
        acc_blk = _vmem_bytes((1, th * row_w, tn), 4)                # f32 accumulator / temps
        return fixed + 2 * out_blk + 2 * acc_blk

    if tile_h is None:
        th = H
        for cand in range(H, 0, -1):
            if H % cand:
                continue
            # (8,128) rule: the flattened block dim th*(W+2) must be 8-aligned unless full.
            if cand != H and (cand * row_w) % 8:
                continue
            if need_for(cand) <= budget:
                th = cand
                break
    else:
        th = tile_h
        assert H % th == 0 and (th == H or (th * row_w) % 8 == 0), (H, W, th)

    need = need_for(th)
    if need > cap:
        # TODO(synk): halo-tiled manual-DMA path (memory_space=pl.ANY) for this regime.
        raise ValueError(
            f"VMEM plan needs {need >> 20} MiB but chip VMEM is {cap >> 20} MiB "
            f"(H={H}, W={W}, C={C}, tile_h={th}, tile_cout={tn})")
    vmem_limit = int(min(max(need + (8 << 20), 16 << 20), cap))
    return th, tn, vmem_limit


def _make_spec(shape, index_map, single_buffer):
    """BlockSpec, single-buffered when requested (fallback if pipeline_mode is unsupported)."""
    if single_buffer:
        try:
            return pl.BlockSpec(shape, index_map, pipeline_mode=pl.Buffered(1))
        except (TypeError, AttributeError):
            pass
    return pl.BlockSpec(shape, index_map)


# --------------------------------------------------------------------------------------
# kernel
# --------------------------------------------------------------------------------------
def _make_conv_dup_kernel(tile_h, width, num_h_tiles):
    row_w = width + 2
    rows = tile_h * row_w          # matmul M-dim per tile (includes 2 junk columns per conv row)
    aligned = (rows % 8) == 0

    def kernel(x_ref, w_ref, b_ref, o_ref):
        # x_ref: (1, (H+3)*(W+2), Cin)  flattened zero-padded image, resident across inner axes
        # w_ref: (9, Cin, TN)           3x3 weights, tap-major (tap = dh*3 + dw), this Cout tile
        # b_ref: (1, TN)                f32 bias for this Cout tile
        # o_ref: (1, 2, 2, tile_h*(W+2), TN)  conv output duplicated 2x2 (row copy a, col copy b)
        if num_h_tiles == 1:
            h_elem0 = 0                                  # static offsets -> plain static slices
        else:
            h_elem0 = pl.program_id(2) * rows            # element offset of this H tile
            if aligned:
                h_elem0 = pl.multiple_of(h_elem0, 8)

        acc = None
        for dh in range(3):
            for dw in range(3):
                base = h_elem0 + dh * row_w + dw
                xs = x_ref[0, pl.ds(base, rows), :]      # single offset view, no reshape copies
                d = jnp.dot(xs, w_ref[dh * 3 + dw], preferred_element_type=jnp.float32)
                acc = d if acc is None else acc + d      # chained accumulation (MRB-friendly)

        y = (acc + b_ref[...]).astype(o_ref.dtype)
        # Nearest-neighbour 2x: four plain stores of the 1x tile (no 4x broadcast temp).
        for a in range(2):
            for b in range(2):
                o_ref[0, a, b, :, :] = y

    return kernel


# --------------------------------------------------------------------------------------
# wrapper
# --------------------------------------------------------------------------------------
def upsample_forward(x_nchw, weight, bias, *, tile_h=None, tile_cout=None, compute_dtype=None):
    """Conv2d(C, C, 3, padding=1) followed by nearest 2x upsample.

    x_nchw: (N, C, H, W); weight: (C, C, 3, 3) [out, in, kh, kw]; bias: (C,)
    compute_dtype: optional matmul operand dtype (e.g. jnp.bfloat16); accumulation stays f32.
    returns: (N, C, 2H, 2W) in the input dtype.
    """
    N, C, H, W = x_nchw.shape
    assert weight.shape == (C, C, 3, 3) and bias.shape == (C,)
    out_dtype = jnp.dtype(x_nchw.dtype)
    cdtype = jnp.dtype(compute_dtype) if compute_dtype is not None else out_dtype

    row_w = W + 2
    pad_rows = (H + 3) * row_w

    # Layout glue on the 1x input: NCHW -> NHWC, zero pad (top 1 / bottom 2 / left 1 / right 1;
    # the extra bottom row keeps the last tile's flat tap windows in bounds), then flatten rows.
    x_nhwc = jnp.transpose(x_nchw, (0, 2, 3, 1)).astype(cdtype)
    x_pad = jnp.pad(x_nhwc, ((0, 0), (1, 2), (1, 1), (0, 0)))
    x_flat = x_pad.reshape(N, pad_rows, C)

    # (Cout, Cin, kh, kw) -> (9, Cin, Cout), tap = dh*3 + dw.
    w_taps = jnp.transpose(weight, (2, 3, 1, 0)).reshape(9, C, C).astype(cdtype)
    b_row = bias.reshape(1, C).astype(jnp.float32)

    def call(single_buffer):
        th, tn, vmem_limit = _plan_tiles(C, H, W, cdtype.itemsize, out_dtype.itemsize,
                                         tile_h, tile_cout, single_buffer)
        n_h = H // th
        n_c = C // tn
        in_specs = [
            _make_spec((1, pad_rows, C), lambda n, jc, i: (n, 0, 0), single_buffer),
            _make_spec((9, C, tn), lambda n, jc, i: (0, 0, jc), single_buffer),
            _make_spec((1, tn), lambda n, jc, i: (0, jc), single_buffer),
        ]
        out_spec = pl.BlockSpec((1, 2, 2, th * row_w, tn),
                                lambda n, jc, i: (n, 0, 0, i, jc))
        return pl.pallas_call(
            _make_conv_dup_kernel(th, W, n_h),
            out_shape=jax.ShapeDtypeStruct((N, 2, 2, H * row_w, C), out_dtype),
            grid=(N, n_c, n_h),
            in_specs=in_specs,
            out_specs=out_spec,
            compiler_params=pltpu.CompilerParams(
                dimension_semantics=("parallel", "arbitrary", "arbitrary"),
                vmem_limit_bytes=vmem_limit,
            ),
        )(x_flat, w_taps, b_row)

    try:
        out_k = call(single_buffer=True)
    except Exception:
        # TODO(synk): pipeline_mode=pl.Buffered(1) unsupported on this jax/Mosaic version; fall
        # back to default double-buffering (costs extra VMEM for the resident inputs).
        out_k = call(single_buffer=False)

    # One fused XLA pass to the PyTorch layout (NCHW); it also drops the 2 junk columns per row.
    # TODO(synk): a channels-last consumer could take out_k directly and skip this transpose pass.
    out6 = out_k.reshape(N, 2, 2, H, row_w, C)[:, :, :, :, :W, :]     # (N, a, b, H, W, C)
    out = jnp.transpose(out6, (0, 5, 3, 1, 4, 2)).reshape(N, C, 2 * H, 2 * W)
    return out


# --------------------------------------------------------------------------------------
# reference + test
# --------------------------------------------------------------------------------------
def reference_forward(x, weight, bias):
    """Pure-JAX reference: conv3x3 pad=1 (NCHW) + nearest 2x upsample."""
    y = jax.lax.conv_general_dilated(
        x, weight, window_strides=(1, 1), padding=((1, 1), (1, 1)),
        dimension_numbers=("NCHW", "OIHW", "NCHW"),
        precision=jax.lax.Precision.HIGHEST)
    y = y + bias[None, :, None, None]
    return jnp.repeat(jnp.repeat(y, 2, axis=2), 2, axis=3)


if __name__ == "__main__":
    key = jax.random.PRNGKey(0)
    kx, kw, kb = jax.random.split(key, 3)

    N, C, H, W = 2, 4, 16, 16
    x = jax.random.normal(kx, (N, C, H, W), jnp.float32)

    # PyTorch-style uniform(-1/sqrt(fan_in), 1/sqrt(fan_in)) init.
    fan_in = C * 3 * 3
    bound = 1.0 / (fan_in ** 0.5)
    weight = jax.random.uniform(kw, (C, C, 3, 3), jnp.float32, -bound, bound)
    bias = jax.random.uniform(kb, (C,), jnp.float32, -bound, bound)

    ref = reference_forward(x, weight, bias)

    # Default plan (single H tile, single Cout tile at this size).
    out = jax.block_until_ready(upsample_forward(x, weight, bias))
    assert out.shape == (N, C, 2 * H, 2 * W), out.shape
    assert jnp.allclose(out, ref, atol=1e-5, rtol=1e-5), float(jnp.max(jnp.abs(out - ref)))

    # Forced multi-H-tile path (grid h axis = 2) to exercise the dynamic-offset tap windows.
    out_t = jax.block_until_ready(upsample_forward(x, weight, bias, tile_h=8))
    assert jnp.allclose(out_t, ref, atol=1e-5, rtol=1e-5), float(jnp.max(jnp.abs(out_t - ref)))

    # bf16 MXU operands (review item), f32 accumulation.
    out_bf = jax.block_until_ready(
        upsample_forward(x, weight, bias, compute_dtype=jnp.bfloat16))
    assert jnp.allclose(out_bf, ref, atol=5e-2, rtol=5e-2), float(jnp.max(jnp.abs(out_bf - ref)))

    # Cout-tiled path (grid cout axis = 2) at a lane-dense channel count.
    N2, C2, H2, W2 = 1, 256, 8, 8
    k2x, k2w, k2b = jax.random.split(jax.random.PRNGKey(1), 3)
    x2 = jax.random.normal(k2x, (N2, C2, H2, W2), jnp.float32)
    bnd2 = 1.0 / ((C2 * 9) ** 0.5)
    w2 = jax.random.uniform(k2w, (C2, C2, 3, 3), jnp.float32, -bnd2, bnd2)
    b2 = jax.random.uniform(k2b, (C2,), jnp.float32, -bnd2, bnd2)
    ref2 = reference_forward(x2, w2, b2)
    out2 = jax.block_until_ready(upsample_forward(x2, w2, b2, tile_cout=128))
    assert jnp.allclose(out2, ref2, atol=2e-3, rtol=2e-3), float(jnp.max(jnp.abs(out2 - ref2)))

    print("KERNEL_OK")
</pallas_src>

<mosaic_0001>
module attributes {stable_mosaic.version = 11 : i64} {
  func.func @kernel(%arg0: i32, %arg1: i32, %arg2: i32, %arg3: memref<1x342x4xf32, #tpu.memory_space<vmem>>, %arg4: memref<9x4x4xf32, #tpu.memory_space<vmem>>, %arg5: memref<1x4xf32, #tpu.memory_space<vmem>>, %arg6: memref<1x2x2x288x4xf32, #tpu.memory_space<vmem>>) attributes {dimension_semantics = [#tpu.dimension_semantics<parallel>, #tpu.dimension_semantics<arbitrary>, #tpu.dimension_semantics<arbitrary>], iteration_bounds = array<i64: 2, 1, 1>, scalar_prefetch = 0 : i64, scratch_operands = 0 : i64, tpu.core_type = #tpu.core_type<tc>, window_params = [{pipeline_mode = #tpu.pipeline_mode<synchronous>, transform_indices = @transform_0, window_bounds = array<i64: 1, 342, 4>}, {pipeline_mode = #tpu.pipeline_mode<synchronous>, transform_indices = @transform_1, window_bounds = array<i64: 9, 4, 4>}, {pipeline_mode = #tpu.pipeline_mode<synchronous>, transform_indices = @transform_2, window_bounds = array<i64: 1, 4>}, {transform_indices = @transform_3, window_bounds = array<i64: 1, 2, 2, 288, 4>}]} {
    %c0 = arith.constant 0 : index
    %c0_0 = arith.constant 0 : index
    %c0_1 = arith.constant 0 : index
    %0 = vector.load %arg3[%c0, %c0_0, %c0_1] : memref<1x342x4xf32, #tpu.memory_space<vmem>>, vector<1x288x4xf32>
    %1 = vector.shape_cast %0 : vector<1x288x4xf32> to vector<288x4xf32>
    %c0_2 = arith.constant 0 : index
    %c0_3 = arith.constant 0 : index
    %c0_4 = arith.constant 0 : index
    %2 = vector.load %arg4[%c0_2, %c0_3, %c0_4] : memref<9x4x4xf32, #tpu.memory_space<vmem>>, vector<1x4x4xf32>
    %3 = vector.shape_cast %2 : vector<1x4x4xf32> to vector<4x4xf32>
    %cst = arith.constant dense<0.000000e+00> : vector<288x4xf32>
    %4 = tpu.matmul %1, %3, %cst {dimension_numbers = #tpu.dot_dimension_numbers<[1], [0], [0], [1], [0, 0, 1, 1], [], []>} : vector<288x4xf32>, vector<4x4xf32>, vector<288x4xf32> -> vector<288x4xf32>
    %c0_5 = arith.constant 0 : index
    %c1 = arith.constant 1 : index
    %c0_6 = arith.constant 0 : index
    %5 = vector.load %arg3[%c0_5, %c1, %c0_6] : memref<1x342x4xf32, #tpu.memory_space<vmem>>, vector<1x288x4xf32>
    %6 = vector.shape_cast %5 : vector<1x288x4xf32> to vector<288x4xf32>
    %c1_7 = arith.constant 1 : index
    %c0_8 = arith.constant 0 : index
    %c0_9 = arith.constant 0 : index
    %7 = vector.load %arg4[%c1_7, %c0_8, %c0_9] : memref<9x4x4xf32, #tpu.memory_space<vmem>>, vector<1x4x4xf32>
    %8 = vector.shape_cast %7 : vector<1x4x4xf32> to vector<4x4xf32>
    %cst_10 = arith.constant dense<0.000000e+00> : vector<288x4xf32>
    %9 = tpu.matmul %6, %8, %cst_10 {dimension_numbers = #tpu.dot_dimension_numbers<[1], [0], [0], [1], [0, 0, 1, 1], [], []>} : vector<288x4xf32>, vector<4x4xf32>, vector<288x4xf32> -> vector<288x4xf32>
    %10 = arith.addf %4, %9 : vector<288x4xf32>
    %c0_11 = arith.constant 0 : index
    %c2 = arith.constant 2 : index
    %c0_12 = arith.constant 0 : index
    %11 = vector.load %arg3[%c0_11, %c2, %c0_12] : memref<1x342x4xf32, #tpu.memory_space<vmem>>, vector<1x288x4xf32>
    %12 = vector.shape_cast %11 : vector<1x288x4xf32> to vector<288x4xf32>
    %c2_13 = arith.constant 2 : index
    %c0_14 = arith.constant 0 : index
    %c0_15 = arith.constant 0 : index
    %13 = vector.load %arg4[%c2_13, %c0_14, %c0_15] : memref<9x4x4xf32, #tpu.memory_space<vmem>>, vector<1x4x4xf32>
    %14 = vector.shape_cast %13 : vector<1x4x4xf32> to vector<4x4xf32>
    %cst_16 = arith.constant dense<0.000000e+00> : vector<288x4xf32>
    %15 = tpu.matmul %12, %14, %cst_16 {dimension_numbers = #tpu.dot_dimension_numbers<[1], [0], [0], [1], [0, 0, 1, 1], [], []>} : vector<288x4xf32>, vector<4x4xf32>, vector<288x4xf32> -> vector<288x4xf32>
    %16 = arith.addf %10, %15 : vector<288x4xf32>
    %c0_17 = arith.constant 0 : index
    %c18 = arith.constant 18 : index
    %c0_18 = arith.constant 0 : index
    %17 = vector.load %arg3[%c0_17, %c18, %c0_18] : memref<1x342x4xf32, #tpu.memory_space<vmem>>, vector<1x288x4xf32>
    %18 = vector.shape_cast %17 : vector<1x288x4xf32> to vector<288x4xf32>
    %c3 = arith.constant 3 : index
    %c0_19 = arith.constant 0 : index
    %c0_20 = arith.constant 0 : index
    %19 = vector.load %arg4[%c3, %c0_19, %c0_20] : memref<9x4x4xf32, #tpu.memory_space<vmem>>, vector<1x4x4xf32>
    %20 = vector.shape_cast %19 : vector<1x4x4xf32> to vector<4x4xf32>
    %cst_21 = arith.constant dense<0.000000e+00> : vector<288x4xf32>
    %21 = tpu.matmul %18, %20, %cst_21 {dimension_numbers = #tpu.dot_dimension_numbers<[1], [0], [0], [1], [0, 0, 1, 1], [], []>} : vector<288x4xf32>, vector<4x4xf32>, vector<288x4xf32> -> vector<288x4xf32>
    %22 = arith.addf %16, %21 : vector<288x4xf32>
    %c0_22 = arith.constant 0 : index
    %c19 = arith.constant 19 : index
    %c0_23 = arith.constant 0 : index
    %23 = vector.load %arg3[%c0_22, %c19, %c0_23] : memref<1x342x4xf32, #tpu.memory_space<vmem>>, vector<1x288x4xf32>
    %24 = vector.shape_cast %23 : vector<1x288x4xf32> to vector<288x4xf32>
    %c4 = arith.constant 4 : index
    %c0_24 = arith.constant 0 : index
    %c0_25 = arith.constant 0 : index
    %25 = vector.load %arg4[%c4, %c0_24, %c0_25] : memref<9x4x4xf32, #tpu.memory_space<vmem>>, vector<1x4x4xf32>
    %26 = vector.shape_cast %25 : vector<1x4x4xf32> to vector<4x4xf32>
    %cst_26 = arith.constant dense<0.000000e+00> : vector<288x4xf32>
    %27 = tpu.matmul %24, %26, %cst_26 {dimension_numbers = #tpu.dot_dimension_numbers<[1], [0], [0], [1], [0, 0, 1, 1], [], []>} : vector<288x4xf32>, vector<4x4xf32>, vector<288x4xf32> -> vector<288x4xf32>
    %28 = arith.addf %22, %27 : vector<288x4xf32>
    %c0_27 = arith.constant 0 : index
    %c20 = arith.constant 20 : index
    %c0_28 = arith.constant 0 : index
    %29 = vector.load %arg3[%c0_27, %c20, %c0_28] : memref<1x342x4xf32, #tpu.memory_space<vmem>>, vector<1x288x4xf32>
    %30 = vector.shape_cast %29 : vector<1x288x4xf32> to vector<288x4xf32>
    %c5 = arith.constant 5 : index
    %c0_29 = arith.constant 0 : index
    %c0_30 = arith.constant 0 : index
    %31 = vector.load %arg4[%c5, %c0_29, %c0_30] : memref<9x4x4xf32, #tpu.memory_space<vmem>>, vector<1x4x4xf32>
    %32 = vector.shape_cast %31 : vector<1x4x4xf32> to vector<4x4xf32>
    %cst_31 = arith.constant dense<0.000000e+00> : vector<288x4xf32>
    %33 = tpu.matmul %30, %32, %cst_31 {dimension_numbers = #tpu.dot_dimension_numbers<[1], [0], [0], [1], [0, 0, 1, 1], [], []>} : vector<288x4xf32>, vector<4x4xf32>, vector<288x4xf32> -> vector<288x4xf32>
    %34 = arith.addf %28, %33 : vector<288x4xf32>
    %c0_32 = arith.constant 0 : index
    %c36 = arith.constant 36 : index
    %c0_33 = arith.constant 0 : index
    %35 = vector.load %arg3[%c0_32, %c36, %c0_33] : memref<1x342x4xf32, #tpu.memory_space<vmem>>, vector<1x288x4xf32>
    %36 = vector.shape_cast %35 : vector<1x288x4xf32> to vector<288x4xf32>
    %c6 = arith.constant 6 : index
    %c0_34 = arith.constant 0 : index
    %c0_35 = arith.constant 0 : index
    %37 = vector.load %arg4[%c6, %c0_34, %c0_35] : memref<9x4x4xf32, #tpu.memory_space<vmem>>, vector<1x4x4xf32>
    %38 = vector.shape_cast %37 : vector<1x4x4xf32> to vector<4x4xf32>
    %cst_36 = arith.constant dense<0.000000e+00> : vector<288x4xf32>
    %39 = tpu.matmul %36, %38, %cst_36 {dimension_numbers = #tpu.dot_dimension_numbers<[1], [0], [0], [1], [0, 0, 1, 1], [], []>} : vector<288x4xf32>, vector<4x4xf32>, vector<288x4xf32> -> vector<288x4xf32>
    %40 = arith.addf %34, %39 : vector<288x4xf32>
    %c0_37 = arith.constant 0 : index
    %c37 = arith.constant 37 : index
    %c0_38 = arith.constant 0 : index
    %41 = vector.load %arg3[%c0_37, %c37, %c0_38] : memref<1x342x4xf32, #tpu.memory_space<vmem>>, vector<1x288x4xf32>
    %42 = vector.shape_cast %41 : vector<1x288x4xf32> to vector<288x4xf32>
    %c7 = arith.constant 7 : index
    %c0_39 = arith.constant 0 : index
    %c0_40 = arith.constant 0 : index
    %43 = vector.load %arg4[%c7, %c0_39, %c0_40] : memref<9x4x4xf32, #tpu.memory_space<vmem>>, vector<1x4x4xf32>
    %44 = vector.shape_cast %43 : vector<1x4x4xf32> to vector<4x4xf32>
    %cst_41 = arith.constant dense<0.000000e+00> : vector<288x4xf32>
    %45 = tpu.matmul %42, %44, %cst_41 {dimension_numbers = #tpu.dot_dimension_numbers<[1], [0], [0], [1], [0, 0, 1, 1], [], []>} : vector<288x4xf32>, vector<4x4xf32>, vector<288x4xf32> -> vector<288x4xf32>
    %46 = arith.addf %40, %45 : vector<288x4xf32>
    %c0_42 = arith.constant 0 : index
    %c38 = arith.constant 38 : index
    %c0_43 = arith.constant 0 : index
    %47 = vector.load %arg3[%c0_42, %c38, %c0_43] : memref<1x342x4xf32, #tpu.memory_space<vmem>>, vector<1x288x4xf32>
    %48 = vector.shape_cast %47 : vector<1x288x4xf32> to vector<288x4xf32>
    %c8 = arith.constant 8 : index
    %c0_44 = arith.constant 0 : index
    %c0_45 = arith.constant 0 : index
    %49 = vector.load %arg4[%c8, %c0_44, %c0_45] : memref<9x4x4xf32, #tpu.memory_space<vmem>>, vector<1x4x4xf32>
    %50 = vector.shape_cast %49 : vector<1x4x4xf32> to vector<4x4xf32>
    %cst_46 = arith.constant dense<0.000000e+00> : vector<288x4xf32>
    %51 = tpu.matmul %48, %50, %cst_46 {dimension_numbers = #tpu.dot_dimension_numbers<[1], [0], [0], [1], [0, 0, 1, 1], [], []>} : vector<288x4xf32>, vector<4x4xf32>, vector<288x4xf32> -> vector<288x4xf32>
    %52 = arith.addf %46, %51 : vector<288x4xf32>
    %c0_47 = arith.constant 0 : index
    %c0_48 = arith.constant 0 : index
    %53 = vector.load %arg5[%c0_47, %c0_48] : memref<1x4xf32, #tpu.memory_space<vmem>>, vector<1x4xf32>
    %54 = vector.broadcast %53 : vector<1x4xf32> to vector<288x4xf32>
    %55 = arith.addf %52, %54 : vector<288x4xf32>
    %c0_49 = arith.constant 0 : index
    %c0_50 = arith.constant 0 : index
    %c0_51 = arith.constant 0 : index
    %c0_52 = arith.constant 0 : index
    %c0_53 = arith.constant 0 : index
    %56 = vector.load %arg6[%c0_49, %c0_50, %c0_51, %c0_52, %c0_53] : memref<1x2x2x288x4xf32, #tpu.memory_space<vmem>>, vector<1x1x1x288x4xf32>
    %57 = vector.shape_cast %56 : vector<1x1x1x288x4xf32> to vector<288x4xf32>
    %58 = vector.shape_cast %55 : vector<288x4xf32> to vector<1x1x1x288x4xf32>
    tpu.vector_store %arg6[%c0_49, %c0_50, %c0_51, %c0_52, %c0_53], %58 {strides = array<i32>} : memref<1x2x2x288x4xf32, #tpu.memory_space<vmem>>, vector<1x1x1x288x4xf32>,
    %c0_54 = arith.constant 0 : index
    %c0_55 = arith.constant 0 : index
    %c1_56 = arith.constant 1 : index
    %c0_57 = arith.constant 0 : index
    %c0_58 = arith.constant 0 : index
    %59 = vector.load %arg6[%c0_54, %c0_55, %c1_56, %c0_57, %c0_58] : memref<1x2x2x288x4xf32, #tpu.memory_space<vmem>>, vector<1x1x1x288x4xf32>
    %60 = vector.shape_cast %59 : vector<1x1x1x288x4xf32> to vector<288x4xf32>
    %61 = vector.shape_cast %55 : vector<288x4xf32> to vector<1x1x1x288x4xf32>
    tpu.vector_store %arg6[%c0_54, %c0_55, %c1_56, %c0_57, %c0_58], %61 {strides = array<i32>} : memref<1x2x2x288x4xf32, #tpu.memory_space<vmem>>, vector<1x1x1x288x4xf32>,
    %c0_59 = arith.constant 0 : index
    %c1_60 = arith.constant 1 : index
    %c0_61 = arith.constant 0 : index
    %c0_62 = arith.constant 0 : index
    %c0_63 = arith.constant 0 : index
    %62 = vector.load %arg6[%c0_59, %c1_60, %c0_61, %c0_62, %c0_63] : memref<1x2x2x288x4xf32, #tpu.memory_space<vmem>>, vector<1x1x1x288x4xf32>
    %63 = vector.shape_cast %62 : vector<1x1x1x288x4xf32> to vector<288x4xf32>
    %64 = vector.shape_cast %55 : vector<288x4xf32> to vector<1x1x1x288x4xf32>
    tpu.vector_store %arg6[%c0_59, %c1_60, %c0_61, %c0_62, %c0_63], %64 {strides = array<i32>} : memref<1x2x2x288x4xf32, #tpu.memory_space<vmem>>, vector<1x1x1x288x4xf32>,
    %c0_64 = arith.constant 0 : index
    %c1_65 = arith.constant 1 : index
    %c1_66 = arith.constant 1 : index
    %c0_67 = arith.constant 0 : index
    %c0_68 = arith.constant 0 : index
    %65 = vector.load %arg6[%c0_64, %c1_65, %c1_66, %c0_67, %c0_68] : memref<1x2x2x288x4xf32, #tpu.memory_space<vmem>>, vector<1x1x1x288x4xf32>
    %66 = vector.shape_cast %65 : vector<1x1x1x288x4xf32> to vector<288x4xf32>
    %67 = vector.shape_cast %55 : vector<288x4xf32> to vector<1x1x1x288x4xf32>
    tpu.vector_store %arg6[%c0_64, %c1_65, %c1_66, %c0_67, %c0_68], %67 {strides = array<i32>} : memref<1x2x2x288x4xf32, #tpu.memory_space<vmem>>, vector<1x1x1x288x4xf32>,
    return
  }
  func.func @transform_0(%arg0: i32, %arg1: i32, %arg2: i32) -> (i32, i32, i32) {
    %c0_i32 = arith.constant 0 : i32
    %c0_i32_0 = arith.constant 0 : i32
    %c0_i32_1 = arith.constant 0 : i32
    return %arg0, %c0_i32, %c0_i32_0 : i32, i32, i32
  }
  func.func @transform_1(%arg0: i32, %arg1: i32, %arg2: i32) -> (i32, i32, i32) {
    %c0_i32 = arith.constant 0 : i32
    %c0_i32_0 = arith.constant 0 : i32
    %c0_i32_1 = arith.constant 0 : i32
    return %c0_i32, %c0_i32_0, %arg1 : i32, i32, i32
  }
  func.func @transform_2(%arg0: i32, %arg1: i32, %arg2: i32) -> (i32, i32) {
    %c0_i32 = arith.constant 0 : i32
    %c0_i32_0 = arith.constant 0 : i32
    return %c0_i32, %arg1 : i32, i32
  }
  func.func @transform_3(%arg0: i32, %arg1: i32, %arg2: i32) -> (i32, i32, i32, i32, i32) {
    %c0_i32 = arith.constant 0 : i32
    %c0_i32_0 = arith.constant 0 : i32
    %c0_i32_1 = arith.constant 0 : i32
    return %arg0, %c0_i32, %c0_i32_0, %arg2, %arg1 : i32, i32, i32, i32, i32
  }
}

module attributes {stable_mosaic.version = 11 : i64} {
  func.func @kernel(%arg0: i32, %arg1: i32, %arg2: i32, %arg3: memref<1x342x4xf32, #tpu.memory_space<vmem>>, %arg4: memref<9x4x4xf32, #tpu.memory_space<vmem>>, %arg5: memref<1x4xf32, #tpu.memory_space<vmem>>, %arg6: memref<1x2x2x288x4xf32, #tpu.memory_space<vmem>>) attributes {dimension_semantics = [#tpu.dimension_semantics<parallel>, #tpu.dimension_semantics<arbitrary>, #tpu.dimension_semantics<arbitrary>], iteration_bounds = array<i64: 2, 1, 1>, scalar_prefetch = 0 : i64, scratch_operands = 0 : i64, tpu.core_type = #tpu.core_type<tc>, window_params = [{transform_indices = @transform_0, window_bounds = array<i64: 1, 342, 4>}, {transform_indices = @transform_1, window_bounds = array<i64: 9, 4, 4>}, {transform_indices = @transform_2, window_bounds = array<i64: 1, 4>}, {transform_indices = @transform_3, window_bounds = array<i64: 1, 2, 2, 288, 4>}]} {
    %c0 = arith.constant 0 : index
    %c0_0 = arith.constant 0 : index
    %c0_1 = arith.constant 0 : index
    %0 = vector.load %arg3[%c0, %c0_0, %c0_1] : memref<1x342x4xf32, #tpu.memory_space<vmem>>, vector<1x288x4xf32>
    %1 = vector.shape_cast %0 : vector<1x288x4xf32> to vector<288x4xf32>
    %c0_2 = arith.constant 0 : index
    %c0_3 = arith.constant 0 : index
    %c0_4 = arith.constant 0 : index
    %2 = vector.load %arg4[%c0_2, %c0_3, %c0_4] : memref<9x4x4xf32, #tpu.memory_space<vmem>>, vector<1x4x4xf32>
    %3 = vector.shape_cast %2 : vector<1x4x4xf32> to vector<4x4xf32>
    %cst = arith.constant dense<0.000000e+00> : vector<288x4xf32>
    %4 = tpu.matmul %1, %3, %cst {dimension_numbers = #tpu.dot_dimension_numbers<[1], [0], [0], [1], [0, 0, 1, 1], [], []>} : vector<288x4xf32>, vector<4x4xf32>, vector<288x4xf32> -> vector<288x4xf32>
    %c0_5 = arith.constant 0 : index
    %c1 = arith.constant 1 : index
    %c0_6 = arith.constant 0 : index
    %5 = vector.load %arg3[%c0_5, %c1, %c0_6] : memref<1x342x4xf32, #tpu.memory_space<vmem>>, vector<1x288x4xf32>
    %6 = vector.shape_cast %5 : vector<1x288x4xf32> to vector<288x4xf32>
    %c1_7 = arith.constant 1 : index
    %c0_8 = arith.constant 0 : index
    %c0_9 = arith.constant 0 : index
    %7 = vector.load %arg4[%c1_7, %c0_8, %c0_9] : memref<9x4x4xf32, #tpu.memory_space<vmem>>, vector<1x4x4xf32>
    %8 = vector.shape_cast %7 : vector<1x4x4xf32> to vector<4x4xf32>
    %cst_10 = arith.constant dense<0.000000e+00> : vector<288x4xf32>
    %9 = tpu.matmul %6, %8, %cst_10 {dimension_numbers = #tpu.dot_dimension_numbers<[1], [0], [0], [1], [0, 0, 1, 1], [], []>} : vector<288x4xf32>, vector<4x4xf32>, vector<288x4xf32> -> vector<288x4xf32>
    %10 = arith.addf %4, %9 : vector<288x4xf32>
    %c0_11 = arith.constant 0 : index
    %c2 = arith.constant 2 : index
    %c0_12 = arith.constant 0 : index
    %11 = vector.load %arg3[%c0_11, %c2, %c0_12] : memref<1x342x4xf32, #tpu.memory_space<vmem>>, vector<1x288x4xf32>
    %12 = vector.shape_cast %11 : vector<1x288x4xf32> to vector<288x4xf32>
    %c2_13 = arith.constant 2 : index
    %c0_14 = arith.constant 0 : index
    %c0_15 = arith.constant 0 : index
    %13 = vector.load %arg4[%c2_13, %c0_14, %c0_15] : memref<9x4x4xf32, #tpu.memory_space<vmem>>, vector<1x4x4xf32>
    %14 = vector.shape_cast %13 : vector<1x4x4xf32> to vector<4x4xf32>
    %cst_16 = arith.constant dense<0.000000e+00> : vector<288x4xf32>
    %15 = tpu.matmul %12, %14, %cst_16 {dimension_numbers = #tpu.dot_dimension_numbers<[1], [0], [0], [1], [0, 0, 1, 1], [], []>} : vector<288x4xf32>, vector<4x4xf32>, vector<288x4xf32> -> vector<288x4xf32>
    %16 = arith.addf %10, %15 : vector<288x4xf32>
    %c0_17 = arith.constant 0 : index
    %c18 = arith.constant 18 : index
    %c0_18 = arith.constant 0 : index
    %17 = vector.load %arg3[%c0_17, %c18, %c0_18] : memref<1x342x4xf32, #tpu.memory_space<vmem>>, vector<1x288x4xf32>
    %18 = vector.shape_cast %17 : vector<1x288x4xf32> to vector<288x4xf32>
    %c3 = arith.constant 3 : index
    %c0_19 = arith.constant 0 : index
    %c0_20 = arith.constant 0 : index
    %19 = vector.load %arg4[%c3, %c0_19, %c0_20] : memref<9x4x4xf32, #tpu.memory_space<vmem>>, vector<1x4x4xf32>
    %20 = vector.shape_cast %19 : vector<1x4x4xf32> to vector<4x4xf32>
    %cst_21 = arith.constant dense<0.000000e+00> : vector<288x4xf32>
    %21 = tpu.matmul %18, %20, %cst_21 {dimension_numbers = #tpu.dot_dimension_numbers<[1], [0], [0], [1], [0, 0, 1, 1], [], []>} : vector<288x4xf32>, vector<4x4xf32>, vector<288x4xf32> -> vector<288x4xf32>
    %22 = arith.addf %16, %21 : vector<288x4xf32>
    %c0_22 = arith.constant 0 : index
    %c19 = arith.constant 19 : index
    %c0_23 = arith.constant 0 : index
    %23 = vector.load %arg3[%c0_22, %c19, %c0_23] : memref<1x342x4xf32, #tpu.memory_space<vmem>>, vector<1x288x4xf32>
    %24 = vector.shape_cast %23 : vector<1x288x4xf32> to vector<288x4xf32>
    %c4 = arith.constant 4 : index
    %c0_24 = arith.constant 0 : index
    %c0_25 = arith.constant 0 : index
    %25 = vector.load %arg4[%c4, %c0_24, %c0_25] : memref<9x4x4xf32, #tpu.memory_space<vmem>>, vector<1x4x4xf32>
    %26 = vector.shape_cast %25 : vector<1x4x4xf32> to vector<4x4xf32>
    %cst_26 = arith.constant dense<0.000000e+00> : vector<288x4xf32>
    %27 = tpu.matmul %24, %26, %cst_26 {dimension_numbers = #tpu.dot_dimension_numbers<[1], [0], [0], [1], [0, 0, 1, 1], [], []>} : vector<288x4xf32>, vector<4x4xf32>, vector<288x4xf32> -> vector<288x4xf32>
    %28 = arith.addf %22, %27 : vector<288x4xf32>
    %c0_27 = arith.constant 0 : index
    %c20 = arith.constant 20 : index
    %c0_28 = arith.constant 0 : index
    %29 = vector.load %arg3[%c0_27, %c20, %c0_28] : memref<1x342x4xf32, #tpu.memory_space<vmem>>, vector<1x288x4xf32>
    %30 = vector.shape_cast %29 : vector<1x288x4xf32> to vector<288x4xf32>
    %c5 = arith.constant 5 : index
    %c0_29 = arith.constant 0 : index
    %c0_30 = arith.constant 0 : index
    %31 = vector.load %arg4[%c5, %c0_29, %c0_30] : memref<9x4x4xf32, #tpu.memory_space<vmem>>, vector<1x4x4xf32>
    %32 = vector.shape_cast %31 : vector<1x4x4xf32> to vector<4x4xf32>
    %cst_31 = arith.constant dense<0.000000e+00> : vector<288x4xf32>
    %33 = tpu.matmul %30, %32, %cst_31 {dimension_numbers = #tpu.dot_dimension_numbers<[1], [0], [0], [1], [0, 0, 1, 1], [], []>} : vector<288x4xf32>, vector<4x4xf32>, vector<288x4xf32> -> vector<288x4xf32>
    %34 = arith.addf %28, %33 : vector<288x4xf32>
    %c0_32 = arith.constant 0 : index
    %c36 = arith.constant 36 : index
    %c0_33 = arith.constant 0 : index
    %35 = vector.load %arg3[%c0_32, %c36, %c0_33] : memref<1x342x4xf32, #tpu.memory_space<vmem>>, vector<1x288x4xf32>
    %36 = vector.shape_cast %35 : vector<1x288x4xf32> to vector<288x4xf32>
    %c6 = arith.constant 6 : index
    %c0_34 = arith.constant 0 : index
    %c0_35 = arith.constant 0 : index
    %37 = vector.load %arg4[%c6, %c0_34, %c0_35] : memref<9x4x4xf32, #tpu.memory_space<vmem>>, vector<1x4x4xf32>
    %38 = vector.shape_cast %37 : vector<1x4x4xf32> to vector<4x4xf32>
    %cst_36 = arith.constant dense<0.000000e+00> : vector<288x4xf32>
    %39 = tpu.matmul %36, %38, %cst_36 {dimension_numbers = #tpu.dot_dimension_numbers<[1], [0], [0], [1], [0, 0, 1, 1], [], []>} : vector<288x4xf32>, vector<4x4xf32>, vector<288x4xf32> -> vector<288x4xf32>
    %40 = arith.addf %34, %39 : vector<288x4xf32>
    %c0_37 = arith.constant 0 : index
    %c37 = arith.constant 37 : index
    %c0_38 = arith.constant 0 : index
    %41 = vector.load %arg3[%c0_37, %c37, %c0_38] : memref<1x342x4xf32, #tpu.memory_space<vmem>>, vector<1x288x4xf32>
    %42 = vector.shape_cast %41 : vector<1x288x4xf32> to vector<288x4xf32>
    %c7 = arith.constant 7 : index
    %c0_39 = arith.constant 0 : index
    %c0_40 = arith.constant 0 : index
    %43 = vector.load %arg4[%c7, %c0_39, %c0_40] : memref<9x4x4xf32, #tpu.memory_space<vmem>>, vector<1x4x4xf32>
    %44 = vector.shape_cast %43 : vector<1x4x4xf32> to vector<4x4xf32>
    %cst_41 = arith.constant dense<0.000000e+00> : vector<288x4xf32>
    %45 = tpu.matmul %42, %44, %cst_41 {dimension_numbers = #tpu.dot_dimension_numbers<[1], [0], [0], [1], [0, 0, 1, 1], [], []>} : vector<288x4xf32>, vector<4x4xf32>, vector<288x4xf32> -> vector<288x4xf32>
    %46 = arith.addf %40, %45 : vector<288x4xf32>
    %c0_42 = arith.constant 0 : index
    %c38 = arith.constant 38 : index
    %c0_43 = arith.constant 0 : index
    %47 = vector.load %arg3[%c0_42, %c38, %c0_43] : memref<1x342x4xf32, #tpu.memory_space<vmem>>, vector<1x288x4xf32>
    %48 = vector.shape_cast %47 : vector<1x288x4xf32> to vector<288x4xf32>
    %c8 = arith.constant 8 : index
    %c0_44 = arith.constant 0 : index
    %c0_45 = arith.constant 0 : index
    %49 = vector.load %arg4[%c8, %c0_44, %c0_45] : memref<9x4x4xf32, #tpu.memory_space<vmem>>, vector<1x4x4xf32>
    %50 = vector.shape_cast %49 : vector<1x4x4xf32> to vector<4x4xf32>
    %cst_46 = arith.constant dense<0.000000e+00> : vector<288x4xf32>
    %51 = tpu.matmul %48, %50, %cst_46 {dimension_numbers = #tpu.dot_dimension_numbers<[1], [0], [0], [1], [0, 0, 1, 1], [], []>} : vector<288x4xf32>, vector<4x4xf32>, vector<288x4xf32> -> vector<288x4xf32>
    %52 = arith.addf %46, %51 : vector<288x4xf32>
    %c0_47 = arith.constant 0 : index
    %c0_48 = arith.constant 0 : index
    %53 = vector.load %arg5[%c0_47, %c0_48] : memref<1x4xf32, #tpu.memory_space<vmem>>, vector<1x4xf32>
    %54 = vector.broadcast %53 : vector<1x4xf32> to vector<288x4xf32>
    %55 = arith.addf %52, %54 : vector<288x4xf32>
    %c0_49 = arith.constant 0 : index
    %c0_50 = arith.constant 0 : index
    %c0_51 = arith.constant 0 : index
    %c0_52 = arith.constant 0 : index
    %c0_53 = arith.constant 0 : index
    %56 = vector.load %arg6[%c0_49, %c0_50, %c0_51, %c0_52, %c0_53] : memref<1x2x2x288x4xf32, #tpu.memory_space<vmem>>, vector<1x1x1x288x4xf32>
    %57 = vector.shape_cast %56 : vector<1x1x1x288x4xf32> to vector<288x4xf32>
    %58 = vector.shape_cast %55 : vector<288x4xf32> to vector<1x1x1x288x4xf32>
    tpu.vector_store %arg6[%c0_49, %c0_50, %c0_51, %c0_52, %c0_53], %58 {strides = array<i32>} : memref<1x2x2x288x4xf32, #tpu.memory_space<vmem>>, vector<1x1x1x288x4xf32>,
    %c0_54 = arith.constant 0 : index
    %c0_55 = arith.constant 0 : index
    %c1_56 = arith.constant 1 : index
    %c0_57 = arith.constant 0 : index
    %c0_58 = arith.constant 0 : index
    %59 = vector.load %arg6[%c0_54, %c0_55, %c1_56, %c0_57, %c0_58] : memref<1x2x2x288x4xf32, #tpu.memory_space<vmem>>, vector<1x1x1x288x4xf32>
    %60 = vector.shape_cast %59 : vector<1x1x1x288x4xf32> to vector<288x4xf32>
    %61 = vector.shape_cast %55 : vector<288x4xf32> to vector<1x1x1x288x4xf32>
    tpu.vector_store %arg6[%c0_54, %c0_55, %c1_56, %c0_57, %c0_58], %61 {strides = array<i32>} : memref<1x2x2x288x4xf32, #tpu.memory_space<vmem>>, vector<1x1x1x288x4xf32>,
    %c0_59 = arith.constant 0 : index
    %c1_60 = arith.constant 1 : index
    %c0_61 = arith.constant 0 : index
    %c0_62 = arith.constant 0 : index
    %c0_63 = arith.constant 0 : index
    %62 = vector.load %arg6[%c0_59, %c1_60, %c0_61, %c0_62, %c0_63] : memref<1x2x2x288x4xf32, #tpu.memory_space<vmem>>, vector<1x1x1x288x4xf32>
    %63 = vector.shape_cast %62 : vector<1x1x1x288x4xf32> to vector<288x4xf32>
    %64 = vector.shape_cast %55 : vector<288x4xf32> to vector<1x1x1x288x4xf32>
    tpu.vector_store %arg6[%c0_59, %c1_60, %c0_61, %c0_62, %c0_63], %64 {strides = array<i32>} : memref<1x2x2x288x4xf32, #tpu.memory_space<vmem>>, vector<1x1x1x288x4xf32>,
    %c0_64 = arith.constant 0 : index
    %c1_65 = arith.constant 1 : index
    %c1_66 = arith.constant 1 : index
    %c0_67 = arith.constant 0 : index
    %c0_68 = arith.constant 0 : index
    %65 = vector.load %arg6[%c0_64, %c1_65, %c1_66, %c0_67, %c0_68] : memref<1x2x2x288x4xf32, #tpu.memory_space<vmem>>, vector<1x1x1x288x4xf32>
    %66 = vector.shape_cast %65 : vector<1x1x1x288x4xf32> to vector<288x4xf32>
    %67 = vector.shape_cast %55 : vector<288x4xf32> to vector<1x1x1x288x4xf32>
    tpu.vector_store %arg6[%c0_64, %c1_65, %c1_66, %c0_67, %c0_68], %67 {strides = array<i32>} : memref<1x2x2x288x4xf32, #tpu.memory_space<vmem>>, vector<1x1x1x288x4xf32>,
    return
  }
  func.func @transform_0(%arg0: i32, %arg1: i32, %arg2: i32) -> (i32, i32, i32) {
    %c0_i32 = arith.constant 0 : i32
    %c0_i32_0 = arith.constant 0 : i32
    %c0_i32_1 = arith.constant 0 : i32
    return %arg0, %c0_i32, %c0_i32_0 : i32, i32, i32
  }
  func.func @transform_1(%arg0: i32, %arg1: i32, %arg2: i32) -> (i32, i32, i32) {
    %c0_i32 = arith.constant 0 : i32
    %c0_i32_0 = arith.constant 0 : i32
    %c0_i32_1 = arith.constant 0 : i32
    return %c0_i32, %c0_i32_0, %arg1 : i32, i32, i32
  }
  func.func @transform_2(%arg0: i32, %arg1: i32, %arg2: i32) -> (i32, i32) {
    %c0_i32 = arith.constant 0 : i32
    %c0_i32_0 = arith.constant 0 : i32
    return %c0_i32, %arg1 : i32, i32
  }
  func.func @transform_3(%arg0: i32, %arg1: i32, %arg2: i32) -> (i32, i32, i32, i32, i32) {
    %c0_i32 = arith.constant 0 : i32
    %c0_i32_0 = arith.constant 0 : i32
    %c0_i32_1 = arith.constant 0 : i32
    return %arg0, %c0_i32, %c0_i32_0, %arg2, %arg1 : i32, i32, i32, i32, i32
  }
}

</mosaic_0001>

<llo_original>
// kernel: tpu_custom_call.1
$region0: #{tpu_custom_call.1}
  #allocation0 [shape = 'u32[]', space=smem, size = 0x4, offset = 0x4, fixed_abs, tag = 'smem constant byte address 0x4 - core index']
  #allocation1 [shape = 'u32[144,128]{1,0:T(1,128)}', space=vmem, size = 0x12000, scoped, tag = 'internal scratch']
  %s0 = inlined_call_operand.vmem [shape: f32[2,342,4], index: 0, kind: input, shape index: {}]
  %s1 = inlined_call_operand.vmem [shape: f32[9,4,4], index: 1, kind: input, shape index: {}]
  %s2 = inlined_call_operand.hbm [shape: f32[1,4], index: 2, kind: input, shape index: {}]
  %s3 = inlined_call_operand.vmem [shape: f32[2,2,2,288,4], index: 3, kind: output, shape index: {}]
  %s4 = sld [smem:[#allocation0]]
  $region49: #{tpu_custom_call.1} parent=0
    _
  %s6 = ssub.s32 1, %s4
  %s7 = scalar_select 0, %s6, %s4
  $region1: #{tpu_custom_call.1} parent=0
    #allocation2 [shape = 'u8[512]{0}', space=vmem, size = 0x400, scoped, tag = 'input window, operand 2, single buffered']
    #allocation3 [shape = 's32[2]{0}', space=sflag, size = 0x8, scoped, tag = 'scoped memory for tpu_custom_call.1']
    %8 = vsyncpa [#allocation3], 0
    loop: start=0, step=1, limit=4
    $region2: #{tpu_custom_call.1} parent=1 // loop_pre_header
      _
    $region3: #{tpu_custom_call.1} parent=1 // loop_header
      %s10 = sphi 0, %s14
      %p11 = scmp.ge.s32.totalorder %s10, 4
      %s17 = sphi 0, %s36
      %s18 = sphi 0, %s32
      %s19 = sphi 0, %s28
      %s20 = sphi 0, %s17
      %s21 = sphi 0, %s18
      %s22 = sphi 0, %s19
      %s23 = sphi 0, %s20
      %s24 = sphi 0, %s21
      %s25 = sphi 0, %s22
      %s39 = sphi 0, %s41
      %s42 = sphi 0, %s39
      %s43 = sphi 0, %s42
      %s59 = sphi 0, %s43
      %s65 = sphi 0, %s67
      %s68 = sphi 0, %s65
      %s69 = sphi 0, %s68
      %s85 = sphi 0, %s69
      %s91 = sphi 0, %s93
      %s94 = sphi 0, %s91
      %s95 = sphi 0, %s94
      %s111 = sphi 0, %s95
      %s121 = sphi 0, %s123
      %s124 = sphi 0, %s121
      %s125 = sphi 0, %s124
      %s141 = sphi 0, %s125
    $region4: #{tpu_custom_call.1} parent=1 // loop_header_branch
      %13 = sbr.rel (%p11) target = $region8
    $region5: #{tpu_custom_call.1} parent=1 // loop_body
      %s15 = ssub.s32 %s10, 1
      %s16 = ssub.s32 %s10, 2
      %s26 = sadd.s32 1, %s19
      %p27 = scmp.ge.s32.totalorder %s26, 1
      %s28 = scalar_select %p27, 0, %s26
      %s29 = sadd.s32 1, %s18
      %s30 = scalar_select %p27, %s29, %s18
      %p31 = scmp.ge.s32.totalorder %s30, 1
      %s32 = scalar_select %p31, 0, %s30
      %s33 = sadd.s32 1, %s17
      %s34 = scalar_select %p31, %s33, %s17
      %p35 = scmp.ge.s32.totalorder %s34, 2
      %s36 = scalar_select %p35, 0, %s34
      %s37 = ssub.s32 %s17, %s36
      %p38 = scmp.eq.s32.totalorder %s37, 0
      %s40 = sadd.s32 %s39, 1
      %s41 = scalar_select %p38, %s39, %s40
      %p44 = pneg %p38
      %p45 = scmp.eq.s32.totalorder %s10, 1
      %p46 = por %p44, %p45
      %p47 = scmp.ne.s32.totalorder %s39, %s42
      %p48 = scmp.eq.s32.totalorder %s10, 0
      %p49 = por %p47, %p48
      %p50 = scmp.ne.s32.totalorder %s39, %s42
      %p51 = scmp.eq.s32.totalorder %s15, 1
      %p52 = por %p50, %p51
      %p53 = scmp.ne.s32.totalorder %s42, %s43
      %p54 = scmp.eq.s32.totalorder %s15, 0
      %p55 = por %p53, %p54
      %p56 = scmp.ne.s32.totalorder %s42, %s43
      %p57 = scmp.eq.s32.totalorder %s16, 1
      %p58 = por %p56, %p57
      %p60 = scmp.ne.s32.totalorder %s43, %s59
      %p61 = scmp.eq.s32.totalorder %s16, 0
      %p62 = por %p60, %p61
      %s63 = ssub.s32 %s18, %s32
      %p64 = scmp.eq.s32.totalorder %s63, 0
      %s66 = sadd.s32 %s65, 1
      %s67 = scalar_select %p64, %s65, %s66
      %p70 = pneg %p64
      %p71 = scmp.eq.s32.totalorder %s10, 1
      %p72 = por %p70, %p71
      %p73 = scmp.ne.s32.totalorder %s65, %s68
      %p74 = scmp.eq.s32.totalorder %s10, 0
      %p75 = por %p73, %p74
      %p76 = scmp.ne.s32.totalorder %s65, %s68
      %p77 = scmp.eq.s32.totalorder %s15, 1
      %p78 = por %p76, %p77
      %p79 = scmp.ne.s32.totalorder %s68, %s69
      %p80 = scmp.eq.s32.totalorder %s15, 0
      %p81 = por %p79, %p80
      %p82 = scmp.ne.s32.totalorder %s68, %s69
      %p83 = scmp.eq.s32.totalorder %s16, 1
      %p84 = por %p82, %p83
      %p86 = scmp.ne.s32.totalorder %s69, %s85
      %p87 = scmp.eq.s32.totalorder %s16, 0
      %p88 = por %p86, %p87
      %s89 = ssub.s32 %s18, %s32
      %p90 = scmp.eq.s32.totalorder %s89, 0
      %s92 = sadd.s32 %s91, 1
      %s93 = scalar_select %p90, %s91, %s92
      %p96 = pneg %p90
      %p97 = scmp.eq.s32.totalorder %s10, 1
      %p98 = por %p96, %p97
      %p99 = scmp.ne.s32.totalorder %s91, %s94
      %p100 = scmp.eq.s32.totalorder %s10, 0
      %p101 = por %p99, %p100
      %p102 = scmp.ne.s32.totalorder %s91, %s94
      %p103 = scmp.eq.s32.totalorder %s15, 1
      %p104 = por %p102, %p103
      %p105 = scmp.ne.s32.totalorder %s94, %s95
      %p106 = scmp.eq.s32.totalorder %s15, 0
      %p107 = por %p105, %p106
      %p108 = scmp.ne.s32.totalorder %s94, %s95
      %p109 = scmp.eq.s32.totalorder %s16, 1
      %p110 = por %p108, %p109
      %p112 = scmp.ne.s32.totalorder %s95, %s111
      %p113 = scmp.eq.s32.totalorder %s16, 0
      %p114 = por %p112, %p113
      %s115 = ssub.s32 %s17, %s36
      %s116 = ssub.s32 %s19, %s28
      %s117 = sor.u32 %s115, %s116
      %s118 = ssub.s32 %s18, %s32
      %s119 = sor.u32 %s117, %s118
      %p120 = scmp.eq.s32.totalorder %s119, 0
      %s122 = sadd.s32 %s121, 1
      %s123 = scalar_select %p120, %s121, %s122
      %p126 = pneg %p120
      %p127 = scmp.eq.s32.totalorder %s10, 1
      %p128 = por %p126, %p127
      %p129 = scmp.ne.s32.totalorder %s121, %s124
      %p130 = scmp.eq.s32.totalorder %s10, 0
      %p131 = por %p129, %p130
      %p132 = scmp.ne.s32.totalorder %s121, %s124
      %p133 = scmp.eq.s32.totalorder %s15, 1
      %p134 = por %p132, %p133
      %p135 = scmp.ne.s32.totalorder %s124, %s125
      %p136 = scmp.eq.s32.totalorder %s15, 0
      %p137 = por %p135, %p136
      %p138 = scmp.ne.s32.totalorder %s124, %s125
      %p139 = scmp.eq.s32.totalorder %s16, 1
      %p140 = por %p138, %p139
      %p142 = scmp.ne.s32.totalorder %s125, %s141
      %p143 = scmp.eq.s32.totalorder %s16, 0
      %p144 = por %p142, %p143
      %p145 = scmp.le.s32.totalorder 1, %s10
      %p146 = scmp.lt.s32.totalorder %s10, 3
      %p147 = pnand %p145, %p146
      %p148 = pneg %p147
      // Predicated region
      $region9: #{tpu_custom_call.1} parent=5 // pred_check
        _
      $region10: #{tpu_custom_call.1} parent=5 // pred_check_branch
        %150 = sbr.rel (%p147) target = $region12
      $region11: #{tpu_custom_call.1} parent=5 // pred_region
        %s151 = ssub.s32 %s10, 1
        // Predicated region
        $region13: #{tpu_custom_call.1} parent=11 // pred_check
          %p152 = pneg %p55
        $region14: #{tpu_custom_call.1} parent=11 // pred_check_branch
          %154 = sbr.rel (%p152) target = $region16
        $region15: #{tpu_custom_call.1} parent=11 // pred_region
          %p155 = scmp.lt.s32.totalorder %s20, 1
          %s156 = scalar_select %p155, %s20, 1
          %s157 = smul.addr %s156, 43
          %s158 = smul.addr %s157, 8
          %s159 = scalar_lea.vmem %s0, %s158
        $region16: #{tpu_custom_call.1} parent=11 // pred_fallthru
          _
        // Predicated region
        $region17: #{tpu_custom_call.1} parent=11 // pred_check
          %p160 = pneg %p81
        $region18: #{tpu_custom_call.1} parent=11 // pred_check_branch
          %162 = sbr.rel (%p160) target = $region20
        $region19: #{tpu_custom_call.1} parent=11 // pred_region
          %p163 = scmp.lt.s32.totalorder %s21, 0
          %s164 = scalar_select %p163, %s21, 0
          %s165 = smul.addr %s164, 4
          %s166 = scalar_lea.vmem %s1, %s165
        $region20: #{tpu_custom_call.1} parent=11 // pred_fallthru
          _
        // Predicated region
        $region21: #{tpu_custom_call.1} parent=11 // pred_check
          %p167 = pneg %p107
        $region22: #{tpu_custom_call.1} parent=11 // pred_check_branch
          %169 = sbr.rel (%p167) target = $region24
        $region23: #{tpu_custom_call.1} parent=11 // pred_region
          %s171 = ssub.s32 16, 16
          %172 = vsyncadd [#allocation3], %s171
          %s173 = smul.addr %s21, 16
          %s174 = scalar_lea.hbm %s2, %s173
          %s176 = sshll.u32 [#allocation2], 4
          %s177 = int_to_ptr.vmem [resolvable:$true] %s176
          %179 = dma.hbm_to_vmem [thread:$0]  %s174, 16, %s177, [#allocation3]
        $region24: #{tpu_custom_call.1} parent=11 // pred_fallthru
          _
      $region12: #{tpu_custom_call.1} parent=5 // pred_fallthru
        _
      %p180 = scmp.lt.s32.totalorder %s10, 2
      // Predicated region
      $region25: #{tpu_custom_call.1} parent=5 // pred_check
        %p181 = pneg %p180
      $region26: #{tpu_custom_call.1} parent=5 // pred_check_branch
        %183 = sbr.rel (%p181) target = $region28
      $region27: #{tpu_custom_call.1} parent=5 // pred_region
        _
      $region28: #{tpu_custom_call.1} parent=5 // pred_fallthru
        _
      %p184 = scmp.le.s32.totalorder 1, %s10
      %p185 = scmp.lt.s32.totalorder %s10, 3
      %p186 = pnand %p184, %p185
      %p187 = pneg %p186
      // Predicated region
      $region29: #{tpu_custom_call.1} parent=5 // pred_check
        _
      $region30: #{tpu_custom_call.1} parent=5 // pred_check_branch
        %189 = sbr.rel (%p186) target = $region32
      $region31: #{tpu_custom_call.1} parent=5 // pred_region
        %s190 = ssub.s32 %s10, 1
        // Predicated region
        $region33: #{tpu_custom_call.1} parent=31 // pred_check
          %p191 = pneg %p107
        $region34: #{tpu_custom_call.1} parent=31 // pred_check_branch
          %193 = sbr.rel (%p191) target = $region36
        $region35: #{tpu_custom_call.1} parent=31 // pred_region
          %194 = dma.done [#allocation3], 16
        $region36: #{tpu_custom_call.1} parent=31 // pred_fallthru
          _
        %p195 = scmp.lt.s32.totalorder %s20, 1
        %s196 = scalar_select %p195, %s20, 1
        %s197 = smul.addr %s196, 43
        %s198 = smul.addr %s197, 8
        %s199 = scalar_lea.vmem %s0, %s198
        %p200 = pneg %p55
        %p201 = pneg %p52
        %p202 = scmp.lt.s32.totalorder %s21, 0
        %s203 = scalar_select %p202, %s21, 0
        %s204 = smul.addr %s203, 4
        %s205 = scalar_lea.vmem %s1, %s204
        %p206 = pneg %p81
        %p207 = pneg %p78
        %p208 = pneg %p107
        %p209 = pneg %p104
        %p210 = pneg %p137
        %p211 = pneg %p134
        %s212 = smul.u32 36, %s22
        %p213 = scmp.lt.s32.totalorder %s20, 1
        %s214 = scalar_select %p213, %s20, 1
        %p215 = scmp.lt.s32.totalorder %s212, 35
        %s216 = scalar_select %p215, %s212, 35
        %p217 = scmp.lt.s32.totalorder %s21, 0
        %s218 = scalar_select %p217, %s21, 0
        %s219 = sadd.s32 %s218, %s216
        %s220 = smul.addr %s214, 144
        %s221 = sadd.s32 %s219, %s220
        %s222 = smul.addr %s221, 8
        %s223 = scalar_lea.vmem %s3, %s222
        %p224 = scmp.lt.s32.totalorder %s20, 1
        %s225 = scalar_select %p224, %s20, 1
        %s226 = smul.addr %s225, 43
        %s227 = smul.addr %s226, 8
        %s228 = scalar_lea.vmem %s0, %s227
        %p229 = scmp.lt.s32.totalorder %s21, 0
        %s230 = scalar_select %p229, %s21, 0
        %s231 = smul.addr %s230, 4
        %s232 = scalar_lea.vmem %s1, %s231
        %s233 = smul.u32 36, %s22
        %p234 = scmp.lt.s32.totalorder %s20, 1
        %s235 = scalar_select %p234, %s20, 1
        %p236 = scmp.lt.s32.totalorder %s233, 35
        %s237 = scalar_select %p236, %s233, 35
        %p238 = scmp.lt.s32.totalorder %s21, 0
        %s239 = scalar_select %p238, %s21, 0
        %s240 = sadd.s32 %s239, %s237
        %s241 = smul.addr %s235, 144
        %s242 = sadd.s32 %s240, %s241
        %s243 = smul.addr %s242, 8
        %s244 = scalar_lea.vmem %s3, %s243
        %s245 = smul.u32 36, %s22
        %v246 = vld [vmem:[%s228] sm:$0xff]
        %v247 = vld [vmem:[%s228 + $0x8] sm:$0xff]
        %v248 = vld [vmem:[%s228 + $0x10] sm:$0xff]
        %v249 = vld [vmem:[%s228 + $0x18] sm:$0xff]
        %v250 = vld [vmem:[%s228 + $0x20] sm:$0xff]
        %v251 = vld [vmem:[%s228 + $0x28] sm:$0xff]
        %v252 = vld [vmem:[%s228 + $0x30] sm:$0xff]
        %v253 = vld [vmem:[%s228 + $0x38] sm:$0xff]
        %v254 = vld [vmem:[%s228 + $0x40] sm:$0xff]
        %v255 = vld [vmem:[%s228 + $0x48] sm:$0xff]
        %v256 = vld [vmem:[%s228 + $0x50] sm:$0xff]
        %v257 = vld [vmem:[%s228 + $0x58] sm:$0xff]
        %v258 = vld [vmem:[%s228 + $0x60] sm:$0xff]
        %v259 = vld [vmem:[%s228 + $0x68] sm:$0xff]
        %v260 = vld [vmem:[%s228 + $0x70] sm:$0xff]
        %v261 = vld [vmem:[%s228 + $0x78] sm:$0xff]
        %v262 = vld [vmem:[%s228 + $0x80] sm:$0xff]
        %v263 = vld [vmem:[%s228 + $0x88] sm:$0xff]
        %v264 = vld [vmem:[%s228 + $0x90] sm:$0xff]
        %v265 = vld [vmem:[%s228 + $0x98] sm:$0xff]
        %v266 = vld [vmem:[%s228 + $0xa0] sm:$0xff]
        %v267 = vld [vmem:[%s228 + $0xa8] sm:$0xff]
        %v268 = vld [vmem:[%s228 + $0xb0] sm:$0xff]
        %v269 = vld [vmem:[%s228 + $0xb8] sm:$0xff]
        %v270 = vld [vmem:[%s228 + $0xc0] sm:$0xff]
        %v271 = vld [vmem:[%s228 + $0xc8] sm:$0xff]
        %v272 = vld [vmem:[%s228 + $0xd0] sm:$0xff]
        %v273 = vld [vmem:[%s228 + $0xd8] sm:$0xff]
        %v274 = vld [vmem:[%s228 + $0xe0] sm:$0xff]
        %v275 = vld [vmem:[%s228 + $0xe8] sm:$0xff]
        %v276 = vld [vmem:[%s228 + $0xf0] sm:$0xff]
        %v277 = vld [vmem:[%s228 + $0xf8] sm:$0xff]
        %v278 = vld [vmem:[%s228 + $0x100] sm:$0xff]
        %v279 = vld [vmem:[%s228 + $0x108] sm:$0xff]
        %v280 = vld [vmem:[%s228 + $0x110] sm:$0xff]
        %v281 = vld [vmem:[%s228 + $0x118] sm:$0xff]
        %v282 = vld [vmem:[%s232] sm:$0xf]
        %v283 = vld [vmem:[%s228 + $0x1] sm:$0xff]
        %v284 = vld [vmem:[%s228 + $0x9] sm:$0xff]
        %v285 = vld [vmem:[%s228 + $0x11] sm:$0xff]
        %v286 = vld [vmem:[%s228 + $0x19] sm:$0xff]
        %v287 = vld [vmem:[%s228 + $0x21] sm:$0xff]
        %v288 = vld [vmem:[%s228 + $0x29] sm:$0xff]
        %v289 = vld [vmem:[%s228 + $0x31] sm:$0xff]
        %v290 = vld [vmem:[%s228 + $0x39] sm:$0xff]
        %v291 = vld [vmem:[%s228 + $0x41] sm:$0xff]
        %v292 = vld [vmem:[%s228 + $0x49] sm:$0xff]
        %v293 = vld [vmem:[%s228 + $0x51] sm:$0xff]
        %v294 = vld [vmem:[%s228 + $0x59] sm:$0xff]
        %v295 = vld [vmem:[%s228 + $0x61] sm:$0xff]
        %v296 = vld [vmem:[%s228 + $0x69] sm:$0xff]
        %v297 = vld [vmem:[%s228 + $0x71] sm:$0xff]
        %v298 = vld [vmem:[%s228 + $0x79] sm:$0xff]
        %v299 = vld [vmem:[%s228 + $0x81] sm:$0xff]
        %v300 = vld [vmem:[%s228 + $0x89] sm:$0xff]
        %v301 = vld [vmem:[%s228 + $0x91] sm:$0xff]
        %v302 = vld [vmem:[%s228 + $0x99] sm:$0xff]
        %v303 = vld [vmem:[%s228 + $0xa1] sm:$0xff]
        %v304 = vld [vmem:[%s228 + $0xa9] sm:$0xff]
        %v305 = vld [vmem:[%s228 + $0xb1] sm:$0xff]
        %v306 = vld [vmem:[%s228 + $0xb9] sm:$0xff]
        %v307 = vld [vmem:[%s228 + $0xc1] sm:$0xff]
        %v308 = vld [vmem:[%s228 + $0xc9] sm:$0xff]
        %v309 = vld [vmem:[%s228 + $0xd1] sm:$0xff]
        %v310 = vld [vmem:[%s228 + $0xd9] sm:$0xff]
        %v311 = vld [vmem:[%s228 + $0xe1] sm:$0xff]
        %v312 = vld [vmem:[%s228 + $0xe9] sm:$0xff]
        %v313 = vld [vmem:[%s228 + $0xf1] sm:$0xff]
        %v314 = vld [vmem:[%s228 + $0xf9] sm:$0xff]
        %v315 = vld [vmem:[%s228 + $0x101] sm:$0xff]
        %v316 = vld [vmem:[%s228 + $0x109] sm:$0xff]
        %v317 = vld [vmem:[%s228 + $0x111] sm:$0xff]
        %v318 = vld [vmem:[%s228 + $0x119] sm:$0xff]
        %s319 = scalar_lea.vmem %s232, 4
        %v320 = vld [vmem:[%s319] sm:$0xf]
        %vm321 = vcmask 31744
        %v323 = vsel %vm321, %v283, 0
        %v326 = vsel %vm321, %v284, 0
        %v329 = vsel %vm321, %v285, 0
        %v332 = vsel %vm321, %v286, 0
        %v335 = vsel %vm321, %v287, 0
        %v338 = vsel %vm321, %v288, 0
        %v341 = vsel %vm321, %v289, 0
        %v344 = vsel %vm321, %v290, 0
        %v347 = vsel %vm321, %v291, 0
        %v350 = vsel %vm321, %v292, 0
        %v353 = vsel %vm321, %v293, 0
        %v356 = vsel %vm321, %v294, 0
        %v359 = vsel %vm321, %v295, 0
        %v362 = vsel %vm321, %v296, 0
        %v365 = vsel %vm321, %v297, 0
        %v368 = vsel %vm321, %v298, 0
        %v371 = vsel %vm321, %v299, 0
        %v374 = vsel %vm321, %v300, 0
        %v377 = vsel %vm321, %v301, 0
        %v380 = vsel %vm321, %v302, 0
        %v383 = vsel %vm321, %v303, 0
        %v386 = vsel %vm321, %v304, 0
        %v389 = vsel %vm321, %v305, 0
        %v392 = vsel %vm321, %v306, 0
        %v395 = vsel %vm321, %v307, 0
        %v398 = vsel %vm321, %v308, 0
        %v401 = vsel %vm321, %v309, 0
        %v404 = vsel %vm321, %v310, 0
        %v407 = vsel %vm321, %v311, 0
        %v410 = vsel %vm321, %v312, 0
        %v413 = vsel %vm321, %v313, 0
        %v416 = vsel %vm321, %v314, 0
        %v419 = vsel %vm321, %v315, 0
        %v422 = vsel %vm321, %v316, 0
        %v425 = vsel %vm321, %v317, 0
        %v428 = vsel %vm321, %v318, 0
        %vm430 = vcmask 1043456
        %v432 = vsel %vm430, %v320, 0
        %434 = vmatprep.subr.mxu0 0.0
        %435 = vmatpush1.msra.mxu0 %v432
        %436 = vmatprep.subr.mxu0 0.0
        %437 = vmatpush1.msra.mxu0 0.0
        %438 = vmatprep.subr.mxu0 0.0
        %439 = vmatpush1.msra.mxu0 0.0
        %440 = vmatprep.subr.mxu0 0.0
        %441 = vmatpush1.msra.mxu0 0.0
        %442 = vmatprep.subr.mxu0 0.0
        %443 = vmatpush1.msra.mxu0 0.0
        %444 = vmatprep.subr.mxu0 0.0
        %445 = vmatpush1.msra.mxu0 0.0
        %446 = vmatprep.subr.mxu0 0.0
        %447 = vmatpush1.msra.mxu0 0.0
        %448 = vmatprep.subr.mxu0 0.0
        %449 = vmatpush1.msra.mxu0 0.0
        %450 = vmatprep.subr.mxu0 0.0
        %451 = vmatpush1.msra.mxu0 0.0
        %452 = vmatprep.subr.mxu0 0.0
        %453 = vmatpush1.msra.mxu0 0.0
        %454 = vmatprep.subr.mxu0 0.0
        %455 = vmatpush1.msra.mxu0 0.0
        %456 = vmatprep.subr.mxu0 0.0
        %457 = vmatpush1.msra.mxu0 0.0
        %458 = vmatprep.subr.mxu0 0.0
        %459 = vmatpush1.msra.mxu0 0.0
        %460 = vmatprep.subr.mxu0 0.0
        %461 = vmatpush1.msra.mxu0 0.0
        %462 = vmatprep.subr.mxu0 0.0
        %463 = vmatpush1.msra.mxu0 0.0
        %464 = vmatprep.subr.mxu0 0.0
        %465 = vmatpush1.msra.mxu0 0.0
        %466 = vmatprep.subr.mxu0 0.0
        %467 = vmatpush1.msra.mxu0 0.0
        %468 = vmatprep.subr.mxu0 0.0
        %469 = vmatpush1.msra.mxu0 0.0
        %470 = vmatprep.subr.mxu0 0.0
        %471 = vmatpush1.msra.mxu0 0.0
        %472 = vmatprep.subr.mxu0 0.0
        %473 = vmatpush1.msra.mxu0 0.0
        %474 = vmatprep.subr.mxu0 0.0
        %475 = vmatpush1.msra.mxu0 0.0
        %476 = vmatprep.subr.mxu0 0.0
        %477 = vmatpush1.msra.mxu0 0.0
        %478 = vmatprep.subr.mxu0 0.0
        %479 = vmatpush1.msra.mxu0 0.0
        %480 = vmatprep.subr.mxu0 0.0
        %481 = vmatpush1.msra.mxu0 0.0
        %482 = vmatprep.subr.mxu0 0.0
        %483 = vmatpush1.msra.mxu0 0.0
        %484 = vmatprep.subr.mxu0 0.0
        %485 = vmatpush1.msra.mxu0 0.0
        %486 = vmatprep.subr.mxu0 0.0
        %487 = vmatpush1.msra.mxu0 0.0
        %488 = vmatprep.subr.mxu0 0.0
        %489 = vmatpush1.msra.mxu0 0.0
        %490 = vmatprep.subr.mxu0 0.0
        %491 = vmatpush1.msra.mxu0 0.0
        %492 = vmatprep.subr.mxu0 0.0
        %493 = vmatpush1.msra.mxu0 0.0
        %494 = vmatprep.subr.mxu0 0.0
        %495 = vmatpush1.msra.mxu0 0.0
        %496 = vmatprep.subr.mxu0 0.0
        %497 = vmatpush1.msra.mxu0 0.0
        %498 = vmatprep.mubr.f32.mxu0 0.0
        %499 = vmatmul.mubr.f32.gmra.mrb[0].mxu0 %v323
        %v500 = vpop.f32.mrb[0].mxu0
        %v501 = vadd.f32 0.0, %v500
        %v502 = vpop.f32.mrb[0].mxu0
        %503 = vmatprep.mubr.f32.mxu0 0.0
        %504 = vmatmul.mubr.f32.gmra.mrb[0].mxu0 %v326
        %v505 = vpop.f32.mrb[0].mxu0
        %v506 = vadd.f32 0.0, %v505
        %v507 = vpop.f32.mrb[0].mxu0
        %508 = vmatprep.mubr.f32.mxu0 0.0
        %509 = vmatmul.mubr.f32.gmra.mrb[0].mxu0 %v329
        %v510 = vpop.f32.mrb[0].mxu0
        %v511 = vadd.f32 0.0, %v510
        %v512 = vpop.f32.mrb[0].mxu0
        %513 = vmatprep.mubr.f32.mxu0 0.0
        %514 = vmatmul.mubr.f32.gmra.mrb[0].mxu0 %v332
        %v515 = vpop.f32.mrb[0].mxu0
        %v516 = vadd.f32 0.0, %v515
        %v517 = vpop.f32.mrb[0].mxu0
        %518 = vmatprep.mubr.f32.mxu0 0.0
        %519 = vmatmul.mubr.f32.gmra.mrb[0].mxu0 %v335
        %v520 = vpop.f32.mrb[0].mxu0
        %v521 = vadd.f32 0.0, %v520
        %v522 = vpop.f32.mrb[0].mxu0
        %523 = vmatprep.mubr.f32.mxu0 0.0
        %524 = vmatmul.mubr.f32.gmra.mrb[0].mxu0 %v338
        %v525 = vpop.f32.mrb[0].mxu0
        %v526 = vadd.f32 0.0, %v525
        %v527 = vpop.f32.mrb[0].mxu0
        %528 = vmatprep.mubr.f32.mxu0 0.0
        %529 = vmatmul.mubr.f32.gmra.mrb[0].mxu0 %v341
        %v530 = vpop.f32.mrb[0].mxu0
        %v531 = vadd.f32 0.0, %v530
        %v532 = vpop.f32.mrb[0].mxu0
        %533 = vmatprep.mubr.f32.mxu0 0.0
        %534 = vmatmul.mubr.f32.gmra.mrb[0].mxu0 %v344
        %v535 = vpop.f32.mrb[0].mxu0
        %v536 = vadd.f32 0.0, %v535
        %v537 = vpop.f32.mrb[0].mxu0
        %538 = vmatprep.mubr.f32.mxu0 0.0
        %539 = vmatmul.mubr.f32.gmra.mrb[0].mxu0 %v347
        %v540 = vpop.f32.mrb[0].mxu0
        %v541 = vadd.f32 0.0, %v540
        %v542 = vpop.f32.mrb[0].mxu0
        %543 = vmatprep.mubr.f32.mxu0 0.0
        %544 = vmatmul.mubr.f32.gmra.mrb[0].mxu0 %v350
        %v545 = vpop.f32.mrb[0].mxu0
        %v546 = vadd.f32 0.0, %v545
        %v547 = vpop.f32.mrb[0].mxu0
        %548 = vmatprep.mubr.f32.mxu0 0.0
        %549 = vmatmul.mubr.f32.gmra.mrb[0].mxu0 %v353
        %v550 = vpop.f32.mrb[0].mxu0
        %v551 = vadd.f32 0.0, %v550
        %v552 = vpop.f32.mrb[0].mxu0
        %553 = vmatprep.mubr.f32.mxu0 0.0
        %554 = vmatmul.mubr.f32.gmra.mrb[0].mxu0 %v356
        %v555 = vpop.f32.mrb[0].mxu0
        %v556 = vadd.f32 0.0, %v555
        %v557 = vpop.f32.mrb[0].mxu0
        %558 = vmatprep.mubr.f32.mxu0 0.0
        %559 = vmatmul.mubr.f32.gmra.mrb[0].mxu0 %v359
        %v560 = vpop.f32.mrb[0].mxu0
        %v561 = vadd.f32 0.0, %v560
        %v562 = vpop.f32.mrb[0].mxu0
        %563 = vmatprep.mubr.f32.mxu0 0.0
        %564 = vmatmul.mubr.f32.gmra.mrb[0].mxu0 %v362
        %v565 = vpop.f32.mrb[0].mxu0
        %v566 = vadd.f32 0.0, %v565
        %v567 = vpop.f32.mrb[0].mxu0
        %568 = vmatprep.mubr.f32.mxu0 0.0
        %569 = vmatmul.mubr.f32.gmra.mrb[0].mxu0 %v365
        %v570 = vpop.f32.mrb[0].mxu0
        %v571 = vadd.f32 0.0, %v570
        %v572 = vpop.f32.mrb[0].mxu0
        %573 = vmatprep.mubr.f32.mxu0 0.0
        %574 = vmatmul.mubr.f32.gmra.mrb[0].mxu0 %v368
        %v575 = vpop.f32.mrb[0].mxu0
        %v576 = vadd.f32 0.0, %v575
        %v577 = vpop.f32.mrb[0].mxu0
        %578 = vmatprep.mubr.f32.mxu0 0.0
        %579 = vmatmul.mubr.f32.gmra.mrb[0].mxu0 %v371
        %v580 = vpop.f32.mrb[0].mxu0
        %v581 = vadd.f32 0.0, %v580
        %v582 = vpop.f32.mrb[0].mxu0
        %583 = vmatprep.mubr.f32.mxu0 0.0
        %584 = vmatmul.mubr.f32.gmra.mrb[0].mxu0 %v374
        %v585 = vpop.f32.mrb[0].mxu0
        %v586 = vadd.f32 0.0, %v585
        %v587 = vpop.f32.mrb[0].mxu0
        %588 = vmatprep.mubr.f32.mxu0 0.0
        %589 = vmatmul.mubr.f32.gmra.mrb[0].mxu0 %v377
        %v590 = vpop.f32.mrb[0].mxu0
        %v591 = vadd.f32 0.0, %v590
        %v592 = vpop.f32.mrb[0].mxu0
        %593 = vmatprep.mubr.f32.mxu0 0.0
        %594 = vmatmul.mubr.f32.gmra.mrb[0].mxu0 %v380
        %v595 = vpop.f32.mrb[0].mxu0
        %v596 = vadd.f32 0.0, %v595
        %v597 = vpop.f32.mrb[0].mxu0
        %598 = vmatprep.mubr.f32.mxu0 0.0
        %599 = vmatmul.mubr.f32.gmra.mrb[0].mxu0 %v383
        %v600 = vpop.f32.mrb[0].mxu0
        %v601 = vadd.f32 0.0, %v600
        %v602 = vpop.f32.mrb[0].mxu0
        %603 = vmatprep.mubr.f32.mxu0 0.0
        %604 = vmatmul.mubr.f32.gmra.mrb[0].mxu0 %v386
        %v605 = vpop.f32.mrb[0].mxu0
        %v606 = vadd.f32 0.0, %v605
        %v607 = vpop.f32.mrb[0].mxu0
        %608 = vmatprep.mubr.f32.mxu0 0.0
        %609 = vmatmul.mubr.f32.gmra.mrb[0].mxu0 %v389
        %v610 = vpop.f32.mrb[0].mxu0
        %v611 = vadd.f32 0.0, %v610
        %v612 = vpop.f32.mrb[0].mxu0
        %613 = vmatprep.mubr.f32.mxu0 0.0
        %614 = vmatmul.mubr.f32.gmra.mrb[0].mxu0 %v392
        %v615 = vpop.f32.mrb[0].mxu0
        %v616 = vadd.f32 0.0, %v615
        %v617 = vpop.f32.mrb[0].mxu0
        %618 = vmatprep.mubr.f32.mxu0 0.0
        %619 = vmatmul.mubr.f32.gmra.mrb[0].mxu0 %v395
        %v620 = vpop.f32.mrb[0].mxu0
        %v621 = vadd.f32 0.0, %v620
        %v622 = vpop.f32.mrb[0].mxu0
        %623 = vmatprep.mubr.f32.mxu0 0.0
        %624 = vmatmul.mubr.f32.gmra.mrb[0].mxu0 %v398
        %v625 = vpop.f32.mrb[0].mxu0
        %v626 = vadd.f32 0.0, %v625
        %v627 = vpop.f32.mrb[0].mxu0
        %628 = vmatprep.mubr.f32.mxu0 0.0
        %629 = vmatmul.mubr.f32.gmra.mrb[0].mxu0 %v401
        %v630 = vpop.f32.mrb[0].mxu0
        %v631 = vadd.f32 0.0, %v630
        %v632 = vpop.f32.mrb[0].mxu0
        %633 = vmatprep.mubr.f32.mxu0 0.0
        %634 = vmatmul.mubr.f32.gmra.mrb[0].mxu0 %v404
        %v635 = vpop.f32.mrb[0].mxu0
        %v636 = vadd.f32 0.0, %v635
        %v637 = vpop.f32.mrb[0].mxu0
        %638 = vmatprep.mubr.f32.mxu0 0.0
        %639 = vmatmul.mubr.f32.gmra.mrb[0].mxu0 %v407
        %v640 = vpop.f32.mrb[0].mxu0
        %v641 = vadd.f32 0.0, %v640
        %v642 = vpop.f32.mrb[0].mxu0
        %643 = vmatprep.mubr.f32.mxu0 0.0
        %644 = vmatmul.mubr.f32.gmra.mrb[0].mxu0 %v410
        %v645 = vpop.f32.mrb[0].mxu0
        %v646 = vadd.f32 0.0, %v645
        %v647 = vpop.f32.mrb[0].mxu0
        %648 = vmatprep.mubr.f32.mxu0 0.0
        %649 = vmatmul.mubr.f32.gmra.mrb[0].mxu0 %v413
        %v650 = vpop.f32.mrb[0].mxu0
        %v651 = vadd.f32 0.0, %v650
        %v652 = vpop.f32.mrb[0].mxu0
        %653 = vmatprep.mubr.f32.mxu0 0.0
        %654 = vmatmul.mubr.f32.gmra.mrb[0].mxu0 %v416
        %v655 = vpop.f32.mrb[0].mxu0
        %v656 = vadd.f32 0.0, %v655
        %v657 = vpop.f32.mrb[0].mxu0
        %658 = vmatprep.mubr.f32.mxu0 0.0
        %659 = vmatmul.mubr.f32.gmra.mrb[0].mxu0 %v419
        %v660 = vpop.f32.mrb[0].mxu0
        %v661 = vadd.f32 0.0, %v660
        %v662 = vpop.f32.mrb[0].mxu0
        %663 = vmatprep.mubr.f32.mxu0 0.0
        %664 = vmatmul.mubr.f32.gmra.mrb[0].mxu0 %v422
        %v665 = vpop.f32.mrb[0].mxu0
        %v666 = vadd.f32 0.0, %v665
        %v667 = vpop.f32.mrb[0].mxu0
        %668 = vmatprep.mubr.f32.mxu0 0.0
        %669 = vmatmul.mubr.f32.gmra.mrb[0].mxu0 %v425
        %v670 = vpop.f32.mrb[0].mxu0
        %v671 = vadd.f32 0.0, %v670
        %v672 = vpop.f32.mrb[0].mxu0
        %673 = vmatprep.mubr.f32.mxu0 0.0
        %674 = vmatmul.mubr.f32.gmra.mrb[0].mxu0 %v428
        %v675 = vpop.f32.mrb[0].mxu0
        %v676 = vadd.f32 0.0, %v675
        %v677 = vpop.f32.mrb[0].mxu0
        %678 = vdwg.mxu0
        %v680 = vsel %vm321, %v246, 0
        %v683 = vsel %vm321, %v247, 0
        %v686 = vsel %vm321, %v248, 0
        %v689 = vsel %vm321, %v249, 0
        %v692 = vsel %vm321, %v250, 0
        %v695 = vsel %vm321, %v251, 0
        %v698 = vsel %vm321, %v252, 0
        %v701 = vsel %vm321, %v253, 0
        %v704 = vsel %vm321, %v254, 0
        %v707 = vsel %vm321, %v255, 0
        %v710 = vsel %vm321, %v256, 0
        %v713 = vsel %vm321, %v257, 0
        %v716 = vsel %vm321, %v258, 0
        %v719 = vsel %vm321, %v259, 0
        %v722 = vsel %vm321, %v260, 0
        %v725 = vsel %vm321, %v261, 0
        %v728 = vsel %vm321, %v262, 0
        %v731 = vsel %vm321, %v263, 0
        %v734 = vsel %vm321, %v264, 0
        %v737 = vsel %vm321, %v265, 0
        %v740 = vsel %vm321, %v266, 0
        %v743 = vsel %vm321, %v267, 0
        %v746 = vsel %vm321, %v268, 0
        %v749 = vsel %vm321, %v269, 0
        %v752 = vsel %vm321, %v270, 0
        %v755 = vsel %vm321, %v271, 0
        %v758 = vsel %vm321, %v272, 0
        %v761 = vsel %vm321, %v273, 0
        %v764 = vsel %vm321, %v274, 0
        %v767 = vsel %vm321, %v275, 0
        %v770 = vsel %vm321, %v276, 0
        %v773 = vsel %vm321, %v277, 0
        %v776 = vsel %vm321, %v278, 0
        %v779 = vsel %vm321, %v279, 0
        %v782 = vsel %vm321, %v280, 0
        %v785 = vsel %vm321, %v281, 0
        %v788 = vsel %vm430, %v282, 0
        %790 = vmatprep.subr.mxu0 0.0
        %791 = vmatpush1.msra.mxu0 %v788
        %792 = vmatprep.subr.mxu0 0.0
        %793 = vmatpush1.msra.mxu0 0.0
        %794 = vmatprep.subr.mxu0 0.0
        %795 = vmatpush1.msra.mxu0 0.0
        %796 = vmatprep.subr.mxu0 0.0
        %797 = vmatpush1.msra.mxu0 0.0
        %798 = vmatprep.subr.mxu0 0.0
        %799 = vmatpush1.msra.mxu0 0.0
        %800 = vmatprep.subr.mxu0 0.0
        %801 = vmatpush1.msra.mxu0 0.0
        %802 = vmatprep.subr.mxu0 0.0
        %803 = vmatpush1.msra.mxu0 0.0
        %804 = vmatprep.subr.mxu0 0.0
        %805 = vmatpush1.msra.mxu0 0.0
        %806 = vmatprep.subr.mxu0 0.0
        %807 = vmatpush1.msra.mxu0 0.0
        %808 = vmatprep.subr.mxu0 0.0
        %809 = vmatpush1.msra.mxu0 0.0
        %810 = vmatprep.subr.mxu0 0.0
        %811 = vmatpush1.msra.mxu0 0.0
        %812 = vmatprep.subr.mxu0 0.0
        %813 = vmatpush1.msra.mxu0 0.0
        %814 = vmatprep.subr.mxu0 0.0
        %815 = vmatpush1.msra.mxu0 0.0
        %816 = vmatprep.subr.mxu0 0.0
        %817 = vmatpush1.msra.mxu0 0.0
        %818 = vmatprep.subr.mxu0 0.0
        %819 = vmatpush1.msra.mxu0 0.0
        %820 = vmatprep.subr.mxu0 0.0
        %821 = vmatpush1.msra.mxu0 0.0
        %822 = vmatprep.subr.mxu0 0.0
        %823 = vmatpush1.msra.mxu0 0.0
        %824 = vmatprep.subr.mxu0 0.0
        %825 = vmatpush1.msra.mxu0 0.0
        %826 = vmatprep.subr.mxu0 0.0
        %827 = vmatpush1.msra.mxu0 0.0
        %828 = vmatprep.subr.mxu0 0.0
        %829 = vmatpush1.msra.mxu0 0.0
        %830 = vmatprep.subr.mxu0 0.0
        %831 = vmatpush1.msra.mxu0 0.0
        %832 = vmatprep.subr.mxu0 0.0
        %833 = vmatpush1.msra.mxu0 0.0
        %834 = vmatprep.subr.mxu0 0.0
        %835 = vmatpush1.msra.mxu0 0.0
        %836 = vmatprep.subr.mxu0 0.0
        %837 = vmatpush1.msra.mxu0 0.0
        %838 = vmatprep.subr.mxu0 0.0
        %839 = vmatpush1.msra.mxu0 0.0
        %840 = vmatprep.subr.mxu0 0.0
        %841 = vmatpush1.msra.mxu0 0.0
        %842 = vmatprep.subr.mxu0 0.0
        %843 = vmatpush1.msra.mxu0 0.0
        %844 = vmatprep.subr.mxu0 0.0
        %845 = vmatpush1.msra.mxu0 0.0
        %846 = vmatprep.subr.mxu0 0.0
        %847 = vmatpush1.msra.mxu0 0.0
        %848 = vmatprep.subr.mxu0 0.0
        %849 = vmatpush1.msra.mxu0 0.0
        %850 = vmatprep.subr.mxu0 0.0
        %851 = vmatpush1.msra.mxu0 0.0
        %852 = vmatprep.subr.mxu0 0.0
        %853 = vmatpush1.msra.mxu0 0.0
        %854 = vmatprep.mubr.f32.mxu0 0.0
        %855 = vmatmul.mubr.f32.gmra.mrb[0].mxu0 %v680
        %v856 = vpop.f32.mrb[0].mxu0
        %v857 = vadd.f32 %v501, %v856
        %v858 = vpop.f32.mrb[0].mxu0
        %859 = vmatprep.mubr.f32.mxu0 0.0
        %860 = vmatmul.mubr.f32.gmra.mrb[0].mxu0 %v683
        %v861 = vpop.f32.mrb[0].mxu0
        %v862 = vadd.f32 %v506, %v861
        %v863 = vpop.f32.mrb[0].mxu0
        %864 = vmatprep.mubr.f32.mxu0 0.0
        %865 = vmatmul.mubr.f32.gmra.mrb[0].mxu0 %v686
        %v866 = vpop.f32.mrb[0].mxu0
        %v867 = vadd.f32 %v511, %v866
        %v868 = vpop.f32.mrb[0].mxu0
        %869 = vmatprep.mubr.f32.mxu0 0.0
        %870 = vmatmul.mubr.f32.gmra.mrb[0].mxu0 %v689
        %v871 = vpop.f32.mrb[0].mxu0
        %v872 = vadd.f32 %v516, %v871
        %v873 = vpop.f32.mrb[0].mxu0
        %874 = vmatprep.mubr.f32.mxu0 0.0
        %875 = vmatmul.mubr.f32.gmra.mrb[0].mxu0 %v692
        %v876 = vpop.f32.mrb[0].mxu0
        %v877 = vadd.f32 %v521, %v876
        %v878 = vpop.f32.mrb[0].mxu0
        %879 = vmatprep.mubr.f32.mxu0 0.0
        %880 = vmatmul.mubr.f32.gmra.mrb[0].mxu0 %v695
        %v881 = vpop.f32.mrb[0].mxu0
        %v882 = vadd.f32 %v526, %v881
        %v883 = vpop.f32.mrb[0].mxu0
        %884 = vmatprep.mubr.f32.mxu0 0.0
        %885 = vmatmul.mubr.f32.gmra.mrb[0].mxu0 %v698
        %v886 = vpop.f32.mrb[0].mxu0
        %v887 = vadd.f32 %v531, %v886
        %v888 = vpop.f32.mrb[0].mxu0
        %889 = vmatprep.mubr.f32.mxu0 0.0
        %890 = vmatmul.mubr.f32.gmra.mrb[0].mxu0 %v701
        %v891 = vpop.f32.mrb[0].mxu0
        %v892 = vadd.f32 %v536, %v891
        %v893 = vpop.f32.mrb[0].mxu0
        %894 = vmatprep.mubr.f32.mxu0 0.0
        %895 = vmatmul.mubr.f32.gmra.mrb[0].mxu0 %v704
        %v896 = vpop.f32.mrb[0].mxu0
        %v897 = vadd.f32 %v541, %v896
        %v898 = vpop.f32.mrb[0].mxu0
        %899 = vmatprep.mubr.f32.mxu0 0.0
        %900 = vmatmul.mubr.f32.gmra.mrb[0].mxu0 %v707
        %v901 = vpop.f32.mrb[0].mxu0
        %v902 = vadd.f32 %v546, %v901
        %v903 = vpop.f32.mrb[0].mxu0
        %904 = vmatprep.mubr.f32.mxu0 0.0
        %905 = vmatmul.mubr.f32.gmra.mrb[0].mxu0 %v710
        %v906 = vpop.f32.mrb[0].mxu0
        %v907 = vadd.f32 %v551, %v906
        %v908 = vpop.f32.mrb[0].mxu0
        %909 = vmatprep.mubr.f32.mxu0 0.0
        %910 = vmatmul.mubr.f32.gmra.mrb[0].mxu0 %v713
        %v911 = vpop.f32.mrb[0].mxu0
        %v912 = vadd.f32 %v556, %v911
        %v913 = vpop.f32.mrb[0].mxu0
        %914 = vmatprep.mubr.f32.mxu0 0.0
        %915 = vmatmul.mubr.f32.gmra.mrb[0].mxu0 %v716
        %v916 = vpop.f32.mrb[0].mxu0
        %v917 = vadd.f32 %v561, %v916
        %v918 = vpop.f32.mrb[0].mxu0
        %919 = vmatprep.mubr.f32.mxu0 0.0
        %920 = vmatmul.mubr.f32.gmra.mrb[0].mxu0 %v719
        %v921 = vpop.f32.mrb[0].mxu0
        %v922 = vadd.f32 %v566, %v921
        %v923 = vpop.f32.mrb[0].mxu0
        %924 = vmatprep.mubr.f32.mxu0 0.0
        %925 = vmatmul.mubr.f32.gmra.mrb[0].mxu0 %v722
        %v926 = vpop.f32.mrb[0].mxu0
        %v927 = vadd.f32 %v571, %v926
        %v928 = vpop.f32.mrb[0].mxu0
        %929 = vmatprep.mubr.f32.mxu0 0.0
        %930 = vmatmul.mubr.f32.gmra.mrb[0].mxu0 %v725
        %v931 = vpop.f32.mrb[0].mxu0
        %v932 = vadd.f32 %v576, %v931
        %v933 = vpop.f32.mrb[0].mxu0
        %934 = vmatprep.mubr.f32.mxu0 0.0
        %935 = vmatmul.mubr.f32.gmra.mrb[0].mxu0 %v728
        %v936 = vpop.f32.mrb[0].mxu0
        %v937 = vadd.f32 %v581, %v936
        %v938 = vpop.f32.mrb[0].mxu0
        %939 = vmatprep.mubr.f32.mxu0 0.0
        %940 = vmatmul.mubr.f32.gmra.mrb[0].mxu0 %v731
        %v941 = vpop.f32.mrb[0].mxu0
        %v942 = vadd.f32 %v586, %v941
        %v943 = vpop.f32.mrb[0].mxu0
        %944 = vmatprep.mubr.f32.mxu0 0.0
        %945 = vmatmul.mubr.f32.gmra.mrb[0].mxu0 %v734
        %v946 = vpop.f32.mrb[0].mxu0
        %v947 = vadd.f32 %v591, %v946
        %v948 = vpop.f32.mrb[0].mxu0
        %949 = vmatprep.mubr.f32.mxu0 0.0
        %950 = vmatmul.mubr.f32.gmra.mrb[0].mxu0 %v737
        %v951 = vpop.f32.mrb[0].mxu0
        %v952 = vadd.f32 %v596, %v951
        %v953 = vpop.f32.mrb[0].mxu0
        %954 = vmatprep.mubr.f32.mxu0 0.0
        %955 = vmatmul.mubr.f32.gmra.mrb[0].mxu0 %v740
        %v956 = vpop.f32.mrb[0].mxu0
        %v957 = vadd.f32 %v601, %v956
        %v958 = vpop.f32.mrb[0].mxu0
        %959 = vmatprep.mubr.f32.mxu0 0.0
        %960 = vmatmul.mubr.f32.gmra.mrb[0].mxu0 %v743
        %v961 = vpop.f32.mrb[0].mxu0
        %v962 = vadd.f32 %v606, %v961
        %v963 = vpop.f32.mrb[0].mxu0
        %964 = vmatprep.mubr.f32.mxu0 0.0
        %965 = vmatmul.mubr.f32.gmra.mrb[0].mxu0 %v746
        %v966 = vpop.f32.mrb[0].mxu0
        %v967 = vadd.f32 %v611, %v966
        %v968 = vpop.f32.mrb[0].mxu0
        %969 = vmatprep.mubr.f32.mxu0 0.0
        %970 = vmatmul.mubr.f32.gmra.mrb[0].mxu0 %v749
        %v971 = vpop.f32.mrb[0].mxu0
        %v972 = vadd.f32 %v616, %v971
        %v973 = vpop.f32.mrb[0].mxu0
        %974 = vmatprep.mubr.f32.mxu0 0.0
        %975 = vmatmul.mubr.f32.gmra.mrb[0].mxu0 %v752
        %v976 = vpop.f32.mrb[0].mxu0
        %v977 = vadd.f32 %v621, %v976
        %v978 = vpop.f32.mrb[0].mxu0
        %979 = vmatprep.mubr.f32.mxu0 0.0
        %980 = vmatmul.mubr.f32.gmra.mrb[0].mxu0 %v755
        %v981 = vpop.f32.mrb[0].mxu0
        %v982 = vadd.f32 %v626, %v981
        %v983 = vpop.f32.mrb[0].mxu0
        %984 = vmatprep.mubr.f32.mxu0 0.0
        %985 = vmatmul.mubr.f32.gmra.mrb[0].mxu0 %v758
        %v986 = vpop.f32.mrb[0].mxu0
        %v987 = vadd.f32 %v631, %v986
        %v988 = vpop.f32.mrb[0].mxu0
        %989 = vmatprep.mubr.f32.mxu0 0.0
        %990 = vmatmul.mubr.f32.gmra.mrb[0].mxu0 %v761
        %v991 = vpop.f32.mrb[0].mxu0
        %v992 = vadd.f32 %v636, %v991
        %v993 = vpop.f32.mrb[0].mxu0
        %994 = vmatprep.mubr.f32.mxu0 0.0
        %995 = vmatmul.mubr.f32.gmra.mrb[0].mxu0 %v764
        %v996 = vpop.f32.mrb[0].mxu0
        %v997 = vadd.f32 %v641, %v996
        %v998 = vpop.f32.mrb[0].mxu0
        %999 = vmatprep.mubr.f32.mxu0 0.0
        %1000 = vmatmul.mubr.f32.gmra.mrb[0].mxu0 %v767
        %v1001 = vpop.f32.mrb[0].mxu0
        %v1002 = vadd.f32 %v646, %v1001
        %v1003 = vpop.f32.mrb[0].mxu0
        %1004 = vmatprep.mubr.f32.mxu0 0.0
        %1005 = vmatmul.mubr.f32.gmra.mrb[0].mxu0 %v770
        %v1006 = vpop.f32.mrb[0].mxu0
        %v1007 = vadd.f32 %v651, %v1006
        %v1008 = vpop.f32.mrb[0].mxu0
        %1009 = vmatprep.mubr.f32.mxu0 0.0
        %1010 = vmatmul.mubr.f32.gmra.mrb[0].mxu0 %v773
        %v1011 = vpop.f32.mrb[0].mxu0
        %v1012 = vadd.f32 %v656, %v1011
        %v1013 = vpop.f32.mrb[0].mxu0
        %1014 = vmatprep.mubr.f32.mxu0 0.0
        %1015 = vmatmul.mubr.f32.gmra.mrb[0].mxu0 %v776
        %v1016 = vpop.f32.mrb[0].mxu0
        %v1017 = vadd.f32 %v661, %v1016
        %v1018 = vpop.f32.mrb[0].mxu0
        %1019 = vmatprep.mubr.f32.mxu0 0.0
        %1020 = vmatmul.mubr.f32.gmra.mrb[0].mxu0 %v779
        %v1021 = vpop.f32.mrb[0].mxu0
        %v1022 = vadd.f32 %v666, %v1021
        %v1023 = vpop.f32.mrb[0].mxu0
        %1024 = vmatprep.mubr.f32.mxu0 0.0
        %1025 = vmatmul.mubr.f32.gmra.mrb[0].mxu0 %v782
        %v1026 = vpop.f32.mrb[0].mxu0
        %v1027 = vadd.f32 %v671, %v1026
        %v1028 = vpop.f32.mrb[0].mxu0
        %1029 = vmatprep.mubr.f32.mxu0 0.0
        %1030 = vmatmul.mubr.f32.gmra.mrb[0].mxu0 %v785
        %v1031 = vpop.f32.mrb[0].mxu0
        %v1032 = vadd.f32 %v676, %v1031
        %v1033 = vpop.f32.mrb[0].mxu0
        %1034 = vdwg.mxu0
        %v1035 = vld [vmem:[%s228 + $0x2] sm:$0xff]
        %v1036 = vld [vmem:[%s228 + $0xa] sm:$0xff]
        %v1037 = vld [vmem:[%s228 + $0x12] sm:$0xff]
        %v1038 = vld [vmem:[%s228 + $0x1a] sm:$0xff]
        %v1039 = vld [vmem:[%s228 + $0x22] sm:$0xff]
        %v1040 = vld [vmem:[%s228 + $0x2a] sm:$0xff]
        %v1041 = vld [vmem:[%s228 + $0x32] sm:$0xff]
        %v1042 = vld [vmem:[%s228 + $0x3a] sm:$0xff]
        %v1043 = vld [vmem:[%s228 + $0x42] sm:$0xff]
        %v1044 = vld [vmem:[%s228 + $0x4a] sm:$0xff]
        %v1045 = vld [vmem:[%s228 + $0x52] sm:$0xff]
        %v1046 = vld [vmem:[%s228 + $0x5a] sm:$0xff]
        %v1047 = vld [vmem:[%s228 + $0x62] sm:$0xff]
        %v1048 = vld [vmem:[%s228 + $0x6a] sm:$0xff]
        %v1049 = vld [vmem:[%s228 + $0x72] sm:$0xff]
        %v1050 = vld [vmem:[%s228 + $0x7a] sm:$0xff]
        %v1051 = vld [vmem:[%s228 + $0x82] sm:$0xff]
        %v1052 = vld [vmem:[%s228 + $0x8a] sm:$0xff]
        %v1053 = vld [vmem:[%s228 + $0x92] sm:$0xff]
        %v1054 = vld [vmem:[%s228 + $0x9a] sm:$0xff]
        %v1055 = vld [vmem:[%s228 + $0xa2] sm:$0xff]
        %v1056 = vld [vmem:[%s228 + $0xaa] sm:$0xff]
        %v1057 = vld [vmem:[%s228 + $0xb2] sm:$0xff]
        %v1058 = vld [vmem:[%s228 + $0xba] sm:$0xff]
        %v1059 = vld [vmem:[%s228 + $0xc2] sm:$0xff]
        %v1060 = vld [vmem:[%s228 + $0xca] sm:$0xff]
        %v1061 = vld [vmem:[%s228 + $0xd2] sm:$0xff]
        %v1062 = vld [vmem:[%s228 + $0xda] sm:$0xff]
        %v1063 = vld [vmem:[%s228 + $0xe2] sm:$0xff]
        %v1064 = vld [vmem:[%s228 + $0xea] sm:$0xff]
        %v1065 = vld [vmem:[%s228 + $0xf2] sm:$0xff]
        %v1066 = vld [vmem:[%s228 + $0xfa] sm:$0xff]
        %v1067 = vld [vmem:[%s228 + $0x102] sm:$0xff]
        %v1068 = vld [vmem:[%s228 + $0x10a] sm:$0xff]
        %v1069 = vld [vmem:[%s228 + $0x112] sm:$0xff]
        %v1070 = vld [vmem:[%s228 + $0x11a] sm:$0xff]
        %s1071 = scalar_lea.vmem %s232, 8
        %v1072 = vld [vmem:[%s1071] sm:$0xf]
        %v1074 = vsel %vm321, %v1035, 0
        %v1077 = vsel %vm321, %v1036, 0
        %v1080 = vsel %vm321, %v1037, 0
        %v1083 = vsel %vm321, %v1038, 0
        %v1086 = vsel %vm321, %v1039, 0
        %v1089 = vsel %vm321, %v1040, 0
        %v1092 = vsel %vm321, %v1041, 0
        %v1095 = vsel %vm321, %v1042, 0
        %v1098 = vsel %vm321, %v1043, 0
        %v1101 = vsel %vm321, %v1044, 0
        %v1104 = vsel %vm321, %v1045, 0
        %v1107 = vsel %vm321, %v1046, 0
        %v1110 = vsel %vm321, %v1047, 0
        %v1113 = vsel %vm321, %v1048, 0
        %v1116 = vsel %vm321, %v1049, 0
        %v1119 = vsel %vm321, %v1050, 0
        %v1122 = vsel %vm321, %v1051, 0
        %v1125 = vsel %vm321, %v1052, 0
        %v1128 = vsel %vm321, %v1053, 0
        %v1131 = vsel %vm321, %v1054, 0
        %v1134 = vsel %vm321, %v1055, 0
        %v1137 = vsel %vm321, %v1056, 0
        %v1140 = vsel %vm321, %v1057, 0
        %v1143 = vsel %vm321, %v1058, 0
        %v1146 = vsel %vm321, %v1059, 0
        %v1149 = vsel %vm321, %v1060, 0
        %v1152 = vsel %vm321, %v1061, 0
        %v1155 = vsel %vm321, %v1062, 0
        %v1158 = vsel %vm321, %v1063, 0
        %v1161 = vsel %vm321, %v1064, 0
        %v1164 = vsel %vm321, %v1065, 0
        %v1167 = vsel %vm321, %v1066, 0
        %v1170 = vsel %vm321, %v1067, 0
        %v1173 = vsel %vm321, %v1068, 0
        %v1176 = vsel %vm321, %v1069, 0
        %v1179 = vsel %vm321, %v1070, 0
        %v1182 = vsel %vm430, %v1072, 0
        %1184 = vmatprep.subr.mxu0 0.0
        %1185 = vmatpush1.msra.mxu0 %v1182
        %1186 = vmatprep.subr.mxu0 0.0
        %1187 = vmatpush1.msra.mxu0 0.0
        %1188 = vmatprep.subr.mxu0 0.0
        %1189 = vmatpush1.msra.mxu0 0.0
        %1190 = vmatprep.subr.mxu0 0.0
        %1191 = vmatpush1.msra.mxu0 0.0
        %1192 = vmatprep.subr.mxu0 0.0
        %1193 = vmatpush1.msra.mxu0 0.0
        %1194 = vmatprep.subr.mxu0 0.0
        %1195 = vmatpush1.msra.mxu0 0.0
        %1196 = vmatprep.subr.mxu0 0.0
        %1197 = vmatpush1.msra.mxu0 0.0
        %1198 = vmatprep.subr.mxu0 0.0
        %1199 = vmatpush1.msra.mxu0 0.0
        %1200 = vmatprep.subr.mxu0 0.0
        %1201 = vmatpush1.msra.mxu0 0.0
        %1202 = vmatprep.subr.mxu0 0.0
        %1203 = vmatpush1.msra.mxu0 0.0
        %1204 = vmatprep.subr.mxu0 0.0
        %1205 = vmatpush1.msra.mxu0 0.0
        %1206 = vmatprep.subr.mxu0 0.0
        %1207 = vmatpush1.msra.mxu0 0.0
        %1208 = vmatprep.subr.mxu0 0.0
        %1209 = vmatpush1.msra.mxu0 0.0
        %1210 = vmatprep.subr.mxu0 0.0
        %1211 = vmatpush1.msra.mxu0 0.0
        %1212 = vmatprep.subr.mxu0 0.0
        %1213 = vmatpush1.msra.mxu0 0.0
        %1214 = vmatprep.subr.mxu0 0.0
        %1215 = vmatpush1.msra.mxu0 0.0
        %1216 = vmatprep.subr.mxu0 0.0
        %1217 = vmatpush1.msra.mxu0 0.0
        %1218 = vmatprep.subr.mxu0 0.0
        %1219 = vmatpush1.msra.mxu0 0.0
        %1220 = vmatprep.subr.mxu0 0.0
        %1221 = vmatpush1.msra.mxu0 0.0
        %1222 = vmatprep.subr.mxu0 0.0
        %1223 = vmatpush1.msra.mxu0 0.0
        %1224 = vmatprep.subr.mxu0 0.0
        %1225 = vmatpush1.msra.mxu0 0.0
        %1226 = vmatprep.subr.mxu0 0.0
        %1227 = vmatpush1.msra.mxu0 0.0
        %1228 = vmatprep.subr.mxu0 0.0
        %1229 = vmatpush1.msra.mxu0 0.0
        %1230 = vmatprep.subr.mxu0 0.0
        %1231 = vmatpush1.msra.mxu0 0.0
        %1232 = vmatprep.subr.mxu0 0.0
        %1233 = vmatpush1.msra.mxu0 0.0
        %1234 = vmatprep.subr.mxu0 0.0
        %1235 = vmatpush1.msra.mxu0 0.0
        %1236 = vmatprep.subr.mxu0 0.0
        %1237 = vmatpush1.msra.mxu0 0.0
        %1238 = vmatprep.subr.mxu0 0.0
        %1239 = vmatpush1.msra.mxu0 0.0
        %1240 = vmatprep.subr.mxu0 0.0
        %1241 = vmatpush1.msra.mxu0 0.0
        %1242 = vmatprep.subr.mxu0 0.0
        %1243 = vmatpush1.msra.mxu0 0.0
        %1244 = vmatprep.subr.mxu0 0.0
        %1245 = vmatpush1.msra.mxu0 0.0
        %1246 = vmatprep.subr.mxu0 0.0
        %1247 = vmatpush1.msra.mxu0 0.0
        %1248 = vmatprep.mubr.f32.mxu0 0.0
        %1249 = vmatmul.mubr.f32.gmra.mrb[0].mxu0 %v1074
        %v1250 = vpop.f32.mrb[0].mxu0
        %v1251 = vadd.f32 0.0, %v1250
        %v1252 = vpop.f32.mrb[0].mxu0
        %1253 = vmatprep.mubr.f32.mxu0 0.0
        %1254 = vmatmul.mubr.f32.gmra.mrb[0].mxu0 %v1077
        %v1255 = vpop.f32.mrb[0].mxu0
        %v1256 = vadd.f32 0.0, %v1255
        %v1257 = vpop.f32.mrb[0].mxu0
        %1258 = vmatprep.mubr.f32.mxu0 0.0
        %1259 = vmatmul.mubr.f32.gmra.mrb[0].mxu0 %v1080
        %v1260 = vpop.f32.mrb[0].mxu0
        %v1261 = vadd.f32 0.0, %v1260
        %v1262 = vpop.f32.mrb[0].mxu0
        %1263 = vmatprep.mubr.f32.mxu0 0.0
        %1264 = vmatmul.mubr.f32.gmra.mrb[0].mxu0 %v1083
        %v1265 = vpop.f32.mrb[0].mxu0
        %v1266 = vadd.f32 0.0, %v1265
        %v1267 = vpop.f32.mrb[0].mxu0
        %1268 = vmatprep.mubr.f32.mxu0 0.0
        %1269 = vmatmul.mubr.f32.gmra.mrb[0].mxu0 %v1086
        %v1270 = vpop.f32.mrb[0].mxu0
        %v1271 = vadd.f32 0.0, %v1270
        %v1272 = vpop.f32.mrb[0].mxu0
        %1273 = vmatprep.mubr.f32.mxu0 0.0
        %1274 = vmatmul.mubr.f32.gmra.mrb[0].mxu0 %v1089
        %v1275 = vpop.f32.mrb[0].mxu0
        %v1276 = vadd.f32 0.0, %v1275
        %v1277 = vpop.f32.mrb[0].mxu0
        %1278 = vmatprep.mubr.f32.mxu0 0.0
        %1279 = vmatmul.mubr.f32.gmra.mrb[0].mxu0 %v1092
        %v1280 = vpop.f32.mrb[0].mxu0
        %v1281 = vadd.f32 0.0, %v1280
        %v1282 = vpop.f32.mrb[0].mxu0
        %1283 = vmatprep.mubr.f32.mxu0 0.0
        %1284 = vmatmul.mubr.f32.gmra.mrb[0].mxu0 %v1095
        %v1285 = vpop.f32.mrb[0].mxu0
        %v1286 = vadd.f32 0.0, %v1285
        %v1287 = vpop.f32.mrb[0].mxu0
        %1288 = vmatprep.mubr.f32.mxu0 0.0
        %1289 = vmatmul.mubr.f32.gmra.mrb[0].mxu0 %v1098
        %v1290 = vpop.f32.mrb[0].mxu0
        %v1291 = vadd.f32 0.0, %v1290
        %v1292 = vpop.f32.mrb[0].mxu0
        %1293 = vmatprep.mubr.f32.mxu0 0.0
        %1294 = vmatmul.mubr.f32.gmra.mrb[0].mxu0 %v1101
        %v1295 = vpop.f32.mrb[0].mxu0
        %v1296 = vadd.f32 0.0, %v1295
        %v1297 = vpop.f32.mrb[0].mxu0
        %1298 = vmatprep.mubr.f32.mxu0 0.0
        %1299 = vmatmul.mubr.f32.gmra.mrb[0].mxu0 %v1104
        %v1300 = vpop.f32.mrb[0].mxu0
        %v1301 = vadd.f32 0.0, %v1300
        %v1302 = vpop.f32.mrb[0].mxu0
        %1303 = vmatprep.mubr.f32.mxu0 0.0
        %1304 = vmatmul.mubr.f32.gmra.mrb[0].mxu0 %v1107
        %v1305 = vpop.f32.mrb[0].mxu0
        %v1306 = vadd.f32 0.0, %v1305
        %v1307 = vpop.f32.mrb[0].mxu0
        %1308 = vmatprep.mubr.f32.mxu0 0.0
        %1309 = vmatmul.mubr.f32.gmra.mrb[0].mxu0 %v1110
        %v1310 = vpop.f32.mrb[0].mxu0
        %v1311 = vadd.f32 0.0, %v1310
        %v1312 = vpop.f32.mrb[0].mxu0
        %1313 = vmatprep.mubr.f32.mxu0 0.0
        %1314 = vmatmul.mubr.f32.gmra.mrb[0].mxu0 %v1113
        %v1315 = vpop.f32.mrb[0].mxu0
        %v1316 = vadd.f32 0.0, %v1315
        %v1317 = vpop.f32.mrb[0].mxu0
        %1318 = vmatprep.mubr.f32.mxu0 0.0
        %1319 = vmatmul.mubr.f32.gmra.mrb[0].mxu0 %v1116
        %v1320 = vpop.f32.mrb[0].mxu0
        %v1321 = vadd.f32 0.0, %v1320
        %v1322 = vpop.f32.mrb[0].mxu0
        %1323 = vmatprep.mubr.f32.mxu0 0.0
        %1324 = vmatmul.mubr.f32.gmra.mrb[0].mxu0 %v1119
        %v1325 = vpop.f32.mrb[0].mxu0
        %v1326 = vadd.f32 0.0, %v1325
        %v1327 = vpop.f32.mrb[0].mxu0
        %1328 = vmatprep.mubr.f32.mxu0 0.0
        %1329 = vmatmul.mubr.f32.gmra.mrb[0].mxu0 %v1122
        %v1330 = vpop.f32.mrb[0].mxu0
        %v1331 = vadd.f32 0.0, %v1330
        %v1332 = vpop.f32.mrb[0].mxu0
        %1333 = vmatprep.mubr.f32.mxu0 0.0
        %1334 = vmatmul.mubr.f32.gmra.mrb[0].mxu0 %v1125
        %v1335 = vpop.f32.mrb[0].mxu0
        %v1336 = vadd.f32 0.0, %v1335
        %v1337 = vpop.f32.mrb[0].mxu0
        %1338 = vmatprep.mubr.f32.mxu0 0.0
        %1339 = vmatmul.mubr.f32.gmra.mrb[0].mxu0 %v1128
        %v1340 = vpop.f32.mrb[0].mxu0
        %v1341 = vadd.f32 0.0, %v1340
        %v1342 = vpop.f32.mrb[0].mxu0
        %1343 = vmatprep.mubr.f32.mxu0 0.0
        %1344 = vmatmul.mubr.f32.gmra.mrb[0].mxu0 %v1131
        %v1345 = vpop.f32.mrb[0].mxu0
        %v1346 = vadd.f32 0.0, %v1345
        %v1347 = vpop.f32.mrb[0].mxu0
        %1348 = vmatprep.mubr.f32.mxu0 0.0
        %1349 = vmatmul.mubr.f32.gmra.mrb[0].mxu0 %v1134
        %v1350 = vpop.f32.mrb[0].mxu0
        %v1351 = vadd.f32 0.0, %v1350
        %v1352 = vpop.f32.mrb[0].mxu0
        %1353 = vmatprep.mubr.f32.mxu0 0.0
        %1354 = vmatmul.mubr.f32.gmra.mrb[0].mxu0 %v1137
        %v1355 = vpop.f32.mrb[0].mxu0
        %v1356 = vadd.f32 0.0, %v1355
        %v1357 = vpop.f32.mrb[0].mxu0
        %1358 = vmatprep.mubr.f32.mxu0 0.0
        %1359 = vmatmul.mubr.f32.gmra.mrb[0].mxu0 %v1140
        %v1360 = vpop.f32.mrb[0].mxu0
        %v1361 = vadd.f32 0.0, %v1360
        %v1362 = vpop.f32.mrb[0].mxu0
        %1363 = vmatprep.mubr.f32.mxu0 0.0
        %1364 = vmatmul.mubr.f32.gmra.mrb[0].mxu0 %v1143
        %v1365 = vpop.f32.mrb[0].mxu0
        %v1366 = vadd.f32 0.0, %v1365
        %v1367 = vpop.f32.mrb[0].mxu0
        %1368 = vmatprep.mubr.f32.mxu0 0.0
        %1369 = vmatmul.mubr.f32.gmra.mrb[0].mxu0 %v1146
        %v1370 = vpop.f32.mrb[0].mxu0
        %v1371 = vadd.f32 0.0, %v1370
        %v1372 = vpop.f32.mrb[0].mxu0
        %1373 = vmatprep.mubr.f32.mxu0 0.0
        %1374 = vmatmul.mubr.f32.gmra.mrb[0].mxu0 %v1149
        %v1375 = vpop.f32.mrb[0].mxu0
        %v1376 = vadd.f32 0.0, %v1375
        %v1377 = vpop.f32.mrb[0].mxu0
        %1378 = vmatprep.mubr.f32.mxu0 0.0
        %1379 = vmatmul.mubr.f32.gmra.mrb[0].mxu0 %v1152
        %v1380 = vpop.f32.mrb[0].mxu0
        %v1381 = vadd.f32 0.0, %v1380
        %v1382 = vpop.f32.mrb[0].mxu0
        %1383 = vmatprep.mubr.f32.mxu0 0.0
        %1384 = vmatmul.mubr.f32.gmra.mrb[0].mxu0 %v1155
        %v1385 = vpop.f32.mrb[0].mxu0
        %v1386 = vadd.f32 0.0, %v1385
        %v1387 = vpop.f32.mrb[0].mxu0
        %1388 = vmatprep.mubr.f32.mxu0 0.0
        %1389 = vmatmul.mubr.f32.gmra.mrb[0].mxu0 %v1158
        %v1390 = vpop.f32.mrb[0].mxu0
        %v1391 = vadd.f32 0.0, %v1390
        %v1392 = vpop.f32.mrb[0].mxu0
        %1393 = vmatprep.mubr.f32.mxu0 0.0
        %1394 = vmatmul.mubr.f32.gmra.mrb[0].mxu0 %v1161
        %v1395 = vpop.f32.mrb[0].mxu0
        %v1396 = vadd.f32 0.0, %v1395
        %v1397 = vpop.f32.mrb[0].mxu0
        %1398 = vmatprep.mubr.f32.mxu0 0.0
        %1399 = vmatmul.mubr.f32.gmra.mrb[0].mxu0 %v1164
        %v1400 = vpop.f32.mrb[0].mxu0
        %v1401 = vadd.f32 0.0, %v1400
        %v1402 = vpop.f32.mrb[0].mxu0
        %1403 = vmatprep.mubr.f32.mxu0 0.0
        %1404 = vmatmul.mubr.f32.gmra.mrb[0].mxu0 %v1167
        %v1405 = vpop.f32.mrb[0].mxu0
        %v1406 = vadd.f32 0.0, %v1405
        %v1407 = vpop.f32.mrb[0].mxu0
        %1408 = vmatprep.mubr.f32.mxu0 0.0
        %1409 = vmatmul.mubr.f32.gmra.mrb[0].mxu0 %v1170
        %v1410 = vpop.f32.mrb[0].mxu0
        %v1411 = vadd.f32 0.0, %v1410
        %v1412 = vpop.f32.mrb[0].mxu0
        %1413 = vmatprep.mubr.f32.mxu0 0.0
        %1414 = vmatmul.mubr.f32.gmra.mrb[0].mxu0 %v1173
        %v1415 = vpop.f32.mrb[0].mxu0
        %v1416 = vadd.f32 0.0, %v1415
        %v1417 = vpop.f32.mrb[0].mxu0
        %1418 = vmatprep.mubr.f32.mxu0 0.0
        %1419 = vmatmul.mubr.f32.gmra.mrb[0].mxu0 %v1176
        %v1420 = vpop.f32.mrb[0].mxu0
        %v1421 = vadd.f32 0.0, %v1420
        %v1422 = vpop.f32.mrb[0].mxu0
        %1423 = vmatprep.mubr.f32.mxu0 0.0
        %1424 = vmatmul.mubr.f32.gmra.mrb[0].mxu0 %v1179
        %v1425 = vpop.f32.mrb[0].mxu0
        %v1426 = vadd.f32 0.0, %v1425
        %v1427 = vpop.f32.mrb[0].mxu0
        %1428 = vdwg.mxu0
        %v1429 = vadd.f32 %v857, %v1251
        %v1430 = vadd.f32 %v862, %v1256
        %v1431 = vadd.f32 %v867, %v1261
        %v1432 = vadd.f32 %v872, %v1266
        %v1433 = vadd.f32 %v877, %v1271
        %v1434 = vadd.f32 %v882, %v1276
        %v1435 = vadd.f32 %v887, %v1281
        %v1436 = vadd.f32 %v892, %v1286
        %v1437 = vadd.f32 %v897, %v1291
        %v1438 = vadd.f32 %v902, %v1296
        %v1439 = vadd.f32 %v907, %v1301
        %v1440 = vadd.f32 %v912, %v1306
        %v1441 = vadd.f32 %v917, %v1311
        %v1442 = vadd.f32 %v922, %v1316
        %v1443 = vadd.f32 %v927, %v1321
        %v1444 = vadd.f32 %v932, %v1326
        %v1445 = vadd.f32 %v937, %v1331
        %v1446 = vadd.f32 %v942, %v1336
        %v1447 = vadd.f32 %v947, %v1341
        %v1448 = vadd.f32 %v952, %v1346
        %v1449 = vadd.f32 %v957, %v1351
        %v1450 = vadd.f32 %v962, %v1356
        %v1451 = vadd.f32 %v967, %v1361
        %v1452 = vadd.f32 %v972, %v1366
        %v1453 = vadd.f32 %v977, %v1371
        %v1454 = vadd.f32 %v982, %v1376
        %v1455 = vadd.f32 %v987, %v1381
        %v1456 = vadd.f32 %v992, %v1386
        %v1457 = vadd.f32 %v997, %v1391
        %v1458 = vadd.f32 %v1002, %v1396
        %v1459 = vadd.f32 %v1007, %v1401
        %v1460 = vadd.f32 %v1012, %v1406
        %v1461 = vadd.f32 %v1017, %v1411
        %v1462 = vadd.f32 %v1022, %v1416
        %v1463 = vadd.f32 %v1027, %v1421
        %v1464 = vadd.f32 %v1032, %v1426
        %v1465 = vld [vmem:[%s228 + $0x12] sm:$0xff]
        %v1466 = vld [vmem:[%s228 + $0x1a] sm:$0xff]
        %v1467 = vld [vmem:[%s228 + $0x22] sm:$0xff]
        %v1468 = vld [vmem:[%s228 + $0x2a] sm:$0xff]
        %v1469 = vld [vmem:[%s228 + $0x32] sm:$0xff]
        %v1470 = vld [vmem:[%s228 + $0x3a] sm:$0xff]
        %v1471 = vld [vmem:[%s228 + $0x42] sm:$0xff]
        %v1472 = vld [vmem:[%s228 + $0x4a] sm:$0xff]
        %v1473 = vld [vmem:[%s228 + $0x52] sm:$0xff]
        %v1474 = vld [vmem:[%s228 + $0x5a] sm:$0xff]
        %v1475 = vld [vmem:[%s228 + $0x62] sm:$0xff]
        %v1476 = vld [vmem:[%s228 + $0x6a] sm:$0xff]
        %v1477 = vld [vmem:[%s228 + $0x72] sm:$0xff]
        %v1478 = vld [vmem:[%s228 + $0x7a] sm:$0xff]
        %v1479 = vld [vmem:[%s228 + $0x82] sm:$0xff]
        %v1480 = vld [vmem:[%s228 + $0x8a] sm:$0xff]
        %v1481 = vld [vmem:[%s228 + $0x92] sm:$0xff]
        %v1482 = vld [vmem:[%s228 + $0x9a] sm:$0xff]
        %v1483 = vld [vmem:[%s228 + $0xa2] sm:$0xff]
        %v1484 = vld [vmem:[%s228 + $0xaa] sm:$0xff]
        %v1485 = vld [vmem:[%s228 + $0xb2] sm:$0xff]
        %v1486 = vld [vmem:[%s228 + $0xba] sm:$0xff]
        %v1487 = vld [vmem:[%s228 + $0xc2] sm:$0xff]
        %v1488 = vld [vmem:[%s228 + $0xca] sm:$0xff]
        %v1489 = vld [vmem:[%s228 + $0xd2] sm:$0xff]
        %v1490 = vld [vmem:[%s228 + $0xda] sm:$0xff]
        %v1491 = vld [vmem:[%s228 + $0xe2] sm:$0xff]
        %v1492 = vld [vmem:[%s228 + $0xea] sm:$0xff]
        %v1493 = vld [vmem:[%s228 + $0xf2] sm:$0xff]
        %v1494 = vld [vmem:[%s228 + $0xfa] sm:$0xff]
        %v1495 = vld [vmem:[%s228 + $0x102] sm:$0xff]
        %v1496 = vld [vmem:[%s228 + $0x10a] sm:$0xff]
        %v1497 = vld [vmem:[%s228 + $0x112] sm:$0xff]
        %v1498 = vld [vmem:[%s228 + $0x11a] sm:$0xff]
        %v1499 = vld [vmem:[%s228 + $0x122] sm:$0xff]
        %v1500 = vld [vmem:[%s228 + $0x12a] sm:$0xff]
        %s1501 = scalar_lea.vmem %s232, 12
        %v1502 = vld [vmem:[%s1501] sm:$0xf]
        %v1504 = vsel %vm321, %v1465, 0
        %v1507 = vsel %vm321, %v1466, 0
        %v1510 = vsel %vm321, %v1467, 0
        %v1513 = vsel %vm321, %v1468, 0
        %v1516 = vsel %vm321, %v1469, 0
        %v1519 = vsel %vm321, %v1470, 0
        %v1522 = vsel %vm321, %v1471, 0
        %v1525 = vsel %vm321, %v1472, 0
        %v1528 = vsel %vm321, %v1473, 0
        %v1531 = vsel %vm321, %v1474, 0
        %v1534 = vsel %vm321, %v1475, 0
        %v1537 = vsel %vm321, %v1476, 0
        %v1540 = vsel %vm321, %v1477, 0
        %v1543 = vsel %vm321, %v1478, 0
        %v1546 = vsel %vm321, %v1479, 0
        %v1549 = vsel %vm321, %v1480, 0
        %v1552 = vsel %vm321, %v1481, 0
        %v1555 = vsel %vm321, %v1482, 0
        %v1558 = vsel %vm321, %v1483, 0
        %v1561 = vsel %vm321, %v1484, 0
        %v1564 = vsel %vm321, %v1485, 0
        %v1567 = vsel %vm321, %v1486, 0
        %v1570 = vsel %vm321, %v1487, 0
        %v1573 = vsel %vm321, %v1488, 0
        %v1576 = vsel %vm321, %v1489, 0
        %v1579 = vsel %vm321, %v1490, 0
        %v1582 = vsel %vm321, %v1491, 0
        %v1585 = vsel %vm321, %v1492, 0
        %v1588 = vsel %vm321, %v1493, 0
        %v1591 = vsel %vm321, %v1494, 0
        %v1594 = vsel %vm321, %v1495, 0
        %v1597 = vsel %vm321, %v1496, 0
        %v1600 = vsel %vm321, %v1497, 0
        %v1603 = vsel %vm321, %v1498, 0
        %v1606 = vsel %vm321, %v1499, 0
        %v1609 = vsel %vm321, %v1500, 0
        %v1612 = vsel %vm430, %v1502, 0
        %1614 = vmatprep.subr.mxu0 0.0
        %1615 = vmatpush1.msra.mxu0 %v1612
        %1616 = vmatprep.subr.mxu0 0.0
        %1617 = vmatpush1.msra.mxu0 0.0
        %1618 = vmatprep.subr.mxu0 0.0
        %1619 = vmatpush1.msra.mxu0 0.0
        %1620 = vmatprep.subr.mxu0 0.0
        %1621 = vmatpush1.msra.mxu0 0.0
        %1622 = vmatprep.subr.mxu0 0.0
        %1623 = vmatpush1.msra.mxu0 0.0
        %1624 = vmatprep.subr.mxu0 0.0
        %1625 = vmatpush1.msra.mxu0 0.0
        %1626 = vmatprep.subr.mxu0 0.0
        %1627 = vmatpush1.msra.mxu0 0.0
        %1628 = vmatprep.subr.mxu0 0.0
        %1629 = vmatpush1.msra.mxu0 0.0
        %1630 = vmatprep.subr.mxu0 0.0
        %1631 = vmatpush1.msra.mxu0 0.0
        %1632 = vmatprep.subr.mxu0 0.0
        %1633 = vmatpush1.msra.mxu0 0.0
        %1634 = vmatprep.subr.mxu0 0.0
        %1635 = vmatpush1.msra.mxu0 0.0
        %1636 = vmatprep.subr.mxu0 0.0
        %1637 = vmatpush1.msra.mxu0 0.0
        %1638 = vmatprep.subr.mxu0 0.0
        %1639 = vmatpush1.msra.mxu0 0.0
        %1640 = vmatprep.subr.mxu0 0.0
        %1641 = vmatpush1.msra.mxu0 0.0
        %1642 = vmatprep.subr.mxu0 0.0
        %1643 = vmatpush1.msra.mxu0 0.0
        %1644 = vmatprep.subr.mxu0 0.0
        %1645 = vmatpush1.msra.mxu0 0.0
        %1646 = vmatprep.subr.mxu0 0.0
        %1647 = vmatpush1.msra.mxu0 0.0
        %1648 = vmatprep.subr.mxu0 0.0
        %1649 = vmatpush1.msra.mxu0 0.0
        %1650 = vmatprep.subr.mxu0 0.0
        %1651 = vmatpush1.msra.mxu0 0.0
        %1652 = vmatprep.subr.mxu0 0.0
        %1653 = vmatpush1.msra.mxu0 0.0
        %1654 = vmatprep.subr.mxu0 0.0
        %1655 = vmatpush1.msra.mxu0 0.0
        %1656 = vmatprep.subr.mxu0 0.0
        %1657 = vmatpush1.msra.mxu0 0.0
        %1658 = vmatprep.subr.mxu0 0.0
        %1659 = vmatpush1.msra.mxu0 0.0
        %1660 = vmatprep.subr.mxu0 0.0
        %1661 = vmatpush1.msra.mxu0 0.0
        %1662 = vmatprep.subr.mxu0 0.0
        %1663 = vmatpush1.msra.mxu0 0.0
        %1664 = vmatprep.subr.mxu0 0.0
        %1665 = vmatpush1.msra.mxu0 0.0
        %1666 = vmatprep.subr.mxu0 0.0
        %1667 = vmatpush1.msra.mxu0 0.0
        %1668 = vmatprep.subr.mxu0 0.0
        %1669 = vmatpush1.msra.mxu0 0.0
        %1670 = vmatprep.subr.mxu0 0.0
        %1671 = vmatpush1.msra.mxu0 0.0
        %1672 = vmatprep.subr.mxu0 0.0
        %1673 = vmatpush1.msra.mxu0 0.0
        %1674 = vmatprep.subr.mxu0 0.0
        %1675 = vmatpush1.msra.mxu0 0.0
        %1676 = vmatprep.subr.mxu0 0.0
        %1677 = vmatpush1.msra.mxu0 0.0
        %1678 = vmatprep.mubr.f32.mxu0 0.0
        %1679 = vmatmul.mubr.f32.gmra.mrb[0].mxu0 %v1504
        %v1680 = vpop.f32.mrb[0].mxu0
        %v1681 = vadd.f32 0.0, %v1680
        %v1682 = vpop.f32.mrb[0].mxu0
        %1683 = vmatprep.mubr.f32.mxu0 0.0
        %1684 = vmatmul.mubr.f32.gmra.mrb[0].mxu0 %v1507
        %v1685 = vpop.f32.mrb[0].mxu0
        %v1686 = vadd.f32 0.0, %v1685
        %v1687 = vpop.f32.mrb[0].mxu0
        %1688 = vmatprep.mubr.f32.mxu0 0.0
        %1689 = vmatmul.mubr.f32.gmra.mrb[0].mxu0 %v1510
        %v1690 = vpop.f32.mrb[0].mxu0
        %v1691 = vadd.f32 0.0, %v1690
        %v1692 = vpop.f32.mrb[0].mxu0
        %1693 = vmatprep.mubr.f32.mxu0 0.0
        %1694 = vmatmul.mubr.f32.gmra.mrb[0].mxu0 %v1513
        %v1695 = vpop.f32.mrb[0].mxu0
        %v1696 = vadd.f32 0.0, %v1695
        %v1697 = vpop.f32.mrb[0].mxu0
        %1698 = vmatprep.mubr.f32.mxu0 0.0
        %1699 = vmatmul.mubr.f32.gmra.mrb[0].mxu0 %v1516
        %v1700 = vpop.f32.mrb[0].mxu0
        %v1701 = vadd.f32 0.0, %v1700
        %v1702 = vpop.f32.mrb[0].mxu0
        %1703 = vmatprep.mubr.f32.mxu0 0.0
        %1704 = vmatmul.mubr.f32.gmra.mrb[0].mxu0 %v1519
        %v1705 = vpop.f32.mrb[0].mxu0
        %v1706 = vadd.f32 0.0, %v1705
        %v1707 = vpop.f32.mrb[0].mxu0
        %1708 = vmatprep.mubr.f32.mxu0 0.0
        %1709 = vmatmul.mubr.f32.gmra.mrb[0].mxu0 %v1522
        %v1710 = vpop.f32.mrb[0].mxu0
        %v1711 = vadd.f32 0.0, %v1710
        %v1712 = vpop.f32.mrb[0].mxu0
        %1713 = vmatprep.mubr.f32.mxu0 0.0
        %1714 = vmatmul.mubr.f32.gmra.mrb[0].mxu0 %v1525
        %v1715 = vpop.f32.mrb[0].mxu0
        %v1716 = vadd.f32 0.0, %v1715
        %v1717 = vpop.f32.mrb[0].mxu0
        %1718 = vmatprep.mubr.f32.mxu0 0.0
        %1719 = vmatmul.mubr.f32.gmra.mrb[0].mxu0 %v1528
        %v1720 = vpop.f32.mrb[0].mxu0
        %v1721 = vadd.f32 0.0, %v1720
        %v1722 = vpop.f32.mrb[0].mxu0
        %1723 = vmatprep.mubr.f32.mxu0 0.0
        %1724 = vmatmul.mubr.f32.gmra.mrb[0].mxu0 %v1531
        %v1725 = vpop.f32.mrb[0].mxu0
        %v1726 = vadd.f32 0.0, %v1725
        %v1727 = vpop.f32.mrb[0].mxu0
        %1728 = vmatprep.mubr.f32.mxu0 0.0
        %1729 = vmatmul.mubr.f32.gmra.mrb[0].mxu0 %v1534
        %v1730 = vpop.f32.mrb[0].mxu0
        %v1731 = vadd.f32 0.0, %v1730
        %v1732 = vpop.f32.mrb[0].mxu0
        %1733 = vmatprep.mubr.f32.mxu0 0.0
        %1734 = vmatmul.mubr.f32.gmra.mrb[0].mxu0 %v1537
        %v1735 = vpop.f32.mrb[0].mxu0
        %v1736 = vadd.f32 0.0, %v1735
        %v1737 = vpop.f32.mrb[0].mxu0
        %1738 = vmatprep.mubr.f32.mxu0 0.0
        %1739 = vmatmul.mubr.f32.gmra.mrb[0].mxu0 %v1540
        %v1740 = vpop.f32.mrb[0].mxu0
        %v1741 = vadd.f32 0.0, %v1740
        %v1742 = vpop.f32.mrb[0].mxu0
        %1743 = vmatprep.mubr.f32.mxu0 0.0
        %1744 = vmatmul.mubr.f32.gmra.mrb[0].mxu0 %v1543
        %v1745 = vpop.f32.mrb[0].mxu0
        %v1746 = vadd.f32 0.0, %v1745
        %v1747 = vpop.f32.mrb[0].mxu0
        %1748 = vmatprep.mubr.f32.mxu0 0.0
        %1749 = vmatmul.mubr.f32.gmra.mrb[0].mxu0 %v1546
        %v1750 = vpop.f32.mrb[0].mxu0
        %v1751 = vadd.f32 0.0, %v1750
        %v1752 = vpop.f32.mrb[0].mxu0
        %1753 = vmatprep.mubr.f32.mxu0 0.0
        %1754 = vmatmul.mubr.f32.gmra.mrb[0].mxu0 %v1549
        %v1755 = vpop.f32.mrb[0].mxu0
        %v1756 = vadd.f32 0.0, %v1755
        %v1757 = vpop.f32.mrb[0].mxu0
        %1758 = vmatprep.mubr.f32.mxu0 0.0
        %1759 = vmatmul.mubr.f32.gmra.mrb[0].mxu0 %v1552
        %v1760 = vpop.f32.mrb[0].mxu0
        %v1761 = vadd.f32 0.0, %v1760
        %v1762 = vpop.f32.mrb[0].mxu0
        %1763 = vmatprep.mubr.f32.mxu0 0.0
        %1764 = vmatmul.mubr.f32.gmra.mrb[0].mxu0 %v1555
        %v1765 = vpop.f32.mrb[0].mxu0
        %v1766 = vadd.f32 0.0, %v1765
        %v1767 = vpop.f32.mrb[0].mxu0
        %1768 = vmatprep.mubr.f32.mxu0 0.0
        %1769 = vmatmul.mubr.f32.gmra.mrb[0].mxu0 %v1558
        %v1770 = vpop.f32.mrb[0].mxu0
        %v1771 = vadd.f32 0.0, %v1770
        %v1772 = vpop.f32.mrb[0].mxu0
        %1773 = vmatprep.mubr.f32.mxu0 0.0
        %1774 = vmatmul.mubr.f32.gmra.mrb[0].mxu0 %v1561
        %v1775 = vpop.f32.mrb[0].mxu0
        %v1776 = vadd.f32 0.0, %v1775
        %v1777 = vpop.f32.mrb[0].mxu0
        %1778 = vmatprep.mubr.f32.mxu0 0.0
        %1779 = vmatmul.mubr.f32.gmra.mrb[0].mxu0 %v1564
        %v1780 = vpop.f32.mrb[0].mxu0
        %v1781 = vadd.f32 0.0, %v1780
        %v1782 = vpop.f32.mrb[0].mxu0
        %1783 = vmatprep.mubr.f32.mxu0 0.0
        %1784 = vmatmul.mubr.f32.gmra.mrb[0].mxu0 %v1567
        %v1785 = vpop.f32.mrb[0].mxu0
        %v1786 = vadd.f32 0.0, %v1785
        %v1787 = vpop.f32.mrb[0].mxu0
        %1788 = vmatprep.mubr.f32.mxu0 0.0
        %1789 = vmatmul.mubr.f32.gmra.mrb[0].mxu0 %v1570
        %v1790 = vpop.f32.mrb[0].mxu0
        %v1791 = vadd.f32 0.0, %v1790
        %v1792 = vpop.f32.mrb[0].mxu0
        %1793 = vmatprep.mubr.f32.mxu0 0.0
        %1794 = vmatmul.mubr.f32.gmra.mrb[0].mxu0 %v1573
        %v1795 = vpop.f32.mrb[0].mxu0
        %v1796 = vadd.f32 0.0, %v1795
        %v1797 = vpop.f32.mrb[0].mxu0
        %1798 = vmatprep.mubr.f32.mxu0 0.0
        %1799 = vmatmul.mubr.f32.gmra.mrb[0].mxu0 %v1576
        %v1800 = vpop.f32.mrb[0].mxu0
        %v1801 = vadd.f32 0.0, %v1800
        %v1802 = vpop.f32.mrb[0].mxu0
        %1803 = vmatprep.mubr.f32.mxu0 0.0
        %1804 = vmatmul.mubr.f32.gmra.mrb[0].mxu0 %v1579
        %v1805 = vpop.f32.mrb[0].mxu0
        %v1806 = vadd.f32 0.0, %v1805
        %v1807 = vpop.f32.mrb[0].mxu0
        %1808 = vmatprep.mubr.f32.mxu0 0.0
        %1809 = vmatmul.mubr.f32.gmra.mrb[0].mxu0 %v1582
        %v1810 = vpop.f32.mrb[0].mxu0
        %v1811 = vadd.f32 0.0, %v1810
        %v1812 = vpop.f32.mrb[0].mxu0
        %1813 = vmatprep.mubr.f32.mxu0 0.0
        %1814 = vmatmul.mubr.f32.gmra.mrb[0].mxu0 %v1585
        %v1815 = vpop.f32.mrb[0].mxu0
        %v1816 = vadd.f32 0.0, %v1815
        %v1817 = vpop.f32.mrb[0].mxu0
        %1818 = vmatprep.mubr.f32.mxu0 0.0
        %1819 = vmatmul.mubr.f32.gmra.mrb[0].mxu0 %v1588
        %v1820 = vpop.f32.mrb[0].mxu0
        %v1821 = vadd.f32 0.0, %v1820
        %v1822 = vpop.f32.mrb[0].mxu0
        %1823 = vmatprep.mubr.f32.mxu0 0.0
        %1824 = vmatmul.mubr.f32.gmra.mrb[0].mxu0 %v1591
        %v1825 = vpop.f32.mrb[0].mxu0
        %v1826 = vadd.f32 0.0, %v1825
        %v1827 = vpop.f32.mrb[0].mxu0
        %1828 = vmatprep.mubr.f32.mxu0 0.0
        %1829 = vmatmul.mubr.f32.gmra.mrb[0].mxu0 %v1594
        %v1830 = vpop.f32.mrb[0].mxu0
        %v1831 = vadd.f32 0.0, %v1830
        %v1832 = vpop.f32.mrb[0].mxu0
        %1833 = vmatprep.mubr.f32.mxu0 0.0
        %1834 = vmatmul.mubr.f32.gmra.mrb[0].mxu0 %v1597
        %v1835 = vpop.f32.mrb[0].mxu0
        %v1836 = vadd.f32 0.0, %v1835
        %v1837 = vpop.f32.mrb[0].mxu0
        %1838 = vmatprep.mubr.f32.mxu0 0.0
        %1839 = vmatmul.mubr.f32.gmra.mrb[0].mxu0 %v1600
        %v1840 = vpop.f32.mrb[0].mxu0
        %v1841 = vadd.f32 0.0, %v1840
        %v1842 = vpop.f32.mrb[0].mxu0
        %1843 = vmatprep.mubr.f32.mxu0 0.0
        %1844 = vmatmul.mubr.f32.gmra.mrb[0].mxu0 %v1603
        %v1845 = vpop.f32.mrb[0].mxu0
        %v1846 = vadd.f32 0.0, %v1845
        %v1847 = vpop.f32.mrb[0].mxu0
        %1848 = vmatprep.mubr.f32.mxu0 0.0
        %1849 = vmatmul.mubr.f32.gmra.mrb[0].mxu0 %v1606
        %v1850 = vpop.f32.mrb[0].mxu0
        %v1851 = vadd.f32 0.0, %v1850
        %v1852 = vpop.f32.mrb[0].mxu0
        %1853 = vmatprep.mubr.f32.mxu0 0.0
        %1854 = vmatmul.mubr.f32.gmra.mrb[0].mxu0 %v1609
        %v1855 = vpop.f32.mrb[0].mxu0
        %v1856 = vadd.f32 0.0, %v1855
        %v1857 = vpop.f32.mrb[0].mxu0
        %1858 = vdwg.mxu0
        %v1859 = vadd.f32 %v1429, %v1681
        %v1860 = vadd.f32 %v1430, %v1686
        %v1861 = vadd.f32 %v1431, %v1691
        %v1862 = vadd.f32 %v1432, %v1696
        %v1863 = vadd.f32 %v1433, %v1701
        %v1864 = vadd.f32 %v1434, %v1706
        %v1865 = vadd.f32 %v1435, %v1711
        %v1866 = vadd.f32 %v1436, %v1716
        %v1867 = vadd.f32 %v1437, %v1721
        %v1868 = vadd.f32 %v1438, %v1726
        %v1869 = vadd.f32 %v1439, %v1731
        %v1870 = vadd.f32 %v1440, %v1736
        %v1871 = vadd.f32 %v1441, %v1741
        %v1872 = vadd.f32 %v1442, %v1746
        %v1873 = vadd.f32 %v1443, %v1751
        %v1874 = vadd.f32 %v1444, %v1756
        %v1875 = vadd.f32 %v1445, %v1761
        %v1876 = vadd.f32 %v1446, %v1766
        %v1877 = vadd.f32 %v1447, %v1771
        %v1878 = vadd.f32 %v1448, %v1776
        %v1879 = vadd.f32 %v1449, %v1781
        %v1880 = vadd.f32 %v1450, %v1786
        %v1881 = vadd.f32 %v1451, %v1791
        %v1882 = vadd.f32 %v1452, %v1796
        %v1883 = vadd.f32 %v1453, %v1801
        %v1884 = vadd.f32 %v1454, %v1806
        %v1885 = vadd.f32 %v1455, %v1811
        %v1886 = vadd.f32 %v1456, %v1816
        %v1887 = vadd.f32 %v1457, %v1821
        %v1888 = vadd.f32 %v1458, %v1826
        %v1889 = vadd.f32 %v1459, %v1831
        %v1890 = vadd.f32 %v1460, %v1836
        %v1891 = vadd.f32 %v1461, %v1841
        %v1892 = vadd.f32 %v1462, %v1846
        %v1893 = vadd.f32 %v1463, %v1851
        %v1894 = vadd.f32 %v1464, %v1856
        %v1895 = vld [vmem:[%s228 + $0x13] sm:$0xff]
        %v1896 = vld [vmem:[%s228 + $0x1b] sm:$0xff]
        %v1897 = vld [vmem:[%s228 + $0x23] sm:$0xff]
        %v1898 = vld [vmem:[%s228 + $0x2b] sm:$0xff]
        %v1899 = vld [vmem:[%s228 + $0x33] sm:$0xff]
        %v1900 = vld [vmem:[%s228 + $0x3b] sm:$0xff]
        %v1901 = vld [vmem:[%s228 + $0x43] sm:$0xff]
        %v1902 = vld [vmem:[%s228 + $0x4b] sm:$0xff]
        %v1903 = vld [vmem:[%s228 + $0x53] sm:$0xff]
        %v1904 = vld [vmem:[%s228 + $0x5b] sm:$0xff]
        %v1905 = vld [vmem:[%s228 + $0x63] sm:$0xff]
        %v1906 = vld [vmem:[%s228 + $0x6b] sm:$0xff]
        %v1907 = vld [vmem:[%s228 + $0x73] sm:$0xff]
        %v1908 = vld [vmem:[%s228 + $0x7b] sm:$0xff]
        %v1909 = vld [vmem:[%s228 + $0x83] sm:$0xff]
        %v1910 = vld [vmem:[%s228 + $0x8b] sm:$0xff]
        %v1911 = vld [vmem:[%s228 + $0x93] sm:$0xff]
        %v1912 = vld [vmem:[%s228 + $0x9b] sm:$0xff]
        %v1913 = vld [vmem:[%s228 + $0xa3] sm:$0xff]
        %v1914 = vld [vmem:[%s228 + $0xab] sm:$0xff]
        %v1915 = vld [vmem:[%s228 + $0xb3] sm:$0xff]
        %v1916 = vld [vmem:[%s228 + $0xbb] sm:$0xff]
        %v1917 = vld [vmem:[%s228 + $0xc3] sm:$0xff]
        %v1918 = vld [vmem:[%s228 + $0xcb] sm:$0xff]
        %v1919 = vld [vmem:[%s228 + $0xd3] sm:$0xff]
        %v1920 = vld [vmem:[%s228 + $0xdb] sm:$0xff]
        %v1921 = vld [vmem:[%s228 + $0xe3] sm:$0xff]
        %v1922 = vld [vmem:[%s228 + $0xeb] sm:$0xff]
        %v1923 = vld [vmem:[%s228 + $0xf3] sm:$0xff]
        %v1924 = vld [vmem:[%s228 + $0xfb] sm:$0xff]
        %v1925 = vld [vmem:[%s228 + $0x103] sm:$0xff]
        %v1926 = vld [vmem:[%s228 + $0x10b] sm:$0xff]
        %v1927 = vld [vmem:[%s228 + $0x113] sm:$0xff]
        %v1928 = vld [vmem:[%s228 + $0x11b] sm:$0xff]
        %v1929 = vld [vmem:[%s228 + $0x123] sm:$0xff]
        %v1930 = vld [vmem:[%s228 + $0x12b] sm:$0xff]
        %s1931 = scalar_lea.vmem %s232, 16
        %v1932 = vld [vmem:[%s1931] sm:$0xf]
        %v1934 = vsel %vm321, %v1895, 0
        %v1937 = vsel %vm321, %v1896, 0
        %v1940 = vsel %vm321, %v1897, 0
        %v1943 = vsel %vm321, %v1898, 0
        %v1946 = vsel %vm321, %v1899, 0
        %v1949 = vsel %vm321, %v1900, 0
        %v1952 = vsel %vm321, %v1901, 0
        %v1955 = vsel %vm321, %v1902, 0
        %v1958 = vsel %vm321, %v1903, 0
        %v1961 = vsel %vm321, %v1904, 0
        %v1964 = vsel %vm321, %v1905, 0
        %v1967 = vsel %vm321, %v1906, 0
        %v1970 = vsel %vm321, %v1907, 0
        %v1973 = vsel %vm321, %v1908, 0
        %v1976 = vsel %vm321, %v1909, 0
        %v1979 = vsel %vm321, %v1910, 0
        %v1982 = vsel %vm321, %v1911, 0
        %v1985 = vsel %vm321, %v1912, 0
        %v1988 = vsel %vm321, %v1913, 0
        %v1991 = vsel %vm321, %v1914, 0
        %v1994 = vsel %vm321, %v1915, 0
        %v1997 = vsel %vm321, %v1916, 0
        %v2000 = vsel %vm321, %v1917, 0
        %v2003 = vsel %vm321, %v1918, 0
        %v2006 = vsel %vm321, %v1919, 0
        %v2009 = vsel %vm321, %v1920, 0
        %v2012 = vsel %vm321, %v1921, 0
        %v2015 = vsel %vm321, %v1922, 0
        %v2018 = vsel %vm321, %v1923, 0
        %v2021 = vsel %vm321, %v1924, 0
        %v2024 = vsel %vm321, %v1925, 0
        %v2027 = vsel %vm321, %v1926, 0
        %v2030 = vsel %vm321, %v1927, 0
        %v2033 = vsel %vm321, %v1928, 0
        %v2036 = vsel %vm321, %v1929, 0
        %v2039 = vsel %vm321, %v1930, 0
        %v2042 = vsel %vm430, %v1932, 0
        %2044 = vmatprep.subr.mxu0 0.0
        %2045 = vmatpush1.msra.mxu0 %v2042
        %2046 = vmatprep.subr.mxu0 0.0
        %2047 = vmatpush1.msra.mxu0 0.0
        %2048 = vmatprep.subr.mxu0 0.0
        %2049 = vmatpush1.msra.mxu0 0.0
        %2050 = vmatprep.subr.mxu0 0.0
        %2051 = vmatpush1.msra.mxu0 0.0
        %2052 = vmatprep.subr.mxu0 0.0
        %2053 = vmatpush1.msra.mxu0 0.0
        %2054 = vmatprep.subr.mxu0 0.0
        %2055 = vmatpush1.msra.mxu0 0.0
        %2056 = vmatprep.subr.mxu0 0.0
        %2057 = vmatpush1.msra.mxu0 0.0
        %2058 = vmatprep.subr.mxu0 0.0
        %2059 = vmatpush1.msra.mxu0 0.0
        %2060 = vmatprep.subr.mxu0 0.0
        %2061 = vmatpush1.msra.mxu0 0.0
        %2062 = vmatprep.subr.mxu0 0.0
        %2063 = vmatpush1.msra.mxu0 0.0
        %2064 = vmatprep.subr.mxu0 0.0
        %2065 = vmatpush1.msra.mxu0 0.0
        %2066 = vmatprep.subr.mxu0 0.0
        %2067 = vmatpush1.msra.mxu0 0.0
        %2068 = vmatprep.subr.mxu0 0.0
        %2069 = vmatpush1.msra.mxu0 0.0
        %2070 = vmatprep.subr.mxu0 0.0
        %2071 = vmatpush1.msra.mxu0 0.0
        %2072 = vmatprep.subr.mxu0 0.0
        %2073 = vmatpush1.msra.mxu0 0.0
        %2074 = vmatprep.subr.mxu0 0.0
        %2075 = vmatpush1.msra.mxu0 0.0
        %2076 = vmatprep.subr.mxu0 0.0
        %2077 = vmatpush1.msra.mxu0 0.0
        %2078 = vmatprep.subr.mxu0 0.0
        %2079 = vmatpush1.msra.mxu0 0.0
        %2080 = vmatprep.subr.mxu0 0.0
        %2081 = vmatpush1.msra.mxu0 0.0
        %2082 = vmatprep.subr.mxu0 0.0
        %2083 = vmatpush1.msra.mxu0 0.0
        %2084 = vmatprep.subr.mxu0 0.0
        %2085 = vmatpush1.msra.mxu0 0.0
        %2086 = vmatprep.subr.mxu0 0.0
        %2087 = vmatpush1.msra.mxu0 0.0
        %2088 = vmatprep.subr.mxu0 0.0
        %2089 = vmatpush1.msra.mxu0 0.0
        %2090 = vmatprep.subr.mxu0 0.0
        %2091 = vmatpush1.msra.mxu0 0.0
        %2092 = vmatprep.subr.mxu0 0.0
        %2093 = vmatpush1.msra.mxu0 0.0
        %2094 = vmatprep.subr.mxu0 0.0
        %2095 = vmatpush1.msra.mxu0 0.0
        %2096 = vmatprep.subr.mxu0 0.0
        %2097 = vmatpush1.msra.mxu0 0.0
        %2098 = vmatprep.subr.mxu0 0.0
        %2099 = vmatpush1.msra.mxu0 0.0
        %2100 = vmatprep.subr.mxu0 0.0
        %2101 = vmatpush1.msra.mxu0 0.0
        %2102 = vmatprep.subr.mxu0 0.0
        %2103 = vmatpush1.msra.mxu0 0.0
        %2104 = vmatprep.subr.mxu0 0.0
        %2105 = vmatpush1.msra.mxu0 0.0
        %2106 = vmatprep.subr.mxu0 0.0
        %2107 = vmatpush1.msra.mxu0 0.0
        %2108 = vmatprep.mubr.f32.mxu0 0.0
        %2109 = vmatmul.mubr.f32.gmra.mrb[0].mxu0 %v1934
        %v2110 = vpop.f32.mrb[0].mxu0
        %v2111 = vadd.f32 0.0, %v2110
        %v2112 = vpop.f32.mrb[0].mxu0
        %2113 = vmatprep.mubr.f32.mxu0 0.0
        %2114 = vmatmul.mubr.f32.gmra.mrb[0].mxu0 %v1937
        %v2115 = vpop.f32.mrb[0].mxu0
        %v2116 = vadd.f32 0.0, %v2115
        %v2117 = vpop.f32.mrb[0].mxu0
        %2118 = vmatprep.mubr.f32.mxu0 0.0
        %2119 = vmatmul.mubr.f32.gmra.mrb[0].mxu0 %v1940
        %v2120 = vpop.f32.mrb[0].mxu0
        %v2121 = vadd.f32 0.0, %v2120
        %v2122 = vpop.f32.mrb[0].mxu0
        %2123 = vmatprep.mubr.f32.mxu0 0.0
        %2124 = vmatmul.mubr.f32.gmra.mrb[0].mxu0 %v1943
        %v2125 = vpop.f32.mrb[0].mxu0
        %v2126 = vadd.f32 0.0, %v2125
        %v2127 = vpop.f32.mrb[0].mxu0
        %2128 = vmatprep.mubr.f32.mxu0 0.0
        %2129 = vmatmul.mubr.f32.gmra.mrb[0].mxu0 %v1946
        %v2130 = vpop.f32.mrb[0].mxu0
        %v2131 = vadd.f32 0.0, %v2130
        %v2132 = vpop.f32.mrb[0].mxu0
        %2133 = vmatprep.mubr.f32.mxu0 0.0
        %2134 = vmatmul.mubr.f32.gmra.mrb[0].mxu0 %v1949
        %v2135 = vpop.f32.mrb[0].mxu0
        %v2136 = vadd.f32 0.0, %v2135
        %v2137 = vpop.f32.mrb[0].mxu0
        %2138 = vmatprep.mubr.f32.mxu0 0.0
        %2139 = vmatmul.mubr.f32.gmra.mrb[0].mxu0 %v1952
        %v2140 = vpop.f32.mrb[0].mxu0
        %v2141 = vadd.f32 0.0, %v2140
        %v2142 = vpop.f32.mrb[0].mxu0
        %2143 = vmatprep.mubr.f32.mxu0 0.0
        %2144 = vmatmul.mubr.f32.gmra.mrb[0].mxu0 %v1955
        %v2145 = vpop.f32.mrb[0].mxu0
        %v2146 = vadd.f32 0.0, %v2145
        %v2147 = vpop.f32.mrb[0].mxu0
        %2148 = vmatprep.mubr.f32.mxu0 0.0
        %2149 = vmatmul.mubr.f32.gmra.mrb[0].mxu0 %v1958
        %v2150 = vpop.f32.mrb[0].mxu0
        %v2151 = vadd.f32 0.0, %v2150
        %v2152 = vpop.f32.mrb[0].mxu0
        %2153 = vmatprep.mubr.f32.mxu0 0.0
        %2154 = vmatmul.mubr.f32.gmra.mrb[0].mxu0 %v1961
        %v2155 = vpop.f32.mrb[0].mxu0
        %v2156 = vadd.f32 0.0, %v2155
        %v2157 = vpop.f32.mrb[0].mxu0
        %2158 = vmatprep.mubr.f32.mxu0 0.0
        %2159 = vmatmul.mubr.f32.gmra.mrb[0].mxu0 %v1964
        %v2160 = vpop.f32.mrb[0].mxu0
        %v2161 = vadd.f32 0.0, %v2160
        %v2162 = vpop.f32.mrb[0].mxu0
        %2163 = vmatprep.mubr.f32.mxu0 0.0
        %2164 = vmatmul.mubr.f32.gmra.mrb[0].mxu0 %v1967
        %v2165 = vpop.f32.mrb[0].mxu0
        %v2166 = vadd.f32 0.0, %v2165
        %v2167 = vpop.f32.mrb[0].mxu0
        %2168 = vmatprep.mubr.f32.mxu0 0.0
        %2169 = vmatmul.mubr.f32.gmra.mrb[0].mxu0 %v1970
        %v2170 = vpop.f32.mrb[0].mxu0
        %v2171 = vadd.f32 0.0, %v2170
        %v2172 = vpop.f32.mrb[0].mxu0
        %2173 = vmatprep.mubr.f32.mxu0 0.0
        %2174 = vmatmul.mubr.f32.gmra.mrb[0].mxu0 %v1973
        %v2175 = vpop.f32.mrb[0].mxu0
        %v2176 = vadd.f32 0.0, %v2175
        %v2177 = vpop.f32.mrb[0].mxu0
        %2178 = vmatprep.mubr.f32.mxu0 0.0
        %2179 = vmatmul.mubr.f32.gmra.mrb[0].mxu0 %v1976
        %v2180 = vpop.f32.mrb[0].mxu0
        %v2181 = vadd.f32 0.0, %v2180
        %v2182 = vpop.f32.mrb[0].mxu0
        %2183 = vmatprep.mubr.f32.mxu0 0.0
        %2184 = vmatmul.mubr.f32.gmra.mrb[0].mxu0 %v1979
        %v2185 = vpop.f32.mrb[0].mxu0
        %v2186 = vadd.f32 0.0, %v2185
        %v2187 = vpop.f32.mrb[0].mxu0
        %2188 = vmatprep.mubr.f32.mxu0 0.0
        %2189 = vmatmul.mubr.f32.gmra.mrb[0].mxu0 %v1982
        %v2190 = vpop.f32.mrb[0].mxu0
        %v2191 = vadd.f32 0.0, %v2190
        %v2192 = vpop.f32.mrb[0].mxu0
        %2193 = vmatprep.mubr.f32.mxu0 0.0
        %2194 = vmatmul.mubr.f32.gmra.mrb[0].mxu0 %v1985
        %v2195 = vpop.f32.mrb[0].mxu0
        %v2196 = vadd.f32 0.0, %v2195
        %v2197 = vpop.f32.mrb[0].mxu0
        %2198 = vmatprep.mubr.f32.mxu0 0.0
        %2199 = vmatmul.mubr.f32.gmra.mrb[0].mxu0 %v1988
        %v2200 = vpop.f32.mrb[0].mxu0
        %v2201 = vadd.f32 0.0, %v2200
        %v2202 = vpop.f32.mrb[0].mxu0
        %2203 = vmatprep.mubr.f32.mxu0 0.0
        %2204 = vmatmul.mubr.f32.gmra.mrb[0].mxu0 %v1991
        %v2205 = vpop.f32.mrb[0].mxu0
        %v2206 = vadd.f32 0.0, %v2205
        %v2207 = vpop.f32.mrb[0].mxu0
        %2208 = vmatprep.mubr.f32.mxu0 0.0
        %2209 = vmatmul.mubr.f32.gmra.mrb[0].mxu0 %v1994
        %v2210 = vpop.f32.mrb[0].mxu0
        %v2211 = vadd.f32 0.0, %v2210
        %v2212 = vpop.f32.mrb[0].mxu0
        %2213 = vmatprep.mubr.f32.mxu0 0.0
        %2214 = vmatmul.mubr.f32.gmra.mrb[0].mxu0 %v1997
        %v2215 = vpop.f32.mrb[0].mxu0
        %v2216 = vadd.f32 0.0, %v2215
        %v2217 = vpop.f32.mrb[0].mxu0
        %2218 = vmatprep.mubr.f32.mxu0 0.0
        %2219 = vmatmul.mubr.f32.gmra.mrb[0].mxu0 %v2000
        %v2220 = vpop.f32.mrb[0].mxu0
        %v2221 = vadd.f32 0.0, %v2220
        %v2222 = vpop.f32.mrb[0].mxu0
        %2223 = vmatprep.mubr.f32.mxu0 0.0
        %2224 = vmatmul.mubr.f32.gmra.mrb[0].mxu0 %v2003
        %v2225 = vpop.f32.mrb[0].mxu0
        %v2226 = vadd.f32 0.0, %v2225
        %v2227 = vpop.f32.mrb[0].mxu0
        %2228 = vmatprep.mubr.f32.mxu0 0.0
        %2229 = vmatmul.mubr.f32.gmra.mrb[0].mxu0 %v2006
        %v2230 = vpop.f32.mrb[0].mxu0
        %v2231 = vadd.f32 0.0, %v2230
        %v2232 = vpop.f32.mrb[0].mxu0
        %2233 = vmatprep.mubr.f32.mxu0 0.0
        %2234 = vmatmul.mubr.f32.gmra.mrb[0].mxu0 %v2009
        %v2235 = vpop.f32.mrb[0].mxu0
        %v2236 = vadd.f32 0.0, %v2235
        %v2237 = vpop.f32.mrb[0].mxu0
        %2238 = vmatprep.mubr.f32.mxu0 0.0
        %2239 = vmatmul.mubr.f32.gmra.mrb[0].mxu0 %v2012
        %v2240 = vpop.f32.mrb[0].mxu0
        %v2241 = vadd.f32 0.0, %v2240
        %v2242 = vpop.f32.mrb[0].mxu0
        %2243 = vmatprep.mubr.f32.mxu0 0.0
        %2244 = vmatmul.mubr.f32.gmra.mrb[0].mxu0 %v2015
        %v2245 = vpop.f32.mrb[0].mxu0
        %v2246 = vadd.f32 0.0, %v2245
        %v2247 = vpop.f32.mrb[0].mxu0
        %2248 = vmatprep.mubr.f32.mxu0 0.0
        %2249 = vmatmul.mubr.f32.gmra.mrb[0].mxu0 %v2018
        %v2250 = vpop.f32.mrb[0].mxu0
        %v2251 = vadd.f32 0.0, %v2250
        %v2252 = vpop.f32.mrb[0].mxu0
        %2253 = vmatprep.mubr.f32.mxu0 0.0
        %2254 = vmatmul.mubr.f32.gmra.mrb[0].mxu0 %v2021
        %v2255 = vpop.f32.mrb[0].mxu0
        %v2256 = vadd.f32 0.0, %v2255
        %v2257 = vpop.f32.mrb[0].mxu0
        %2258 = vmatprep.mubr.f32.mxu0 0.0
        %2259 = vmatmul.mubr.f32.gmra.mrb[0].mxu0 %v2024
        %v2260 = vpop.f32.mrb[0].mxu0
        %v2261 = vadd.f32 0.0, %v2260
        %v2262 = vpop.f32.mrb[0].mxu0
        %2263 = vmatprep.mubr.f32.mxu0 0.0
        %2264 = vmatmul.mubr.f32.gmra.mrb[0].mxu0 %v2027
        %v2265 = vpop.f32.mrb[0].mxu0
        %v2266 = vadd.f32 0.0, %v2265
        %v2267 = vpop.f32.mrb[0].mxu0
        %2268 = vmatprep.mubr.f32.mxu0 0.0
        %2269 = vmatmul.mubr.f32.gmra.mrb[0].mxu0 %v2030
        %v2270 = vpop.f32.mrb[0].mxu0
        %v2271 = vadd.f32 0.0, %v2270
        %v2272 = vpop.f32.mrb[0].mxu0
        %2273 = vmatprep.mubr.f32.mxu0 0.0
        %2274 = vmatmul.mubr.f32.gmra.mrb[0].mxu0 %v2033
        %v2275 = vpop.f32.mrb[0].mxu0
        %v2276 = vadd.f32 0.0, %v2275
        %v2277 = vpop.f32.mrb[0].mxu0
        %2278 = vmatprep.mubr.f32.mxu0 0.0
        %2279 = vmatmul.mubr.f32.gmra.mrb[0].mxu0 %v2036
        %v2280 = vpop.f32.mrb[0].mxu0
        %v2281 = vadd.f32 0.0, %v2280
        %v2282 = vpop.f32.mrb[0].mxu0
        %2283 = vmatprep.mubr.f32.mxu0 0.0
        %2284 = vmatmul.mubr.f32.gmra.mrb[0].mxu0 %v2039
        %v2285 = vpop.f32.mrb[0].mxu0
        %v2286 = vadd.f32 0.0, %v2285
        %v2287 = vpop.f32.mrb[0].mxu0
        %2288 = vdwg.mxu0
        %v2289 = vadd.f32 %v1859, %v2111
        %v2290 = vadd.f32 %v1860, %v2116
        %v2291 = vadd.f32 %v1861, %v2121
        %v2292 = vadd.f32 %v1862, %v2126
        %v2293 = vadd.f32 %v1863, %v2131
        %v2294 = vadd.f32 %v1864, %v2136
        %v2295 = vadd.f32 %v1865, %v2141
        %v2296 = vadd.f32 %v1866, %v2146
        %v2297 = vadd.f32 %v1867, %v2151
        %v2298 = vadd.f32 %v1868, %v2156
        %v2299 = vadd.f32 %v1869, %v2161
        %v2300 = vadd.f32 %v1870, %v2166
        %v2301 = vadd.f32 %v1871, %v2171
        %v2302 = vadd.f32 %v1872, %v2176
        %v2303 = vadd.f32 %v1873, %v2181
        %v2304 = vadd.f32 %v1874, %v2186
        %v2305 = vadd.f32 %v1875, %v2191
        %v2306 = vadd.f32 %v1876, %v2196
        %v2307 = vadd.f32 %v1877, %v2201
        %v2308 = vadd.f32 %v1878, %v2206
        %v2309 = vadd.f32 %v1879, %v2211
        %v2310 = vadd.f32 %v1880, %v2216
        %v2311 = vadd.f32 %v1881, %v2221
        %v2312 = vadd.f32 %v1882, %v2226
        %v2313 = vadd.f32 %v1883, %v2231
        %v2314 = vadd.f32 %v1884, %v2236
        %v2315 = vadd.f32 %v1885, %v2241
        %v2316 = vadd.f32 %v1886, %v2246
        %v2317 = vadd.f32 %v1887, %v2251
        %v2318 = vadd.f32 %v1888, %v2256
        %v2319 = vadd.f32 %v1889, %v2261
        %v2320 = vadd.f32 %v1890, %v2266
        %v2321 = vadd.f32 %v1891, %v2271
        %v2322 = vadd.f32 %v1892, %v2276
        %v2323 = vadd.f32 %v1893, %v2281
        %v2324 = vadd.f32 %v1894, %v2286
        %v2325 = vld [vmem:[%s228 + $0x14] sm:$0xff]
        %v2326 = vld [vmem:[%s228 + $0x1c] sm:$0xff]
        %v2327 = vld [vmem:[%s228 + $0x24] sm:$0xff]
        %v2328 = vld [vmem:[%s228 + $0x2c] sm:$0xff]
        %v2329 = vld [vmem:[%s228 + $0x34] sm:$0xff]
        %v2330 = vld [vmem:[%s228 + $0x3c] sm:$0xff]
        %v2331 = vld [vmem:[%s228 + $0x44] sm:$0xff]
        %v2332 = vld [vmem:[%s228 + $0x4c] sm:$0xff]
        %v2333 = vld [vmem:[%s228 + $0x54] sm:$0xff]
        %v2334 = vld [vmem:[%s228 + $0x5c] sm:$0xff]
        %v2335 = vld [vmem:[%s228 + $0x64] sm:$0xff]
        %v2336 = vld [vmem:[%s228 + $0x6c] sm:$0xff]
        %v2337 = vld [vmem:[%s228 + $0x74] sm:$0xff]
        %v2338 = vld [vmem:[%s228 + $0x7c] sm:$0xff]
        %v2339 = vld [vmem:[%s228 + $0x84] sm:$0xff]
        %v2340 = vld [vmem:[%s228 + $0x8c] sm:$0xff]
        %v2341 = vld [vmem:[%s228 + $0x94] sm:$0xff]
        %v2342 = vld [vmem:[%s228 + $0x9c] sm:$0xff]
        %v2343 = vld [vmem:[%s228 + $0xa4] sm:$0xff]
        %v2344 = vld [vmem:[%s228 + $0xac] sm:$0xff]
        %v2345 = vld [vmem:[%s228 + $0xb4] sm:$0xff]
        %v2346 = vld [vmem:[%s228 + $0xbc] sm:$0xff]
        %v2347 = vld [vmem:[%s228 + $0xc4] sm:$0xff]
        %v2348 = vld [vmem:[%s228 + $0xcc] sm:$0xff]
        %v2349 = vld [vmem:[%s228 + $0xd4] sm:$0xff]
        %v2350 = vld [vmem:[%s228 + $0xdc] sm:$0xff]
        %v2351 = vld [vmem:[%s228 + $0xe4] sm:$0xff]
        %v2352 = vld [vmem:[%s228 + $0xec] sm:$0xff]
        %v2353 = vld [vmem:[%s228 + $0xf4] sm:$0xff]
        %v2354 = vld [vmem:[%s228 + $0xfc] sm:$0xff]
        %v2355 = vld [vmem:[%s228 + $0x104] sm:$0xff]
        %v2356 = vld [vmem:[%s228 + $0x10c] sm:$0xff]
        %v2357 = vld [vmem:[%s228 + $0x114] sm:$0xff]
        %v2358 = vld [vmem:[%s228 + $0x11c] sm:$0xff]
        %v2359 = vld [vmem:[%s228 + $0x124] sm:$0xff]
        %v2360 = vld [vmem:[%s228 + $0x12c] sm:$0xff]
        %s2361 = scalar_lea.vmem %s232, 20
        %v2362 = vld [vmem:[%s2361] sm:$0xf]
        %v2364 = vsel %vm321, %v2325, 0
        %v2367 = vsel %vm321, %v2326, 0
        %v2370 = vsel %vm321, %v2327, 0
        %v2373 = vsel %vm321, %v2328, 0
        %v2376 = vsel %vm321, %v2329, 0
        %v2379 = vsel %vm321, %v2330, 0
        %v2382 = vsel %vm321, %v2331, 0
        %v2385 = vsel %vm321, %v2332, 0
        %v2388 = vsel %vm321, %v2333, 0
        %v2391 = vsel %vm321, %v2334, 0
        %v2394 = vsel %vm321, %v2335, 0
        %v2397 = vsel %vm321, %v2336, 0
        %v2400 = vsel %vm321, %v2337, 0
        %v2403 = vsel %vm321, %v2338, 0
        %v2406 = vsel %vm321, %v2339, 0
        %v2409 = vsel %vm321, %v2340, 0
        %v2412 = vsel %vm321, %v2341, 0
        %v2415 = vsel %vm321, %v2342, 0
        %v2418 = vsel %vm321, %v2343, 0
        %v2421 = vsel %vm321, %v2344, 0
        %v2424 = vsel %vm321, %v2345, 0
        %v2427 = vsel %vm321, %v2346, 0
        %v2430 = vsel %vm321, %v2347, 0
        %v2433 = vsel %vm321, %v2348, 0
        %v2436 = vsel %vm321, %v2349, 0
        %v2439 = vsel %vm321, %v2350, 0
        %v2442 = vsel %vm321, %v2351, 0
        %v2445 = vsel %vm321, %v2352, 0
        %v2448 = vsel %vm321, %v2353, 0
        %v2451 = vsel %vm321, %v2354, 0
        %v2454 = vsel %vm321, %v2355, 0
        %v2457 = vsel %vm321, %v2356, 0
        %v2460 = vsel %vm321, %v2357, 0
        %v2463 = vsel %vm321, %v2358, 0
        %v2466 = vsel %vm321, %v2359, 0
        %v2469 = vsel %vm321, %v2360, 0
        %v2472 = vsel %vm430, %v2362, 0
        %2474 = vmatprep.subr.mxu0 0.0
        %2475 = vmatpush1.msra.mxu0 %v2472
        %2476 = vmatprep.subr.mxu0 0.0
        %2477 = vmatpush1.msra.mxu0 0.0
        %2478 = vmatprep.subr.mxu0 0.0
        %2479 = vmatpush1.msra.mxu0 0.0
        %2480 = vmatprep.subr.mxu0 0.0
        %2481 = vmatpush1.msra.mxu0 0.0
        %2482 = vmatprep.subr.mxu0 0.0
        %2483 = vmatpush1.msra.mxu0 0.0
        %2484 = vmatprep.subr.mxu0 0.0
        %2485 = vmatpush1.msra.mxu0 0.0
        %2486 = vmatprep.subr.mxu0 0.0
        %2487 = vmatpush1.msra.mxu0 0.0
        %2488 = vmatprep.subr.mxu0 0.0
        %2489 = vmatpush1.msra.mxu0 0.0
        %2490 = vmatprep.subr.mxu0 0.0
        %2491 = vmatpush1.msra.mxu0 0.0
        %2492 = vmatprep.subr.mxu0 0.0
        %2493 = vmatpush1.msra.mxu0 0.0
        %2494 = vmatprep.subr.mxu0 0.0
        %2495 = vmatpush1.msra.mxu0 0.0
        %2496 = vmatprep.subr.mxu0 0.0
        %2497 = vmatpush1.msra.mxu0 0.0
        %2498 = vmatprep.subr.mxu0 0.0
        %2499 = vmatpush1.msra.mxu0 0.0
        %2500 = vmatprep.subr.mxu0 0.0
        %2501 = vmatpush1.msra.mxu0 0.0
        %2502 = vmatprep.subr.mxu0 0.0
        %2503 = vmatpush1.msra.mxu0 0.0
        %2504 = vmatprep.subr.mxu0 0.0
        %2505 = vmatpush1.msra.mxu0 0.0
        %2506 = vmatprep.subr.mxu0 0.0
        %2507 = vmatpush1.msra.mxu0 0.0
        %2508 = vmatprep.subr.mxu0 0.0
        %2509 = vmatpush1.msra.mxu0 0.0
        %2510 = vmatprep.subr.mxu0 0.0
        %2511 = vmatpush1.msra.mxu0 0.0
        %2512 = vmatprep.subr.mxu0 0.0
        %2513 = vmatpush1.msra.mxu0 0.0
        %2514 = vmatprep.subr.mxu0 0.0
        %2515 = vmatpush1.msra.mxu0 0.0
        %2516 = vmatprep.subr.mxu0 0.0
        %2517 = vmatpush1.msra.mxu0 0.0
        %2518 = vmatprep.subr.mxu0 0.0
        %2519 = vmatpush1.msra.mxu0 0.0
        %2520 = vmatprep.subr.mxu0 0.0
        %2521 = vmatpush1.msra.mxu0 0.0
        %2522 = vmatprep.subr.mxu0 0.0
        %2523 = vmatpush1.msra.mxu0 0.0
        %2524 = vmatprep.subr.mxu0 0.0
        %2525 = vmatpush1.msra.mxu0 0.0
        %2526 = vmatprep.subr.mxu0 0.0
        %2527 = vmatpush1.msra.mxu0 0.0
        %2528 = vmatprep.subr.mxu0 0.0
        %2529 = vmatpush1.msra.mxu0 0.0
        %2530 = vmatprep.subr.mxu0 0.0
        %2531 = vmatpush1.msra.mxu0 0.0
        %2532 = vmatprep.subr.mxu0 0.0
        %2533 = vmatpush1.msra.mxu0 0.0
        %2534 = vmatprep.subr.mxu0 0.0
        %2535 = vmatpush1.msra.mxu0 0.0
        %2536 = vmatprep.subr.mxu0 0.0
        %2537 = vmatpush1.msra.mxu0 0.0
        %2538 = vmatprep.mubr.f32.mxu0 0.0
        %2539 = vmatmul.mubr.f32.gmra.mrb[0].mxu0 %v2364
        %v2540 = vpop.f32.mrb[0].mxu0
        %v2541 = vadd.f32 0.0, %v2540
        %v2542 = vpop.f32.mrb[0].mxu0
        %2543 = vmatprep.mubr.f32.mxu0 0.0
        %2544 = vmatmul.mubr.f32.gmra.mrb[0].mxu0 %v2367
        %v2545 = vpop.f32.mrb[0].mxu0
        %v2546 = vadd.f32 0.0, %v2545
        %v2547 = vpop.f32.mrb[0].mxu0
        %2548 = vmatprep.mubr.f32.mxu0 0.0
        %2549 = vmatmul.mubr.f32.gmra.mrb[0].mxu0 %v2370
        %v2550 = vpop.f32.mrb[0].mxu0
        %v2551 = vadd.f32 0.0, %v2550
        %v2552 = vpop.f32.mrb[0].mxu0
        %2553 = vmatprep.mubr.f32.mxu0 0.0
        %2554 = vmatmul.mubr.f32.gmra.mrb[0].mxu0 %v2373
        %v2555 = vpop.f32.mrb[0].mxu0
        %v2556 = vadd.f32 0.0, %v2555
        %v2557 = vpop.f32.mrb[0].mxu0
        %2558 = vmatprep.mubr.f32.mxu0 0.0
        %2559 = vmatmul.mubr.f32.gmra.mrb[0].mxu0 %v2376
        %v2560 = vpop.f32.mrb[0].mxu0
        %v2561 = vadd.f32 0.0, %v2560
        %v2562 = vpop.f32.mrb[0].mxu0
        %2563 = vmatprep.mubr.f32.mxu0 0.0
        %2564 = vmatmul.mubr.f32.gmra.mrb[0].mxu0 %v2379
        %v2565 = vpop.f32.mrb[0].mxu0
        %v2566 = vadd.f32 0.0, %v2565
        %v2567 = vpop.f32.mrb[0].mxu0
        %2568 = vmatprep.mubr.f32.mxu0 0.0
        %2569 = vmatmul.mubr.f32.gmra.mrb[0].mxu0 %v2382
        %v2570 = vpop.f32.mrb[0].mxu0
        %v2571 = vadd.f32 0.0, %v2570
        %v2572 = vpop.f32.mrb[0].mxu0
        %2573 = vmatprep.mubr.f32.mxu0 0.0
        %2574 = vmatmul.mubr.f32.gmra.mrb[0].mxu0 %v2385
        %v2575 = vpop.f32.mrb[0].mxu0
        %v2576 = vadd.f32 0.0, %v2575
        %v2577 = vpop.f32.mrb[0].mxu0
        %2578 = vmatprep.mubr.f32.mxu0 0.0
        %2579 = vmatmul.mubr.f32.gmra.mrb[0].mxu0 %v2388
        %v2580 = vpop.f32.mrb[0].mxu0
        %v2581 = vadd.f32 0.0, %v2580
        %v2582 = vpop.f32.mrb[0].mxu0
        %2583 = vmatprep.mubr.f32.mxu0 0.0
        %2584 = vmatmul.mubr.f32.gmra.mrb[0].mxu0 %v2391
        %v2585 = vpop.f32.mrb[0].mxu0
        %v2586 = vadd.f32 0.0, %v2585
        %v2587 = vpop.f32.mrb[0].mxu0
        %2588 = vmatprep.mubr.f32.mxu0 0.0
        %2589 = vmatmul.mubr.f32.gmra.mrb[0].mxu0 %v2394
        %v2590 = vpop.f32.mrb[0].mxu0
        %v2591 = vadd.f32 0.0, %v2590
        %v2592 = vpop.f32.mrb[0].mxu0
        %2593 = vmatprep.mubr.f32.mxu0 0.0
        %2594 = vmatmul.mubr.f32.gmra.mrb[0].mxu0 %v2397
        %v2595 = vpop.f32.mrb[0].mxu0
        %v2596 = vadd.f32 0.0, %v2595
        %v2597 = vpop.f32.mrb[0].mxu0
        %2598 = vmatprep.mubr.f32.mxu0 0.0
        %2599 = vmatmul.mubr.f32.gmra.mrb[0].mxu0 %v2400
        %v2600 = vpop.f32.mrb[0].mxu0
        %v2601 = vadd.f32 0.0, %v2600
        %v2602 = vpop.f32.mrb[0].mxu0
        %2603 = vmatprep.mubr.f32.mxu0 0.0
        %2604 = vmatmul.mubr.f32.gmra.mrb[0].mxu0 %v2403
        %v2605 = vpop.f32.mrb[0].mxu0
        %v2606 = vadd.f32 0.0, %v2605
        %v2607 = vpop.f32.mrb[0].mxu0
        %2608 = vmatprep.mubr.f32.mxu0 0.0
        %2609 = vmatmul.mubr.f32.gmra.mrb[0].mxu0 %v2406
        %v2610 = vpop.f32.mrb[0].mxu0
        %v2611 = vadd.f32 0.0, %v2610
        %v2612 = vpop.f32.mrb[0].mxu0
        %2613 = vmatprep.mubr.f32.mxu0 0.0
        %2614 = vmatmul.mubr.f32.gmra.mrb[0].mxu0 %v2409
        %v2615 = vpop.f32.mrb[0].mxu0
        %v2616 = vadd.f32 0.0, %v2615
        %v2617 = vpop.f32.mrb[0].mxu0
        %2618 = vmatprep.mubr.f32.mxu0 0.0
        %2619 = vmatmul.mubr.f32.gmra.mrb[0].mxu0 %v2412
        %v2620 = vpop.f32.mrb[0].mxu0
        %v2621 = vadd.f32 0.0, %v2620
        %v2622 = vpop.f32.mrb[0].mxu0
        %2623 = vmatprep.mubr.f32.mxu0 0.0
        %2624 = vmatmul.mubr.f32.gmra.mrb[0].mxu0 %v2415
        %v2625 = vpop.f32.mrb[0].mxu0
        %v2626 = vadd.f32 0.0, %v2625
        %v2627 = vpop.f32.mrb[0].mxu0
        %2628 = vmatprep.mubr.f32.mxu0 0.0
        %2629 = vmatmul.mubr.f32.gmra.mrb[0].mxu0 %v2418
        %v2630 = vpop.f32.mrb[0].mxu0
        %v2631 = vadd.f32 0.0, %v2630
        %v2632 = vpop.f32.mrb[0].mxu0
        %2633 = vmatprep.mubr.f32.mxu0 0.0
        %2634 = vmatmul.mubr.f32.gmra.mrb[0].mxu0 %v2421
        %v2635 = vpop.f32.mrb[0].mxu0
        %v2636 = vadd.f32 0.0, %v2635
        %v2637 = vpop.f32.mrb[0].mxu0
        %2638 = vmatprep.mubr.f32.mxu0 0.0
        %2639 = vmatmul.mubr.f32.gmra.mrb[0].mxu0 %v2424
        %v2640 = vpop.f32.mrb[0].mxu0
        %v2641 = vadd.f32 0.0, %v2640
        %v2642 = vpop.f32.mrb[0].mxu0
        %2643 = vmatprep.mubr.f32.mxu0 0.0
        %2644 = vmatmul.mubr.f32.gmra.mrb[0].mxu0 %v2427
        %v2645 = vpop.f32.mrb[0].mxu0
        %v2646 = vadd.f32 0.0, %v2645
        %v2647 = vpop.f32.mrb[0].mxu0
        %2648 = vmatprep.mubr.f32.mxu0 0.0
        %2649 = vmatmul.mubr.f32.gmra.mrb[0].mxu0 %v2430
        %v2650 = vpop.f32.mrb[0].mxu0
        %v2651 = vadd.f32 0.0, %v2650
        %v2652 = vpop.f32.mrb[0].mxu0
        %2653 = vmatprep.mubr.f32.mxu0 0.0
        %2654 = vmatmul.mubr.f32.gmra.mrb[0].mxu0 %v2433
        %v2655 = vpop.f32.mrb[0].mxu0
        %v2656 = vadd.f32 0.0, %v2655
        %v2657 = vpop.f32.mrb[0].mxu0
        %2658 = vmatprep.mubr.f32.mxu0 0.0
        %2659 = vmatmul.mubr.f32.gmra.mrb[0].mxu0 %v2436
        %v2660 = vpop.f32.mrb[0].mxu0
        %v2661 = vadd.f32 0.0, %v2660
        %v2662 = vpop.f32.mrb[0].mxu0
        %2663 = vmatprep.mubr.f32.mxu0 0.0
        %2664 = vmatmul.mubr.f32.gmra.mrb[0].mxu0 %v2439
        %v2665 = vpop.f32.mrb[0].mxu0
        %v2666 = vadd.f32 0.0, %v2665
        %v2667 = vpop.f32.mrb[0].mxu0
        %2668 = vmatprep.mubr.f32.mxu0 0.0
        %2669 = vmatmul.mubr.f32.gmra.mrb[0].mxu0 %v2442
        %v2670 = vpop.f32.mrb[0].mxu0
        %v2671 = vadd.f32 0.0, %v2670
        %v2672 = vpop.f32.mrb[0].mxu0
        %2673 = vmatprep.mubr.f32.mxu0 0.0
        %2674 = vmatmul.mubr.f32.gmra.mrb[0].mxu0 %v2445
        %v2675 = vpop.f32.mrb[0].mxu0
        %v2676 = vadd.f32 0.0, %v2675
        %v2677 = vpop.f32.mrb[0].mxu0
        %2678 = vmatprep.mubr.f32.mxu0 0.0
        %2679 = vmatmul.mubr.f32.gmra.mrb[0].mxu0 %v2448
        %v2680 = vpop.f32.mrb[0].mxu0
        %v2681 = vadd.f32 0.0, %v2680
        %v2682 = vpop.f32.mrb[0].mxu0
        %2683 = vmatprep.mubr.f32.mxu0 0.0
        %2684 = vmatmul.mubr.f32.gmra.mrb[0].mxu0 %v2451
        %v2685 = vpop.f32.mrb[0].mxu0
        %v2686 = vadd.f32 0.0, %v2685
        %v2687 = vpop.f32.mrb[0].mxu0
        %2688 = vmatprep.mubr.f32.mxu0 0.0
        %2689 = vmatmul.mubr.f32.gmra.mrb[0].mxu0 %v2454
        %v2690 = vpop.f32.mrb[0].mxu0
        %v2691 = vadd.f32 0.0, %v2690
        %v2692 = vpop.f32.mrb[0].mxu0
        %2693 = vmatprep.mubr.f32.mxu0 0.0
        %2694 = vmatmul.mubr.f32.gmra.mrb[0].mxu0 %v2457
        %v2695 = vpop.f32.mrb[0].mxu0
        %v2696 = vadd.f32 0.0, %v2695
        %v2697 = vpop.f32.mrb[0].mxu0
        %2698 = vmatprep.mubr.f32.mxu0 0.0
        %2699 = vmatmul.mubr.f32.gmra.mrb[0].mxu0 %v2460
        %v2700 = vpop.f32.mrb[0].mxu0
        %v2701 = vadd.f32 0.0, %v2700
        %v2702 = vpop.f32.mrb[0].mxu0
        %2703 = vmatprep.mubr.f32.mxu0 0.0
        %2704 = vmatmul.mubr.f32.gmra.mrb[0].mxu0 %v2463
        %v2705 = vpop.f32.mrb[0].mxu0
        %v2706 = vadd.f32 0.0, %v2705
        %v2707 = vpop.f32.mrb[0].mxu0
        %2708 = vmatprep.mubr.f32.mxu0 0.0
        %2709 = vmatmul.mubr.f32.gmra.mrb[0].mxu0 %v2466
        %v2710 = vpop.f32.mrb[0].mxu0
        %v2711 = vadd.f32 0.0, %v2710
        %v2712 = vpop.f32.mrb[0].mxu0
        %2713 = vmatprep.mubr.f32.mxu0 0.0
        %2714 = vmatmul.mubr.f32.gmra.mrb[0].mxu0 %v2469
        %v2715 = vpop.f32.mrb[0].mxu0
        %v2716 = vadd.f32 0.0, %v2715
        %v2717 = vpop.f32.mrb[0].mxu0
        %2718 = vdwg.mxu0
        %v2719 = vadd.f32 %v2289, %v2541
        %v2720 = vadd.f32 %v2290, %v2546
        %v2721 = vadd.f32 %v2291, %v2551
        %v2722 = vadd.f32 %v2292, %v2556
        %v2723 = vadd.f32 %v2293, %v2561
        %v2724 = vadd.f32 %v2294, %v2566
        %v2725 = vadd.f32 %v2295, %v2571
        %v2726 = vadd.f32 %v2296, %v2576
        %v2727 = vadd.f32 %v2297, %v2581
        %v2728 = vadd.f32 %v2298, %v2586
        %v2729 = vadd.f32 %v2299, %v2591
        %v2730 = vadd.f32 %v2300, %v2596
        %v2731 = vadd.f32 %v2301, %v2601
        %v2732 = vadd.f32 %v2302, %v2606
        %v2733 = vadd.f32 %v2303, %v2611
        %v2734 = vadd.f32 %v2304, %v2616
        %v2735 = vadd.f32 %v2305, %v2621
        %v2736 = vadd.f32 %v2306, %v2626
        %v2737 = vadd.f32 %v2307, %v2631
        %v2738 = vadd.f32 %v2308, %v2636
        %v2739 = vadd.f32 %v2309, %v2641
        %v2740 = vadd.f32 %v2310, %v2646
        %v2741 = vadd.f32 %v2311, %v2651
        %v2742 = vadd.f32 %v2312, %v2656
        %v2743 = vadd.f32 %v2313, %v2661
        %v2744 = vadd.f32 %v2314, %v2666
        %v2745 = vadd.f32 %v2315, %v2671
        %v2746 = vadd.f32 %v2316, %v2676
        %v2747 = vadd.f32 %v2317, %v2681
        %v2748 = vadd.f32 %v2318, %v2686
        %v2749 = vadd.f32 %v2319, %v2691
        %v2750 = vadd.f32 %v2320, %v2696
        %v2751 = vadd.f32 %v2321, %v2701
        %v2752 = vadd.f32 %v2322, %v2706
        %v2753 = vadd.f32 %v2323, %v2711
        %v2754 = vadd.f32 %v2324, %v2716
        %v2755 = vld [vmem:[%s228 + $0x24] sm:$0xff]
        %v2756 = vld [vmem:[%s228 + $0x2c] sm:$0xff]
        %v2757 = vld [vmem:[%s228 + $0x34] sm:$0xff]
        %v2758 = vld [vmem:[%s228 + $0x3c] sm:$0xff]
        %v2759 = vld [vmem:[%s228 + $0x44] sm:$0xff]
        %v2760 = vld [vmem:[%s228 + $0x4c] sm:$0xff]
        %v2761 = vld [vmem:[%s228 + $0x54] sm:$0xff]
        %v2762 = vld [vmem:[%s228 + $0x5c] sm:$0xff]
        %v2763 = vld [vmem:[%s228 + $0x64] sm:$0xff]
        %v2764 = vld [vmem:[%s228 + $0x6c] sm:$0xff]
        %v2765 = vld [vmem:[%s228 + $0x74] sm:$0xff]
        %v2766 = vld [vmem:[%s228 + $0x7c] sm:$0xff]
        %v2767 = vld [vmem:[%s228 + $0x84] sm:$0xff]
        %v2768 = vld [vmem:[%s228 + $0x8c] sm:$0xff]
        %v2769 = vld [vmem:[%s228 + $0x94] sm:$0xff]
        %v2770 = vld [vmem:[%s228 + $0x9c] sm:$0xff]
        %v2771 = vld [vmem:[%s228 + $0xa4] sm:$0xff]
        %v2772 = vld [vmem:[%s228 + $0xac] sm:$0xff]
        %v2773 = vld [vmem:[%s228 + $0xb4] sm:$0xff]
        %v2774 = vld [vmem:[%s228 + $0xbc] sm:$0xff]
        %v2775 = vld [vmem:[%s228 + $0xc4] sm:$0xff]
        %v2776 = vld [vmem:[%s228 + $0xcc] sm:$0xff]
        %v2777 = vld [vmem:[%s228 + $0xd4] sm:$0xff]
        %v2778 = vld [vmem:[%s228 + $0xdc] sm:$0xff]
        %v2779 = vld [vmem:[%s228 + $0xe4] sm:$0xff]
        %v2780 = vld [vmem:[%s228 + $0xec] sm:$0xff]
        %v2781 = vld [vmem:[%s228 + $0xf4] sm:$0xff]
        %v2782 = vld [vmem:[%s228 + $0xfc] sm:$0xff]
        %v2783 = vld [vmem:[%s228 + $0x104] sm:$0xff]
        %v2784 = vld [vmem:[%s228 + $0x10c] sm:$0xff]
        %v2785 = vld [vmem:[%s228 + $0x114] sm:$0xff]
        %v2786 = vld [vmem:[%s228 + $0x11c] sm:$0xff]
        %v2787 = vld [vmem:[%s228 + $0x124] sm:$0xff]
        %v2788 = vld [vmem:[%s228 + $0x12c] sm:$0xff]
        %v2789 = vld [vmem:[%s228 + $0x134] sm:$0xff]
        %v2790 = vld [vmem:[%s228 + $0x13c] sm:$0xff]
        %s2791 = scalar_lea.vmem %s232, 24
        %v2792 = vld [vmem:[%s2791] sm:$0xf]
        %v2794 = vsel %vm321, %v2755, 0
        %v2797 = vsel %vm321, %v2756, 0
        %v2800 = vsel %vm321, %v2757, 0
        %v2803 = vsel %vm321, %v2758, 0
        %v2806 = vsel %vm321, %v2759, 0
        %v2809 = vsel %vm321, %v2760, 0
        %v2812 = vsel %vm321, %v2761, 0
        %v2815 = vsel %vm321, %v2762, 0
        %v2818 = vsel %vm321, %v2763, 0
        %v2821 = vsel %vm321, %v2764, 0
        %v2824 = vsel %vm321, %v2765, 0
        %v2827 = vsel %vm321, %v2766, 0
        %v2830 = vsel %vm321, %v2767, 0
        %v2833 = vsel %vm321, %v2768, 0
        %v2836 = vsel %vm321, %v2769, 0
        %v2839 = vsel %vm321, %v2770, 0
        %v2842 = vsel %vm321, %v2771, 0
        %v2845 = vsel %vm321, %v2772, 0
        %v2848 = vsel %vm321, %v2773, 0
        %v2851 = vsel %vm321, %v2774, 0
        %v2854 = vsel %vm321, %v2775, 0
        %v2857 = vsel %vm321, %v2776, 0
        %v2860 = vsel %vm321, %v2777, 0
        %v2863 = vsel %vm321, %v2778, 0
        %v2866 = vsel %vm321, %v2779, 0
        %v2869 = vsel %vm321, %v2780, 0
        %v2872 = vsel %vm321, %v2781, 0
        %v2875 = vsel %vm321, %v2782, 0
        %v2878 = vsel %vm321, %v2783, 0
        %v2881 = vsel %vm321, %v2784, 0
        %v2884 = vsel %vm321, %v2785, 0
        %v2887 = vsel %vm321, %v2786, 0
        %v2890 = vsel %vm321, %v2787, 0
        %v2893 = vsel %vm321, %v2788, 0
        %v2896 = vsel %vm321, %v2789, 0
        %v2899 = vsel %vm321, %v2790, 0
        %v2902 = vsel %vm430, %v2792, 0
        %2904 = vmatprep.subr.mxu0 0.0
        %2905 = vmatpush1.msra.mxu0 %v2902
        %2906 = vmatprep.subr.mxu0 0.0
        %2907 = vmatpush1.msra.mxu0 0.0
        %2908 = vmatprep.subr.mxu0 0.0
        %2909 = vmatpush1.msra.mxu0 0.0
        %2910 = vmatprep.subr.mxu0 0.0
        %2911 = vmatpush1.msra.mxu0 0.0
        %2912 = vmatprep.subr.mxu0 0.0
        %2913 = vmatpush1.msra.mxu0 0.0
        %2914 = vmatprep.subr.mxu0 0.0
        %2915 = vmatpush1.msra.mxu0 0.0
        %2916 = vmatprep.subr.mxu0 0.0
        %2917 = vmatpush1.msra.mxu0 0.0
        %2918 = vmatprep.subr.mxu0 0.0
        %2919 = vmatpush1.msra.mxu0 0.0
        %2920 = vmatprep.subr.mxu0 0.0
        %2921 = vmatpush1.msra.mxu0 0.0
        %2922 = vmatprep.subr.mxu0 0.0
        %2923 = vmatpush1.msra.mxu0 0.0
        %2924 = vmatprep.subr.mxu0 0.0
        %2925 = vmatpush1.msra.mxu0 0.0
        %2926 = vmatprep.subr.mxu0 0.0
        %2927 = vmatpush1.msra.mxu0 0.0
        %2928 = vmatprep.subr.mxu0 0.0
        %2929 = vmatpush1.msra.mxu0 0.0
        %2930 = vmatprep.subr.mxu0 0.0
        %2931 = vmatpush1.msra.mxu0 0.0
        %2932 = vmatprep.subr.mxu0 0.0
        %2933 = vmatpush1.msra.mxu0 0.0
        %2934 = vmatprep.subr.mxu0 0.0
        %2935 = vmatpush1.msra.mxu0 0.0
        %2936 = vmatprep.subr.mxu0 0.0
        %2937 = vmatpush1.msra.mxu0 0.0
        %2938 = vmatprep.subr.mxu0 0.0
        %2939 = vmatpush1.msra.mxu0 0.0
        %2940 = vmatprep.subr.mxu0 0.0
        %2941 = vmatpush1.msra.mxu0 0.0
        %2942 = vmatprep.subr.mxu0 0.0
        %2943 = vmatpush1.msra.mxu0 0.0
        %2944 = vmatprep.subr.mxu0 0.0
        %2945 = vmatpush1.msra.mxu0 0.0
        %2946 = vmatprep.subr.mxu0 0.0
        %2947 = vmatpush1.msra.mxu0 0.0
        %2948 = vmatprep.subr.mxu0 0.0
        %2949 = vmatpush1.msra.mxu0 0.0
        %2950 = vmatprep.subr.mxu0 0.0
        %2951 = vmatpush1.msra.mxu0 0.0
        %2952 = vmatprep.subr.mxu0 0.0
        %2953 = vmatpush1.msra.mxu0 0.0
        %2954 = vmatprep.subr.mxu0 0.0
        %2955 = vmatpush1.msra.mxu0 0.0
        %2956 = vmatprep.subr.mxu0 0.0
        %2957 = vmatpush1.msra.mxu0 0.0
        %2958 = vmatprep.subr.mxu0 0.0
        %2959 = vmatpush1.msra.mxu0 0.0
        %2960 = vmatprep.subr.mxu0 0.0
        %2961 = vmatpush1.msra.mxu0 0.0
        %2962 = vmatprep.subr.mxu0 0.0
        %2963 = vmatpush1.msra.mxu0 0.0
        %2964 = vmatprep.subr.mxu0 0.0
        %2965 = vmatpush1.msra.mxu0 0.0
        %2966 = vmatprep.subr.mxu0 0.0
        %2967 = vmatpush1.msra.mxu0 0.0
        %2968 = vmatprep.mubr.f32.mxu0 0.0
        %2969 = vmatmul.mubr.f32.gmra.mrb[0].mxu0 %v2794
        %v2970 = vpop.f32.mrb[0].mxu0
        %v2971 = vadd.f32 0.0, %v2970
        %v2972 = vpop.f32.mrb[0].mxu0
        %2973 = vmatprep.mubr.f32.mxu0 0.0
        %2974 = vmatmul.mubr.f32.gmra.mrb[0].mxu0 %v2797
        %v2975 = vpop.f32.mrb[0].mxu0
        %v2976 = vadd.f32 0.0, %v2975
        %v2977 = vpop.f32.mrb[0].mxu0
        %2978 = vmatprep.mubr.f32.mxu0 0.0
        %2979 = vmatmul.mubr.f32.gmra.mrb[0].mxu0 %v2800
        %v2980 = vpop.f32.mrb[0].mxu0
        %v2981 = vadd.f32 0.0, %v2980
        %v2982 = vpop.f32.mrb[0].mxu0
        %2983 = vmatprep.mubr.f32.mxu0 0.0
        %2984 = vmatmul.mubr.f32.gmra.mrb[0].mxu0 %v2803
        %v2985 = vpop.f32.mrb[0].mxu0
        %v2986 = vadd.f32 0.0, %v2985
        %v2987 = vpop.f32.mrb[0].mxu0
        %2988 = vmatprep.mubr.f32.mxu0 0.0
        %2989 = vmatmul.mubr.f32.gmra.mrb[0].mxu0 %v2806
        %v2990 = vpop.f32.mrb[0].mxu0
        %v2991 = vadd.f32 0.0, %v2990
        %v2992 = vpop.f32.mrb[0].mxu0
        %2993 = vmatprep.mubr.f32.mxu0 0.0
        %2994 = vmatmul.mubr.f32.gmra.mrb[0].mxu0 %v2809
        %v2995 = vpop.f32.mrb[0].mxu0
        %v2996 = vadd.f32 0.0, %v2995
        %v2997 = vpop.f32.mrb[0].mxu0
        %2998 = vmatprep.mubr.f32.mxu0 0.0
        %2999 = vmatmul.mubr.f32.gmra.mrb[0].mxu0 %v2812
        %v3000 = vpop.f32.mrb[0].mxu0
        %v3001 = vadd.f32 0.0, %v3000
        %v3002 = vpop.f32.mrb[0].mxu0
        %3003 = vmatprep.mubr.f32.mxu0 0.0
        %3004 = vmatmul.mubr.f32.gmra.mrb[0].mxu0 %v2815
        %v3005 = vpop.f32.mrb[0].mxu0
        %v3006 = vadd.f32 0.0, %v3005
        %v3007 = vpop.f32.mrb[0].mxu0
        %3008 = vmatprep.mubr.f32.mxu0 0.0
        %3009 = vmatmul.mubr.f32.gmra.mrb[0].mxu0 %v2818
        %v3010 = vpop.f32.mrb[0].mxu0
        %v3011 = vadd.f32 0.0, %v3010
        %v3012 = vpop.f32.mrb[0].mxu0
        %3013 = vmatprep.mubr.f32.mxu0 0.0
        %3014 = vmatmul.mubr.f32.gmra.mrb[0].mxu0 %v2821
        %v3015 = vpop.f32.mrb[0].mxu0
        %v3016 = vadd.f32 0.0, %v3015
        %v3017 = vpop.f32.mrb[0].mxu0
        %3018 = vmatprep.mubr.f32.mxu0 0.0
        %3019 = vmatmul.mubr.f32.gmra.mrb[0].mxu0 %v2824
        %v3020 = vpop.f32.mrb[0].mxu0
        %v3021 = vadd.f32 0.0, %v3020
        %v3022 = vpop.f32.mrb[0].mxu0
        %3023 = vmatprep.mubr.f32.mxu0 0.0
        %3024 = vmatmul.mubr.f32.gmra.mrb[0].mxu0 %v2827
        %v3025 = vpop.f32.mrb[0].mxu0
        %v3026 = vadd.f32 0.0, %v3025
        %v3027 = vpop.f32.mrb[0].mxu0
        %3028 = vmatprep.mubr.f32.mxu0 0.0
        %3029 = vmatmul.mubr.f32.gmra.mrb[0].mxu0 %v2830
        %v3030 = vpop.f32.mrb[0].mxu0
        %v3031 = vadd.f32 0.0, %v3030
        %v3032 = vpop.f32.mrb[0].mxu0
        %3033 = vmatprep.mubr.f32.mxu0 0.0
        %3034 = vmatmul.mubr.f32.gmra.mrb[0].mxu0 %v2833
        %v3035 = vpop.f32.mrb[0].mxu0
        %v3036 = vadd.f32 0.0, %v3035
        %v3037 = vpop.f32.mrb[0].mxu0
        %3038 = vmatprep.mubr.f32.mxu0 0.0
        %3039 = vmatmul.mubr.f32.gmra.mrb[0].mxu0 %v2836
        %v3040 = vpop.f32.mrb[0].mxu0
        %v3041 = vadd.f32 0.0, %v3040
        %v3042 = vpop.f32.mrb[0].mxu0
        %3043 = vmatprep.mubr.f32.mxu0 0.0
        %3044 = vmatmul.mubr.f32.gmra.mrb[0].mxu0 %v2839
        %v3045 = vpop.f32.mrb[0].mxu0
        %v3046 = vadd.f32 0.0, %v3045
        %v3047 = vpop.f32.mrb[0].mxu0
        %3048 = vmatprep.mubr.f32.mxu0 0.0
        %3049 = vmatmul.mubr.f32.gmra.mrb[0].mxu0 %v2842
        %v3050 = vpop.f32.mrb[0].mxu0
        %v3051 = vadd.f32 0.0, %v3050
        %v3052 = vpop.f32.mrb[0].mxu0
        %3053 = vmatprep.mubr.f32.mxu0 0.0
        %3054 = vmatmul.mubr.f32.gmra.mrb[0].mxu0 %v2845
        %v3055 = vpop.f32.mrb[0].mxu0
        %v3056 = vadd.f32 0.0, %v3055
        %v3057 = vpop.f32.mrb[0].mxu0
        %3058 = vmatprep.mubr.f32.mxu0 0.0
        %3059 = vmatmul.mubr.f32.gmra.mrb[0].mxu0 %v2848
        %v3060 = vpop.f32.mrb[0].mxu0
        %v3061 = vadd.f32 0.0, %v3060
        %v3062 = vpop.f32.mrb[0].mxu0
        %3063 = vmatprep.mubr.f32.mxu0 0.0
        %3064 = vmatmul.mubr.f32.gmra.mrb[0].mxu0 %v2851
        %v3065 = vpop.f32.mrb[0].mxu0
        %v3066 = vadd.f32 0.0, %v3065
        %v3067 = vpop.f32.mrb[0].mxu0
        %3068 = vmatprep.mubr.f32.mxu0 0.0
        %3069 = vmatmul.mubr.f32.gmra.mrb[0].mxu0 %v2854
        %v3070 = vpop.f32.mrb[0].mxu0
        %v3071 = vadd.f32 0.0, %v3070
        %v3072 = vpop.f32.mrb[0].mxu0
        %3073 = vmatprep.mubr.f32.mxu0 0.0
        %3074 = vmatmul.mubr.f32.gmra.mrb[0].mxu0 %v2857
        %v3075 = vpop.f32.mrb[0].mxu0
        %v3076 = vadd.f32 0.0, %v3075
        %v3077 = vpop.f32.mrb[0].mxu0
        %3078 = vmatprep.mubr.f32.mxu0 0.0
        %3079 = vmatmul.mubr.f32.gmra.mrb[0].mxu0 %v2860
        %v3080 = vpop.f32.mrb[0].mxu0
        %v3081 = vadd.f32 0.0, %v3080
        %v3082 = vpop.f32.mrb[0].mxu0
        %3083 = vmatprep.mubr.f32.mxu0 0.0
        %3084 = vmatmul.mubr.f32.gmra.mrb[0].mxu0 %v2863
        %v3085 = vpop.f32.mrb[0].mxu0
        %v3086 = vadd.f32 0.0, %v3085
        %v3087 = vpop.f32.mrb[0].mxu0
        %3088 = vmatprep.mubr.f32.mxu0 0.0
        %3089 = vmatmul.mubr.f32.gmra.mrb[0].mxu0 %v2866
        %v3090 = vpop.f32.mrb[0].mxu0
        %v3091 = vadd.f32 0.0, %v3090
        %v3092 = vpop.f32.mrb[0].mxu0
        %3093 = vmatprep.mubr.f32.mxu0 0.0
        %3094 = vmatmul.mubr.f32.gmra.mrb[0].mxu0 %v2869
        %v3095 = vpop.f32.mrb[0].mxu0
        %v3096 = vadd.f32 0.0, %v3095
        %v3097 = vpop.f32.mrb[0].mxu0
        %3098 = vmatprep.mubr.f32.mxu0 0.0
        %3099 = vmatmul.mubr.f32.gmra.mrb[0].mxu0 %v2872
        %v3100 = vpop.f32.mrb[0].mxu0
        %v3101 = vadd.f32 0.0, %v3100
        %v3102 = vpop.f32.mrb[0].mxu0
        %3103 = vmatprep.mubr.f32.mxu0 0.0
        %3104 = vmatmul.mubr.f32.gmra.mrb[0].mxu0 %v2875
        %v3105 = vpop.f32.mrb[0].mxu0
        %v3106 = vadd.f32 0.0, %v3105
        %v3107 = vpop.f32.mrb[0].mxu0
        %3108 = vmatprep.mubr.f32.mxu0 0.0
        %3109 = vmatmul.mubr.f32.gmra.mrb[0].mxu0 %v2878
        %v3110 = vpop.f32.mrb[0].mxu0
        %v3111 = vadd.f32 0.0, %v3110
        %v3112 = vpop.f32.mrb[0].mxu0
        %3113 = vmatprep.mubr.f32.mxu0 0.0
        %3114 = vmatmul.mubr.f32.gmra.mrb[0].mxu0 %v2881
        %v3115 = vpop.f32.mrb[0].mxu0
        %v3116 = vadd.f32 0.0, %v3115
        %v3117 = vpop.f32.mrb[0].mxu0
        %3118 = vmatprep.mubr.f32.mxu0 0.0
        %3119 = vmatmul.mubr.f32.gmra.mrb[0].mxu0 %v2884
        %v3120 = vpop.f32.mrb[0].mxu0
        %v3121 = vadd.f32 0.0, %v3120
        %v3122 = vpop.f32.mrb[0].mxu0
        %3123 = vmatprep.mubr.f32.mxu0 0.0
        %3124 = vmatmul.mubr.f32.gmra.mrb[0].mxu0 %v2887
        %v3125 = vpop.f32.mrb[0].mxu0
        %v3126 = vadd.f32 0.0, %v3125
        %v3127 = vpop.f32.mrb[0].mxu0
        %3128 = vmatprep.mubr.f32.mxu0 0.0
        %3129 = vmatmul.mubr.f32.gmra.mrb[0].mxu0 %v2890
        %v3130 = vpop.f32.mrb[0].mxu0
        %v3131 = vadd.f32 0.0, %v3130
        %v3132 = vpop.f32.mrb[0].mxu0
        %3133 = vmatprep.mubr.f32.mxu0 0.0
        %3134 = vmatmul.mubr.f32.gmra.mrb[0].mxu0 %v2893
        %v3135 = vpop.f32.mrb[0].mxu0
        %v3136 = vadd.f32 0.0, %v3135
        %v3137 = vpop.f32.mrb[0].mxu0
        %3138 = vmatprep.mubr.f32.mxu0 0.0
        %3139 = vmatmul.mubr.f32.gmra.mrb[0].mxu0 %v2896
        %v3140 = vpop.f32.mrb[0].mxu0
        %v3141 = vadd.f32 0.0, %v3140
        %v3142 = vpop.f32.mrb[0].mxu0
        %3143 = vmatprep.mubr.f32.mxu0 0.0
        %3144 = vmatmul.mubr.f32.gmra.mrb[0].mxu0 %v2899
        %v3145 = vpop.f32.mrb[0].mxu0
        %v3146 = vadd.f32 0.0, %v3145
        %v3147 = vpop.f32.mrb[0].mxu0
        %3148 = vdwg.mxu0
        %v3149 = vadd.f32 %v2719, %v2971
        %v3150 = vadd.f32 %v2720, %v2976
        %v3151 = vadd.f32 %v2721, %v2981
        %v3152 = vadd.f32 %v2722, %v2986
        %v3153 = vadd.f32 %v2723, %v2991
        %v3154 = vadd.f32 %v2724, %v2996
        %v3155 = vadd.f32 %v2725, %v3001
        %v3156 = vadd.f32 %v2726, %v3006
        %v3157 = vadd.f32 %v2727, %v3011
        %v3158 = vadd.f32 %v2728, %v3016
        %v3159 = vadd.f32 %v2729, %v3021
        %v3160 = vadd.f32 %v2730, %v3026
        %v3161 = vadd.f32 %v2731, %v3031
        %v3162 = vadd.f32 %v2732, %v3036
        %v3163 = vadd.f32 %v2733, %v3041
        %v3164 = vadd.f32 %v2734, %v3046
        %v3165 = vadd.f32 %v2735, %v3051
        %v3166 = vadd.f32 %v2736, %v3056
        %v3167 = vadd.f32 %v2737, %v3061
        %v3168 = vadd.f32 %v2738, %v3066
        %v3169 = vadd.f32 %v2739, %v3071
        %v3170 = vadd.f32 %v2740, %v3076
        %v3171 = vadd.f32 %v2741, %v3081
        %v3172 = vadd.f32 %v2742, %v3086
        %v3173 = vadd.f32 %v2743, %v3091
        %v3174 = vadd.f32 %v2744, %v3096
        %v3175 = vadd.f32 %v2745, %v3101
        %v3176 = vadd.f32 %v2746, %v3106
        %v3177 = vadd.f32 %v2747, %v3111
        %v3178 = vadd.f32 %v2748, %v3116
        %v3179 = vadd.f32 %v2749, %v3121
        %v3180 = vadd.f32 %v2750, %v3126
        %v3181 = vadd.f32 %v2751, %v3131
        %v3182 = vadd.f32 %v2752, %v3136
        %v3183 = vadd.f32 %v2753, %v3141
        %v3184 = vadd.f32 %v2754, %v3146
        %v3185 = vld [vmem:[%s228 + $0x25] sm:$0xff]
        %v3186 = vld [vmem:[%s228 + $0x2d] sm:$0xff]
        %v3187 = vld [vmem:[%s228 + $0x35] sm:$0xff]
        %v3188 = vld [vmem:[%s228 + $0x3d] sm:$0xff]
        %v3189 = vld [vmem:[%s228 + $0x45] sm:$0xff]
        %v3190 = vld [vmem:[%s228 + $0x4d] sm:$0xff]
        %v3191 = vld [vmem:[%s228 + $0x55] sm:$0xff]
        %v3192 = vld [vmem:[%s228 + $0x5d] sm:$0xff]
        %v3193 = vld [vmem:[%s228 + $0x65] sm:$0xff]
        %v3194 = vld [vmem:[%s228 + $0x6d] sm:$0xff]
        %v3195 = vld [vmem:[%s228 + $0x75] sm:$0xff]
        %v3196 = vld [vmem:[%s228 + $0x7d] sm:$0xff]
        %v3197 = vld [vmem:[%s228 + $0x85] sm:$0xff]
        %v3198 = vld [vmem:[%s228 + $0x8d] sm:$0xff]
        %v3199 = vld [vmem:[%s228 + $0x95] sm:$0xff]
        %v3200 = vld [vmem:[%s228 + $0x9d] sm:$0xff]
        %v3201 = vld [vmem:[%s228 + $0xa5] sm:$0xff]
        %v3202 = vld [vmem:[%s228 + $0xad] sm:$0xff]
        %v3203 = vld [vmem:[%s228 + $0xb5] sm:$0xff]
        %v3204 = vld [vmem:[%s228 + $0xbd] sm:$0xff]
        %v3205 = vld [vmem:[%s228 + $0xc5] sm:$0xff]
        %v3206 = vld [vmem:[%s228 + $0xcd] sm:$0xff]
        %v3207 = vld [vmem:[%s228 + $0xd5] sm:$0xff]
        %v3208 = vld [vmem:[%s228 + $0xdd] sm:$0xff]
        %v3209 = vld [vmem:[%s228 + $0xe5] sm:$0xff]
        %v3210 = vld [vmem:[%s228 + $0xed] sm:$0xff]
        %v3211 = vld [vmem:[%s228 + $0xf5] sm:$0xff]
        %v3212 = vld [vmem:[%s228 + $0xfd] sm:$0xff]
        %v3213 = vld [vmem:[%s228 + $0x105] sm:$0xff]
        %v3214 = vld [vmem:[%s228 + $0x10d] sm:$0xff]
        %v3215 = vld [vmem:[%s228 + $0x115] sm:$0xff]
        %v3216 = vld [vmem:[%s228 + $0x11d] sm:$0xff]
        %v3217 = vld [vmem:[%s228 + $0x125] sm:$0xff]
        %v3218 = vld [vmem:[%s228 + $0x12d] sm:$0xff]
        %v3219 = vld [vmem:[%s228 + $0x135] sm:$0xff]
        %v3220 = vld [vmem:[%s228 + $0x13d] sm:$0xff]
        %s3221 = scalar_lea.vmem %s232, 28
        %v3222 = vld [vmem:[%s3221] sm:$0xf]
        %v3224 = vsel %vm321, %v3185, 0
        %v3227 = vsel %vm321, %v3186, 0
        %v3230 = vsel %vm321, %v3187, 0
        %v3233 = vsel %vm321, %v3188, 0
        %v3236 = vsel %vm321, %v3189, 0
        %v3239 = vsel %vm321, %v3190, 0
        %v3242 = vsel %vm321, %v3191, 0
        %v3245 = vsel %vm321, %v3192, 0
        %v3248 = vsel %vm321, %v3193, 0
        %v3251 = vsel %vm321, %v3194, 0
        %v3254 = vsel %vm321, %v3195, 0
        %v3257 = vsel %vm321, %v3196, 0
        %v3260 = vsel %vm321, %v3197, 0
        %v3263 = vsel %vm321, %v3198, 0
        %v3266 = vsel %vm321, %v3199, 0
        %v3269 = vsel %vm321, %v3200, 0
        %v3272 = vsel %vm321, %v3201, 0
        %v3275 = vsel %vm321, %v3202, 0
        %v3278 = vsel %vm321, %v3203, 0
        %v3281 = vsel %vm321, %v3204, 0
        %v3284 = vsel %vm321, %v3205, 0
        %v3287 = vsel %vm321, %v3206, 0
        %v3290 = vsel %vm321, %v3207, 0
        %v3293 = vsel %vm321, %v3208, 0
        %v3296 = vsel %vm321, %v3209, 0
        %v3299 = vsel %vm321, %v3210, 0
        %v3302 = vsel %vm321, %v3211, 0
        %v3305 = vsel %vm321, %v3212, 0
        %v3308 = vsel %vm321, %v3213, 0
        %v3311 = vsel %vm321, %v3214, 0
        %v3314 = vsel %vm321, %v3215, 0
        %v3317 = vsel %vm321, %v3216, 0
        %v3320 = vsel %vm321, %v3217, 0
        %v3323 = vsel %vm321, %v3218, 0
        %v3326 = vsel %vm321, %v3219, 0
        %v3329 = vsel %vm321, %v3220, 0
        %v3332 = vsel %vm430, %v3222, 0
        %3334 = vmatprep.subr.mxu0 0.0
        %3335 = vmatpush1.msra.mxu0 %v3332
        %3336 = vmatprep.subr.mxu0 0.0
        %3337 = vmatpush1.msra.mxu0 0.0
        %3338 = vmatprep.subr.mxu0 0.0
        %3339 = vmatpush1.msra.mxu0 0.0
        %3340 = vmatprep.subr.mxu0 0.0
        %3341 = vmatpush1.msra.mxu0 0.0
        %3342 = vmatprep.subr.mxu0 0.0
        %3343 = vmatpush1.msra.mxu0 0.0
        %3344 = vmatprep.subr.mxu0 0.0
        %3345 = vmatpush1.msra.mxu0 0.0
        %3346 = vmatprep.subr.mxu0 0.0
        %3347 = vmatpush1.msra.mxu0 0.0
        %3348 = vmatprep.subr.mxu0 0.0
        %3349 = vmatpush1.msra.mxu0 0.0
        %3350 = vmatprep.subr.mxu0 0.0
        %3351 = vmatpush1.msra.mxu0 0.0
        %3352 = vmatprep.subr.mxu0 0.0
        %3353 = vmatpush1.msra.mxu0 0.0
        %3354 = vmatprep.subr.mxu0 0.0
        %3355 = vmatpush1.msra.mxu0 0.0
        %3356 = vmatprep.subr.mxu0 0.0
        %3357 = vmatpush1.msra.mxu0 0.0
        %3358 = vmatprep.subr.mxu0 0.0
        %3359 = vmatpush1.msra.mxu0 0.0
        %3360 = vmatprep.subr.mxu0 0.0
        %3361 = vmatpush1.msra.mxu0 0.0
        %3362 = vmatprep.subr.mxu0 0.0
        %3363 = vmatpush1.msra.mxu0 0.0
        %3364 = vmatprep.subr.mxu0 0.0
        %3365 = vmatpush1.msra.mxu0 0.0
        %3366 = vmatprep.subr.mxu0 0.0
        %3367 = vmatpush1.msra.mxu0 0.0
        %3368 = vmatprep.subr.mxu0 0.0
        %3369 = vmatpush1.msra.mxu0 0.0
        %3370 = vmatprep.subr.mxu0 0.0
        %3371 = vmatpush1.msra.mxu0 0.0
        %3372 = vmatprep.subr.mxu0 0.0
        %3373 = vmatpush1.msra.mxu0 0.0
        %3374 = vmatprep.subr.mxu0 0.0
        %3375 = vmatpush1.msra.mxu0 0.0
        %3376 = vmatprep.subr.mxu0 0.0
        %3377 = vmatpush1.msra.mxu0 0.0
        %3378 = vmatprep.subr.mxu0 0.0
        %3379 = vmatpush1.msra.mxu0 0.0
        %3380 = vmatprep.subr.mxu0 0.0
        %3381 = vmatpush1.msra.mxu0 0.0
        %3382 = vmatprep.subr.mxu0 0.0
        %3383 = vmatpush1.msra.mxu0 0.0
        %3384 = vmatprep.subr.mxu0 0.0
        %3385 = vmatpush1.msra.mxu0 0.0
        %3386 = vmatprep.subr.mxu0 0.0
        %3387 = vmatpush1.msra.mxu0 0.0
        %3388 = vmatprep.subr.mxu0 0.0
        %3389 = vmatpush1.msra.mxu0 0.0
        %3390 = vmatprep.subr.mxu0 0.0
        %3391 = vmatpush1.msra.mxu0 0.0
        %3392 = vmatprep.subr.mxu0 0.0
        %3393 = vmatpush1.msra.mxu0 0.0
        %3394 = vmatprep.subr.mxu0 0.0
        %3395 = vmatpush1.msra.mxu0 0.0
        %3396 = vmatprep.subr.mxu0 0.0
        %3397 = vmatpush1.msra.mxu0 0.0
        %3398 = vmatprep.mubr.f32.mxu0 0.0
        %3399 = vmatmul.mubr.f32.gmra.mrb[0].mxu0 %v3224
        %v3400 = vpop.f32.mrb[0].mxu0
        %v3401 = vadd.f32 0.0, %v3400
        %v3402 = vpop.f32.mrb[0].mxu0
        %3403 = vmatprep.mubr.f32.mxu0 0.0
        %3404 = vmatmul.mubr.f32.gmra.mrb[0].mxu0 %v3227
        %v3405 = vpop.f32.mrb[0].mxu0
        %v3406 = vadd.f32 0.0, %v3405
        %v3407 = vpop.f32.mrb[0].mxu0
        %3408 = vmatprep.mubr.f32.mxu0 0.0
        %3409 = vmatmul.mubr.f32.gmra.mrb[0].mxu0 %v3230
        %v3410 = vpop.f32.mrb[0].mxu0
        %v3411 = vadd.f32 0.0, %v3410
        %v3412 = vpop.f32.mrb[0].mxu0
        %3413 = vmatprep.mubr.f32.mxu0 0.0
        %3414 = vmatmul.mubr.f32.gmra.mrb[0].mxu0 %v3233
        %v3415 = vpop.f32.mrb[0].mxu0
        %v3416 = vadd.f32 0.0, %v3415
        %v3417 = vpop.f32.mrb[0].mxu0
        %3418 = vmatprep.mubr.f32.mxu0 0.0
        %3419 = vmatmul.mubr.f32.gmra.mrb[0].mxu0 %v3236
        %v3420 = vpop.f32.mrb[0].mxu0
        %v3421 = vadd.f32 0.0, %v3420
        %v3422 = vpop.f32.mrb[0].mxu0
        %3423 = vmatprep.mubr.f32.mxu0 0.0
        %3424 = vmatmul.mubr.f32.gmra.mrb[0].mxu0 %v3239
        %v3425 = vpop.f32.mrb[0].mxu0
        %v3426 = vadd.f32 0.0, %v3425
        %v3427 = vpop.f32.mrb[0].mxu0
        %3428 = vmatprep.mubr.f32.mxu0 0.0
        %3429 = vmatmul.mubr.f32.gmra.mrb[0].mxu0 %v3242
        %v3430 = vpop.f32.mrb[0].mxu0
        %v3431 = vadd.f32 0.0, %v3430
        %v3432 = vpop.f32.mrb[0].mxu0
        %3433 = vmatprep.mubr.f32.mxu0 0.0
        %3434 = vmatmul.mubr.f32.gmra.mrb[0].mxu0 %v3245
        %v3435 = vpop.f32.mrb[0].mxu0
        %v3436 = vadd.f32 0.0, %v3435
        %v3437 = vpop.f32.mrb[0].mxu0
        %3438 = vmatprep.mubr.f32.mxu0 0.0
        %3439 = vmatmul.mubr.f32.gmra.mrb[0].mxu0 %v3248
        %v3440 = vpop.f32.mrb[0].mxu0
        %v3441 = vadd.f32 0.0, %v3440
        %v3442 = vpop.f32.mrb[0].mxu0
        %3443 = vmatprep.mubr.f32.mxu0 0.0
        %3444 = vmatmul.mubr.f32.gmra.mrb[0].mxu0 %v3251
        %v3445 = vpop.f32.mrb[0].mxu0
        %v3446 = vadd.f32 0.0, %v3445
        %v3447 = vpop.f32.mrb[0].mxu0
        %3448 = vmatprep.mubr.f32.mxu0 0.0
        %3449 = vmatmul.mubr.f32.gmra.mrb[0].mxu0 %v3254
        %v3450 = vpop.f32.mrb[0].mxu0
        %v3451 = vadd.f32 0.0, %v3450
        %v3452 = vpop.f32.mrb[0].mxu0
        %3453 = vmatprep.mubr.f32.mxu0 0.0
        %3454 = vmatmul.mubr.f32.gmra.mrb[0].mxu0 %v3257
        %v3455 = vpop.f32.mrb[0].mxu0
        %v3456 = vadd.f32 0.0, %v3455
        %v3457 = vpop.f32.mrb[0].mxu0
        %3458 = vmatprep.mubr.f32.mxu0 0.0
        %3459 = vmatmul.mubr.f32.gmra.mrb[0].mxu0 %v3260
        %v3460 = vpop.f32.mrb[0].mxu0
        %v3461 = vadd.f32 0.0, %v3460
        %v3462 = vpop.f32.mrb[0].mxu0
        %3463 = vmatprep.mubr.f32.mxu0 0.0
        %3464 = vmatmul.mubr.f32.gmra.mrb[0].mxu0 %v3263
        %v3465 = vpop.f32.mrb[0].mxu0
        %v3466 = vadd.f32 0.0, %v3465
        %v3467 = vpop.f32.mrb[0].mxu0
        %3468 = vmatprep.mubr.f32.mxu0 0.0
        %3469 = vmatmul.mubr.f32.gmra.mrb[0].mxu0 %v3266
        %v3470 = vpop.f32.mrb[0].mxu0
        %v3471 = vadd.f32 0.0, %v3470
        %v3472 = vpop.f32.mrb[0].mxu0
        %3473 = vmatprep.mubr.f32.mxu0 0.0
        %3474 = vmatmul.mubr.f32.gmra.mrb[0].mxu0 %v3269
        %v3475 = vpop.f32.mrb[0].mxu0
        %v3476 = vadd.f32 0.0, %v3475
        %v3477 = vpop.f32.mrb[0].mxu0
        %3478 = vmatprep.mubr.f32.mxu0 0.0
        %3479 = vmatmul.mubr.f32.gmra.mrb[0].mxu0 %v3272
        %v3480 = vpop.f32.mrb[0].mxu0
        %v3481 = vadd.f32 0.0, %v3480
        %v3482 = vpop.f32.mrb[0].mxu0
        %3483 = vmatprep.mubr.f32.mxu0 0.0
        %3484 = vmatmul.mubr.f32.gmra.mrb[0].mxu0 %v3275
        %v3485 = vpop.f32.mrb[0].mxu0
        %v3486 = vadd.f32 0.0, %v3485
        %v3487 = vpop.f32.mrb[0].mxu0
        %3488 = vmatprep.mubr.f32.mxu0 0.0
        %3489 = vmatmul.mubr.f32.gmra.mrb[0].mxu0 %v3278
        %v3490 = vpop.f32.mrb[0].mxu0
        %v3491 = vadd.f32 0.0, %v3490
        %v3492 = vpop.f32.mrb[0].mxu0
        %3493 = vmatprep.mubr.f32.mxu0 0.0
        %3494 = vmatmul.mubr.f32.gmra.mrb[0].mxu0 %v3281
        %v3495 = vpop.f32.mrb[0].mxu0
        %v3496 = vadd.f32 0.0, %v3495
        %v3497 = vpop.f32.mrb[0].mxu0
        %3498 = vmatprep.mubr.f32.mxu0 0.0
        %3499 = vmatmul.mubr.f32.gmra.mrb[0].mxu0 %v3284
        %v3500 = vpop.f32.mrb[0].mxu0
        %v3501 = vadd.f32 0.0, %v3500
        %v3502 = vpop.f32.mrb[0].mxu0
        %3503 = vmatprep.mubr.f32.mxu0 0.0
        %3504 = vmatmul.mubr.f32.gmra.mrb[0].mxu0 %v3287
        %v3505 = vpop.f32.mrb[0].mxu0
        %v3506 = vadd.f32 0.0, %v3505
        %v3507 = vpop.f32.mrb[0].mxu0
        %3508 = vmatprep.mubr.f32.mxu0 0.0
        %3509 = vmatmul.mubr.f32.gmra.mrb[0].mxu0 %v3290
        %v3510 = vpop.f32.mrb[0].mxu0
        %v3511 = vadd.f32 0.0, %v3510
        %v3512 = vpop.f32.mrb[0].mxu0
        %3513 = vmatprep.mubr.f32.mxu0 0.0
        %3514 = vmatmul.mubr.f32.gmra.mrb[0].mxu0 %v3293
        %v3515 = vpop.f32.mrb[0].mxu0
        %v3516 = vadd.f32 0.0, %v3515
        %v3517 = vpop.f32.mrb[0].mxu0
        %3518 = vmatprep.mubr.f32.mxu0 0.0
        %3519 = vmatmul.mubr.f32.gmra.mrb[0].mxu0 %v3296
        %v3520 = vpop.f32.mrb[0].mxu0
        %v3521 = vadd.f32 0.0, %v3520
        %v3522 = vpop.f32.mrb[0].mxu0
        %3523 = vmatprep.mubr.f32.mxu0 0.0
        %3524 = vmatmul.mubr.f32.gmra.mrb[0].mxu0 %v3299
        %v3525 = vpop.f32.mrb[0].mxu0
        %v3526 = vadd.f32 0.0, %v3525
        %v3527 = vpop.f32.mrb[0].mxu0
        %3528 = vmatprep.mubr.f32.mxu0 0.0
        %3529 = vmatmul.mubr.f32.gmra.mrb[0].mxu0 %v3302
        %v3530 = vpop.f32.mrb[0].mxu0
        %v3531 = vadd.f32 0.0, %v3530
        %v3532 = vpop.f32.mrb[0].mxu0
        %3533 = vmatprep.mubr.f32.mxu0 0.0
        %3534 = vmatmul.mubr.f32.gmra.mrb[0].mxu0 %v3305
        %v3535 = vpop.f32.mrb[0].mxu0
        %v3536 = vadd.f32 0.0, %v3535
        %v3537 = vpop.f32.mrb[0].mxu0
        %3538 = vmatprep.mubr.f32.mxu0 0.0
        %3539 = vmatmul.mubr.f32.gmra.mrb[0].mxu0 %v3308
        %v3540 = vpop.f32.mrb[0].mxu0
        %v3541 = vadd.f32 0.0, %v3540
        %v3542 = vpop.f32.mrb[0].mxu0
        %3543 = vmatprep.mubr.f32.mxu0 0.0
        %3544 = vmatmul.mubr.f32.gmra.mrb[0].mxu0 %v3311
        %v3545 = vpop.f32.mrb[0].mxu0
        %v3546 = vadd.f32 0.0, %v3545
        %v3547 = vpop.f32.mrb[0].mxu0
        %3548 = vmatprep.mubr.f32.mxu0 0.0
        %3549 = vmatmul.mubr.f32.gmra.mrb[0].mxu0 %v3314
        %v3550 = vpop.f32.mrb[0].mxu0
        %v3551 = vadd.f32 0.0, %v3550
        %v3552 = vpop.f32.mrb[0].mxu0
        %3553 = vmatprep.mubr.f32.mxu0 0.0
        %3554 = vmatmul.mubr.f32.gmra.mrb[0].mxu0 %v3317
        %v3555 = vpop.f32.mrb[0].mxu0
        %v3556 = vadd.f32 0.0, %v3555
        %v3557 = vpop.f32.mrb[0].mxu0
        %3558 = vmatprep.mubr.f32.mxu0 0.0
        %3559 = vmatmul.mubr.f32.gmra.mrb[0].mxu0 %v3320
        %v3560 = vpop.f32.mrb[0].mxu0
        %v3561 = vadd.f32 0.0, %v3560
        %v3562 = vpop.f32.mrb[0].mxu0
        %3563 = vmatprep.mubr.f32.mxu0 0.0
        %3564 = vmatmul.mubr.f32.gmra.mrb[0].mxu0 %v3323
        %v3565 = vpop.f32.mrb[0].mxu0
        %v3566 = vadd.f32 0.0, %v3565
        %v3567 = vpop.f32.mrb[0].mxu0
        %3568 = vmatprep.mubr.f32.mxu0 0.0
        %3569 = vmatmul.mubr.f32.gmra.mrb[0].mxu0 %v3326
        %v3570 = vpop.f32.mrb[0].mxu0
        %v3571 = vadd.f32 0.0, %v3570
        %v3572 = vpop.f32.mrb[0].mxu0
        %3573 = vmatprep.mubr.f32.mxu0 0.0
        %3574 = vmatmul.mubr.f32.gmra.mrb[0].mxu0 %v3329
        %v3575 = vpop.f32.mrb[0].mxu0
        %v3576 = vadd.f32 0.0, %v3575
        %v3577 = vpop.f32.mrb[0].mxu0
        %3578 = vdwg.mxu0
        %v3579 = vadd.f32 %v3149, %v3401
        %v3580 = vadd.f32 %v3150, %v3406
        %v3581 = vadd.f32 %v3151, %v3411
        %v3582 = vadd.f32 %v3152, %v3416
        %v3583 = vadd.f32 %v3153, %v3421
        %v3584 = vadd.f32 %v3154, %v3426
        %v3585 = vadd.f32 %v3155, %v3431
        %v3586 = vadd.f32 %v3156, %v3436
        %v3587 = vadd.f32 %v3157, %v3441
        %v3588 = vadd.f32 %v3158, %v3446
        %v3589 = vadd.f32 %v3159, %v3451
        %v3590 = vadd.f32 %v3160, %v3456
        %v3591 = vadd.f32 %v3161, %v3461
        %v3592 = vadd.f32 %v3162, %v3466
        %v3593 = vadd.f32 %v3163, %v3471
        %v3594 = vadd.f32 %v3164, %v3476
        %v3595 = vadd.f32 %v3165, %v3481
        %v3596 = vadd.f32 %v3166, %v3486
        %v3597 = vadd.f32 %v3167, %v3491
        %v3598 = vadd.f32 %v3168, %v3496
        %v3599 = vadd.f32 %v3169, %v3501
        %v3600 = vadd.f32 %v3170, %v3506
        %v3601 = vadd.f32 %v3171, %v3511
        %v3602 = vadd.f32 %v3172, %v3516
        %v3603 = vadd.f32 %v3173, %v3521
        %v3604 = vadd.f32 %v3174, %v3526
        %v3605 = vadd.f32 %v3175, %v3531
        %v3606 = vadd.f32 %v3176, %v3536
        %v3607 = vadd.f32 %v3177, %v3541
        %v3608 = vadd.f32 %v3178, %v3546
        %v3609 = vadd.f32 %v3179, %v3551
        %v3610 = vadd.f32 %v3180, %v3556
        %v3611 = vadd.f32 %v3181, %v3561
        %v3612 = vadd.f32 %v3182, %v3566
        %v3613 = vadd.f32 %v3183, %v3571
        %v3614 = vadd.f32 %v3184, %v3576
        %v3615 = vld [vmem:[%s228 + $0x26] sm:$0xff]
        %v3616 = vld [vmem:[%s228 + $0x2e] sm:$0xff]
        %v3617 = vld [vmem:[%s228 + $0x36] sm:$0xff]
        %v3618 = vld [vmem:[%s228 + $0x3e] sm:$0xff]
        %v3619 = vld [vmem:[%s228 + $0x46] sm:$0xff]
        %v3620 = vld [vmem:[%s228 + $0x4e] sm:$0xff]
        %v3621 = vld [vmem:[%s228 + $0x56] sm:$0xff]
        %v3622 = vld [vmem:[%s228 + $0x5e] sm:$0xff]
        %v3623 = vld [vmem:[%s228 + $0x66] sm:$0xff]
        %v3624 = vld [vmem:[%s228 + $0x6e] sm:$0xff]
        %v3625 = vld [vmem:[%s228 + $0x76] sm:$0xff]
        %v3626 = vld [vmem:[%s228 + $0x7e] sm:$0xff]
        %v3627 = vld [vmem:[%s228 + $0x86] sm:$0xff]
        %v3628 = vld [vmem:[%s228 + $0x8e] sm:$0xff]
        %v3629 = vld [vmem:[%s228 + $0x96] sm:$0xff]
        %v3630 = vld [vmem:[%s228 + $0x9e] sm:$0xff]
        %v3631 = vld [vmem:[%s228 + $0xa6] sm:$0xff]
        %v3632 = vld [vmem:[%s228 + $0xae] sm:$0xff]
        %v3633 = vld [vmem:[%s228 + $0xb6] sm:$0xff]
        %v3634 = vld [vmem:[%s228 + $0xbe] sm:$0xff]
        %v3635 = vld [vmem:[%s228 + $0xc6] sm:$0xff]
        %v3636 = vld [vmem:[%s228 + $0xce] sm:$0xff]
        %v3637 = vld [vmem:[%s228 + $0xd6] sm:$0xff]
        %v3638 = vld [vmem:[%s228 + $0xde] sm:$0xff]
        %v3639 = vld [vmem:[%s228 + $0xe6] sm:$0xff]
        %v3640 = vld [vmem:[%s228 + $0xee] sm:$0xff]
        %v3641 = vld [vmem:[%s228 + $0xf6] sm:$0xff]
        %v3642 = vld [vmem:[%s228 + $0xfe] sm:$0xff]
        %v3643 = vld [vmem:[%s228 + $0x106] sm:$0xff]
        %v3644 = vld [vmem:[%s228 + $0x10e] sm:$0xff]
        %v3645 = vld [vmem:[%s228 + $0x116] sm:$0xff]
        %v3646 = vld [vmem:[%s228 + $0x11e] sm:$0xff]
        %v3647 = vld [vmem:[%s228 + $0x126] sm:$0xff]
        %v3648 = vld [vmem:[%s228 + $0x12e] sm:$0xff]
        %v3649 = vld [vmem:[%s228 + $0x136] sm:$0xff]
        %v3650 = vld [vmem:[%s228 + $0x13e] sm:$0xff]
        %s3651 = scalar_lea.vmem %s232, 32
        %v3652 = vld [vmem:[%s3651] sm:$0xf]
        %v3654 = vsel %vm321, %v3615, 0
        %v3657 = vsel %vm321, %v3616, 0
        %v3660 = vsel %vm321, %v3617, 0
        %v3663 = vsel %vm321, %v3618, 0
        %v3666 = vsel %vm321, %v3619, 0
        %v3669 = vsel %vm321, %v3620, 0
        %v3672 = vsel %vm321, %v3621, 0
        %v3675 = vsel %vm321, %v3622, 0
        %v3678 = vsel %vm321, %v3623, 0
        %v3681 = vsel %vm321, %v3624, 0
        %v3684 = vsel %vm321, %v3625, 0
        %v3687 = vsel %vm321, %v3626, 0
        %v3690 = vsel %vm321, %v3627, 0
        %v3693 = vsel %vm321, %v3628, 0
        %v3696 = vsel %vm321, %v3629, 0
        %v3699 = vsel %vm321, %v3630, 0
        %v3702 = vsel %vm321, %v3631, 0
        %v3705 = vsel %vm321, %v3632, 0
        %v3708 = vsel %vm321, %v3633, 0
        %v3711 = vsel %vm321, %v3634, 0
        %v3714 = vsel %vm321, %v3635, 0
        %v3717 = vsel %vm321, %v3636, 0
        %v3720 = vsel %vm321, %v3637, 0
        %v3723 = vsel %vm321, %v3638, 0
        %v3726 = vsel %vm321, %v3639, 0
        %v3729 = vsel %vm321, %v3640, 0
        %v3732 = vsel %vm321, %v3641, 0
        %v3735 = vsel %vm321, %v3642, 0
        %v3738 = vsel %vm321, %v3643, 0
        %v3741 = vsel %vm321, %v3644, 0
        %v3744 = vsel %vm321, %v3645, 0
        %v3747 = vsel %vm321, %v3646, 0
        %v3750 = vsel %vm321, %v3647, 0
        %v3753 = vsel %vm321, %v3648, 0
        %v3756 = vsel %vm321, %v3649, 0
        %v3759 = vsel %vm321, %v3650, 0
        %v3762 = vsel %vm430, %v3652, 0
        %3764 = vmatprep.subr.mxu0 0.0
        %3765 = vmatpush1.msra.mxu0 %v3762
        %3766 = vmatprep.subr.mxu0 0.0
        %3767 = vmatpush1.msra.mxu0 0.0
        %3768 = vmatprep.subr.mxu0 0.0
        %3769 = vmatpush1.msra.mxu0 0.0
        %3770 = vmatprep.subr.mxu0 0.0
        %3771 = vmatpush1.msra.mxu0 0.0
        %3772 = vmatprep.subr.mxu0 0.0
        %3773 = vmatpush1.msra.mxu0 0.0
        %3774 = vmatprep.subr.mxu0 0.0
        %3775 = vmatpush1.msra.mxu0 0.0
        %3776 = vmatprep.subr.mxu0 0.0
        %3777 = vmatpush1.msra.mxu0 0.0
        %3778 = vmatprep.subr.mxu0 0.0
        %3779 = vmatpush1.msra.mxu0 0.0
        %3780 = vmatprep.subr.mxu0 0.0
        %3781 = vmatpush1.msra.mxu0 0.0
        %3782 = vmatprep.subr.mxu0 0.0
        %3783 = vmatpush1.msra.mxu0 0.0
        %3784 = vmatprep.subr.mxu0 0.0
        %3785 = vmatpush1.msra.mxu0 0.0
        %3786 = vmatprep.subr.mxu0 0.0
        %3787 = vmatpush1.msra.mxu0 0.0
        %3788 = vmatprep.subr.mxu0 0.0
        %3789 = vmatpush1.msra.mxu0 0.0
        %3790 = vmatprep.subr.mxu0 0.0
        %3791 = vmatpush1.msra.mxu0 0.0
        %3792 = vmatprep.subr.mxu0 0.0
        %3793 = vmatpush1.msra.mxu0 0.0
        %3794 = vmatprep.subr.mxu0 0.0
        %3795 = vmatpush1.msra.mxu0 0.0
        %3796 = vmatprep.subr.mxu0 0.0
        %3797 = vmatpush1.msra.mxu0 0.0
        %3798 = vmatprep.subr.mxu0 0.0
        %3799 = vmatpush1.msra.mxu0 0.0
        %3800 = vmatprep.subr.mxu0 0.0
        %3801 = vmatpush1.msra.mxu0 0.0
        %3802 = vmatprep.subr.mxu0 0.0
        %3803 = vmatpush1.msra.mxu0 0.0
        %3804 = vmatprep.subr.mxu0 0.0
        %3805 = vmatpush1.msra.mxu0 0.0
        %3806 = vmatprep.subr.mxu0 0.0
        %3807 = vmatpush1.msra.mxu0 0.0
        %3808 = vmatprep.subr.mxu0 0.0
        %3809 = vmatpush1.msra.mxu0 0.0
        %3810 = vmatprep.subr.mxu0 0.0
        %3811 = vmatpush1.msra.mxu0 0.0
        %3812 = vmatprep.subr.mxu0 0.0
        %3813 = vmatpush1.msra.mxu0 0.0
        %3814 = vmatprep.subr.mxu0 0.0
        %3815 = vmatpush1.msra.mxu0 0.0
        %3816 = vmatprep.subr.mxu0 0.0
        %3817 = vmatpush1.msra.mxu0 0.0
        %3818 = vmatprep.subr.mxu0 0.0
        %3819 = vmatpush1.msra.mxu0 0.0
        %3820 = vmatprep.subr.mxu0 0.0
        %3821 = vmatpush1.msra.mxu0 0.0
        %3822 = vmatprep.subr.mxu0 0.0
        %3823 = vmatpush1.msra.mxu0 0.0
        %3824 = vmatprep.subr.mxu0 0.0
        %3825 = vmatpush1.msra.mxu0 0.0
        %3826 = vmatprep.subr.mxu0 0.0
        %3827 = vmatpush1.msra.mxu0 0.0
        %3828 = vmatprep.mubr.f32.mxu0 0.0
        %3829 = vmatmul.mubr.f32.gmra.mrb[0].mxu0 %v3654
        %v3830 = vpop.f32.mrb[0].mxu0
        %v3831 = vadd.f32 0.0, %v3830
        %v3832 = vpop.f32.mrb[0].mxu0
        %3833 = vmatprep.mubr.f32.mxu0 0.0
        %3834 = vmatmul.mubr.f32.gmra.mrb[0].mxu0 %v3657
        %v3835 = vpop.f32.mrb[0].mxu0
        %v3836 = vadd.f32 0.0, %v3835
        %v3837 = vpop.f32.mrb[0].mxu0
        %3838 = vmatprep.mubr.f32.mxu0 0.0
        %3839 = vmatmul.mubr.f32.gmra.mrb[0].mxu0 %v3660
        %v3840 = vpop.f32.mrb[0].mxu0
        %v3841 = vadd.f32 0.0, %v3840
        %v3842 = vpop.f32.mrb[0].mxu0
        %3843 = vmatprep.mubr.f32.mxu0 0.0
        %3844 = vmatmul.mubr.f32.gmra.mrb[0].mxu0 %v3663
        %v3845 = vpop.f32.mrb[0].mxu0
        %v3846 = vadd.f32 0.0, %v3845
        %v3847 = vpop.f32.mrb[0].mxu0
        %3848 = vmatprep.mubr.f32.mxu0 0.0
        %3849 = vmatmul.mubr.f32.gmra.mrb[0].mxu0 %v3666
        %v3850 = vpop.f32.mrb[0].mxu0
        %v3851 = vadd.f32 0.0, %v3850
        %v3852 = vpop.f32.mrb[0].mxu0
        %3853 = vmatprep.mubr.f32.mxu0 0.0
        %3854 = vmatmul.mubr.f32.gmra.mrb[0].mxu0 %v3669
        %v3855 = vpop.f32.mrb[0].mxu0
        %v3856 = vadd.f32 0.0, %v3855
        %v3857 = vpop.f32.mrb[0].mxu0
        %3858 = vmatprep.mubr.f32.mxu0 0.0
        %3859 = vmatmul.mubr.f32.gmra.mrb[0].mxu0 %v3672
        %v3860 = vpop.f32.mrb[0].mxu0
        %v3861 = vadd.f32 0.0, %v3860
        %v3862 = vpop.f32.mrb[0].mxu0
        %3863 = vmatprep.mubr.f32.mxu0 0.0
        %3864 = vmatmul.mubr.f32.gmra.mrb[0].mxu0 %v3675
        %v3865 = vpop.f32.mrb[0].mxu0
        %v3866 = vadd.f32 0.0, %v3865
        %v3867 = vpop.f32.mrb[0].mxu0
        %3868 = vmatprep.mubr.f32.mxu0 0.0
        %3869 = vmatmul.mubr.f32.gmra.mrb[0].mxu0 %v3678
        %v3870 = vpop.f32.mrb[0].mxu0
        %v3871 = vadd.f32 0.0, %v3870
        %v3872 = vpop.f32.mrb[0].mxu0
        %3873 = vmatprep.mubr.f32.mxu0 0.0
        %3874 = vmatmul.mubr.f32.gmra.mrb[0].mxu0 %v3681
        %v3875 = vpop.f32.mrb[0].mxu0
        %v3876 = vadd.f32 0.0, %v3875
        %v3877 = vpop.f32.mrb[0].mxu0
        %3878 = vmatprep.mubr.f32.mxu0 0.0
        %3879 = vmatmul.mubr.f32.gmra.mrb[0].mxu0 %v3684
        %v3880 = vpop.f32.mrb[0].mxu0
        %v3881 = vadd.f32 0.0, %v3880
        %v3882 = vpop.f32.mrb[0].mxu0
        %3883 = vmatprep.mubr.f32.mxu0 0.0
        %3884 = vmatmul.mubr.f32.gmra.mrb[0].mxu0 %v3687
        %v3885 = vpop.f32.mrb[0].mxu0
        %v3886 = vadd.f32 0.0, %v3885
        %v3887 = vpop.f32.mrb[0].mxu0
        %3888 = vmatprep.mubr.f32.mxu0 0.0
        %3889 = vmatmul.mubr.f32.gmra.mrb[0].mxu0 %v3690
        %v3890 = vpop.f32.mrb[0].mxu0
        %v3891 = vadd.f32 0.0, %v3890
        %v3892 = vpop.f32.mrb[0].mxu0
        %3893 = vmatprep.mubr.f32.mxu0 0.0
        %3894 = vmatmul.mubr.f32.gmra.mrb[0].mxu0 %v3693
        %v3895 = vpop.f32.mrb[0].mxu0
        %v3896 = vadd.f32 0.0, %v3895
        %v3897 = vpop.f32.mrb[0].mxu0
        %3898 = vmatprep.mubr.f32.mxu0 0.0
        %3899 = vmatmul.mubr.f32.gmra.mrb[0].mxu0 %v3696
        %v3900 = vpop.f32.mrb[0].mxu0
        %v3901 = vadd.f32 0.0, %v3900
        %v3902 = vpop.f32.mrb[0].mxu0
        %3903 = vmatprep.mubr.f32.mxu0 0.0
        %3904 = vmatmul.mubr.f32.gmra.mrb[0].mxu0 %v3699
        %v3905 = vpop.f32.mrb[0].mxu0
        %v3906 = vadd.f32 0.0, %v3905
        %v3907 = vpop.f32.mrb[0].mxu0
        %3908 = vmatprep.mubr.f32.mxu0 0.0
        %3909 = vmatmul.mubr.f32.gmra.mrb[0].mxu0 %v3702
        %v3910 = vpop.f32.mrb[0].mxu0
        %v3911 = vadd.f32 0.0, %v3910
        %v3912 = vpop.f32.mrb[0].mxu0
        %3913 = vmatprep.mubr.f32.mxu0 0.0
        %3914 = vmatmul.mubr.f32.gmra.mrb[0].mxu0 %v3705
        %v3915 = vpop.f32.mrb[0].mxu0
        %v3916 = vadd.f32 0.0, %v3915
        %v3917 = vpop.f32.mrb[0].mxu0
        %3918 = vmatprep.mubr.f32.mxu0 0.0
        %3919 = vmatmul.mubr.f32.gmra.mrb[0].mxu0 %v3708
        %v3920 = vpop.f32.mrb[0].mxu0
        %v3921 = vadd.f32 0.0, %v3920
        %v3922 = vpop.f32.mrb[0].mxu0
        %3923 = vmatprep.mubr.f32.mxu0 0.0
        %3924 = vmatmul.mubr.f32.gmra.mrb[0].mxu0 %v3711
        %v3925 = vpop.f32.mrb[0].mxu0
        %v3926 = vadd.f32 0.0, %v3925
        %v3927 = vpop.f32.mrb[0].mxu0
        %3928 = vmatprep.mubr.f32.mxu0 0.0
        %3929 = vmatmul.mubr.f32.gmra.mrb[0].mxu0 %v3714
        %v3930 = vpop.f32.mrb[0].mxu0
        %v3931 = vadd.f32 0.0, %v3930
        %v3932 = vpop.f32.mrb[0].mxu0
        %3933 = vmatprep.mubr.f32.mxu0 0.0
        %3934 = vmatmul.mubr.f32.gmra.mrb[0].mxu0 %v3717
        %v3935 = vpop.f32.mrb[0].mxu0
        %v3936 = vadd.f32 0.0, %v3935
        %v3937 = vpop.f32.mrb[0].mxu0
        %3938 = vmatprep.mubr.f32.mxu0 0.0
        %3939 = vmatmul.mubr.f32.gmra.mrb[0].mxu0 %v3720
        %v3940 = vpop.f32.mrb[0].mxu0
        %v3941 = vadd.f32 0.0, %v3940
        %v3942 = vpop.f32.mrb[0].mxu0
        %3943 = vmatprep.mubr.f32.mxu0 0.0
        %3944 = vmatmul.mubr.f32.gmra.mrb[0].mxu0 %v3723
        %v3945 = vpop.f32.mrb[0].mxu0
        %v3946 = vadd.f32 0.0, %v3945
        %v3947 = vpop.f32.mrb[0].mxu0
        %3948 = vmatprep.mubr.f32.mxu0 0.0
        %3949 = vmatmul.mubr.f32.gmra.mrb[0].mxu0 %v3726
        %v3950 = vpop.f32.mrb[0].mxu0
        %v3951 = vadd.f32 0.0, %v3950
        %v3952 = vpop.f32.mrb[0].mxu0
        %3953 = vmatprep.mubr.f32.mxu0 0.0
        %3954 = vmatmul.mubr.f32.gmra.mrb[0].mxu0 %v3729
        %v3955 = vpop.f32.mrb[0].mxu0
        %v3956 = vadd.f32 0.0, %v3955
        %v3957 = vpop.f32.mrb[0].mxu0
        %3958 = vmatprep.mubr.f32.mxu0 0.0
        %3959 = vmatmul.mubr.f32.gmra.mrb[0].mxu0 %v3732
        %v3960 = vpop.f32.mrb[0].mxu0
        %v3961 = vadd.f32 0.0, %v3960
        %v3962 = vpop.f32.mrb[0].mxu0
        %3963 = vmatprep.mubr.f32.mxu0 0.0
        %3964 = vmatmul.mubr.f32.gmra.mrb[0].mxu0 %v3735
        %v3965 = vpop.f32.mrb[0].mxu0
        %v3966 = vadd.f32 0.0, %v3965
        %v3967 = vpop.f32.mrb[0].mxu0
        %3968 = vmatprep.mubr.f32.mxu0 0.0
        %3969 = vmatmul.mubr.f32.gmra.mrb[0].mxu0 %v3738
        %v3970 = vpop.f32.mrb[0].mxu0
        %v3971 = vadd.f32 0.0, %v3970
        %v3972 = vpop.f32.mrb[0].mxu0
        %3973 = vmatprep.mubr.f32.mxu0 0.0
        %3974 = vmatmul.mubr.f32.gmra.mrb[0].mxu0 %v3741
        %v3975 = vpop.f32.mrb[0].mxu0
        %v3976 = vadd.f32 0.0, %v3975
        %v3977 = vpop.f32.mrb[0].mxu0
        %3978 = vmatprep.mubr.f32.mxu0 0.0
        %3979 = vmatmul.mubr.f32.gmra.mrb[0].mxu0 %v3744
        %v3980 = vpop.f32.mrb[0].mxu0
        %v3981 = vadd.f32 0.0, %v3980
        %v3982 = vpop.f32.mrb[0].mxu0
        %3983 = vmatprep.mubr.f32.mxu0 0.0
        %3984 = vmatmul.mubr.f32.gmra.mrb[0].mxu0 %v3747
        %v3985 = vpop.f32.mrb[0].mxu0
        %v3986 = vadd.f32 0.0, %v3985
        %v3987 = vpop.f32.mrb[0].mxu0
        %3988 = vmatprep.mubr.f32.mxu0 0.0
        %3989 = vmatmul.mubr.f32.gmra.mrb[0].mxu0 %v3750
        %v3990 = vpop.f32.mrb[0].mxu0
        %v3991 = vadd.f32 0.0, %v3990
        %v3992 = vpop.f32.mrb[0].mxu0
        %3993 = vmatprep.mubr.f32.mxu0 0.0
        %3994 = vmatmul.mubr.f32.gmra.mrb[0].mxu0 %v3753
        %v3995 = vpop.f32.mrb[0].mxu0
        %v3996 = vadd.f32 0.0, %v3995
        %v3997 = vpop.f32.mrb[0].mxu0
        %3998 = vmatprep.mubr.f32.mxu0 0.0
        %3999 = vmatmul.mubr.f32.gmra.mrb[0].mxu0 %v3756
        %v4000 = vpop.f32.mrb[0].mxu0
        %v4001 = vadd.f32 0.0, %v4000
        %v4002 = vpop.f32.mrb[0].mxu0
        %4003 = vmatprep.mubr.f32.mxu0 0.0
        %4004 = vmatmul.mubr.f32.gmra.mrb[0].mxu0 %v3759
        %v4005 = vpop.f32.mrb[0].mxu0
        %v4006 = vadd.f32 0.0, %v4005
        %v4007 = vpop.f32.mrb[0].mxu0
        %4008 = vdwg.mxu0
        %v4009 = vadd.f32 %v3579, %v3831
        %v4010 = vadd.f32 %v3580, %v3836
        %v4011 = vadd.f32 %v3581, %v3841
        %v4012 = vadd.f32 %v3582, %v3846
        %v4013 = vadd.f32 %v3583, %v3851
        %v4014 = vadd.f32 %v3584, %v3856
        %v4015 = vadd.f32 %v3585, %v3861
        %v4016 = vadd.f32 %v3586, %v3866
        %v4017 = vadd.f32 %v3587, %v3871
        %v4018 = vadd.f32 %v3588, %v3876
        %v4019 = vadd.f32 %v3589, %v3881
        %v4020 = vadd.f32 %v3590, %v3886
        %v4021 = vadd.f32 %v3591, %v3891
        %v4022 = vadd.f32 %v3592, %v3896
        %v4023 = vadd.f32 %v3593, %v3901
        %v4024 = vadd.f32 %v3594, %v3906
        %v4025 = vadd.f32 %v3595, %v3911
        %v4026 = vadd.f32 %v3596, %v3916
        %v4027 = vadd.f32 %v3597, %v3921
        %v4028 = vadd.f32 %v3598, %v3926
        %v4029 = vadd.f32 %v3599, %v3931
        %v4030 = vadd.f32 %v3600, %v3936
        %v4031 = vadd.f32 %v3601, %v3941
        %v4032 = vadd.f32 %v3602, %v3946
        %v4033 = vadd.f32 %v3603, %v3951
        %v4034 = vadd.f32 %v3604, %v3956
        %v4035 = vadd.f32 %v3605, %v3961
        %v4036 = vadd.f32 %v3606, %v3966
        %v4037 = vadd.f32 %v3607, %v3971
        %v4038 = vadd.f32 %v3608, %v3976
        %v4039 = vadd.f32 %v3609, %v3981
        %v4040 = vadd.f32 %v3610, %v3986
        %v4041 = vadd.f32 %v3611, %v3991
        %v4042 = vadd.f32 %v3612, %v3996
        %v4043 = vadd.f32 %v3613, %v4001
        %v4044 = vadd.f32 %v3614, %v4006
        %v4045 = vld [vmem:[#allocation2] sm:$0x1]
        %v4047 = vlaneseq
        %v4048 = vshrl.u32 %v4047, 7
        %v4049 = vsub.s32 0, %v4048
        %v4050 = vrot.slane %v4045, %v4049
        %v4052 = vadd.f32 %v4009, %v4050
        %v4053 = vadd.f32 %v4010, %v4050
        %v4054 = vadd.f32 %v4011, %v4050
        %v4055 = vadd.f32 %v4012, %v4050
        %v4056 = vadd.f32 %v4013, %v4050
        %v4057 = vadd.f32 %v4014, %v4050
        %v4058 = vadd.f32 %v4015, %v4050
        %v4059 = vadd.f32 %v4016, %v4050
        %v4060 = vadd.f32 %v4017, %v4050
        %v4061 = vadd.f32 %v4018, %v4050
        %v4062 = vadd.f32 %v4019, %v4050
        %v4063 = vadd.f32 %v4020, %v4050
        %v4064 = vadd.f32 %v4021, %v4050
        %v4065 = vadd.f32 %v4022, %v4050
        %v4066 = vadd.f32 %v4023, %v4050
        %v4067 = vadd.f32 %v4024, %v4050
        %v4068 = vadd.f32 %v4025, %v4050
        %v4069 = vadd.f32 %v4026, %v4050
        %v4070 = vadd.f32 %v4027, %v4050
        %v4071 = vadd.f32 %v4028, %v4050
        %v4072 = vadd.f32 %v4029, %v4050
        %v4073 = vadd.f32 %v4030, %v4050
        %v4074 = vadd.f32 %v4031, %v4050
        %v4075 = vadd.f32 %v4032, %v4050
        %v4076 = vadd.f32 %v4033, %v4050
        %v4077 = vadd.f32 %v4034, %v4050
        %v4078 = vadd.f32 %v4035, %v4050
        %v4079 = vadd.f32 %v4036, %v4050
        %v4080 = vadd.f32 %v4037, %v4050
        %v4081 = vadd.f32 %v4038, %v4050
        %v4082 = vadd.f32 %v4039, %v4050
        %v4083 = vadd.f32 %v4040, %v4050
        %v4084 = vadd.f32 %v4041, %v4050
        %v4085 = vadd.f32 %v4042, %v4050
        %v4086 = vadd.f32 %v4043, %v4050
        %v4087 = vadd.f32 %v4044, %v4050
        %4088 = vst.msk [vmem:[%s244] sm:$0xff] %vm321, %v4052
        %4089 = vst.msk [vmem:[%s244 + $0x8] sm:$0xff] %vm321, %v4053
        %4090 = vst.msk [vmem:[%s244 + $0x10] sm:$0xff] %vm321, %v4054
        %4091 = vst.msk [vmem:[%s244 + $0x18] sm:$0xff] %vm321, %v4055
        %4092 = vst.msk [vmem:[%s244 + $0x20] sm:$0xff] %vm321, %v4056
        %4093 = vst.msk [vmem:[%s244 + $0x28] sm:$0xff] %vm321, %v4057
        %4094 = vst.msk [vmem:[%s244 + $0x30] sm:$0xff] %vm321, %v4058
        %4095 = vst.msk [vmem:[%s244 + $0x38] sm:$0xff] %vm321, %v4059
        %4096 = vst.msk [vmem:[%s244 + $0x40] sm:$0xff] %vm321, %v4060
        %4097 = vst.msk [vmem:[%s244 + $0x48] sm:$0xff] %vm321, %v4061
        %4098 = vst.msk [vmem:[%s244 + $0x50] sm:$0xff] %vm321, %v4062
        %4099 = vst.msk [vmem:[%s244 + $0x58] sm:$0xff] %vm321, %v4063
        %4100 = vst.msk [vmem:[%s244 + $0x60] sm:$0xff] %vm321, %v4064
        %4101 = vst.msk [vmem:[%s244 + $0x68] sm:$0xff] %vm321, %v4065
        %4102 = vst.msk [vmem:[%s244 + $0x70] sm:$0xff] %vm321, %v4066
        %4103 = vst.msk [vmem:[%s244 + $0x78] sm:$0xff] %vm321, %v4067
        %4104 = vst.msk [vmem:[%s244 + $0x80] sm:$0xff] %vm321, %v4068
        %4105 = vst.msk [vmem:[%s244 + $0x88] sm:$0xff] %vm321, %v4069
        %4106 = vst.msk [vmem:[%s244 + $0x90] sm:$0xff] %vm321, %v4070
        %4107 = vst.msk [vmem:[%s244 + $0x98] sm:$0xff] %vm321, %v4071
        %4108 = vst.msk [vmem:[%s244 + $0xa0] sm:$0xff] %vm321, %v4072
        %4109 = vst.msk [vmem:[%s244 + $0xa8] sm:$0xff] %vm321, %v4073
        %4110 = vst.msk [vmem:[%s244 + $0xb0] sm:$0xff] %vm321, %v4074
        %4111 = vst.msk [vmem:[%s244 + $0xb8] sm:$0xff] %vm321, %v4075
        %4112 = vst.msk [vmem:[%s244 + $0xc0] sm:$0xff] %vm321, %v4076
        %4113 = vst.msk [vmem:[%s244 + $0xc8] sm:$0xff] %vm321, %v4077
        %4114 = vst.msk [vmem:[%s244 + $0xd0] sm:$0xff] %vm321, %v4078
        %4115 = vst.msk [vmem:[%s244 + $0xd8] sm:$0xff] %vm321, %v4079
        %4116 = vst.msk [vmem:[%s244 + $0xe0] sm:$0xff] %vm321, %v4080
        %4117 = vst.msk [vmem:[%s244 + $0xe8] sm:$0xff] %vm321, %v4081
        %4118 = vst.msk [vmem:[%s244 + $0xf0] sm:$0xff] %vm321, %v4082
        %4119 = vst.msk [vmem:[%s244 + $0xf8] sm:$0xff] %vm321, %v4083
        %4120 = vst.msk [vmem:[%s244 + $0x100] sm:$0xff] %vm321, %v4084
        %4121 = vst.msk [vmem:[%s244 + $0x108] sm:$0xff] %vm321, %v4085
        %4122 = vst.msk [vmem:[%s244 + $0x110] sm:$0xff] %vm321, %v4086
        %4123 = vst.msk [vmem:[%s244 + $0x118] sm:$0xff] %vm321, %v4087
        %s4124 = scalar_lea.vmem %s244, 288
        %4125 = vst.msk [vmem:[%s4124] sm:$0xff] %vm321, %v4052
        %4126 = vst.msk [vmem:[%s4124 + $0x8] sm:$0xff] %vm321, %v4053
        %4127 = vst.msk [vmem:[%s4124 + $0x10] sm:$0xff] %vm321, %v4054
        %4128 = vst.msk [vmem:[%s4124 + $0x18] sm:$0xff] %vm321, %v4055
        %4129 = vst.msk [vmem:[%s4124 + $0x20] sm:$0xff] %vm321, %v4056
        %4130 = vst.msk [vmem:[%s4124 + $0x28] sm:$0xff] %vm321, %v4057
        %4131 = vst.msk [vmem:[%s4124 + $0x30] sm:$0xff] %vm321, %v4058
        %4132 = vst.msk [vmem:[%s4124 + $0x38] sm:$0xff] %vm321, %v4059
        %4133 = vst.msk [vmem:[%s4124 + $0x40] sm:$0xff] %vm321, %v4060
        %4134 = vst.msk [vmem:[%s4124 + $0x48] sm:$0xff] %vm321, %v4061
        %4135 = vst.msk [vmem:[%s4124 + $0x50] sm:$0xff] %vm321, %v4062
        %4136 = vst.msk [vmem:[%s4124 + $0x58] sm:$0xff] %vm321, %v4063
        %4137 = vst.msk [vmem:[%s4124 + $0x60] sm:$0xff] %vm321, %v4064
        %4138 = vst.msk [vmem:[%s4124 + $0x68] sm:$0xff] %vm321, %v4065
        %4139 = vst.msk [vmem:[%s4124 + $0x70] sm:$0xff] %vm321, %v4066
        %4140 = vst.msk [vmem:[%s4124 + $0x78] sm:$0xff] %vm321, %v4067
        %4141 = vst.msk [vmem:[%s4124 + $0x80] sm:$0xff] %vm321, %v4068
        %4142 = vst.msk [vmem:[%s4124 + $0x88] sm:$0xff] %vm321, %v4069
        %4143 = vst.msk [vmem:[%s4124 + $0x90] sm:$0xff] %vm321, %v4070
        %4144 = vst.msk [vmem:[%s4124 + $0x98] sm:$0xff] %vm321, %v4071
        %4145 = vst.msk [vmem:[%s4124 + $0xa0] sm:$0xff] %vm321, %v4072
        %4146 = vst.msk [vmem:[%s4124 + $0xa8] sm:$0xff] %vm321, %v4073
        %4147 = vst.msk [vmem:[%s4124 + $0xb0] sm:$0xff] %vm321, %v4074
        %4148 = vst.msk [vmem:[%s4124 + $0xb8] sm:$0xff] %vm321, %v4075
        %4149 = vst.msk [vmem:[%s4124 + $0xc0] sm:$0xff] %vm321, %v4076
        %4150 = vst.msk [vmem:[%s4124 + $0xc8] sm:$0xff] %vm321, %v4077
        %4151 = vst.msk [vmem:[%s4124 + $0xd0] sm:$0xff] %vm321, %v4078
        %4152 = vst.msk [vmem:[%s4124 + $0xd8] sm:$0xff] %vm321, %v4079
        %4153 = vst.msk [vmem:[%s4124 + $0xe0] sm:$0xff] %vm321, %v4080
        %4154 = vst.msk [vmem:[%s4124 + $0xe8] sm:$0xff] %vm321, %v4081
        %4155 = vst.msk [vmem:[%s4124 + $0xf0] sm:$0xff] %vm321, %v4082
        %4156 = vst.msk [vmem:[%s4124 + $0xf8] sm:$0xff] %vm321, %v4083
        %4157 = vst.msk [vmem:[%s4124 + $0x100] sm:$0xff] %vm321, %v4084
        %4158 = vst.msk [vmem:[%s4124 + $0x108] sm:$0xff] %vm321, %v4085
        %4159 = vst.msk [vmem:[%s4124 + $0x110] sm:$0xff] %vm321, %v4086
        %4160 = vst.msk [vmem:[%s4124 + $0x118] sm:$0xff] %vm321, %v4087
        %s4161 = scalar_lea.vmem %s244, 576
        %4162 = vst.msk [vmem:[%s4161] sm:$0xff] %vm321, %v4052
        %4163 = vst.msk [vmem:[%s4161 + $0x8] sm:$0xff] %vm321, %v4053
        %4164 = vst.msk [vmem:[%s4161 + $0x10] sm:$0xff] %vm321, %v4054
        %4165 = vst.msk [vmem:[%s4161 + $0x18] sm:$0xff] %vm321, %v4055
        %4166 = vst.msk [vmem:[%s4161 + $0x20] sm:$0xff] %vm321, %v4056
        %4167 = vst.msk [vmem:[%s4161 + $0x28] sm:$0xff] %vm321, %v4057
        %4168 = vst.msk [vmem:[%s4161 + $0x30] sm:$0xff] %vm321, %v4058
        %4169 = vst.msk [vmem:[%s4161 + $0x38] sm:$0xff] %vm321, %v4059
        %4170 = vst.msk [vmem:[%s4161 + $0x40] sm:$0xff] %vm321, %v4060
        %4171 = vst.msk [vmem:[%s4161 + $0x48] sm:$0xff] %vm321, %v4061
        %4172 = vst.msk [vmem:[%s4161 + $0x50] sm:$0xff] %vm321, %v4062
        %4173 = vst.msk [vmem:[%s4161 + $0x58] sm:$0xff] %vm321, %v4063
        %4174 = vst.msk [vmem:[%s4161 + $0x60] sm:$0xff] %vm321, %v4064
        %4175 = vst.msk [vmem:[%s4161 + $0x68] sm:$0xff] %vm321, %v4065
        %4176 = vst.msk [vmem:[%s4161 + $0x70] sm:$0xff] %vm321, %v4066
        %4177 = vst.msk [vmem:[%s4161 + $0x78] sm:$0xff] %vm321, %v4067
        %4178 = vst.msk [vmem:[%s4161 + $0x80] sm:$0xff] %vm321, %v4068
        %4179 = vst.msk [vmem:[%s4161 + $0x88] sm:$0xff] %vm321, %v4069
        %4180 = vst.msk [vmem:[%s4161 + $0x90] sm:$0xff] %vm321, %v4070
        %4181 = vst.msk [vmem:[%s4161 + $0x98] sm:$0xff] %vm321, %v4071
        %4182 = vst.msk [vmem:[%s4161 + $0xa0] sm:$0xff] %vm321, %v4072
        %4183 = vst.msk [vmem:[%s4161 + $0xa8] sm:$0xff] %vm321, %v4073
        %4184 = vst.msk [vmem:[%s4161 + $0xb0] sm:$0xff] %vm321, %v4074
        %4185 = vst.msk [vmem:[%s4161 + $0xb8] sm:$0xff] %vm321, %v4075
        %4186 = vst.msk [vmem:[%s4161 + $0xc0] sm:$0xff] %vm321, %v4076
        %4187 = vst.msk [vmem:[%s4161 + $0xc8] sm:$0xff] %vm321, %v4077
        %4188 = vst.msk [vmem:[%s4161 + $0xd0] sm:$0xff] %vm321, %v4078
        %4189 = vst.msk [vmem:[%s4161 + $0xd8] sm:$0xff] %vm321, %v4079
        %4190 = vst.msk [vmem:[%s4161 + $0xe0] sm:$0xff] %vm321, %v4080
        %4191 = vst.msk [vmem:[%s4161 + $0xe8] sm:$0xff] %vm321, %v4081
        %4192 = vst.msk [vmem:[%s4161 + $0xf0] sm:$0xff] %vm321, %v4082
        %4193 = vst.msk [vmem:[%s4161 + $0xf8] sm:$0xff] %vm321, %v4083
        %4194 = vst.msk [vmem:[%s4161 + $0x100] sm:$0xff] %vm321, %v4084
        %4195 = vst.msk [vmem:[%s4161 + $0x108] sm:$0xff] %vm321, %v4085
        %4196 = vst.msk [vmem:[%s4161 + $0x110] sm:$0xff] %vm321, %v4086
        %4197 = vst.msk [vmem:[%s4161 + $0x118] sm:$0xff] %vm321, %v4087
        %s4198 = scalar_lea.vmem %s244, 864
        %4199 = vst.msk [vmem:[%s4198] sm:$0xff] %vm321, %v4052
        %4200 = vst.msk [vmem:[%s4198 + $0x8] sm:$0xff] %vm321, %v4053
        %4201 = vst.msk [vmem:[%s4198 + $0x10] sm:$0xff] %vm321, %v4054
        %4202 = vst.msk [vmem:[%s4198 + $0x18] sm:$0xff] %vm321, %v4055
        %4203 = vst.msk [vmem:[%s4198 + $0x20] sm:$0xff] %vm321, %v4056
        %4204 = vst.msk [vmem:[%s4198 + $0x28] sm:$0xff] %vm321, %v4057
        %4205 = vst.msk [vmem:[%s4198 + $0x30] sm:$0xff] %vm321, %v4058
        %4206 = vst.msk [vmem:[%s4198 + $0x38] sm:$0xff] %vm321, %v4059
        %4207 = vst.msk [vmem:[%s4198 + $0x40] sm:$0xff] %vm321, %v4060
        %4208 = vst.msk [vmem:[%s4198 + $0x48] sm:$0xff] %vm321, %v4061
        %4209 = vst.msk [vmem:[%s4198 + $0x50] sm:$0xff] %vm321, %v4062
        %4210 = vst.msk [vmem:[%s4198 + $0x58] sm:$0xff] %vm321, %v4063
        %4211 = vst.msk [vmem:[%s4198 + $0x60] sm:$0xff] %vm321, %v4064
        %4212 = vst.msk [vmem:[%s4198 + $0x68] sm:$0xff] %vm321, %v4065
        %4213 = vst.msk [vmem:[%s4198 + $0x70] sm:$0xff] %vm321, %v4066
        %4214 = vst.msk [vmem:[%s4198 + $0x78] sm:$0xff] %vm321, %v4067
        %4215 = vst.msk [vmem:[%s4198 + $0x80] sm:$0xff] %vm321, %v4068
        %4216 = vst.msk [vmem:[%s4198 + $0x88] sm:$0xff] %vm321, %v4069
        %4217 = vst.msk [vmem:[%s4198 + $0x90] sm:$0xff] %vm321, %v4070
        %4218 = vst.msk [vmem:[%s4198 + $0x98] sm:$0xff] %vm321, %v4071
        %4219 = vst.msk [vmem:[%s4198 + $0xa0] sm:$0xff] %vm321, %v4072
        %4220 = vst.msk [vmem:[%s4198 + $0xa8] sm:$0xff] %vm321, %v4073
        %4221 = vst.msk [vmem:[%s4198 + $0xb0] sm:$0xff] %vm321, %v4074
        %4222 = vst.msk [vmem:[%s4198 + $0xb8] sm:$0xff] %vm321, %v4075
        %4223 = vst.msk [vmem:[%s4198 + $0xc0] sm:$0xff] %vm321, %v4076
        %4224 = vst.msk [vmem:[%s4198 + $0xc8] sm:$0xff] %vm321, %v4077
        %4225 = vst.msk [vmem:[%s4198 + $0xd0] sm:$0xff] %vm321, %v4078
        %4226 = vst.msk [vmem:[%s4198 + $0xd8] sm:$0xff] %vm321, %v4079
        %4227 = vst.msk [vmem:[%s4198 + $0xe0] sm:$0xff] %vm321, %v4080
        %4228 = vst.msk [vmem:[%s4198 + $0xe8] sm:$0xff] %vm321, %v4081
        %4229 = vst.msk [vmem:[%s4198 + $0xf0] sm:$0xff] %vm321, %v4082
        %4230 = vst.msk [vmem:[%s4198 + $0xf8] sm:$0xff] %vm321, %v4083
        %4231 = vst.msk [vmem:[%s4198 + $0x100] sm:$0xff] %vm321, %v4084
        %4232 = vst.msk [vmem:[%s4198 + $0x108] sm:$0xff] %vm321, %v4085
        %4233 = vst.msk [vmem:[%s4198 + $0x110] sm:$0xff] %vm321, %v4086
        %4234 = vst.msk [vmem:[%s4198 + $0x118] sm:$0xff] %vm321, %v4087
        %s4235 = smul.u32 36, %s22
        %p4236 = scmp.lt.s32.totalorder %s20, 1
        %s4237 = scalar_select %p4236, %s20, 1
        %p4238 = scmp.lt.s32.totalorder %s4235, 35
        %s4239 = scalar_select %p4238, %s4235, 35
        %p4240 = scmp.lt.s32.totalorder %s21, 0
        %s4241 = scalar_select %p4240, %s21, 0
        %s4242 = sadd.s32 %s4241, %s4239
        %s4243 = smul.addr %s4237, 144
        %s4244 = sadd.s32 %s4242, %s4243
        %s4245 = smul.addr %s4244, 8
        %s4246 = scalar_lea.vmem %s3, %s4245
        // Predicated region
        $region37: #{tpu_custom_call.1} parent=31 // pred_check
          %p4247 = pneg %p134
        $region38: #{tpu_custom_call.1} parent=31 // pred_check_branch
          %4249 = sbr.rel (%p4247) target = $region40
        $region39: #{tpu_custom_call.1} parent=31 // pred_region
          %s4250 = smul.u32 36, %s22
        $region40: #{tpu_custom_call.1} parent=31 // pred_fallthru
          _
      $region32: #{tpu_custom_call.1} parent=5 // pred_fallthru
        _
      %p4251 = scmp.le.s32.totalorder 2, %s10
      // Predicated region
      $region41: #{tpu_custom_call.1} parent=5 // pred_check
        %p4252 = pneg %p4251
      $region42: #{tpu_custom_call.1} parent=5 // pred_check_branch
        %4254 = sbr.rel (%p4252) target = $region44
      $region43: #{tpu_custom_call.1} parent=5 // pred_region
        %s4255 = ssub.s32 %s10, 2
        // Predicated region
        $region45: #{tpu_custom_call.1} parent=43 // pred_check
          %p4256 = pneg %p140
        $region46: #{tpu_custom_call.1} parent=43 // pred_check_branch
          %4258 = sbr.rel (%p4256) target = $region48
        $region47: #{tpu_custom_call.1} parent=43 // pred_region
          %s4259 = smul.u32 36, %s25
          %p4260 = scmp.lt.s32.totalorder %s23, 1
          %s4261 = scalar_select %p4260, %s23, 1
          %p4262 = scmp.lt.s32.totalorder %s4259, 35
          %s4263 = scalar_select %p4262, %s4259, 35
          %p4264 = scmp.lt.s32.totalorder %s24, 0
          %s4265 = scalar_select %p4264, %s24, 0
          %s4266 = sadd.s32 %s4265, %s4263
          %s4267 = smul.addr %s4261, 144
          %s4268 = sadd.s32 %s4266, %s4267
          %s4269 = smul.addr %s4268, 8
          %s4270 = scalar_lea.vmem %s3, %s4269
        $region48: #{tpu_custom_call.1} parent=43 // pred_fallthru
          _
      $region44: #{tpu_custom_call.1} parent=5 // pred_fallthru
        _
    $region6: #{tpu_custom_call.1} parent=1 // loop_footer
      %s14 = sadd.s32 1, %s10
    $region7: #{tpu_custom_call.1} parent=1 // loop_footer_branch
      %9 = sbr.rel target = $region3
    $region8: #{tpu_custom_call.1} parent=1 // loop_exit
      _
    %4271 = vsyncpa [#allocation3], 1
    %s4272 = scalar_lea.sflag [#allocation3], 1
    %4273 = vsyncpa %s4272, 1

// kernel: tpu_custom_call.1
$region0: #{tpu_custom_call.1}
  #allocation0 [shape = 'u32[]', space=smem, size = 0x4, offset = 0x4, fixed_abs, tag = 'smem constant byte address 0x4 - core index']
  #allocation1 [shape = 'u32[144,128]{1,0:T(1,128)}', space=vmem, size = 0x12000, scoped, tag = 'internal scratch']
  %s0 = inlined_call_operand.vmem [shape: f32[2,342,4], index: 0, kind: input, shape index: {}]
  %s1 = inlined_call_operand.vmem [shape: f32[9,4,4], index: 1, kind: input, shape index: {}]
  %s2 = inlined_call_operand.hbm [shape: f32[1,4], index: 2, kind: input, shape index: {}]
  %s3 = inlined_call_operand.vmem [shape: f32[2,2,2,288,4], index: 3, kind: output, shape index: {}]
  %s4 = sld [smem:[#allocation0]]
  $region49: #{tpu_custom_call.1} parent=0
    _
  %s6 = ssub.s32 1, %s4
  %s7 = scalar_select 0, %s6, %s4
  $region1: #{tpu_custom_call.1} parent=0
    #allocation2 [shape = 'u8[512]{0}', space=vmem, size = 0x400, scoped, tag = 'input window, operand 2, single buffered']
    #allocation3 [shape = 's32[2]{0}', space=sflag, size = 0x8, scoped, tag = 'scoped memory for tpu_custom_call.1']
    %8 = vsyncpa [#allocation3], 0
    loop: start=0, step=1, limit=4
    $region2: #{tpu_custom_call.1} parent=1 // loop_pre_header
      _
    $region3: #{tpu_custom_call.1} parent=1 // loop_header
      %s10 = sphi 0, %s14
      %p11 = scmp.ge.s32.totalorder %s10, 4
      %s17 = sphi 0, %s36
      %s18 = sphi 0, %s32
      %s19 = sphi 0, %s28
      %s20 = sphi 0, %s17
      %s21 = sphi 0, %s18
      %s22 = sphi 0, %s19
      %s23 = sphi 0, %s20
      %s24 = sphi 0, %s21
      %s25 = sphi 0, %s22
      %s39 = sphi 0, %s41
      %s42 = sphi 0, %s39
      %s43 = sphi 0, %s42
      %s59 = sphi 0, %s43
      %s65 = sphi 0, %s67
      %s68 = sphi 0, %s65
      %s69 = sphi 0, %s68
      %s85 = sphi 0, %s69
      %s91 = sphi 0, %s93
      %s94 = sphi 0, %s91
      %s95 = sphi 0, %s94
      %s111 = sphi 0, %s95
      %s121 = sphi 0, %s123
      %s124 = sphi 0, %s121
      %s125 = sphi 0, %s124
      %s141 = sphi 0, %s125
    $region4: #{tpu_custom_call.1} parent=1 // loop_header_branch
      %13 = sbr.rel (%p11) target = $region8
    $region5: #{tpu_custom_call.1} parent=1 // loop_body
      %s15 = ssub.s32 %s10, 1
      %s16 = ssub.s32 %s10, 2
      %s26 = sadd.s32 1, %s19
      %p27 = scmp.ge.s32.totalorder %s26, 1
      %s28 = scalar_select %p27, 0, %s26
      %s29 = sadd.s32 1, %s18
      %s30 = scalar_select %p27, %s29, %s18
      %p31 = scmp.ge.s32.totalorder %s30, 1
      %s32 = scalar_select %p31, 0, %s30
      %s33 = sadd.s32 1, %s17
      %s34 = scalar_select %p31, %s33, %s17
      %p35 = scmp.ge.s32.totalorder %s34, 2
      %s36 = scalar_select %p35, 0, %s34
      %s37 = ssub.s32 %s17, %s36
      %p38 = scmp.eq.s32.totalorder %s37, 0
      %s40 = sadd.s32 %s39, 1
      %s41 = scalar_select %p38, %s39, %s40
      %p44 = pneg %p38
      %p45 = scmp.eq.s32.totalorder %s10, 1
      %p46 = por %p44, %p45
      %p47 = scmp.ne.s32.totalorder %s39, %s42
      %p48 = scmp.eq.s32.totalorder %s10, 0
      %p49 = por %p47, %p48
      %p50 = scmp.ne.s32.totalorder %s39, %s42
      %p51 = scmp.eq.s32.totalorder %s15, 1
      %p52 = por %p50, %p51
      %p53 = scmp.ne.s32.totalorder %s42, %s43
      %p54 = scmp.eq.s32.totalorder %s15, 0
      %p55 = por %p53, %p54
      %p56 = scmp.ne.s32.totalorder %s42, %s43
      %p57 = scmp.eq.s32.totalorder %s16, 1
      %p58 = por %p56, %p57
      %p60 = scmp.ne.s32.totalorder %s43, %s59
      %p61 = scmp.eq.s32.totalorder %s16, 0
      %p62 = por %p60, %p61
      %s63 = ssub.s32 %s18, %s32
      %p64 = scmp.eq.s32.totalorder %s63, 0
      %s66 = sadd.s32 %s65, 1
      %s67 = scalar_select %p64, %s65, %s66
      %p70 = pneg %p64
      %p71 = scmp.eq.s32.totalorder %s10, 1
      %p72 = por %p70, %p71
      %p73 = scmp.ne.s32.totalorder %s65, %s68
      %p74 = scmp.eq.s32.totalorder %s10, 0
      %p75 = por %p73, %p74
      %p76 = scmp.ne.s32.totalorder %s65, %s68
      %p77 = scmp.eq.s32.totalorder %s15, 1
      %p78 = por %p76, %p77
      %p79 = scmp.ne.s32.totalorder %s68, %s69
      %p80 = scmp.eq.s32.totalorder %s15, 0
      %p81 = por %p79, %p80
      %p82 = scmp.ne.s32.totalorder %s68, %s69
      %p83 = scmp.eq.s32.totalorder %s16, 1
      %p84 = por %p82, %p83
      %p86 = scmp.ne.s32.totalorder %s69, %s85
      %p87 = scmp.eq.s32.totalorder %s16, 0
      %p88 = por %p86, %p87
      %s89 = ssub.s32 %s18, %s32
      %p90 = scmp.eq.s32.totalorder %s89, 0
      %s92 = sadd.s32 %s91, 1
      %s93 = scalar_select %p90, %s91, %s92
      %p96 = pneg %p90
      %p97 = scmp.eq.s32.totalorder %s10, 1
      %p98 = por %p96, %p97
      %p99 = scmp.ne.s32.totalorder %s91, %s94
      %p100 = scmp.eq.s32.totalorder %s10, 0
      %p101 = por %p99, %p100
      %p102 = scmp.ne.s32.totalorder %s91, %s94
      %p103 = scmp.eq.s32.totalorder %s15, 1
      %p104 = por %p102, %p103
      %p105 = scmp.ne.s32.totalorder %s94, %s95
      %p106 = scmp.eq.s32.totalorder %s15, 0
      %p107 = por %p105, %p106
      %p108 = scmp.ne.s32.totalorder %s94, %s95
      %p109 = scmp.eq.s32.totalorder %s16, 1
      %p110 = por %p108, %p109
      %p112 = scmp.ne.s32.totalorder %s95, %s111
      %p113 = scmp.eq.s32.totalorder %s16, 0
      %p114 = por %p112, %p113
      %s115 = ssub.s32 %s17, %s36
      %s116 = ssub.s32 %s19, %s28
      %s117 = sor.u32 %s115, %s116
      %s118 = ssub.s32 %s18, %s32
      %s119 = sor.u32 %s117, %s118
      %p120 = scmp.eq.s32.totalorder %s119, 0
      %s122 = sadd.s32 %s121, 1
      %s123 = scalar_select %p120, %s121, %s122
      %p126 = pneg %p120
      %p127 = scmp.eq.s32.totalorder %s10, 1
      %p128 = por %p126, %p127
      %p129 = scmp.ne.s32.totalorder %s121, %s124
      %p130 = scmp.eq.s32.totalorder %s10, 0
      %p131 = por %p129, %p130
      %p132 = scmp.ne.s32.totalorder %s121, %s124
      %p133 = scmp.eq.s32.totalorder %s15, 1
      %p134 = por %p132, %p133
      %p135 = scmp.ne.s32.totalorder %s124, %s125
      %p136 = scmp.eq.s32.totalorder %s15, 0
      %p137 = por %p135, %p136
      %p138 = scmp.ne.s32.totalorder %s124, %s125
      %p139 = scmp.eq.s32.totalorder %s16, 1
      %p140 = por %p138, %p139
      %p142 = scmp.ne.s32.totalorder %s125, %s141
      %p143 = scmp.eq.s32.totalorder %s16, 0
      %p144 = por %p142, %p143
      %p145 = scmp.le.s32.totalorder 1, %s10
      %p146 = scmp.lt.s32.totalorder %s10, 3
      %p147 = pnand %p145, %p146
      %p148 = pneg %p147
      // Predicated region
      $region9: #{tpu_custom_call.1} parent=5 // pred_check
        _
      $region10: #{tpu_custom_call.1} parent=5 // pred_check_branch
        %150 = sbr.rel (%p147) target = $region12
      $region11: #{tpu_custom_call.1} parent=5 // pred_region
        %s151 = ssub.s32 %s10, 1
        // Predicated region
        $region13: #{tpu_custom_call.1} parent=11 // pred_check
          %p152 = pneg %p81
        $region14: #{tpu_custom_call.1} parent=11 // pred_check_branch
          %154 = sbr.rel (%p152) target = $region16
        $region15: #{tpu_custom_call.1} parent=11 // pred_region
          %p155 = scmp.lt.s32.totalorder %s21, 0
          %s156 = scalar_select %p155, %s21, 0
          %s157 = smul.addr %s156, 4
          %s158 = scalar_lea.vmem %s1, %s157
        $region16: #{tpu_custom_call.1} parent=11 // pred_fallthru
          _
        // Predicated region
        $region17: #{tpu_custom_call.1} parent=11 // pred_check
          %p159 = pneg %p107
        $region18: #{tpu_custom_call.1} parent=11 // pred_check_branch
          %161 = sbr.rel (%p159) target = $region20
        $region19: #{tpu_custom_call.1} parent=11 // pred_region
          %s163 = ssub.s32 16, 16
          %164 = vsyncadd [#allocation3], %s163
          %s165 = smul.addr %s21, 16
          %s166 = scalar_lea.hbm %s2, %s165
          %s168 = sshll.u32 [#allocation2], 4
          %s169 = int_to_ptr.vmem [resolvable:$true] %s168
          %171 = dma.hbm_to_vmem [thread:$0]  %s166, 16, %s169, [#allocation3]
        $region20: #{tpu_custom_call.1} parent=11 // pred_fallthru
          _
      $region12: #{tpu_custom_call.1} parent=5 // pred_fallthru
        _
      %p172 = scmp.lt.s32.totalorder %s10, 2
      // Predicated region
      $region21: #{tpu_custom_call.1} parent=5 // pred_check
        %p173 = pneg %p172
      $region22: #{tpu_custom_call.1} parent=5 // pred_check_branch
        %175 = sbr.rel (%p173) target = $region24
      $region23: #{tpu_custom_call.1} parent=5 // pred_region
        // Predicated region
        $region25: #{tpu_custom_call.1} parent=23 // pred_check
          %p176 = pneg %p49
        $region26: #{tpu_custom_call.1} parent=23 // pred_check_branch
          %178 = sbr.rel (%p176) target = $region28
        $region27: #{tpu_custom_call.1} parent=23 // pred_region
          %p179 = scmp.lt.s32.totalorder %s17, 1
          %s180 = scalar_select %p179, %s17, 1
          %s181 = smul.addr %s180, 43
          %s182 = smul.addr %s181, 8
          %s183 = scalar_lea.vmem %s0, %s182
        $region28: #{tpu_custom_call.1} parent=23 // pred_fallthru
          _
      $region24: #{tpu_custom_call.1} parent=5 // pred_fallthru
        _
      %p184 = scmp.le.s32.totalorder 1, %s10
      %p185 = scmp.lt.s32.totalorder %s10, 3
      %p186 = pnand %p184, %p185
      %p187 = pneg %p186
      // Predicated region
      $region29: #{tpu_custom_call.1} parent=5 // pred_check
        _
      $region30: #{tpu_custom_call.1} parent=5 // pred_check_branch
        %189 = sbr.rel (%p186) target = $region32
      $region31: #{tpu_custom_call.1} parent=5 // pred_region
        %s190 = ssub.s32 %s10, 1
        // Predicated region
        $region33: #{tpu_custom_call.1} parent=31 // pred_check
          %p191 = pneg %p107
        $region34: #{tpu_custom_call.1} parent=31 // pred_check_branch
          %193 = sbr.rel (%p191) target = $region36
        $region35: #{tpu_custom_call.1} parent=31 // pred_region
          %194 = dma.done [#allocation3], 16
        $region36: #{tpu_custom_call.1} parent=31 // pred_fallthru
          _
        %p195 = scmp.lt.s32.totalorder %s20, 1
        %s196 = scalar_select %p195, %s20, 1
        %s197 = smul.addr %s196, 43
        %s198 = smul.addr %s197, 8
        %s199 = scalar_lea.vmem %s0, %s198
        %p200 = pneg %p55
        %p201 = pneg %p52
        %p202 = scmp.lt.s32.totalorder %s21, 0
        %s203 = scalar_select %p202, %s21, 0
        %s204 = smul.addr %s203, 4
        %s205 = scalar_lea.vmem %s1, %s204
        %p206 = pneg %p81
        %p207 = pneg %p78
        %p208 = pneg %p107
        %p209 = pneg %p104
        %p210 = pneg %p137
        %p211 = pneg %p134
        %s212 = smul.u32 36, %s22
        %p213 = scmp.lt.s32.totalorder %s20, 1
        %s214 = scalar_select %p213, %s20, 1
        %p215 = scmp.lt.s32.totalorder %s212, 35
        %s216 = scalar_select %p215, %s212, 35
        %p217 = scmp.lt.s32.totalorder %s21, 0
        %s218 = scalar_select %p217, %s21, 0
        %s219 = sadd.s32 %s218, %s216
        %s220 = smul.addr %s214, 144
        %s221 = sadd.s32 %s219, %s220
        %s222 = smul.addr %s221, 8
        %s223 = scalar_lea.vmem %s3, %s222
        %p224 = scmp.lt.s32.totalorder %s20, 1
        %s225 = scalar_select %p224, %s20, 1
        %s226 = smul.addr %s225, 43
        %s227 = smul.addr %s226, 8
        %s228 = scalar_lea.vmem %s0, %s227
        %p229 = scmp.lt.s32.totalorder %s21, 0
        %s230 = scalar_select %p229, %s21, 0
        %s231 = smul.addr %s230, 4
        %s232 = scalar_lea.vmem %s1, %s231
        %s233 = smul.u32 36, %s22
        %p234 = scmp.lt.s32.totalorder %s20, 1
        %s235 = scalar_select %p234, %s20, 1
        %p236 = scmp.lt.s32.totalorder %s233, 35
        %s237 = scalar_select %p236, %s233, 35
        %p238 = scmp.lt.s32.totalorder %s21, 0
        %s239 = scalar_select %p238, %s21, 0
        %s240 = sadd.s32 %s239, %s237
        %s241 = smul.addr %s235, 144
        %s242 = sadd.s32 %s240, %s241
        %s243 = smul.addr %s242, 8
        %s244 = scalar_lea.vmem %s3, %s243
        %s245 = smul.u32 36, %s22
        %v246 = vld [vmem:[%s228] sm:$0xff]
        %v247 = vld [vmem:[%s228 + $0x8] sm:$0xff]
        %v248 = vld [vmem:[%s228 + $0x10] sm:$0xff]
        %v249 = vld [vmem:[%s228 + $0x18] sm:$0xff]
        %v250 = vld [vmem:[%s228 + $0x20] sm:$0xff]
        %v251 = vld [vmem:[%s228 + $0x28] sm:$0xff]
        %v252 = vld [vmem:[%s228 + $0x30] sm:$0xff]
        %v253 = vld [vmem:[%s228 + $0x38] sm:$0xff]
        %v254 = vld [vmem:[%s228 + $0x40] sm:$0xff]
        %v255 = vld [vmem:[%s228 + $0x48] sm:$0xff]
        %v256 = vld [vmem:[%s228 + $0x50] sm:$0xff]
        %v257 = vld [vmem:[%s228 + $0x58] sm:$0xff]
        %v258 = vld [vmem:[%s228 + $0x60] sm:$0xff]
        %v259 = vld [vmem:[%s228 + $0x68] sm:$0xff]
        %v260 = vld [vmem:[%s228 + $0x70] sm:$0xff]
        %v261 = vld [vmem:[%s228 + $0x78] sm:$0xff]
        %v262 = vld [vmem:[%s228 + $0x80] sm:$0xff]
        %v263 = vld [vmem:[%s228 + $0x88] sm:$0xff]
        %v264 = vld [vmem:[%s228 + $0x90] sm:$0xff]
        %v265 = vld [vmem:[%s228 + $0x98] sm:$0xff]
        %v266 = vld [vmem:[%s228 + $0xa0] sm:$0xff]
        %v267 = vld [vmem:[%s228 + $0xa8] sm:$0xff]
        %v268 = vld [vmem:[%s228 + $0xb0] sm:$0xff]
        %v269 = vld [vmem:[%s228 + $0xb8] sm:$0xff]
        %v270 = vld [vmem:[%s228 + $0xc0] sm:$0xff]
        %v271 = vld [vmem:[%s228 + $0xc8] sm:$0xff]
        %v272 = vld [vmem:[%s228 + $0xd0] sm:$0xff]
        %v273 = vld [vmem:[%s228 + $0xd8] sm:$0xff]
        %v274 = vld [vmem:[%s228 + $0xe0] sm:$0xff]
        %v275 = vld [vmem:[%s228 + $0xe8] sm:$0xff]
        %v276 = vld [vmem:[%s228 + $0xf0] sm:$0xff]
        %v277 = vld [vmem:[%s228 + $0xf8] sm:$0xff]
        %v278 = vld [vmem:[%s228 + $0x100] sm:$0xff]
        %v279 = vld [vmem:[%s228 + $0x108] sm:$0xff]
        %v280 = vld [vmem:[%s228 + $0x110] sm:$0xff]
        %v281 = vld [vmem:[%s228 + $0x118] sm:$0xff]
        %v282 = vld [vmem:[%s232] sm:$0xf]
        %v283 = vld [vmem:[%s228 + $0x1] sm:$0xff]
        %v284 = vld [vmem:[%s228 + $0x9] sm:$0xff]
        %v285 = vld [vmem:[%s228 + $0x11] sm:$0xff]
        %v286 = vld [vmem:[%s228 + $0x19] sm:$0xff]
        %v287 = vld [vmem:[%s228 + $0x21] sm:$0xff]
        %v288 = vld [vmem:[%s228 + $0x29] sm:$0xff]
        %v289 = vld [vmem:[%s228 + $0x31] sm:$0xff]
        %v290 = vld [vmem:[%s228 + $0x39] sm:$0xff]
        %v291 = vld [vmem:[%s228 + $0x41] sm:$0xff]
        %v292 = vld [vmem:[%s228 + $0x49] sm:$0xff]
        %v293 = vld [vmem:[%s228 + $0x51] sm:$0xff]
        %v294 = vld [vmem:[%s228 + $0x59] sm:$0xff]
        %v295 = vld [vmem:[%s228 + $0x61] sm:$0xff]
        %v296 = vld [vmem:[%s228 + $0x69] sm:$0xff]
        %v297 = vld [vmem:[%s228 + $0x71] sm:$0xff]
        %v298 = vld [vmem:[%s228 + $0x79] sm:$0xff]
        %v299 = vld [vmem:[%s228 + $0x81] sm:$0xff]
        %v300 = vld [vmem:[%s228 + $0x89] sm:$0xff]
        %v301 = vld [vmem:[%s228 + $0x91] sm:$0xff]
        %v302 = vld [vmem:[%s228 + $0x99] sm:$0xff]
        %v303 = vld [vmem:[%s228 + $0xa1] sm:$0xff]
        %v304 = vld [vmem:[%s228 + $0xa9] sm:$0xff]
        %v305 = vld [vmem:[%s228 + $0xb1] sm:$0xff]
        %v306 = vld [vmem:[%s228 + $0xb9] sm:$0xff]
        %v307 = vld [vmem:[%s228 + $0xc1] sm:$0xff]
        %v308 = vld [vmem:[%s228 + $0xc9] sm:$0xff]
        %v309 = vld [vmem:[%s228 + $0xd1] sm:$0xff]
        %v310 = vld [vmem:[%s228 + $0xd9] sm:$0xff]
        %v311 = vld [vmem:[%s228 + $0xe1] sm:$0xff]
        %v312 = vld [vmem:[%s228 + $0xe9] sm:$0xff]
        %v313 = vld [vmem:[%s228 + $0xf1] sm:$0xff]
        %v314 = vld [vmem:[%s228 + $0xf9] sm:$0xff]
        %v315 = vld [vmem:[%s228 + $0x101] sm:$0xff]
        %v316 = vld [vmem:[%s228 + $0x109] sm:$0xff]
        %v317 = vld [vmem:[%s228 + $0x111] sm:$0xff]
        %v318 = vld [vmem:[%s228 + $0x119] sm:$0xff]
        %s319 = scalar_lea.vmem %s232, 4
        %v320 = vld [vmem:[%s319] sm:$0xf]
        %vm321 = vcmask 31744
        %v323 = vsel %vm321, %v283, 0
        %v326 = vsel %vm321, %v284, 0
        %v329 = vsel %vm321, %v285, 0
        %v332 = vsel %vm321, %v286, 0
        %v335 = vsel %vm321, %v287, 0
        %v338 = vsel %vm321, %v288, 0
        %v341 = vsel %vm321, %v289, 0
        %v344 = vsel %vm321, %v290, 0
        %v347 = vsel %vm321, %v291, 0
        %v350 = vsel %vm321, %v292, 0
        %v353 = vsel %vm321, %v293, 0
        %v356 = vsel %vm321, %v294, 0
        %v359 = vsel %vm321, %v295, 0
        %v362 = vsel %vm321, %v296, 0
        %v365 = vsel %vm321, %v297, 0
        %v368 = vsel %vm321, %v298, 0
        %v371 = vsel %vm321, %v299, 0
        %v374 = vsel %vm321, %v300, 0
        %v377 = vsel %vm321, %v301, 0
        %v380 = vsel %vm321, %v302, 0
        %v383 = vsel %vm321, %v303, 0
        %v386 = vsel %vm321, %v304, 0
        %v389 = vsel %vm321, %v305, 0
        %v392 = vsel %vm321, %v306, 0
        %v395 = vsel %vm321, %v307, 0
        %v398 = vsel %vm321, %v308, 0
        %v401 = vsel %vm321, %v309, 0
        %v404 = vsel %vm321, %v310, 0
        %v407 = vsel %vm321, %v311, 0
        %v410 = vsel %vm321, %v312, 0
        %v413 = vsel %vm321, %v313, 0
        %v416 = vsel %vm321, %v314, 0
        %v419 = vsel %vm321, %v315, 0
        %v422 = vsel %vm321, %v316, 0
        %v425 = vsel %vm321, %v317, 0
        %v428 = vsel %vm321, %v318, 0
        %vm430 = vcmask 1043456
        %v432 = vsel %vm430, %v320, 0
        %434 = vmatprep.subr.mxu0 0.0
        %435 = vmatpush1.msra.mxu0 %v432
        %436 = vmatprep.subr.mxu0 0.0
        %437 = vmatpush1.msra.mxu0 0.0
        %438 = vmatprep.subr.mxu0 0.0
        %439 = vmatpush1.msra.mxu0 0.0
        %440 = vmatprep.subr.mxu0 0.0
        %441 = vmatpush1.msra.mxu0 0.0
        %442 = vmatprep.subr.mxu0 0.0
        %443 = vmatpush1.msra.mxu0 0.0
        %444 = vmatprep.subr.mxu0 0.0
        %445 = vmatpush1.msra.mxu0 0.0
        %446 = vmatprep.subr.mxu0 0.0
        %447 = vmatpush1.msra.mxu0 0.0
        %448 = vmatprep.subr.mxu0 0.0
        %449 = vmatpush1.msra.mxu0 0.0
        %450 = vmatprep.subr.mxu0 0.0
        %451 = vmatpush1.msra.mxu0 0.0
        %452 = vmatprep.subr.mxu0 0.0
        %453 = vmatpush1.msra.mxu0 0.0
        %454 = vmatprep.subr.mxu0 0.0
        %455 = vmatpush1.msra.mxu0 0.0
        %456 = vmatprep.subr.mxu0 0.0
        %457 = vmatpush1.msra.mxu0 0.0
        %458 = vmatprep.subr.mxu0 0.0
        %459 = vmatpush1.msra.mxu0 0.0
        %460 = vmatprep.subr.mxu0 0.0
        %461 = vmatpush1.msra.mxu0 0.0
        %462 = vmatprep.subr.mxu0 0.0
        %463 = vmatpush1.msra.mxu0 0.0
        %464 = vmatprep.subr.mxu0 0.0
        %465 = vmatpush1.msra.mxu0 0.0
        %466 = vmatprep.subr.mxu0 0.0
        %467 = vmatpush1.msra.mxu0 0.0
        %468 = vmatprep.subr.mxu0 0.0
        %469 = vmatpush1.msra.mxu0 0.0
        %470 = vmatprep.subr.mxu0 0.0
        %471 = vmatpush1.msra.mxu0 0.0
        %472 = vmatprep.subr.mxu0 0.0
        %473 = vmatpush1.msra.mxu0 0.0
        %474 = vmatprep.subr.mxu0 0.0
        %475 = vmatpush1.msra.mxu0 0.0
        %476 = vmatprep.subr.mxu0 0.0
        %477 = vmatpush1.msra.mxu0 0.0
        %478 = vmatprep.subr.mxu0 0.0
        %479 = vmatpush1.msra.mxu0 0.0
        %480 = vmatprep.subr.mxu0 0.0
        %481 = vmatpush1.msra.mxu0 0.0
        %482 = vmatprep.subr.mxu0 0.0
        %483 = vmatpush1.msra.mxu0 0.0
        %484 = vmatprep.subr.mxu0 0.0
        %485 = vmatpush1.msra.mxu0 0.0
        %486 = vmatprep.subr.mxu0 0.0
        %487 = vmatpush1.msra.mxu0 0.0
        %488 = vmatprep.subr.mxu0 0.0
        %489 = vmatpush1.msra.mxu0 0.0
        %490 = vmatprep.subr.mxu0 0.0
        %491 = vmatpush1.msra.mxu0 0.0
        %492 = vmatprep.subr.mxu0 0.0
        %493 = vmatpush1.msra.mxu0 0.0
        %494 = vmatprep.subr.mxu0 0.0
        %495 = vmatpush1.msra.mxu0 0.0
        %496 = vmatprep.subr.mxu0 0.0
        %497 = vmatpush1.msra.mxu0 0.0
        %498 = vmatprep.mubr.f32.mxu0 0.0
        %499 = vmatmul.mubr.f32.gmra.mrb[0].mxu0 %v323
        %v500 = vpop.f32.mrb[0].mxu0
        %v501 = vadd.f32 0.0, %v500
        %v502 = vpop.f32.mrb[0].mxu0
        %503 = vmatprep.mubr.f32.mxu0 0.0
        %504 = vmatmul.mubr.f32.gmra.mrb[0].mxu0 %v326
        %v505 = vpop.f32.mrb[0].mxu0
        %v506 = vadd.f32 0.0, %v505
        %v507 = vpop.f32.mrb[0].mxu0
        %508 = vmatprep.mubr.f32.mxu0 0.0
        %509 = vmatmul.mubr.f32.gmra.mrb[0].mxu0 %v329
        %v510 = vpop.f32.mrb[0].mxu0
        %v511 = vadd.f32 0.0, %v510
        %v512 = vpop.f32.mrb[0].mxu0
        %513 = vmatprep.mubr.f32.mxu0 0.0
        %514 = vmatmul.mubr.f32.gmra.mrb[0].mxu0 %v332
        %v515 = vpop.f32.mrb[0].mxu0
        %v516 = vadd.f32 0.0, %v515
        %v517 = vpop.f32.mrb[0].mxu0
        %518 = vmatprep.mubr.f32.mxu0 0.0
        %519 = vmatmul.mubr.f32.gmra.mrb[0].mxu0 %v335
        %v520 = vpop.f32.mrb[0].mxu0
        %v521 = vadd.f32 0.0, %v520
        %v522 = vpop.f32.mrb[0].mxu0
        %523 = vmatprep.mubr.f32.mxu0 0.0
        %524 = vmatmul.mubr.f32.gmra.mrb[0].mxu0 %v338
        %v525 = vpop.f32.mrb[0].mxu0
        %v526 = vadd.f32 0.0, %v525
        %v527 = vpop.f32.mrb[0].mxu0
        %528 = vmatprep.mubr.f32.mxu0 0.0
        %529 = vmatmul.mubr.f32.gmra.mrb[0].mxu0 %v341
        %v530 = vpop.f32.mrb[0].mxu0
        %v531 = vadd.f32 0.0, %v530
        %v532 = vpop.f32.mrb[0].mxu0
        %533 = vmatprep.mubr.f32.mxu0 0.0
        %534 = vmatmul.mubr.f32.gmra.mrb[0].mxu0 %v344
        %v535 = vpop.f32.mrb[0].mxu0
        %v536 = vadd.f32 0.0, %v535
        %v537 = vpop.f32.mrb[0].mxu0
        %538 = vmatprep.mubr.f32.mxu0 0.0
        %539 = vmatmul.mubr.f32.gmra.mrb[0].mxu0 %v347
        %v540 = vpop.f32.mrb[0].mxu0
        %v541 = vadd.f32 0.0, %v540
        %v542 = vpop.f32.mrb[0].mxu0
        %543 = vmatprep.mubr.f32.mxu0 0.0
        %544 = vmatmul.mubr.f32.gmra.mrb[0].mxu0 %v350
        %v545 = vpop.f32.mrb[0].mxu0
        %v546 = vadd.f32 0.0, %v545
        %v547 = vpop.f32.mrb[0].mxu0
        %548 = vmatprep.mubr.f32.mxu0 0.0
        %549 = vmatmul.mubr.f32.gmra.mrb[0].mxu0 %v353
        %v550 = vpop.f32.mrb[0].mxu0
        %v551 = vadd.f32 0.0, %v550
        %v552 = vpop.f32.mrb[0].mxu0
        %553 = vmatprep.mubr.f32.mxu0 0.0
        %554 = vmatmul.mubr.f32.gmra.mrb[0].mxu0 %v356
        %v555 = vpop.f32.mrb[0].mxu0
        %v556 = vadd.f32 0.0, %v555
        %v557 = vpop.f32.mrb[0].mxu0
        %558 = vmatprep.mubr.f32.mxu0 0.0
        %559 = vmatmul.mubr.f32.gmra.mrb[0].mxu0 %v359
        %v560 = vpop.f32.mrb[0].mxu0
        %v561 = vadd.f32 0.0, %v560
        %v562 = vpop.f32.mrb[0].mxu0
        %563 = vmatprep.mubr.f32.mxu0 0.0
        %564 = vmatmul.mubr.f32.gmra.mrb[0].mxu0 %v362
        %v565 = vpop.f32.mrb[0].mxu0
        %v566 = vadd.f32 0.0, %v565
        %v567 = vpop.f32.mrb[0].mxu0
        %568 = vmatprep.mubr.f32.mxu0 0.0
        %569 = vmatmul.mubr.f32.gmra.mrb[0].mxu0 %v365
        %v570 = vpop.f32.mrb[0].mxu0
        %v571 = vadd.f32 0.0, %v570
        %v572 = vpop.f32.mrb[0].mxu0
        %573 = vmatprep.mubr.f32.mxu0 0.0
        %574 = vmatmul.mubr.f32.gmra.mrb[0].mxu0 %v368
        %v575 = vpop.f32.mrb[0].mxu0
        %v576 = vadd.f32 0.0, %v575
        %v577 = vpop.f32.mrb[0].mxu0
        %578 = vmatprep.mubr.f32.mxu0 0.0
        %579 = vmatmul.mubr.f32.gmra.mrb[0].mxu0 %v371
        %v580 = vpop.f32.mrb[0].mxu0
        %v581 = vadd.f32 0.0, %v580
        %v582 = vpop.f32.mrb[0].mxu0
        %583 = vmatprep.mubr.f32.mxu0 0.0
        %584 = vmatmul.mubr.f32.gmra.mrb[0].mxu0 %v374
        %v585 = vpop.f32.mrb[0].mxu0
        %v586 = vadd.f32 0.0, %v585
        %v587 = vpop.f32.mrb[0].mxu0
        %588 = vmatprep.mubr.f32.mxu0 0.0
        %589 = vmatmul.mubr.f32.gmra.mrb[0].mxu0 %v377
        %v590 = vpop.f32.mrb[0].mxu0
        %v591 = vadd.f32 0.0, %v590
        %v592 = vpop.f32.mrb[0].mxu0
        %593 = vmatprep.mubr.f32.mxu0 0.0
        %594 = vmatmul.mubr.f32.gmra.mrb[0].mxu0 %v380
        %v595 = vpop.f32.mrb[0].mxu0
        %v596 = vadd.f32 0.0, %v595
        %v597 = vpop.f32.mrb[0].mxu0
        %598 = vmatprep.mubr.f32.mxu0 0.0
        %599 = vmatmul.mubr.f32.gmra.mrb[0].mxu0 %v383
        %v600 = vpop.f32.mrb[0].mxu0
        %v601 = vadd.f32 0.0, %v600
        %v602 = vpop.f32.mrb[0].mxu0
        %603 = vmatprep.mubr.f32.mxu0 0.0
        %604 = vmatmul.mubr.f32.gmra.mrb[0].mxu0 %v386
        %v605 = vpop.f32.mrb[0].mxu0
        %v606 = vadd.f32 0.0, %v605
        %v607 = vpop.f32.mrb[0].mxu0
        %608 = vmatprep.mubr.f32.mxu0 0.0
        %609 = vmatmul.mubr.f32.gmra.mrb[0].mxu0 %v389
        %v610 = vpop.f32.mrb[0].mxu0
        %v611 = vadd.f32 0.0, %v610
        %v612 = vpop.f32.mrb[0].mxu0
        %613 = vmatprep.mubr.f32.mxu0 0.0
        %614 = vmatmul.mubr.f32.gmra.mrb[0].mxu0 %v392
        %v615 = vpop.f32.mrb[0].mxu0
        %v616 = vadd.f32 0.0, %v615
        %v617 = vpop.f32.mrb[0].mxu0
        %618 = vmatprep.mubr.f32.mxu0 0.0
        %619 = vmatmul.mubr.f32.gmra.mrb[0].mxu0 %v395
        %v620 = vpop.f32.mrb[0].mxu0
        %v621 = vadd.f32 0.0, %v620
        %v622 = vpop.f32.mrb[0].mxu0
        %623 = vmatprep.mubr.f32.mxu0 0.0
        %624 = vmatmul.mubr.f32.gmra.mrb[0].mxu0 %v398
        %v625 = vpop.f32.mrb[0].mxu0
        %v626 = vadd.f32 0.0, %v625
        %v627 = vpop.f32.mrb[0].mxu0
        %628 = vmatprep.mubr.f32.mxu0 0.0
        %629 = vmatmul.mubr.f32.gmra.mrb[0].mxu0 %v401
        %v630 = vpop.f32.mrb[0].mxu0
        %v631 = vadd.f32 0.0, %v630
        %v632 = vpop.f32.mrb[0].mxu0
        %633 = vmatprep.mubr.f32.mxu0 0.0
        %634 = vmatmul.mubr.f32.gmra.mrb[0].mxu0 %v404
        %v635 = vpop.f32.mrb[0].mxu0
        %v636 = vadd.f32 0.0, %v635
        %v637 = vpop.f32.mrb[0].mxu0
        %638 = vmatprep.mubr.f32.mxu0 0.0
        %639 = vmatmul.mubr.f32.gmra.mrb[0].mxu0 %v407
        %v640 = vpop.f32.mrb[0].mxu0
        %v641 = vadd.f32 0.0, %v640
        %v642 = vpop.f32.mrb[0].mxu0
        %643 = vmatprep.mubr.f32.mxu0 0.0
        %644 = vmatmul.mubr.f32.gmra.mrb[0].mxu0 %v410
        %v645 = vpop.f32.mrb[0].mxu0
        %v646 = vadd.f32 0.0, %v645
        %v647 = vpop.f32.mrb[0].mxu0
        %648 = vmatprep.mubr.f32.mxu0 0.0
        %649 = vmatmul.mubr.f32.gmra.mrb[0].mxu0 %v413
        %v650 = vpop.f32.mrb[0].mxu0
        %v651 = vadd.f32 0.0, %v650
        %v652 = vpop.f32.mrb[0].mxu0
        %653 = vmatprep.mubr.f32.mxu0 0.0
        %654 = vmatmul.mubr.f32.gmra.mrb[0].mxu0 %v416
        %v655 = vpop.f32.mrb[0].mxu0
        %v656 = vadd.f32 0.0, %v655
        %v657 = vpop.f32.mrb[0].mxu0
        %658 = vmatprep.mubr.f32.mxu0 0.0
        %659 = vmatmul.mubr.f32.gmra.mrb[0].mxu0 %v419
        %v660 = vpop.f32.mrb[0].mxu0
        %v661 = vadd.f32 0.0, %v660
        %v662 = vpop.f32.mrb[0].mxu0
        %663 = vmatprep.mubr.f32.mxu0 0.0
        %664 = vmatmul.mubr.f32.gmra.mrb[0].mxu0 %v422
        %v665 = vpop.f32.mrb[0].mxu0
        %v666 = vadd.f32 0.0, %v665
        %v667 = vpop.f32.mrb[0].mxu0
        %668 = vmatprep.mubr.f32.mxu0 0.0
        %669 = vmatmul.mubr.f32.gmra.mrb[0].mxu0 %v425
        %v670 = vpop.f32.mrb[0].mxu0
        %v671 = vadd.f32 0.0, %v670
        %v672 = vpop.f32.mrb[0].mxu0
        %673 = vmatprep.mubr.f32.mxu0 0.0
        %674 = vmatmul.mubr.f32.gmra.mrb[0].mxu0 %v428
        %v675 = vpop.f32.mrb[0].mxu0
        %v676 = vadd.f32 0.0, %v675
        %v677 = vpop.f32.mrb[0].mxu0
        %678 = vdwg.mxu0
        %v680 = vsel %vm321, %v246, 0
        %v683 = vsel %vm321, %v247, 0
        %v686 = vsel %vm321, %v248, 0
        %v689 = vsel %vm321, %v249, 0
        %v692 = vsel %vm321, %v250, 0
        %v695 = vsel %vm321, %v251, 0
        %v698 = vsel %vm321, %v252, 0
        %v701 = vsel %vm321, %v253, 0
        %v704 = vsel %vm321, %v254, 0
        %v707 = vsel %vm321, %v255, 0
        %v710 = vsel %vm321, %v256, 0
        %v713 = vsel %vm321, %v257, 0
        %v716 = vsel %vm321, %v258, 0
        %v719 = vsel %vm321, %v259, 0
        %v722 = vsel %vm321, %v260, 0
        %v725 = vsel %vm321, %v261, 0
        %v728 = vsel %vm321, %v262, 0
        %v731 = vsel %vm321, %v263, 0
        %v734 = vsel %vm321, %v264, 0
        %v737 = vsel %vm321, %v265, 0
        %v740 = vsel %vm321, %v266, 0
        %v743 = vsel %vm321, %v267, 0
        %v746 = vsel %vm321, %v268, 0
        %v749 = vsel %vm321, %v269, 0
        %v752 = vsel %vm321, %v270, 0
        %v755 = vsel %vm321, %v271, 0
        %v758 = vsel %vm321, %v272, 0
        %v761 = vsel %vm321, %v273, 0
        %v764 = vsel %vm321, %v274, 0
        %v767 = vsel %vm321, %v275, 0
        %v770 = vsel %vm321, %v276, 0
        %v773 = vsel %vm321, %v277, 0
        %v776 = vsel %vm321, %v278, 0
        %v779 = vsel %vm321, %v279, 0
        %v782 = vsel %vm321, %v280, 0
        %v785 = vsel %vm321, %v281, 0
        %v788 = vsel %vm430, %v282, 0
        %790 = vmatprep.subr.mxu0 0.0
        %791 = vmatpush1.msra.mxu0 %v788
        %792 = vmatprep.subr.mxu0 0.0
        %793 = vmatpush1.msra.mxu0 0.0
        %794 = vmatprep.subr.mxu0 0.0
        %795 = vmatpush1.msra.mxu0 0.0
        %796 = vmatprep.subr.mxu0 0.0
        %797 = vmatpush1.msra.mxu0 0.0
        %798 = vmatprep.subr.mxu0 0.0
        %799 = vmatpush1.msra.mxu0 0.0
        %800 = vmatprep.subr.mxu0 0.0
        %801 = vmatpush1.msra.mxu0 0.0
        %802 = vmatprep.subr.mxu0 0.0
        %803 = vmatpush1.msra.mxu0 0.0
        %804 = vmatprep.subr.mxu0 0.0
        %805 = vmatpush1.msra.mxu0 0.0
        %806 = vmatprep.subr.mxu0 0.0
        %807 = vmatpush1.msra.mxu0 0.0
        %808 = vmatprep.subr.mxu0 0.0
        %809 = vmatpush1.msra.mxu0 0.0
        %810 = vmatprep.subr.mxu0 0.0
        %811 = vmatpush1.msra.mxu0 0.0
        %812 = vmatprep.subr.mxu0 0.0
        %813 = vmatpush1.msra.mxu0 0.0
        %814 = vmatprep.subr.mxu0 0.0
        %815 = vmatpush1.msra.mxu0 0.0
        %816 = vmatprep.subr.mxu0 0.0
        %817 = vmatpush1.msra.mxu0 0.0
        %818 = vmatprep.subr.mxu0 0.0
        %819 = vmatpush1.msra.mxu0 0.0
        %820 = vmatprep.subr.mxu0 0.0
        %821 = vmatpush1.msra.mxu0 0.0
        %822 = vmatprep.subr.mxu0 0.0
        %823 = vmatpush1.msra.mxu0 0.0
        %824 = vmatprep.subr.mxu0 0.0
        %825 = vmatpush1.msra.mxu0 0.0
        %826 = vmatprep.subr.mxu0 0.0
        %827 = vmatpush1.msra.mxu0 0.0
        %828 = vmatprep.subr.mxu0 0.0
        %829 = vmatpush1.msra.mxu0 0.0
        %830 = vmatprep.subr.mxu0 0.0
        %831 = vmatpush1.msra.mxu0 0.0
        %832 = vmatprep.subr.mxu0 0.0
        %833 = vmatpush1.msra.mxu0 0.0
        %834 = vmatprep.subr.mxu0 0.0
        %835 = vmatpush1.msra.mxu0 0.0
        %836 = vmatprep.subr.mxu0 0.0
        %837 = vmatpush1.msra.mxu0 0.0
        %838 = vmatprep.subr.mxu0 0.0
        %839 = vmatpush1.msra.mxu0 0.0
        %840 = vmatprep.subr.mxu0 0.0
        %841 = vmatpush1.msra.mxu0 0.0
        %842 = vmatprep.subr.mxu0 0.0
        %843 = vmatpush1.msra.mxu0 0.0
        %844 = vmatprep.subr.mxu0 0.0
        %845 = vmatpush1.msra.mxu0 0.0
        %846 = vmatprep.subr.mxu0 0.0
        %847 = vmatpush1.msra.mxu0 0.0
        %848 = vmatprep.subr.mxu0 0.0
        %849 = vmatpush1.msra.mxu0 0.0
        %850 = vmatprep.subr.mxu0 0.0
        %851 = vmatpush1.msra.mxu0 0.0
        %852 = vmatprep.subr.mxu0 0.0
        %853 = vmatpush1.msra.mxu0 0.0
        %854 = vmatprep.mubr.f32.mxu0 0.0
        %855 = vmatmul.mubr.f32.gmra.mrb[0].mxu0 %v680
        %v856 = vpop.f32.mrb[0].mxu0
        %v857 = vadd.f32 %v501, %v856
        %v858 = vpop.f32.mrb[0].mxu0
        %859 = vmatprep.mubr.f32.mxu0 0.0
        %860 = vmatmul.mubr.f32.gmra.mrb[0].mxu0 %v683
        %v861 = vpop.f32.mrb[0].mxu0
        %v862 = vadd.f32 %v506, %v861
        %v863 = vpop.f32.mrb[0].mxu0
        %864 = vmatprep.mubr.f32.mxu0 0.0
        %865 = vmatmul.mubr.f32.gmra.mrb[0].mxu0 %v686
        %v866 = vpop.f32.mrb[0].mxu0
        %v867 = vadd.f32 %v511, %v866
        %v868 = vpop.f32.mrb[0].mxu0
        %869 = vmatprep.mubr.f32.mxu0 0.0
        %870 = vmatmul.mubr.f32.gmra.mrb[0].mxu0 %v689
        %v871 = vpop.f32.mrb[0].mxu0
        %v872 = vadd.f32 %v516, %v871
        %v873 = vpop.f32.mrb[0].mxu0
        %874 = vmatprep.mubr.f32.mxu0 0.0
        %875 = vmatmul.mubr.f32.gmra.mrb[0].mxu0 %v692
        %v876 = vpop.f32.mrb[0].mxu0
        %v877 = vadd.f32 %v521, %v876
        %v878 = vpop.f32.mrb[0].mxu0
        %879 = vmatprep.mubr.f32.mxu0 0.0
        %880 = vmatmul.mubr.f32.gmra.mrb[0].mxu0 %v695
        %v881 = vpop.f32.mrb[0].mxu0
        %v882 = vadd.f32 %v526, %v881
        %v883 = vpop.f32.mrb[0].mxu0
        %884 = vmatprep.mubr.f32.mxu0 0.0
        %885 = vmatmul.mubr.f32.gmra.mrb[0].mxu0 %v698
        %v886 = vpop.f32.mrb[0].mxu0
        %v887 = vadd.f32 %v531, %v886
        %v888 = vpop.f32.mrb[0].mxu0
        %889 = vmatprep.mubr.f32.mxu0 0.0
        %890 = vmatmul.mubr.f32.gmra.mrb[0].mxu0 %v701
        %v891 = vpop.f32.mrb[0].mxu0
        %v892 = vadd.f32 %v536, %v891
        %v893 = vpop.f32.mrb[0].mxu0
        %894 = vmatprep.mubr.f32.mxu0 0.0
        %895 = vmatmul.mubr.f32.gmra.mrb[0].mxu0 %v704
        %v896 = vpop.f32.mrb[0].mxu0
        %v897 = vadd.f32 %v541, %v896
        %v898 = vpop.f32.mrb[0].mxu0
        %899 = vmatprep.mubr.f32.mxu0 0.0
        %900 = vmatmul.mubr.f32.gmra.mrb[0].mxu0 %v707
        %v901 = vpop.f32.mrb[0].mxu0
        %v902 = vadd.f32 %v546, %v901
        %v903 = vpop.f32.mrb[0].mxu0
        %904 = vmatprep.mubr.f32.mxu0 0.0
        %905 = vmatmul.mubr.f32.gmra.mrb[0].mxu0 %v710
        %v906 = vpop.f32.mrb[0].mxu0
        %v907 = vadd.f32 %v551, %v906
        %v908 = vpop.f32.mrb[0].mxu0
        %909 = vmatprep.mubr.f32.mxu0 0.0
        %910 = vmatmul.mubr.f32.gmra.mrb[0].mxu0 %v713
        %v911 = vpop.f32.mrb[0].mxu0
        %v912 = vadd.f32 %v556, %v911
        %v913 = vpop.f32.mrb[0].mxu0
        %914 = vmatprep.mubr.f32.mxu0 0.0
        %915 = vmatmul.mubr.f32.gmra.mrb[0].mxu0 %v716
        %v916 = vpop.f32.mrb[0].mxu0
        %v917 = vadd.f32 %v561, %v916
        %v918 = vpop.f32.mrb[0].mxu0
        %919 = vmatprep.mubr.f32.mxu0 0.0
        %920 = vmatmul.mubr.f32.gmra.mrb[0].mxu0 %v719
        %v921 = vpop.f32.mrb[0].mxu0
        %v922 = vadd.f32 %v566, %v921
        %v923 = vpop.f32.mrb[0].mxu0
        %924 = vmatprep.mubr.f32.mxu0 0.0
        %925 = vmatmul.mubr.f32.gmra.mrb[0].mxu0 %v722
        %v926 = vpop.f32.mrb[0].mxu0
        %v927 = vadd.f32 %v571, %v926
        %v928 = vpop.f32.mrb[0].mxu0
        %929 = vmatprep.mubr.f32.mxu0 0.0
        %930 = vmatmul.mubr.f32.gmra.mrb[0].mxu0 %v725
        %v931 = vpop.f32.mrb[0].mxu0
        %v932 = vadd.f32 %v576, %v931
        %v933 = vpop.f32.mrb[0].mxu0
        %934 = vmatprep.mubr.f32.mxu0 0.0
        %935 = vmatmul.mubr.f32.gmra.mrb[0].mxu0 %v728
        %v936 = vpop.f32.mrb[0].mxu0
        %v937 = vadd.f32 %v581, %v936
        %v938 = vpop.f32.mrb[0].mxu0
        %939 = vmatprep.mubr.f32.mxu0 0.0
        %940 = vmatmul.mubr.f32.gmra.mrb[0].mxu0 %v731
        %v941 = vpop.f32.mrb[0].mxu0
        %v942 = vadd.f32 %v586, %v941
        %v943 = vpop.f32.mrb[0].mxu0
        %944 = vmatprep.mubr.f32.mxu0 0.0
        %945 = vmatmul.mubr.f32.gmra.mrb[0].mxu0 %v734
        %v946 = vpop.f32.mrb[0].mxu0
        %v947 = vadd.f32 %v591, %v946
        %v948 = vpop.f32.mrb[0].mxu0
        %949 = vmatprep.mubr.f32.mxu0 0.0
        %950 = vmatmul.mubr.f32.gmra.mrb[0].mxu0 %v737
        %v951 = vpop.f32.mrb[0].mxu0
        %v952 = vadd.f32 %v596, %v951
        %v953 = vpop.f32.mrb[0].mxu0
        %954 = vmatprep.mubr.f32.mxu0 0.0
        %955 = vmatmul.mubr.f32.gmra.mrb[0].mxu0 %v740
        %v956 = vpop.f32.mrb[0].mxu0
        %v957 = vadd.f32 %v601, %v956
        %v958 = vpop.f32.mrb[0].mxu0
        %959 = vmatprep.mubr.f32.mxu0 0.0
        %960 = vmatmul.mubr.f32.gmra.mrb[0].mxu0 %v743
        %v961 = vpop.f32.mrb[0].mxu0
        %v962 = vadd.f32 %v606, %v961
        %v963 = vpop.f32.mrb[0].mxu0
        %964 = vmatprep.mubr.f32.mxu0 0.0
        %965 = vmatmul.mubr.f32.gmra.mrb[0].mxu0 %v746
        %v966 = vpop.f32.mrb[0].mxu0
        %v967 = vadd.f32 %v611, %v966
        %v968 = vpop.f32.mrb[0].mxu0
        %969 = vmatprep.mubr.f32.mxu0 0.0
        %970 = vmatmul.mubr.f32.gmra.mrb[0].mxu0 %v749
        %v971 = vpop.f32.mrb[0].mxu0
        %v972 = vadd.f32 %v616, %v971
        %v973 = vpop.f32.mrb[0].mxu0
        %974 = vmatprep.mubr.f32.mxu0 0.0
        %975 = vmatmul.mubr.f32.gmra.mrb[0].mxu0 %v752
        %v976 = vpop.f32.mrb[0].mxu0
        %v977 = vadd.f32 %v621, %v976
        %v978 = vpop.f32.mrb[0].mxu0
        %979 = vmatprep.mubr.f32.mxu0 0.0
        %980 = vmatmul.mubr.f32.gmra.mrb[0].mxu0 %v755
        %v981 = vpop.f32.mrb[0].mxu0
        %v982 = vadd.f32 %v626, %v981
        %v983 = vpop.f32.mrb[0].mxu0
        %984 = vmatprep.mubr.f32.mxu0 0.0
        %985 = vmatmul.mubr.f32.gmra.mrb[0].mxu0 %v758
        %v986 = vpop.f32.mrb[0].mxu0
        %v987 = vadd.f32 %v631, %v986
        %v988 = vpop.f32.mrb[0].mxu0
        %989 = vmatprep.mubr.f32.mxu0 0.0
        %990 = vmatmul.mubr.f32.gmra.mrb[0].mxu0 %v761
        %v991 = vpop.f32.mrb[0].mxu0
        %v992 = vadd.f32 %v636, %v991
        %v993 = vpop.f32.mrb[0].mxu0
        %994 = vmatprep.mubr.f32.mxu0 0.0
        %995 = vmatmul.mubr.f32.gmra.mrb[0].mxu0 %v764
        %v996 = vpop.f32.mrb[0].mxu0
        %v997 = vadd.f32 %v641, %v996
        %v998 = vpop.f32.mrb[0].mxu0
        %999 = vmatprep.mubr.f32.mxu0 0.0
        %1000 = vmatmul.mubr.f32.gmra.mrb[0].mxu0 %v767
        %v1001 = vpop.f32.mrb[0].mxu0
        %v1002 = vadd.f32 %v646, %v1001
        %v1003 = vpop.f32.mrb[0].mxu0
        %1004 = vmatprep.mubr.f32.mxu0 0.0
        %1005 = vmatmul.mubr.f32.gmra.mrb[0].mxu0 %v770
        %v1006 = vpop.f32.mrb[0].mxu0
        %v1007 = vadd.f32 %v651, %v1006
        %v1008 = vpop.f32.mrb[0].mxu0
        %1009 = vmatprep.mubr.f32.mxu0 0.0
        %1010 = vmatmul.mubr.f32.gmra.mrb[0].mxu0 %v773
        %v1011 = vpop.f32.mrb[0].mxu0
        %v1012 = vadd.f32 %v656, %v1011
        %v1013 = vpop.f32.mrb[0].mxu0
        %1014 = vmatprep.mubr.f32.mxu0 0.0
        %1015 = vmatmul.mubr.f32.gmra.mrb[0].mxu0 %v776
        %v1016 = vpop.f32.mrb[0].mxu0
        %v1017 = vadd.f32 %v661, %v1016
        %v1018 = vpop.f32.mrb[0].mxu0
        %1019 = vmatprep.mubr.f32.mxu0 0.0
        %1020 = vmatmul.mubr.f32.gmra.mrb[0].mxu0 %v779
        %v1021 = vpop.f32.mrb[0].mxu0
        %v1022 = vadd.f32 %v666, %v1021
        %v1023 = vpop.f32.mrb[0].mxu0
        %1024 = vmatprep.mubr.f32.mxu0 0.0
        %1025 = vmatmul.mubr.f32.gmra.mrb[0].mxu0 %v782
        %v1026 = vpop.f32.mrb[0].mxu0
        %v1027 = vadd.f32 %v671, %v1026
        %v1028 = vpop.f32.mrb[0].mxu0
        %1029 = vmatprep.mubr.f32.mxu0 0.0
        %1030 = vmatmul.mubr.f32.gmra.mrb[0].mxu0 %v785
        %v1031 = vpop.f32.mrb[0].mxu0
        %v1032 = vadd.f32 %v676, %v1031
        %v1033 = vpop.f32.mrb[0].mxu0
        %1034 = vdwg.mxu0
        %v1035 = vld [vmem:[%s228 + $0x2] sm:$0xff]
        %v1036 = vld [vmem:[%s228 + $0xa] sm:$0xff]
        %v1037 = vld [vmem:[%s228 + $0x12] sm:$0xff]
        %v1038 = vld [vmem:[%s228 + $0x1a] sm:$0xff]
        %v1039 = vld [vmem:[%s228 + $0x22] sm:$0xff]
        %v1040 = vld [vmem:[%s228 + $0x2a] sm:$0xff]
        %v1041 = vld [vmem:[%s228 + $0x32] sm:$0xff]
        %v1042 = vld [vmem:[%s228 + $0x3a] sm:$0xff]
        %v1043 = vld [vmem:[%s228 + $0x42] sm:$0xff]
        %v1044 = vld [vmem:[%s228 + $0x4a] sm:$0xff]
        %v1045 = vld [vmem:[%s228 + $0x52] sm:$0xff]
        %v1046 = vld [vmem:[%s228 + $0x5a] sm:$0xff]
        %v1047 = vld [vmem:[%s228 + $0x62] sm:$0xff]
        %v1048 = vld [vmem:[%s228 + $0x6a] sm:$0xff]
        %v1049 = vld [vmem:[%s228 + $0x72] sm:$0xff]
        %v1050 = vld [vmem:[%s228 + $0x7a] sm:$0xff]
        %v1051 = vld [vmem:[%s228 + $0x82] sm:$0xff]
        %v1052 = vld [vmem:[%s228 + $0x8a] sm:$0xff]
        %v1053 = vld [vmem:[%s228 + $0x92] sm:$0xff]
        %v1054 = vld [vmem:[%s228 + $0x9a] sm:$0xff]
        %v1055 = vld [vmem:[%s228 + $0xa2] sm:$0xff]
        %v1056 = vld [vmem:[%s228 + $0xaa] sm:$0xff]
        %v1057 = vld [vmem:[%s228 + $0xb2] sm:$0xff]
        %v1058 = vld [vmem:[%s228 + $0xba] sm:$0xff]
        %v1059 = vld [vmem:[%s228 + $0xc2] sm:$0xff]
        %v1060 = vld [vmem:[%s228 + $0xca] sm:$0xff]
        %v1061 = vld [vmem:[%s228 + $0xd2] sm:$0xff]
        %v1062 = vld [vmem:[%s228 + $0xda] sm:$0xff]
        %v1063 = vld [vmem:[%s228 + $0xe2] sm:$0xff]
        %v1064 = vld [vmem:[%s228 + $0xea] sm:$0xff]
        %v1065 = vld [vmem:[%s228 + $0xf2] sm:$0xff]
        %v1066 = vld [vmem:[%s228 + $0xfa] sm:$0xff]
        %v1067 = vld [vmem:[%s228 + $0x102] sm:$0xff]
        %v1068 = vld [vmem:[%s228 + $0x10a] sm:$0xff]
        %v1069 = vld [vmem:[%s228 + $0x112] sm:$0xff]
        %v1070 = vld [vmem:[%s228 + $0x11a] sm:$0xff]
        %s1071 = scalar_lea.vmem %s232, 8
        %v1072 = vld [vmem:[%s1071] sm:$0xf]
        %v1074 = vsel %vm321, %v1035, 0
        %v1077 = vsel %vm321, %v1036, 0
        %v1080 = vsel %vm321, %v1037, 0
        %v1083 = vsel %vm321, %v1038, 0
        %v1086 = vsel %vm321, %v1039, 0
        %v1089 = vsel %vm321, %v1040, 0
        %v1092 = vsel %vm321, %v1041, 0
        %v1095 = vsel %vm321, %v1042, 0
        %v1098 = vsel %vm321, %v1043, 0
        %v1101 = vsel %vm321, %v1044, 0
        %v1104 = vsel %vm321, %v1045, 0
        %v1107 = vsel %vm321, %v1046, 0
        %v1110 = vsel %vm321, %v1047, 0
        %v1113 = vsel %vm321, %v1048, 0
        %v1116 = vsel %vm321, %v1049, 0
        %v1119 = vsel %vm321, %v1050, 0
        %v1122 = vsel %vm321, %v1051, 0
        %v1125 = vsel %vm321, %v1052, 0
        %v1128 = vsel %vm321, %v1053, 0
        %v1131 = vsel %vm321, %v1054, 0
        %v1134 = vsel %vm321, %v1055, 0
        %v1137 = vsel %vm321, %v1056, 0
        %v1140 = vsel %vm321, %v1057, 0
        %v1143 = vsel %vm321, %v1058, 0
        %v1146 = vsel %vm321, %v1059, 0
        %v1149 = vsel %vm321, %v1060, 0
        %v1152 = vsel %vm321, %v1061, 0
        %v1155 = vsel %vm321, %v1062, 0
        %v1158 = vsel %vm321, %v1063, 0
        %v1161 = vsel %vm321, %v1064, 0
        %v1164 = vsel %vm321, %v1065, 0
        %v1167 = vsel %vm321, %v1066, 0
        %v1170 = vsel %vm321, %v1067, 0
        %v1173 = vsel %vm321, %v1068, 0
        %v1176 = vsel %vm321, %v1069, 0
        %v1179 = vsel %vm321, %v1070, 0
        %v1182 = vsel %vm430, %v1072, 0
        %1184 = vmatprep.subr.mxu0 0.0
        %1185 = vmatpush1.msra.mxu0 %v1182
        %1186 = vmatprep.subr.mxu0 0.0
        %1187 = vmatpush1.msra.mxu0 0.0
        %1188 = vmatprep.subr.mxu0 0.0
        %1189 = vmatpush1.msra.mxu0 0.0
        %1190 = vmatprep.subr.mxu0 0.0
        %1191 = vmatpush1.msra.mxu0 0.0
        %1192 = vmatprep.subr.mxu0 0.0
        %1193 = vmatpush1.msra.mxu0 0.0
        %1194 = vmatprep.subr.mxu0 0.0
        %1195 = vmatpush1.msra.mxu0 0.0
        %1196 = vmatprep.subr.mxu0 0.0
        %1197 = vmatpush1.msra.mxu0 0.0
        %1198 = vmatprep.subr.mxu0 0.0
        %1199 = vmatpush1.msra.mxu0 0.0
        %1200 = vmatprep.subr.mxu0 0.0
        %1201 = vmatpush1.msra.mxu0 0.0
        %1202 = vmatprep.subr.mxu0 0.0
        %1203 = vmatpush1.msra.mxu0 0.0
        %1204 = vmatprep.subr.mxu0 0.0
        %1205 = vmatpush1.msra.mxu0 0.0
        %1206 = vmatprep.subr.mxu0 0.0
        %1207 = vmatpush1.msra.mxu0 0.0
        %1208 = vmatprep.subr.mxu0 0.0
        %1209 = vmatpush1.msra.mxu0 0.0
        %1210 = vmatprep.subr.mxu0 0.0
        %1211 = vmatpush1.msra.mxu0 0.0
        %1212 = vmatprep.subr.mxu0 0.0
        %1213 = vmatpush1.msra.mxu0 0.0
        %1214 = vmatprep.subr.mxu0 0.0
        %1215 = vmatpush1.msra.mxu0 0.0
        %1216 = vmatprep.subr.mxu0 0.0
        %1217 = vmatpush1.msra.mxu0 0.0
        %1218 = vmatprep.subr.mxu0 0.0
        %1219 = vmatpush1.msra.mxu0 0.0
        %1220 = vmatprep.subr.mxu0 0.0
        %1221 = vmatpush1.msra.mxu0 0.0
        %1222 = vmatprep.subr.mxu0 0.0
        %1223 = vmatpush1.msra.mxu0 0.0
        %1224 = vmatprep.subr.mxu0 0.0
        %1225 = vmatpush1.msra.mxu0 0.0
        %1226 = vmatprep.subr.mxu0 0.0
        %1227 = vmatpush1.msra.mxu0 0.0
        %1228 = vmatprep.subr.mxu0 0.0
        %1229 = vmatpush1.msra.mxu0 0.0
        %1230 = vmatprep.subr.mxu0 0.0
        %1231 = vmatpush1.msra.mxu0 0.0
        %1232 = vmatprep.subr.mxu0 0.0
        %1233 = vmatpush1.msra.mxu0 0.0
        %1234 = vmatprep.subr.mxu0 0.0
        %1235 = vmatpush1.msra.mxu0 0.0
        %1236 = vmatprep.subr.mxu0 0.0
        %1237 = vmatpush1.msra.mxu0 0.0
        %1238 = vmatprep.subr.mxu0 0.0
        %1239 = vmatpush1.msra.mxu0 0.0
        %1240 = vmatprep.subr.mxu0 0.0
        %1241 = vmatpush1.msra.mxu0 0.0
        %1242 = vmatprep.subr.mxu0 0.0
        %1243 = vmatpush1.msra.mxu0 0.0
        %1244 = vmatprep.subr.mxu0 0.0
        %1245 = vmatpush1.msra.mxu0 0.0
        %1246 = vmatprep.subr.mxu0 0.0
        %1247 = vmatpush1.msra.mxu0 0.0
        %1248 = vmatprep.mubr.f32.mxu0 0.0
        %1249 = vmatmul.mubr.f32.gmra.mrb[0].mxu0 %v1074
        %v1250 = vpop.f32.mrb[0].mxu0
        %v1251 = vadd.f32 0.0, %v1250
        %v1252 = vpop.f32.mrb[0].mxu0
        %1253 = vmatprep.mubr.f32.mxu0 0.0
        %1254 = vmatmul.mubr.f32.gmra.mrb[0].mxu0 %v1077
        %v1255 = vpop.f32.mrb[0].mxu0
        %v1256 = vadd.f32 0.0, %v1255
        %v1257 = vpop.f32.mrb[0].mxu0
        %1258 = vmatprep.mubr.f32.mxu0 0.0
        %1259 = vmatmul.mubr.f32.gmra.mrb[0].mxu0 %v1080
        %v1260 = vpop.f32.mrb[0].mxu0
        %v1261 = vadd.f32 0.0, %v1260
        %v1262 = vpop.f32.mrb[0].mxu0
        %1263 = vmatprep.mubr.f32.mxu0 0.0
        %1264 = vmatmul.mubr.f32.gmra.mrb[0].mxu0 %v1083
        %v1265 = vpop.f32.mrb[0].mxu0
        %v1266 = vadd.f32 0.0, %v1265
        %v1267 = vpop.f32.mrb[0].mxu0
        %1268 = vmatprep.mubr.f32.mxu0 0.0
        %1269 = vmatmul.mubr.f32.gmra.mrb[0].mxu0 %v1086
        %v1270 = vpop.f32.mrb[0].mxu0
        %v1271 = vadd.f32 0.0, %v1270
        %v1272 = vpop.f32.mrb[0].mxu0
        %1273 = vmatprep.mubr.f32.mxu0 0.0
        %1274 = vmatmul.mubr.f32.gmra.mrb[0].mxu0 %v1089
        %v1275 = vpop.f32.mrb[0].mxu0
        %v1276 = vadd.f32 0.0, %v1275
        %v1277 = vpop.f32.mrb[0].mxu0
        %1278 = vmatprep.mubr.f32.mxu0 0.0
        %1279 = vmatmul.mubr.f32.gmra.mrb[0].mxu0 %v1092
        %v1280 = vpop.f32.mrb[0].mxu0
        %v1281 = vadd.f32 0.0, %v1280
        %v1282 = vpop.f32.mrb[0].mxu0
        %1283 = vmatprep.mubr.f32.mxu0 0.0
        %1284 = vmatmul.mubr.f32.gmra.mrb[0].mxu0 %v1095
        %v1285 = vpop.f32.mrb[0].mxu0
        %v1286 = vadd.f32 0.0, %v1285
        %v1287 = vpop.f32.mrb[0].mxu0
        %1288 = vmatprep.mubr.f32.mxu0 0.0
        %1289 = vmatmul.mubr.f32.gmra.mrb[0].mxu0 %v1098
        %v1290 = vpop.f32.mrb[0].mxu0
        %v1291 = vadd.f32 0.0, %v1290
        %v1292 = vpop.f32.mrb[0].mxu0
        %1293 = vmatprep.mubr.f32.mxu0 0.0
        %1294 = vmatmul.mubr.f32.gmra.mrb[0].mxu0 %v1101
        %v1295 = vpop.f32.mrb[0].mxu0
        %v1296 = vadd.f32 0.0, %v1295
        %v1297 = vpop.f32.mrb[0].mxu0
        %1298 = vmatprep.mubr.f32.mxu0 0.0
        %1299 = vmatmul.mubr.f32.gmra.mrb[0].mxu0 %v1104
        %v1300 = vpop.f32.mrb[0].mxu0
        %v1301 = vadd.f32 0.0, %v1300
        %v1302 = vpop.f32.mrb[0].mxu0
        %1303 = vmatprep.mubr.f32.mxu0 0.0
        %1304 = vmatmul.mubr.f32.gmra.mrb[0].mxu0 %v1107
        %v1305 = vpop.f32.mrb[0].mxu0
        %v1306 = vadd.f32 0.0, %v1305
        %v1307 = vpop.f32.mrb[0].mxu0
        %1308 = vmatprep.mubr.f32.mxu0 0.0
        %1309 = vmatmul.mubr.f32.gmra.mrb[0].mxu0 %v1110
        %v1310 = vpop.f32.mrb[0].mxu0
        %v1311 = vadd.f32 0.0, %v1310
        %v1312 = vpop.f32.mrb[0].mxu0
        %1313 = vmatprep.mubr.f32.mxu0 0.0
        %1314 = vmatmul.mubr.f32.gmra.mrb[0].mxu0 %v1113
        %v1315 = vpop.f32.mrb[0].mxu0
        %v1316 = vadd.f32 0.0, %v1315
        %v1317 = vpop.f32.mrb[0].mxu0
        %1318 = vmatprep.mubr.f32.mxu0 0.0
        %1319 = vmatmul.mubr.f32.gmra.mrb[0].mxu0 %v1116
        %v1320 = vpop.f32.mrb[0].mxu0
        %v1321 = vadd.f32 0.0, %v1320
        %v1322 = vpop.f32.mrb[0].mxu0
        %1323 = vmatprep.mubr.f32.mxu0 0.0
        %1324 = vmatmul.mubr.f32.gmra.mrb[0].mxu0 %v1119
        %v1325 = vpop.f32.mrb[0].mxu0
        %v1326 = vadd.f32 0.0, %v1325
        %v1327 = vpop.f32.mrb[0].mxu0
        %1328 = vmatprep.mubr.f32.mxu0 0.0
        %1329 = vmatmul.mubr.f32.gmra.mrb[0].mxu0 %v1122
        %v1330 = vpop.f32.mrb[0].mxu0
        %v1331 = vadd.f32 0.0, %v1330
        %v1332 = vpop.f32.mrb[0].mxu0
        %1333 = vmatprep.mubr.f32.mxu0 0.0
        %1334 = vmatmul.mubr.f32.gmra.mrb[0].mxu0 %v1125
        %v1335 = vpop.f32.mrb[0].mxu0
        %v1336 = vadd.f32 0.0, %v1335
        %v1337 = vpop.f32.mrb[0].mxu0
        %1338 = vmatprep.mubr.f32.mxu0 0.0
        %1339 = vmatmul.mubr.f32.gmra.mrb[0].mxu0 %v1128
        %v1340 = vpop.f32.mrb[0].mxu0
        %v1341 = vadd.f32 0.0, %v1340
        %v1342 = vpop.f32.mrb[0].mxu0
        %1343 = vmatprep.mubr.f32.mxu0 0.0
        %1344 = vmatmul.mubr.f32.gmra.mrb[0].mxu0 %v1131
        %v1345 = vpop.f32.mrb[0].mxu0
        %v1346 = vadd.f32 0.0, %v1345
        %v1347 = vpop.f32.mrb[0].mxu0
        %1348 = vmatprep.mubr.f32.mxu0 0.0
        %1349 = vmatmul.mubr.f32.gmra.mrb[0].mxu0 %v1134
        %v1350 = vpop.f32.mrb[0].mxu0
        %v1351 = vadd.f32 0.0, %v1350
        %v1352 = vpop.f32.mrb[0].mxu0
        %1353 = vmatprep.mubr.f32.mxu0 0.0
        %1354 = vmatmul.mubr.f32.gmra.mrb[0].mxu0 %v1137
        %v1355 = vpop.f32.mrb[0].mxu0
        %v1356 = vadd.f32 0.0, %v1355
        %v1357 = vpop.f32.mrb[0].mxu0
        %1358 = vmatprep.mubr.f32.mxu0 0.0
        %1359 = vmatmul.mubr.f32.gmra.mrb[0].mxu0 %v1140
        %v1360 = vpop.f32.mrb[0].mxu0
        %v1361 = vadd.f32 0.0, %v1360
        %v1362 = vpop.f32.mrb[0].mxu0
        %1363 = vmatprep.mubr.f32.mxu0 0.0
        %1364 = vmatmul.mubr.f32.gmra.mrb[0].mxu0 %v1143
        %v1365 = vpop.f32.mrb[0].mxu0
        %v1366 = vadd.f32 0.0, %v1365
        %v1367 = vpop.f32.mrb[0].mxu0
        %1368 = vmatprep.mubr.f32.mxu0 0.0
        %1369 = vmatmul.mubr.f32.gmra.mrb[0].mxu0 %v1146
        %v1370 = vpop.f32.mrb[0].mxu0
        %v1371 = vadd.f32 0.0, %v1370
        %v1372 = vpop.f32.mrb[0].mxu0
        %1373 = vmatprep.mubr.f32.mxu0 0.0
        %1374 = vmatmul.mubr.f32.gmra.mrb[0].mxu0 %v1149
        %v1375 = vpop.f32.mrb[0].mxu0
        %v1376 = vadd.f32 0.0, %v1375
        %v1377 = vpop.f32.mrb[0].mxu0
        %1378 = vmatprep.mubr.f32.mxu0 0.0
        %1379 = vmatmul.mubr.f32.gmra.mrb[0].mxu0 %v1152
        %v1380 = vpop.f32.mrb[0].mxu0
        %v1381 = vadd.f32 0.0, %v1380
        %v1382 = vpop.f32.mrb[0].mxu0
        %1383 = vmatprep.mubr.f32.mxu0 0.0
        %1384 = vmatmul.mubr.f32.gmra.mrb[0].mxu0 %v1155
        %v1385 = vpop.f32.mrb[0].mxu0
        %v1386 = vadd.f32 0.0, %v1385
        %v1387 = vpop.f32.mrb[0].mxu0
        %1388 = vmatprep.mubr.f32.mxu0 0.0
        %1389 = vmatmul.mubr.f32.gmra.mrb[0].mxu0 %v1158
        %v1390 = vpop.f32.mrb[0].mxu0
        %v1391 = vadd.f32 0.0, %v1390
        %v1392 = vpop.f32.mrb[0].mxu0
        %1393 = vmatprep.mubr.f32.mxu0 0.0
        %1394 = vmatmul.mubr.f32.gmra.mrb[0].mxu0 %v1161
        %v1395 = vpop.f32.mrb[0].mxu0
        %v1396 = vadd.f32 0.0, %v1395
        %v1397 = vpop.f32.mrb[0].mxu0
        %1398 = vmatprep.mubr.f32.mxu0 0.0
        %1399 = vmatmul.mubr.f32.gmra.mrb[0].mxu0 %v1164
        %v1400 = vpop.f32.mrb[0].mxu0
        %v1401 = vadd.f32 0.0, %v1400
        %v1402 = vpop.f32.mrb[0].mxu0
        %1403 = vmatprep.mubr.f32.mxu0 0.0
        %1404 = vmatmul.mubr.f32.gmra.mrb[0].mxu0 %v1167
        %v1405 = vpop.f32.mrb[0].mxu0
        %v1406 = vadd.f32 0.0, %v1405
        %v1407 = vpop.f32.mrb[0].mxu0
        %1408 = vmatprep.mubr.f32.mxu0 0.0
        %1409 = vmatmul.mubr.f32.gmra.mrb[0].mxu0 %v1170
        %v1410 = vpop.f32.mrb[0].mxu0
        %v1411 = vadd.f32 0.0, %v1410
        %v1412 = vpop.f32.mrb[0].mxu0
        %1413 = vmatprep.mubr.f32.mxu0 0.0
        %1414 = vmatmul.mubr.f32.gmra.mrb[0].mxu0 %v1173
        %v1415 = vpop.f32.mrb[0].mxu0
        %v1416 = vadd.f32 0.0, %v1415
        %v1417 = vpop.f32.mrb[0].mxu0
        %1418 = vmatprep.mubr.f32.mxu0 0.0
        %1419 = vmatmul.mubr.f32.gmra.mrb[0].mxu0 %v1176
        %v1420 = vpop.f32.mrb[0].mxu0
        %v1421 = vadd.f32 0.0, %v1420
        %v1422 = vpop.f32.mrb[0].mxu0
        %1423 = vmatprep.mubr.f32.mxu0 0.0
        %1424 = vmatmul.mubr.f32.gmra.mrb[0].mxu0 %v1179
        %v1425 = vpop.f32.mrb[0].mxu0
        %v1426 = vadd.f32 0.0, %v1425
        %v1427 = vpop.f32.mrb[0].mxu0
        %1428 = vdwg.mxu0
        %v1429 = vadd.f32 %v857, %v1251
        %v1430 = vadd.f32 %v862, %v1256
        %v1431 = vadd.f32 %v867, %v1261
        %v1432 = vadd.f32 %v872, %v1266
        %v1433 = vadd.f32 %v877, %v1271
        %v1434 = vadd.f32 %v882, %v1276
        %v1435 = vadd.f32 %v887, %v1281
        %v1436 = vadd.f32 %v892, %v1286
        %v1437 = vadd.f32 %v897, %v1291
        %v1438 = vadd.f32 %v902, %v1296
        %v1439 = vadd.f32 %v907, %v1301
        %v1440 = vadd.f32 %v912, %v1306
        %v1441 = vadd.f32 %v917, %v1311
        %v1442 = vadd.f32 %v922, %v1316
        %v1443 = vadd.f32 %v927, %v1321
        %v1444 = vadd.f32 %v932, %v1326
        %v1445 = vadd.f32 %v937, %v1331
        %v1446 = vadd.f32 %v942, %v1336
        %v1447 = vadd.f32 %v947, %v1341
        %v1448 = vadd.f32 %v952, %v1346
        %v1449 = vadd.f32 %v957, %v1351
        %v1450 = vadd.f32 %v962, %v1356
        %v1451 = vadd.f32 %v967, %v1361
        %v1452 = vadd.f32 %v972, %v1366
        %v1453 = vadd.f32 %v977, %v1371
        %v1454 = vadd.f32 %v982, %v1376
        %v1455 = vadd.f32 %v987, %v1381
        %v1456 = vadd.f32 %v992, %v1386
        %v1457 = vadd.f32 %v997, %v1391
        %v1458 = vadd.f32 %v1002, %v1396
        %v1459 = vadd.f32 %v1007, %v1401
        %v1460 = vadd.f32 %v1012, %v1406
        %v1461 = vadd.f32 %v1017, %v1411
        %v1462 = vadd.f32 %v1022, %v1416
        %v1463 = vadd.f32 %v1027, %v1421
        %v1464 = vadd.f32 %v1032, %v1426
        %v1465 = vld [vmem:[%s228 + $0x12] sm:$0xff]
        %v1466 = vld [vmem:[%s228 + $0x1a] sm:$0xff]
        %v1467 = vld [vmem:[%s228 + $0x22] sm:$0xff]
        %v1468 = vld [vmem:[%s228 + $0x2a] sm:$0xff]
        %v1469 = vld [vmem:[%s228 + $0x32] sm:$0xff]
        %v1470 = vld [vmem:[%s228 + $0x3a] sm:$0xff]
        %v1471 = vld [vmem:[%s228 + $0x42] sm:$0xff]
        %v1472 = vld [vmem:[%s228 + $0x4a] sm:$0xff]
        %v1473 = vld [vmem:[%s228 + $0x52] sm:$0xff]
        %v1474 = vld [vmem:[%s228 + $0x5a] sm:$0xff]
        %v1475 = vld [vmem:[%s228 + $0x62] sm:$0xff]
        %v1476 = vld [vmem:[%s228 + $0x6a] sm:$0xff]
        %v1477 = vld [vmem:[%s228 + $0x72] sm:$0xff]
        %v1478 = vld [vmem:[%s228 + $0x7a] sm:$0xff]
        %v1479 = vld [vmem:[%s228 + $0x82] sm:$0xff]
        %v1480 = vld [vmem:[%s228 + $0x8a] sm:$0xff]
        %v1481 = vld [vmem:[%s228 + $0x92] sm:$0xff]
        %v1482 = vld [vmem:[%s228 + $0x9a] sm:$0xff]
        %v1483 = vld [vmem:[%s228 + $0xa2] sm:$0xff]
        %v1484 = vld [vmem:[%s228 + $0xaa] sm:$0xff]
        %v1485 = vld [vmem:[%s228 + $0xb2] sm:$0xff]
        %v1486 = vld [vmem:[%s228 + $0xba] sm:$0xff]
        %v1487 = vld [vmem:[%s228 + $0xc2] sm:$0xff]
        %v1488 = vld [vmem:[%s228 + $0xca] sm:$0xff]
        %v1489 = vld [vmem:[%s228 + $0xd2] sm:$0xff]
        %v1490 = vld [vmem:[%s228 + $0xda] sm:$0xff]
        %v1491 = vld [vmem:[%s228 + $0xe2] sm:$0xff]
        %v1492 = vld [vmem:[%s228 + $0xea] sm:$0xff]
        %v1493 = vld [vmem:[%s228 + $0xf2] sm:$0xff]
        %v1494 = vld [vmem:[%s228 + $0xfa] sm:$0xff]
        %v1495 = vld [vmem:[%s228 + $0x102] sm:$0xff]
        %v1496 = vld [vmem:[%s228 + $0x10a] sm:$0xff]
        %v1497 = vld [vmem:[%s228 + $0x112] sm:$0xff]
        %v1498 = vld [vmem:[%s228 + $0x11a] sm:$0xff]
        %v1499 = vld [vmem:[%s228 + $0x122] sm:$0xff]
        %v1500 = vld [vmem:[%s228 + $0x12a] sm:$0xff]
        %s1501 = scalar_lea.vmem %s232, 12
        %v1502 = vld [vmem:[%s1501] sm:$0xf]
        %v1504 = vsel %vm321, %v1465, 0
        %v1507 = vsel %vm321, %v1466, 0
        %v1510 = vsel %vm321, %v1467, 0
        %v1513 = vsel %vm321, %v1468, 0
        %v1516 = vsel %vm321, %v1469, 0
        %v1519 = vsel %vm321, %v1470, 0
        %v1522 = vsel %vm321, %v1471, 0
        %v1525 = vsel %vm321, %v1472, 0
        %v1528 = vsel %vm321, %v1473, 0
        %v1531 = vsel %vm321, %v1474, 0
        %v1534 = vsel %vm321, %v1475, 0
        %v1537 = vsel %vm321, %v1476, 0
        %v1540 = vsel %vm321, %v1477, 0
        %v1543 = vsel %vm321, %v1478, 0
        %v1546 = vsel %vm321, %v1479, 0
        %v1549 = vsel %vm321, %v1480, 0
        %v1552 = vsel %vm321, %v1481, 0
        %v1555 = vsel %vm321, %v1482, 0
        %v1558 = vsel %vm321, %v1483, 0
        %v1561 = vsel %vm321, %v1484, 0
        %v1564 = vsel %vm321, %v1485, 0
        %v1567 = vsel %vm321, %v1486, 0
        %v1570 = vsel %vm321, %v1487, 0
        %v1573 = vsel %vm321, %v1488, 0
        %v1576 = vsel %vm321, %v1489, 0
        %v1579 = vsel %vm321, %v1490, 0
        %v1582 = vsel %vm321, %v1491, 0
        %v1585 = vsel %vm321, %v1492, 0
        %v1588 = vsel %vm321, %v1493, 0
        %v1591 = vsel %vm321, %v1494, 0
        %v1594 = vsel %vm321, %v1495, 0
        %v1597 = vsel %vm321, %v1496, 0
        %v1600 = vsel %vm321, %v1497, 0
        %v1603 = vsel %vm321, %v1498, 0
        %v1606 = vsel %vm321, %v1499, 0
        %v1609 = vsel %vm321, %v1500, 0
        %v1612 = vsel %vm430, %v1502, 0
        %1614 = vmatprep.subr.mxu0 0.0
        %1615 = vmatpush1.msra.mxu0 %v1612
        %1616 = vmatprep.subr.mxu0 0.0
        %1617 = vmatpush1.msra.mxu0 0.0
        %1618 = vmatprep.subr.mxu0 0.0
        %1619 = vmatpush1.msra.mxu0 0.0
        %1620 = vmatprep.subr.mxu0 0.0
        %1621 = vmatpush1.msra.mxu0 0.0
        %1622 = vmatprep.subr.mxu0 0.0
        %1623 = vmatpush1.msra.mxu0 0.0
        %1624 = vmatprep.subr.mxu0 0.0
        %1625 = vmatpush1.msra.mxu0 0.0
        %1626 = vmatprep.subr.mxu0 0.0
        %1627 = vmatpush1.msra.mxu0 0.0
        %1628 = vmatprep.subr.mxu0 0.0
        %1629 = vmatpush1.msra.mxu0 0.0
        %1630 = vmatprep.subr.mxu0 0.0
        %1631 = vmatpush1.msra.mxu0 0.0
        %1632 = vmatprep.subr.mxu0 0.0
        %1633 = vmatpush1.msra.mxu0 0.0
        %1634 = vmatprep.subr.mxu0 0.0
        %1635 = vmatpush1.msra.mxu0 0.0
        %1636 = vmatprep.subr.mxu0 0.0
        %1637 = vmatpush1.msra.mxu0 0.0
        %1638 = vmatprep.subr.mxu0 0.0
        %1639 = vmatpush1.msra.mxu0 0.0
        %1640 = vmatprep.subr.mxu0 0.0
        %1641 = vmatpush1.msra.mxu0 0.0
        %1642 = vmatprep.subr.mxu0 0.0
        %1643 = vmatpush1.msra.mxu0 0.0
        %1644 = vmatprep.subr.mxu0 0.0
        %1645 = vmatpush1.msra.mxu0 0.0
        %1646 = vmatprep.subr.mxu0 0.0
        %1647 = vmatpush1.msra.mxu0 0.0
        %1648 = vmatprep.subr.mxu0 0.0
        %1649 = vmatpush1.msra.mxu0 0.0
        %1650 = vmatprep.subr.mxu0 0.0
        %1651 = vmatpush1.msra.mxu0 0.0
        %1652 = vmatprep.subr.mxu0 0.0
        %1653 = vmatpush1.msra.mxu0 0.0
        %1654 = vmatprep.subr.mxu0 0.0
        %1655 = vmatpush1.msra.mxu0 0.0
        %1656 = vmatprep.subr.mxu0 0.0
        %1657 = vmatpush1.msra.mxu0 0.0
        %1658 = vmatprep.subr.mxu0 0.0
        %1659 = vmatpush1.msra.mxu0 0.0
        %1660 = vmatprep.subr.mxu0 0.0
        %1661 = vmatpush1.msra.mxu0 0.0
        %1662 = vmatprep.subr.mxu0 0.0
        %1663 = vmatpush1.msra.mxu0 0.0
        %1664 = vmatprep.subr.mxu0 0.0
        %1665 = vmatpush1.msra.mxu0 0.0
        %1666 = vmatprep.subr.mxu0 0.0
        %1667 = vmatpush1.msra.mxu0 0.0
        %1668 = vmatprep.subr.mxu0 0.0
        %1669 = vmatpush1.msra.mxu0 0.0
        %1670 = vmatprep.subr.mxu0 0.0
        %1671 = vmatpush1.msra.mxu0 0.0
        %1672 = vmatprep.subr.mxu0 0.0
        %1673 = vmatpush1.msra.mxu0 0.0
        %1674 = vmatprep.subr.mxu0 0.0
        %1675 = vmatpush1.msra.mxu0 0.0
        %1676 = vmatprep.subr.mxu0 0.0
        %1677 = vmatpush1.msra.mxu0 0.0
        %1678 = vmatprep.mubr.f32.mxu0 0.0
        %1679 = vmatmul.mubr.f32.gmra.mrb[0].mxu0 %v1504
        %v1680 = vpop.f32.mrb[0].mxu0
        %v1681 = vadd.f32 0.0, %v1680
        %v1682 = vpop.f32.mrb[0].mxu0
        %1683 = vmatprep.mubr.f32.mxu0 0.0
        %1684 = vmatmul.mubr.f32.gmra.mrb[0].mxu0 %v1507
        %v1685 = vpop.f32.mrb[0].mxu0
        %v1686 = vadd.f32 0.0, %v1685
        %v1687 = vpop.f32.mrb[0].mxu0
        %1688 = vmatprep.mubr.f32.mxu0 0.0
        %1689 = vmatmul.mubr.f32.gmra.mrb[0].mxu0 %v1510
        %v1690 = vpop.f32.mrb[0].mxu0
        %v1691 = vadd.f32 0.0, %v1690
        %v1692 = vpop.f32.mrb[0].mxu0
        %1693 = vmatprep.mubr.f32.mxu0 0.0
        %1694 = vmatmul.mubr.f32.gmra.mrb[0].mxu0 %v1513
        %v1695 = vpop.f32.mrb[0].mxu0
        %v1696 = vadd.f32 0.0, %v1695
        %v1697 = vpop.f32.mrb[0].mxu0
        %1698 = vmatprep.mubr.f32.mxu0 0.0
        %1699 = vmatmul.mubr.f32.gmra.mrb[0].mxu0 %v1516
        %v1700 = vpop.f32.mrb[0].mxu0
        %v1701 = vadd.f32 0.0, %v1700
        %v1702 = vpop.f32.mrb[0].mxu0
        %1703 = vmatprep.mubr.f32.mxu0 0.0
        %1704 = vmatmul.mubr.f32.gmra.mrb[0].mxu0 %v1519
        %v1705 = vpop.f32.mrb[0].mxu0
        %v1706 = vadd.f32 0.0, %v1705
        %v1707 = vpop.f32.mrb[0].mxu0
        %1708 = vmatprep.mubr.f32.mxu0 0.0
        %1709 = vmatmul.mubr.f32.gmra.mrb[0].mxu0 %v1522
        %v1710 = vpop.f32.mrb[0].mxu0
        %v1711 = vadd.f32 0.0, %v1710
        %v1712 = vpop.f32.mrb[0].mxu0
        %1713 = vmatprep.mubr.f32.mxu0 0.0
        %1714 = vmatmul.mubr.f32.gmra.mrb[0].mxu0 %v1525
        %v1715 = vpop.f32.mrb[0].mxu0
        %v1716 = vadd.f32 0.0, %v1715
        %v1717 = vpop.f32.mrb[0].mxu0
        %1718 = vmatprep.mubr.f32.mxu0 0.0
        %1719 = vmatmul.mubr.f32.gmra.mrb[0].mxu0 %v1528
        %v1720 = vpop.f32.mrb[0].mxu0
        %v1721 = vadd.f32 0.0, %v1720
        %v1722 = vpop.f32.mrb[0].mxu0
        %1723 = vmatprep.mubr.f32.mxu0 0.0
        %1724 = vmatmul.mubr.f32.gmra.mrb[0].mxu0 %v1531
        %v1725 = vpop.f32.mrb[0].mxu0
        %v1726 = vadd.f32 0.0, %v1725
        %v1727 = vpop.f32.mrb[0].mxu0
        %1728 = vmatprep.mubr.f32.mxu0 0.0
        %1729 = vmatmul.mubr.f32.gmra.mrb[0].mxu0 %v1534
        %v1730 = vpop.f32.mrb[0].mxu0
        %v1731 = vadd.f32 0.0, %v1730
        %v1732 = vpop.f32.mrb[0].mxu0
        %1733 = vmatprep.mubr.f32.mxu0 0.0
        %1734 = vmatmul.mubr.f32.gmra.mrb[0].mxu0 %v1537
        %v1735 = vpop.f32.mrb[0].mxu0
        %v1736 = vadd.f32 0.0, %v1735
        %v1737 = vpop.f32.mrb[0].mxu0
        %1738 = vmatprep.mubr.f32.mxu0 0.0
        %1739 = vmatmul.mubr.f32.gmra.mrb[0].mxu0 %v1540
        %v1740 = vpop.f32.mrb[0].mxu0
        %v1741 = vadd.f32 0.0, %v1740
        %v1742 = vpop.f32.mrb[0].mxu0
        %1743 = vmatprep.mubr.f32.mxu0 0.0
        %1744 = vmatmul.mubr.f32.gmra.mrb[0].mxu0 %v1543
        %v1745 = vpop.f32.mrb[0].mxu0
        %v1746 = vadd.f32 0.0, %v1745
        %v1747 = vpop.f32.mrb[0].mxu0
        %1748 = vmatprep.mubr.f32.mxu0 0.0
        %1749 = vmatmul.mubr.f32.gmra.mrb[0].mxu0 %v1546
        %v1750 = vpop.f32.mrb[0].mxu0
        %v1751 = vadd.f32 0.0, %v1750
        %v1752 = vpop.f32.mrb[0].mxu0
        %1753 = vmatprep.mubr.f32.mxu0 0.0
        %1754 = vmatmul.mubr.f32.gmra.mrb[0].mxu0 %v1549
        %v1755 = vpop.f32.mrb[0].mxu0
        %v1756 = vadd.f32 0.0, %v1755
        %v1757 = vpop.f32.mrb[0].mxu0
        %1758 = vmatprep.mubr.f32.mxu0 0.0
        %1759 = vmatmul.mubr.f32.gmra.mrb[0].mxu0 %v1552
        %v1760 = vpop.f32.mrb[0].mxu0
        %v1761 = vadd.f32 0.0, %v1760
        %v1762 = vpop.f32.mrb[0].mxu0
        %1763 = vmatprep.mubr.f32.mxu0 0.0
        %1764 = vmatmul.mubr.f32.gmra.mrb[0].mxu0 %v1555
        %v1765 = vpop.f32.mrb[0].mxu0
        %v1766 = vadd.f32 0.0, %v1765
        %v1767 = vpop.f32.mrb[0].mxu0
        %1768 = vmatprep.mubr.f32.mxu0 0.0
        %1769 = vmatmul.mubr.f32.gmra.mrb[0].mxu0 %v1558
        %v1770 = vpop.f32.mrb[0].mxu0
        %v1771 = vadd.f32 0.0, %v1770
        %v1772 = vpop.f32.mrb[0].mxu0
        %1773 = vmatprep.mubr.f32.mxu0 0.0
        %1774 = vmatmul.mubr.f32.gmra.mrb[0].mxu0 %v1561
        %v1775 = vpop.f32.mrb[0].mxu0
        %v1776 = vadd.f32 0.0, %v1775
        %v1777 = vpop.f32.mrb[0].mxu0
        %1778 = vmatprep.mubr.f32.mxu0 0.0
        %1779 = vmatmul.mubr.f32.gmra.mrb[0].mxu0 %v1564
        %v1780 = vpop.f32.mrb[0].mxu0
        %v1781 = vadd.f32 0.0, %v1780
        %v1782 = vpop.f32.mrb[0].mxu0
        %1783 = vmatprep.mubr.f32.mxu0 0.0
        %1784 = vmatmul.mubr.f32.gmra.mrb[0].mxu0 %v1567
        %v1785 = vpop.f32.mrb[0].mxu0
        %v1786 = vadd.f32 0.0, %v1785
        %v1787 = vpop.f32.mrb[0].mxu0
        %1788 = vmatprep.mubr.f32.mxu0 0.0
        %1789 = vmatmul.mubr.f32.gmra.mrb[0].mxu0 %v1570
        %v1790 = vpop.f32.mrb[0].mxu0
        %v1791 = vadd.f32 0.0, %v1790
        %v1792 = vpop.f32.mrb[0].mxu0
        %1793 = vmatprep.mubr.f32.mxu0 0.0
        %1794 = vmatmul.mubr.f32.gmra.mrb[0].mxu0 %v1573
        %v1795 = vpop.f32.mrb[0].mxu0
        %v1796 = vadd.f32 0.0, %v1795
        %v1797 = vpop.f32.mrb[0].mxu0
        %1798 = vmatprep.mubr.f32.mxu0 0.0
        %1799 = vmatmul.mubr.f32.gmra.mrb[0].mxu0 %v1576
        %v1800 = vpop.f32.mrb[0].mxu0
        %v1801 = vadd.f32 0.0, %v1800
        %v1802 = vpop.f32.mrb[0].mxu0
        %1803 = vmatprep.mubr.f32.mxu0 0.0
        %1804 = vmatmul.mubr.f32.gmra.mrb[0].mxu0 %v1579
        %v1805 = vpop.f32.mrb[0].mxu0
        %v1806 = vadd.f32 0.0, %v1805
        %v1807 = vpop.f32.mrb[0].mxu0
        %1808 = vmatprep.mubr.f32.mxu0 0.0
        %1809 = vmatmul.mubr.f32.gmra.mrb[0].mxu0 %v1582
        %v1810 = vpop.f32.mrb[0].mxu0
        %v1811 = vadd.f32 0.0, %v1810
        %v1812 = vpop.f32.mrb[0].mxu0
        %1813 = vmatprep.mubr.f32.mxu0 0.0
        %1814 = vmatmul.mubr.f32.gmra.mrb[0].mxu0 %v1585
        %v1815 = vpop.f32.mrb[0].mxu0
        %v1816 = vadd.f32 0.0, %v1815
        %v1817 = vpop.f32.mrb[0].mxu0
        %1818 = vmatprep.mubr.f32.mxu0 0.0
        %1819 = vmatmul.mubr.f32.gmra.mrb[0].mxu0 %v1588
        %v1820 = vpop.f32.mrb[0].mxu0
        %v1821 = vadd.f32 0.0, %v1820
        %v1822 = vpop.f32.mrb[0].mxu0
        %1823 = vmatprep.mubr.f32.mxu0 0.0
        %1824 = vmatmul.mubr.f32.gmra.mrb[0].mxu0 %v1591
        %v1825 = vpop.f32.mrb[0].mxu0
        %v1826 = vadd.f32 0.0, %v1825
        %v1827 = vpop.f32.mrb[0].mxu0
        %1828 = vmatprep.mubr.f32.mxu0 0.0
        %1829 = vmatmul.mubr.f32.gmra.mrb[0].mxu0 %v1594
        %v1830 = vpop.f32.mrb[0].mxu0
        %v1831 = vadd.f32 0.0, %v1830
        %v1832 = vpop.f32.mrb[0].mxu0
        %1833 = vmatprep.mubr.f32.mxu0 0.0
        %1834 = vmatmul.mubr.f32.gmra.mrb[0].mxu0 %v1597
        %v1835 = vpop.f32.mrb[0].mxu0
        %v1836 = vadd.f32 0.0, %v1835
        %v1837 = vpop.f32.mrb[0].mxu0
        %1838 = vmatprep.mubr.f32.mxu0 0.0
        %1839 = vmatmul.mubr.f32.gmra.mrb[0].mxu0 %v1600
        %v1840 = vpop.f32.mrb[0].mxu0
        %v1841 = vadd.f32 0.0, %v1840
        %v1842 = vpop.f32.mrb[0].mxu0
        %1843 = vmatprep.mubr.f32.mxu0 0.0
        %1844 = vmatmul.mubr.f32.gmra.mrb[0].mxu0 %v1603
        %v1845 = vpop.f32.mrb[0].mxu0
        %v1846 = vadd.f32 0.0, %v1845
        %v1847 = vpop.f32.mrb[0].mxu0
        %1848 = vmatprep.mubr.f32.mxu0 0.0
        %1849 = vmatmul.mubr.f32.gmra.mrb[0].mxu0 %v1606
        %v1850 = vpop.f32.mrb[0].mxu0
        %v1851 = vadd.f32 0.0, %v1850
        %v1852 = vpop.f32.mrb[0].mxu0
        %1853 = vmatprep.mubr.f32.mxu0 0.0
        %1854 = vmatmul.mubr.f32.gmra.mrb[0].mxu0 %v1609
        %v1855 = vpop.f32.mrb[0].mxu0
        %v1856 = vadd.f32 0.0, %v1855
        %v1857 = vpop.f32.mrb[0].mxu0
        %1858 = vdwg.mxu0
        %v1859 = vadd.f32 %v1429, %v1681
        %v1860 = vadd.f32 %v1430, %v1686
        %v1861 = vadd.f32 %v1431, %v1691
        %v1862 = vadd.f32 %v1432, %v1696
        %v1863 = vadd.f32 %v1433, %v1701
        %v1864 = vadd.f32 %v1434, %v1706
        %v1865 = vadd.f32 %v1435, %v1711
        %v1866 = vadd.f32 %v1436, %v1716
        %v1867 = vadd.f32 %v1437, %v1721
        %v1868 = vadd.f32 %v1438, %v1726
        %v1869 = vadd.f32 %v1439, %v1731
        %v1870 = vadd.f32 %v1440, %v1736
        %v1871 = vadd.f32 %v1441, %v1741
        %v1872 = vadd.f32 %v1442, %v1746
        %v1873 = vadd.f32 %v1443, %v1751
        %v1874 = vadd.f32 %v1444, %v1756
        %v1875 = vadd.f32 %v1445, %v1761
        %v1876 = vadd.f32 %v1446, %v1766
        %v1877 = vadd.f32 %v1447, %v1771
        %v1878 = vadd.f32 %v1448, %v1776
        %v1879 = vadd.f32 %v1449, %v1781
        %v1880 = vadd.f32 %v1450, %v1786
        %v1881 = vadd.f32 %v1451, %v1791
        %v1882 = vadd.f32 %v1452, %v1796
        %v1883 = vadd.f32 %v1453, %v1801
        %v1884 = vadd.f32 %v1454, %v1806
        %v1885 = vadd.f32 %v1455, %v1811
        %v1886 = vadd.f32 %v1456, %v1816
        %v1887 = vadd.f32 %v1457, %v1821
        %v1888 = vadd.f32 %v1458, %v1826
        %v1889 = vadd.f32 %v1459, %v1831
        %v1890 = vadd.f32 %v1460, %v1836
        %v1891 = vadd.f32 %v1461, %v1841
        %v1892 = vadd.f32 %v1462, %v1846
        %v1893 = vadd.f32 %v1463, %v1851
        %v1894 = vadd.f32 %v1464, %v1856
        %v1895 = vld [vmem:[%s228 + $0x13] sm:$0xff]
        %v1896 = vld [vmem:[%s228 + $0x1b] sm:$0xff]
        %v1897 = vld [vmem:[%s228 + $0x23] sm:$0xff]
        %v1898 = vld [vmem:[%s228 + $0x2b] sm:$0xff]
        %v1899 = vld [vmem:[%s228 + $0x33] sm:$0xff]
        %v1900 = vld [vmem:[%s228 + $0x3b] sm:$0xff]
        %v1901 = vld [vmem:[%s228 + $0x43] sm:$0xff]
        %v1902 = vld [vmem:[%s228 + $0x4b] sm:$0xff]
        %v1903 = vld [vmem:[%s228 + $0x53] sm:$0xff]
        %v1904 = vld [vmem:[%s228 + $0x5b] sm:$0xff]
        %v1905 = vld [vmem:[%s228 + $0x63] sm:$0xff]
        %v1906 = vld [vmem:[%s228 + $0x6b] sm:$0xff]
        %v1907 = vld [vmem:[%s228 + $0x73] sm:$0xff]
        %v1908 = vld [vmem:[%s228 + $0x7b] sm:$0xff]
        %v1909 = vld [vmem:[%s228 + $0x83] sm:$0xff]
        %v1910 = vld [vmem:[%s228 + $0x8b] sm:$0xff]
        %v1911 = vld [vmem:[%s228 + $0x93] sm:$0xff]
        %v1912 = vld [vmem:[%s228 + $0x9b] sm:$0xff]
        %v1913 = vld [vmem:[%s228 + $0xa3] sm:$0xff]
        %v1914 = vld [vmem:[%s228 + $0xab] sm:$0xff]
        %v1915 = vld [vmem:[%s228 + $0xb3] sm:$0xff]
        %v1916 = vld [vmem:[%s228 + $0xbb] sm:$0xff]
        %v1917 = vld [vmem:[%s228 + $0xc3] sm:$0xff]
        %v1918 = vld [vmem:[%s228 + $0xcb] sm:$0xff]
        %v1919 = vld [vmem:[%s228 + $0xd3] sm:$0xff]
        %v1920 = vld [vmem:[%s228 + $0xdb] sm:$0xff]
        %v1921 = vld [vmem:[%s228 + $0xe3] sm:$0xff]
        %v1922 = vld [vmem:[%s228 + $0xeb] sm:$0xff]
        %v1923 = vld [vmem:[%s228 + $0xf3] sm:$0xff]
        %v1924 = vld [vmem:[%s228 + $0xfb] sm:$0xff]
        %v1925 = vld [vmem:[%s228 + $0x103] sm:$0xff]
        %v1926 = vld [vmem:[%s228 + $0x10b] sm:$0xff]
        %v1927 = vld [vmem:[%s228 + $0x113] sm:$0xff]
        %v1928 = vld [vmem:[%s228 + $0x11b] sm:$0xff]
        %v1929 = vld [vmem:[%s228 + $0x123] sm:$0xff]
        %v1930 = vld [vmem:[%s228 + $0x12b] sm:$0xff]
        %s1931 = scalar_lea.vmem %s232, 16
        %v1932 = vld [vmem:[%s1931] sm:$0xf]
        %v1934 = vsel %vm321, %v1895, 0
        %v1937 = vsel %vm321, %v1896, 0
        %v1940 = vsel %vm321, %v1897, 0
        %v1943 = vsel %vm321, %v1898, 0
        %v1946 = vsel %vm321, %v1899, 0
        %v1949 = vsel %vm321, %v1900, 0
        %v1952 = vsel %vm321, %v1901, 0
        %v1955 = vsel %vm321, %v1902, 0
        %v1958 = vsel %vm321, %v1903, 0
        %v1961 = vsel %vm321, %v1904, 0
        %v1964 = vsel %vm321, %v1905, 0
        %v1967 = vsel %vm321, %v1906, 0
        %v1970 = vsel %vm321, %v1907, 0
        %v1973 = vsel %vm321, %v1908, 0
        %v1976 = vsel %vm321, %v1909, 0
        %v1979 = vsel %vm321, %v1910, 0
        %v1982 = vsel %vm321, %v1911, 0
        %v1985 = vsel %vm321, %v1912, 0
        %v1988 = vsel %vm321, %v1913, 0
        %v1991 = vsel %vm321, %v1914, 0
        %v1994 = vsel %vm321, %v1915, 0
        %v1997 = vsel %vm321, %v1916, 0
        %v2000 = vsel %vm321, %v1917, 0
        %v2003 = vsel %vm321, %v1918, 0
        %v2006 = vsel %vm321, %v1919, 0
        %v2009 = vsel %vm321, %v1920, 0
        %v2012 = vsel %vm321, %v1921, 0
        %v2015 = vsel %vm321, %v1922, 0
        %v2018 = vsel %vm321, %v1923, 0
        %v2021 = vsel %vm321, %v1924, 0
        %v2024 = vsel %vm321, %v1925, 0
        %v2027 = vsel %vm321, %v1926, 0
        %v2030 = vsel %vm321, %v1927, 0
        %v2033 = vsel %vm321, %v1928, 0
        %v2036 = vsel %vm321, %v1929, 0
        %v2039 = vsel %vm321, %v1930, 0
        %v2042 = vsel %vm430, %v1932, 0
        %2044 = vmatprep.subr.mxu0 0.0
        %2045 = vmatpush1.msra.mxu0 %v2042
        %2046 = vmatprep.subr.mxu0 0.0
        %2047 = vmatpush1.msra.mxu0 0.0
        %2048 = vmatprep.subr.mxu0 0.0
        %2049 = vmatpush1.msra.mxu0 0.0
        %2050 = vmatprep.subr.mxu0 0.0
        %2051 = vmatpush1.msra.mxu0 0.0
        %2052 = vmatprep.subr.mxu0 0.0
        %2053 = vmatpush1.msra.mxu0 0.0
        %2054 = vmatprep.subr.mxu0 0.0
        %2055 = vmatpush1.msra.mxu0 0.0
        %2056 = vmatprep.subr.mxu0 0.0
        %2057 = vmatpush1.msra.mxu0 0.0
        %2058 = vmatprep.subr.mxu0 0.0
        %2059 = vmatpush1.msra.mxu0 0.0
        %2060 = vmatprep.subr.mxu0 0.0
        %2061 = vmatpush1.msra.mxu0 0.0
        %2062 = vmatprep.subr.mxu0 0.0
        %2063 = vmatpush1.msra.mxu0 0.0
        %2064 = vmatprep.subr.mxu0 0.0
        %2065 = vmatpush1.msra.mxu0 0.0
        %2066 = vmatprep.subr.mxu0 0.0
        %2067 = vmatpush1.msra.mxu0 0.0
        %2068 = vmatprep.subr.mxu0 0.0
        %2069 = vmatpush1.msra.mxu0 0.0
        %2070 = vmatprep.subr.mxu0 0.0
        %2071 = vmatpush1.msra.mxu0 0.0
        %2072 = vmatprep.subr.mxu0 0.0
        %2073 = vmatpush1.msra.mxu0 0.0
        %2074 = vmatprep.subr.mxu0 0.0
        %2075 = vmatpush1.msra.mxu0 0.0
        %2076 = vmatprep.subr.mxu0 0.0
        %2077 = vmatpush1.msra.mxu0 0.0
        %2078 = vmatprep.subr.mxu0 0.0
        %2079 = vmatpush1.msra.mxu0 0.0
        %2080 = vmatprep.subr.mxu0 0.0
        %2081 = vmatpush1.msra.mxu0 0.0
        %2082 = vmatprep.subr.mxu0 0.0
        %2083 = vmatpush1.msra.mxu0 0.0
        %2084 = vmatprep.subr.mxu0 0.0
        %2085 = vmatpush1.msra.mxu0 0.0
        %2086 = vmatprep.subr.mxu0 0.0
        %2087 = vmatpush1.msra.mxu0 0.0
        %2088 = vmatprep.subr.mxu0 0.0
        %2089 = vmatpush1.msra.mxu0 0.0
        %2090 = vmatprep.subr.mxu0 0.0
        %2091 = vmatpush1.msra.mxu0 0.0
        %2092 = vmatprep.subr.mxu0 0.0
        %2093 = vmatpush1.msra.mxu0 0.0
        %2094 = vmatprep.subr.mxu0 0.0
        %2095 = vmatpush1.msra.mxu0 0.0
        %2096 = vmatprep.subr.mxu0 0.0
        %2097 = vmatpush1.msra.mxu0 0.0
        %2098 = vmatprep.subr.mxu0 0.0
        %2099 = vmatpush1.msra.mxu0 0.0
        %2100 = vmatprep.subr.mxu0 0.0
        %2101 = vmatpush1.msra.mxu0 0.0
        %2102 = vmatprep.subr.mxu0 0.0
        %2103 = vmatpush1.msra.mxu0 0.0
        %2104 = vmatprep.subr.mxu0 0.0
        %2105 = vmatpush1.msra.mxu0 0.0
        %2106 = vmatprep.subr.mxu0 0.0
        %2107 = vmatpush1.msra.mxu0 0.0
        %2108 = vmatprep.mubr.f32.mxu0 0.0
        %2109 = vmatmul.mubr.f32.gmra.mrb[0].mxu0 %v1934
        %v2110 = vpop.f32.mrb[0].mxu0
        %v2111 = vadd.f32 0.0, %v2110
        %v2112 = vpop.f32.mrb[0].mxu0
        %2113 = vmatprep.mubr.f32.mxu0 0.0
        %2114 = vmatmul.mubr.f32.gmra.mrb[0].mxu0 %v1937
        %v2115 = vpop.f32.mrb[0].mxu0
        %v2116 = vadd.f32 0.0, %v2115
        %v2117 = vpop.f32.mrb[0].mxu0
        %2118 = vmatprep.mubr.f32.mxu0 0.0
        %2119 = vmatmul.mubr.f32.gmra.mrb[0].mxu0 %v1940
        %v2120 = vpop.f32.mrb[0].mxu0
        %v2121 = vadd.f32 0.0, %v2120
        %v2122 = vpop.f32.mrb[0].mxu0
        %2123 = vmatprep.mubr.f32.mxu0 0.0
        %2124 = vmatmul.mubr.f32.gmra.mrb[0].mxu0 %v1943
        %v2125 = vpop.f32.mrb[0].mxu0
        %v2126 = vadd.f32 0.0, %v2125
        %v2127 = vpop.f32.mrb[0].mxu0
        %2128 = vmatprep.mubr.f32.mxu0 0.0
        %2129 = vmatmul.mubr.f32.gmra.mrb[0].mxu0 %v1946
        %v2130 = vpop.f32.mrb[0].mxu0
        %v2131 = vadd.f32 0.0, %v2130
        %v2132 = vpop.f32.mrb[0].mxu0
        %2133 = vmatprep.mubr.f32.mxu0 0.0
        %2134 = vmatmul.mubr.f32.gmra.mrb[0].mxu0 %v1949
        %v2135 = vpop.f32.mrb[0].mxu0
        %v2136 = vadd.f32 0.0, %v2135
        %v2137 = vpop.f32.mrb[0].mxu0
        %2138 = vmatprep.mubr.f32.mxu0 0.0
        %2139 = vmatmul.mubr.f32.gmra.mrb[0].mxu0 %v1952
        %v2140 = vpop.f32.mrb[0].mxu0
        %v2141 = vadd.f32 0.0, %v2140
        %v2142 = vpop.f32.mrb[0].mxu0
        %2143 = vmatprep.mubr.f32.mxu0 0.0
        %2144 = vmatmul.mubr.f32.gmra.mrb[0].mxu0 %v1955
        %v2145 = vpop.f32.mrb[0].mxu0
        %v2146 = vadd.f32 0.0, %v2145
        %v2147 = vpop.f32.mrb[0].mxu0
        %2148 = vmatprep.mubr.f32.mxu0 0.0
        %2149 = vmatmul.mubr.f32.gmra.mrb[0].mxu0 %v1958
        %v2150 = vpop.f32.mrb[0].mxu0
        %v2151 = vadd.f32 0.0, %v2150
        %v2152 = vpop.f32.mrb[0].mxu0
        %2153 = vmatprep.mubr.f32.mxu0 0.0
        %2154 = vmatmul.mubr.f32.gmra.mrb[0].mxu0 %v1961
        %v2155 = vpop.f32.mrb[0].mxu0
        %v2156 = vadd.f32 0.0, %v2155
        %v2157 = vpop.f32.mrb[0].mxu0
        %2158 = vmatprep.mubr.f32.mxu0 0.0
        %2159 = vmatmul.mubr.f32.gmra.mrb[0].mxu0 %v1964
        %v2160 = vpop.f32.mrb[0].mxu0
        %v2161 = vadd.f32 0.0, %v2160
        %v2162 = vpop.f32.mrb[0].mxu0
        %2163 = vmatprep.mubr.f32.mxu0 0.0
        %2164 = vmatmul.mubr.f32.gmra.mrb[0].mxu0 %v1967
        %v2165 = vpop.f32.mrb[0].mxu0
        %v2166 = vadd.f32 0.0, %v2165
        %v2167 = vpop.f32.mrb[0].mxu0
        %2168 = vmatprep.mubr.f32.mxu0 0.0
        %2169 = vmatmul.mubr.f32.gmra.mrb[0].mxu0 %v1970
        %v2170 = vpop.f32.mrb[0].mxu0
        %v2171 = vadd.f32 0.0, %v2170
        %v2172 = vpop.f32.mrb[0].mxu0
        %2173 = vmatprep.mubr.f32.mxu0 0.0
        %2174 = vmatmul.mubr.f32.gmra.mrb[0].mxu0 %v1973
        %v2175 = vpop.f32.mrb[0].mxu0
        %v2176 = vadd.f32 0.0, %v2175
        %v2177 = vpop.f32.mrb[0].mxu0
        %2178 = vmatprep.mubr.f32.mxu0 0.0
        %2179 = vmatmul.mubr.f32.gmra.mrb[0].mxu0 %v1976
        %v2180 = vpop.f32.mrb[0].mxu0
        %v2181 = vadd.f32 0.0, %v2180
        %v2182 = vpop.f32.mrb[0].mxu0
        %2183 = vmatprep.mubr.f32.mxu0 0.0
        %2184 = vmatmul.mubr.f32.gmra.mrb[0].mxu0 %v1979
        %v2185 = vpop.f32.mrb[0].mxu0
        %v2186 = vadd.f32 0.0, %v2185
        %v2187 = vpop.f32.mrb[0].mxu0
        %2188 = vmatprep.mubr.f32.mxu0 0.0
        %2189 = vmatmul.mubr.f32.gmra.mrb[0].mxu0 %v1982
        %v2190 = vpop.f32.mrb[0].mxu0
        %v2191 = vadd.f32 0.0, %v2190
        %v2192 = vpop.f32.mrb[0].mxu0
        %2193 = vmatprep.mubr.f32.mxu0 0.0
        %2194 = vmatmul.mubr.f32.gmra.mrb[0].mxu0 %v1985
        %v2195 = vpop.f32.mrb[0].mxu0
        %v2196 = vadd.f32 0.0, %v2195
        %v2197 = vpop.f32.mrb[0].mxu0
        %2198 = vmatprep.mubr.f32.mxu0 0.0
        %2199 = vmatmul.mubr.f32.gmra.mrb[0].mxu0 %v1988
        %v2200 = vpop.f32.mrb[0].mxu0
        %v2201 = vadd.f32 0.0, %v2200
        %v2202 = vpop.f32.mrb[0].mxu0
        %2203 = vmatprep.mubr.f32.mxu0 0.0
        %2204 = vmatmul.mubr.f32.gmra.mrb[0].mxu0 %v1991
        %v2205 = vpop.f32.mrb[0].mxu0
        %v2206 = vadd.f32 0.0, %v2205
        %v2207 = vpop.f32.mrb[0].mxu0
        %2208 = vmatprep.mubr.f32.mxu0 0.0
        %2209 = vmatmul.mubr.f32.gmra.mrb[0].mxu0 %v1994
        %v2210 = vpop.f32.mrb[0].mxu0
        %v2211 = vadd.f32 0.0, %v2210
        %v2212 = vpop.f32.mrb[0].mxu0
        %2213 = vmatprep.mubr.f32.mxu0 0.0
        %2214 = vmatmul.mubr.f32.gmra.mrb[0].mxu0 %v1997
        %v2215 = vpop.f32.mrb[0].mxu0
        %v2216 = vadd.f32 0.0, %v2215
        %v2217 = vpop.f32.mrb[0].mxu0
        %2218 = vmatprep.mubr.f32.mxu0 0.0
        %2219 = vmatmul.mubr.f32.gmra.mrb[0].mxu0 %v2000
        %v2220 = vpop.f32.mrb[0].mxu0
        %v2221 = vadd.f32 0.0, %v2220
        %v2222 = vpop.f32.mrb[0].mxu0
        %2223 = vmatprep.mubr.f32.mxu0 0.0
        %2224 = vmatmul.mubr.f32.gmra.mrb[0].mxu0 %v2003
        %v2225 = vpop.f32.mrb[0].mxu0
        %v2226 = vadd.f32 0.0, %v2225
        %v2227 = vpop.f32.mrb[0].mxu0
        %2228 = vmatprep.mubr.f32.mxu0 0.0
        %2229 = vmatmul.mubr.f32.gmra.mrb[0].mxu0 %v2006
        %v2230 = vpop.f32.mrb[0].mxu0
        %v2231 = vadd.f32 0.0, %v2230
        %v2232 = vpop.f32.mrb[0].mxu0
        %2233 = vmatprep.mubr.f32.mxu0 0.0
        %2234 = vmatmul.mubr.f32.gmra.mrb[0].mxu0 %v2009
        %v2235 = vpop.f32.mrb[0].mxu0
        %v2236 = vadd.f32 0.0, %v2235
        %v2237 = vpop.f32.mrb[0].mxu0
        %2238 = vmatprep.mubr.f32.mxu0 0.0
        %2239 = vmatmul.mubr.f32.gmra.mrb[0].mxu0 %v2012
        %v2240 = vpop.f32.mrb[0].mxu0
        %v2241 = vadd.f32 0.0, %v2240
        %v2242 = vpop.f32.mrb[0].mxu0
        %2243 = vmatprep.mubr.f32.mxu0 0.0
        %2244 = vmatmul.mubr.f32.gmra.mrb[0].mxu0 %v2015
        %v2245 = vpop.f32.mrb[0].mxu0
        %v2246 = vadd.f32 0.0, %v2245
        %v2247 = vpop.f32.mrb[0].mxu0
        %2248 = vmatprep.mubr.f32.mxu0 0.0
        %2249 = vmatmul.mubr.f32.gmra.mrb[0].mxu0 %v2018
        %v2250 = vpop.f32.mrb[0].mxu0
        %v2251 = vadd.f32 0.0, %v2250
        %v2252 = vpop.f32.mrb[0].mxu0
        %2253 = vmatprep.mubr.f32.mxu0 0.0
        %2254 = vmatmul.mubr.f32.gmra.mrb[0].mxu0 %v2021
        %v2255 = vpop.f32.mrb[0].mxu0
        %v2256 = vadd.f32 0.0, %v2255
        %v2257 = vpop.f32.mrb[0].mxu0
        %2258 = vmatprep.mubr.f32.mxu0 0.0
        %2259 = vmatmul.mubr.f32.gmra.mrb[0].mxu0 %v2024
        %v2260 = vpop.f32.mrb[0].mxu0
        %v2261 = vadd.f32 0.0, %v2260
        %v2262 = vpop.f32.mrb[0].mxu0
        %2263 = vmatprep.mubr.f32.mxu0 0.0
        %2264 = vmatmul.mubr.f32.gmra.mrb[0].mxu0 %v2027
        %v2265 = vpop.f32.mrb[0].mxu0
        %v2266 = vadd.f32 0.0, %v2265
        %v2267 = vpop.f32.mrb[0].mxu0
        %2268 = vmatprep.mubr.f32.mxu0 0.0
        %2269 = vmatmul.mubr.f32.gmra.mrb[0].mxu0 %v2030
        %v2270 = vpop.f32.mrb[0].mxu0
        %v2271 = vadd.f32 0.0, %v2270
        %v2272 = vpop.f32.mrb[0].mxu0
        %2273 = vmatprep.mubr.f32.mxu0 0.0
        %2274 = vmatmul.mubr.f32.gmra.mrb[0].mxu0 %v2033
        %v2275 = vpop.f32.mrb[0].mxu0
        %v2276 = vadd.f32 0.0, %v2275
        %v2277 = vpop.f32.mrb[0].mxu0
        %2278 = vmatprep.mubr.f32.mxu0 0.0
        %2279 = vmatmul.mubr.f32.gmra.mrb[0].mxu0 %v2036
        %v2280 = vpop.f32.mrb[0].mxu0
        %v2281 = vadd.f32 0.0, %v2280
        %v2282 = vpop.f32.mrb[0].mxu0
        %2283 = vmatprep.mubr.f32.mxu0 0.0
        %2284 = vmatmul.mubr.f32.gmra.mrb[0].mxu0 %v2039
        %v2285 = vpop.f32.mrb[0].mxu0
        %v2286 = vadd.f32 0.0, %v2285
        %v2287 = vpop.f32.mrb[0].mxu0
        %2288 = vdwg.mxu0
        %v2289 = vadd.f32 %v1859, %v2111
        %v2290 = vadd.f32 %v1860, %v2116
        %v2291 = vadd.f32 %v1861, %v2121
        %v2292 = vadd.f32 %v1862, %v2126
        %v2293 = vadd.f32 %v1863, %v2131
        %v2294 = vadd.f32 %v1864, %v2136
        %v2295 = vadd.f32 %v1865, %v2141
        %v2296 = vadd.f32 %v1866, %v2146
        %v2297 = vadd.f32 %v1867, %v2151
        %v2298 = vadd.f32 %v1868, %v2156
        %v2299 = vadd.f32 %v1869, %v2161
        %v2300 = vadd.f32 %v1870, %v2166
        %v2301 = vadd.f32 %v1871, %v2171
        %v2302 = vadd.f32 %v1872, %v2176
        %v2303 = vadd.f32 %v1873, %v2181
        %v2304 = vadd.f32 %v1874, %v2186
        %v2305 = vadd.f32 %v1875, %v2191
        %v2306 = vadd.f32 %v1876, %v2196
        %v2307 = vadd.f32 %v1877, %v2201
        %v2308 = vadd.f32 %v1878, %v2206
        %v2309 = vadd.f32 %v1879, %v2211
        %v2310 = vadd.f32 %v1880, %v2216
        %v2311 = vadd.f32 %v1881, %v2221
        %v2312 = vadd.f32 %v1882, %v2226
        %v2313 = vadd.f32 %v1883, %v2231
        %v2314 = vadd.f32 %v1884, %v2236
        %v2315 = vadd.f32 %v1885, %v2241
        %v2316 = vadd.f32 %v1886, %v2246
        %v2317 = vadd.f32 %v1887, %v2251
        %v2318 = vadd.f32 %v1888, %v2256
        %v2319 = vadd.f32 %v1889, %v2261
        %v2320 = vadd.f32 %v1890, %v2266
        %v2321 = vadd.f32 %v1891, %v2271
        %v2322 = vadd.f32 %v1892, %v2276
        %v2323 = vadd.f32 %v1893, %v2281
        %v2324 = vadd.f32 %v1894, %v2286
        %v2325 = vld [vmem:[%s228 + $0x14] sm:$0xff]
        %v2326 = vld [vmem:[%s228 + $0x1c] sm:$0xff]
        %v2327 = vld [vmem:[%s228 + $0x24] sm:$0xff]
        %v2328 = vld [vmem:[%s228 + $0x2c] sm:$0xff]
        %v2329 = vld [vmem:[%s228 + $0x34] sm:$0xff]
        %v2330 = vld [vmem:[%s228 + $0x3c] sm:$0xff]
        %v2331 = vld [vmem:[%s228 + $0x44] sm:$0xff]
        %v2332 = vld [vmem:[%s228 + $0x4c] sm:$0xff]
        %v2333 = vld [vmem:[%s228 + $0x54] sm:$0xff]
        %v2334 = vld [vmem:[%s228 + $0x5c] sm:$0xff]
        %v2335 = vld [vmem:[%s228 + $0x64] sm:$0xff]
        %v2336 = vld [vmem:[%s228 + $0x6c] sm:$0xff]
        %v2337 = vld [vmem:[%s228 + $0x74] sm:$0xff]
        %v2338 = vld [vmem:[%s228 + $0x7c] sm:$0xff]
        %v2339 = vld [vmem:[%s228 + $0x84] sm:$0xff]
        %v2340 = vld [vmem:[%s228 + $0x8c] sm:$0xff]
        %v2341 = vld [vmem:[%s228 + $0x94] sm:$0xff]
        %v2342 = vld [vmem:[%s228 + $0x9c] sm:$0xff]
        %v2343 = vld [vmem:[%s228 + $0xa4] sm:$0xff]
        %v2344 = vld [vmem:[%s228 + $0xac] sm:$0xff]
        %v2345 = vld [vmem:[%s228 + $0xb4] sm:$0xff]
        %v2346 = vld [vmem:[%s228 + $0xbc] sm:$0xff]
        %v2347 = vld [vmem:[%s228 + $0xc4] sm:$0xff]
        %v2348 = vld [vmem:[%s228 + $0xcc] sm:$0xff]
        %v2349 = vld [vmem:[%s228 + $0xd4] sm:$0xff]
        %v2350 = vld [vmem:[%s228 + $0xdc] sm:$0xff]
        %v2351 = vld [vmem:[%s228 + $0xe4] sm:$0xff]
        %v2352 = vld [vmem:[%s228 + $0xec] sm:$0xff]
        %v2353 = vld [vmem:[%s228 + $0xf4] sm:$0xff]
        %v2354 = vld [vmem:[%s228 + $0xfc] sm:$0xff]
        %v2355 = vld [vmem:[%s228 + $0x104] sm:$0xff]
        %v2356 = vld [vmem:[%s228 + $0x10c] sm:$0xff]
        %v2357 = vld [vmem:[%s228 + $0x114] sm:$0xff]
        %v2358 = vld [vmem:[%s228 + $0x11c] sm:$0xff]
        %v2359 = vld [vmem:[%s228 + $0x124] sm:$0xff]
        %v2360 = vld [vmem:[%s228 + $0x12c] sm:$0xff]
        %s2361 = scalar_lea.vmem %s232, 20
        %v2362 = vld [vmem:[%s2361] sm:$0xf]
        %v2364 = vsel %vm321, %v2325, 0
        %v2367 = vsel %vm321, %v2326, 0
        %v2370 = vsel %vm321, %v2327, 0
        %v2373 = vsel %vm321, %v2328, 0
        %v2376 = vsel %vm321, %v2329, 0
        %v2379 = vsel %vm321, %v2330, 0
        %v2382 = vsel %vm321, %v2331, 0
        %v2385 = vsel %vm321, %v2332, 0
        %v2388 = vsel %vm321, %v2333, 0
        %v2391 = vsel %vm321, %v2334, 0
        %v2394 = vsel %vm321, %v2335, 0
        %v2397 = vsel %vm321, %v2336, 0
        %v2400 = vsel %vm321, %v2337, 0
        %v2403 = vsel %vm321, %v2338, 0
        %v2406 = vsel %vm321, %v2339, 0
        %v2409 = vsel %vm321, %v2340, 0
        %v2412 = vsel %vm321, %v2341, 0
        %v2415 = vsel %vm321, %v2342, 0
        %v2418 = vsel %vm321, %v2343, 0
        %v2421 = vsel %vm321, %v2344, 0
        %v2424 = vsel %vm321, %v2345, 0
        %v2427 = vsel %vm321, %v2346, 0
        %v2430 = vsel %vm321, %v2347, 0
        %v2433 = vsel %vm321, %v2348, 0
        %v2436 = vsel %vm321, %v2349, 0
        %v2439 = vsel %vm321, %v2350, 0
        %v2442 = vsel %vm321, %v2351, 0
        %v2445 = vsel %vm321, %v2352, 0
        %v2448 = vsel %vm321, %v2353, 0
        %v2451 = vsel %vm321, %v2354, 0
        %v2454 = vsel %vm321, %v2355, 0
        %v2457 = vsel %vm321, %v2356, 0
        %v2460 = vsel %vm321, %v2357, 0
        %v2463 = vsel %vm321, %v2358, 0
        %v2466 = vsel %vm321, %v2359, 0
        %v2469 = vsel %vm321, %v2360, 0
        %v2472 = vsel %vm430, %v2362, 0
        %2474 = vmatprep.subr.mxu0 0.0
        %2475 = vmatpush1.msra.mxu0 %v2472
        %2476 = vmatprep.subr.mxu0 0.0
        %2477 = vmatpush1.msra.mxu0 0.0
        %2478 = vmatprep.subr.mxu0 0.0
        %2479 = vmatpush1.msra.mxu0 0.0
        %2480 = vmatprep.subr.mxu0 0.0
        %2481 = vmatpush1.msra.mxu0 0.0
        %2482 = vmatprep.subr.mxu0 0.0
        %2483 = vmatpush1.msra.mxu0 0.0
        %2484 = vmatprep.subr.mxu0 0.0
        %2485 = vmatpush1.msra.mxu0 0.0
        %2486 = vmatprep.subr.mxu0 0.0
        %2487 = vmatpush1.msra.mxu0 0.0
        %2488 = vmatprep.subr.mxu0 0.0
        %2489 = vmatpush1.msra.mxu0 0.0
        %2490 = vmatprep.subr.mxu0 0.0
        %2491 = vmatpush1.msra.mxu0 0.0
        %2492 = vmatprep.subr.mxu0 0.0
        %2493 = vmatpush1.msra.mxu0 0.0
        %2494 = vmatprep.subr.mxu0 0.0
        %2495 = vmatpush1.msra.mxu0 0.0
        %2496 = vmatprep.subr.mxu0 0.0
        %2497 = vmatpush1.msra.mxu0 0.0
        %2498 = vmatprep.subr.mxu0 0.0
        %2499 = vmatpush1.msra.mxu0 0.0
        %2500 = vmatprep.subr.mxu0 0.0
        %2501 = vmatpush1.msra.mxu0 0.0
        %2502 = vmatprep.subr.mxu0 0.0
        %2503 = vmatpush1.msra.mxu0 0.0
        %2504 = vmatprep.subr.mxu0 0.0
        %2505 = vmatpush1.msra.mxu0 0.0
        %2506 = vmatprep.subr.mxu0 0.0
        %2507 = vmatpush1.msra.mxu0 0.0
        %2508 = vmatprep.subr.mxu0 0.0
        %2509 = vmatpush1.msra.mxu0 0.0
        %2510 = vmatprep.subr.mxu0 0.0
        %2511 = vmatpush1.msra.mxu0 0.0
        %2512 = vmatprep.subr.mxu0 0.0
        %2513 = vmatpush1.msra.mxu0 0.0
        %2514 = vmatprep.subr.mxu0 0.0
        %2515 = vmatpush1.msra.mxu0 0.0
        %2516 = vmatprep.subr.mxu0 0.0
        %2517 = vmatpush1.msra.mxu0 0.0
        %2518 = vmatprep.subr.mxu0 0.0
        %2519 = vmatpush1.msra.mxu0 0.0
        %2520 = vmatprep.subr.mxu0 0.0
        %2521 = vmatpush1.msra.mxu0 0.0
        %2522 = vmatprep.subr.mxu0 0.0
        %2523 = vmatpush1.msra.mxu0 0.0
        %2524 = vmatprep.subr.mxu0 0.0
        %2525 = vmatpush1.msra.mxu0 0.0
        %2526 = vmatprep.subr.mxu0 0.0
        %2527 = vmatpush1.msra.mxu0 0.0
        %2528 = vmatprep.subr.mxu0 0.0
        %2529 = vmatpush1.msra.mxu0 0.0
        %2530 = vmatprep.subr.mxu0 0.0
        %2531 = vmatpush1.msra.mxu0 0.0
        %2532 = vmatprep.subr.mxu0 0.0
        %2533 = vmatpush1.msra.mxu0 0.0
        %2534 = vmatprep.subr.mxu0 0.0
        %2535 = vmatpush1.msra.mxu0 0.0
        %2536 = vmatprep.subr.mxu0 0.0
        %2537 = vmatpush1.msra.mxu0 0.0
        %2538 = vmatprep.mubr.f32.mxu0 0.0
        %2539 = vmatmul.mubr.f32.gmra.mrb[0].mxu0 %v2364
        %v2540 = vpop.f32.mrb[0].mxu0
        %v2541 = vadd.f32 0.0, %v2540
        %v2542 = vpop.f32.mrb[0].mxu0
        %2543 = vmatprep.mubr.f32.mxu0 0.0
        %2544 = vmatmul.mubr.f32.gmra.mrb[0].mxu0 %v2367
        %v2545 = vpop.f32.mrb[0].mxu0
        %v2546 = vadd.f32 0.0, %v2545
        %v2547 = vpop.f32.mrb[0].mxu0
        %2548 = vmatprep.mubr.f32.mxu0 0.0
        %2549 = vmatmul.mubr.f32.gmra.mrb[0].mxu0 %v2370
        %v2550 = vpop.f32.mrb[0].mxu0
        %v2551 = vadd.f32 0.0, %v2550
        %v2552 = vpop.f32.mrb[0].mxu0
        %2553 = vmatprep.mubr.f32.mxu0 0.0
        %2554 = vmatmul.mubr.f32.gmra.mrb[0].mxu0 %v2373
        %v2555 = vpop.f32.mrb[0].mxu0
        %v2556 = vadd.f32 0.0, %v2555
        %v2557 = vpop.f32.mrb[0].mxu0
        %2558 = vmatprep.mubr.f32.mxu0 0.0
        %2559 = vmatmul.mubr.f32.gmra.mrb[0].mxu0 %v2376
        %v2560 = vpop.f32.mrb[0].mxu0
        %v2561 = vadd.f32 0.0, %v2560
        %v2562 = vpop.f32.mrb[0].mxu0
        %2563 = vmatprep.mubr.f32.mxu0 0.0
        %2564 = vmatmul.mubr.f32.gmra.mrb[0].mxu0 %v2379
        %v2565 = vpop.f32.mrb[0].mxu0
        %v2566 = vadd.f32 0.0, %v2565
        %v2567 = vpop.f32.mrb[0].mxu0
        %2568 = vmatprep.mubr.f32.mxu0 0.0
        %2569 = vmatmul.mubr.f32.gmra.mrb[0].mxu0 %v2382
        %v2570 = vpop.f32.mrb[0].mxu0
        %v2571 = vadd.f32 0.0, %v2570
        %v2572 = vpop.f32.mrb[0].mxu0
        %2573 = vmatprep.mubr.f32.mxu0 0.0
        %2574 = vmatmul.mubr.f32.gmra.mrb[0].mxu0 %v2385
        %v2575 = vpop.f32.mrb[0].mxu0
        %v2576 = vadd.f32 0.0, %v2575
        %v2577 = vpop.f32.mrb[0].mxu0
        %2578 = vmatprep.mubr.f32.mxu0 0.0
        %2579 = vmatmul.mubr.f32.gmra.mrb[0].mxu0 %v2388
        %v2580 = vpop.f32.mrb[0].mxu0
        %v2581 = vadd.f32 0.0, %v2580
        %v2582 = vpop.f32.mrb[0].mxu0
        %2583 = vmatprep.mubr.f32.mxu0 0.0
        %2584 = vmatmul.mubr.f32.gmra.mrb[0].mxu0 %v2391
        %v2585 = vpop.f32.mrb[0].mxu0
        %v2586 = vadd.f32 0.0, %v2585
        %v2587 = vpop.f32.mrb[0].mxu0
        %2588 = vmatprep.mubr.f32.mxu0 0.0
        %2589 = vmatmul.mubr.f32.gmra.mrb[0].mxu0 %v2394
        %v2590 = vpop.f32.mrb[0].mxu0
        %v2591 = vadd.f32 0.0, %v2590
        %v2592 = vpop.f32.mrb[0].mxu0
        %2593 = vmatprep.mubr.f32.mxu0 0.0
        %2594 = vmatmul.mubr.f32.gmra.mrb[0].mxu0 %v2397
        %v2595 = vpop.f32.mrb[0].mxu0
        %v2596 = vadd.f32 0.0, %v2595
        %v2597 = vpop.f32.mrb[0].mxu0
        %2598 = vmatprep.mubr.f32.mxu0 0.0
        %2599 = vmatmul.mubr.f32.gmra.mrb[0].mxu0 %v2400
        %v2600 = vpop.f32.mrb[0].mxu0
        %v2601 = vadd.f32 0.0, %v2600
        %v2602 = vpop.f32.mrb[0].mxu0
        %2603 = vmatprep.mubr.f32.mxu0 0.0
        %2604 = vmatmul.mubr.f32.gmra.mrb[0].mxu0 %v2403
        %v2605 = vpop.f32.mrb[0].mxu0
        %v2606 = vadd.f32 0.0, %v2605
        %v2607 = vpop.f32.mrb[0].mxu0
        %2608 = vmatprep.mubr.f32.mxu0 0.0
        %2609 = vmatmul.mubr.f32.gmra.mrb[0].mxu0 %v2406
        %v2610 = vpop.f32.mrb[0].mxu0
        %v2611 = vadd.f32 0.0, %v2610
        %v2612 = vpop.f32.mrb[0].mxu0
        %2613 = vmatprep.mubr.f32.mxu0 0.0
        %2614 = vmatmul.mubr.f32.gmra.mrb[0].mxu0 %v2409
        %v2615 = vpop.f32.mrb[0].mxu0
        %v2616 = vadd.f32 0.0, %v2615
        %v2617 = vpop.f32.mrb[0].mxu0
        %2618 = vmatprep.mubr.f32.mxu0 0.0
        %2619 = vmatmul.mubr.f32.gmra.mrb[0].mxu0 %v2412
        %v2620 = vpop.f32.mrb[0].mxu0
        %v2621 = vadd.f32 0.0, %v2620
        %v2622 = vpop.f32.mrb[0].mxu0
        %2623 = vmatprep.mubr.f32.mxu0 0.0
        %2624 = vmatmul.mubr.f32.gmra.mrb[0].mxu0 %v2415
        %v2625 = vpop.f32.mrb[0].mxu0
        %v2626 = vadd.f32 0.0, %v2625
        %v2627 = vpop.f32.mrb[0].mxu0
        %2628 = vmatprep.mubr.f32.mxu0 0.0
        %2629 = vmatmul.mubr.f32.gmra.mrb[0].mxu0 %v2418
        %v2630 = vpop.f32.mrb[0].mxu0
        %v2631 = vadd.f32 0.0, %v2630
        %v2632 = vpop.f32.mrb[0].mxu0
        %2633 = vmatprep.mubr.f32.mxu0 0.0
        %2634 = vmatmul.mubr.f32.gmra.mrb[0].mxu0 %v2421
        %v2635 = vpop.f32.mrb[0].mxu0
        %v2636 = vadd.f32 0.0, %v2635
        %v2637 = vpop.f32.mrb[0].mxu0
        %2638 = vmatprep.mubr.f32.mxu0 0.0
        %2639 = vmatmul.mubr.f32.gmra.mrb[0].mxu0 %v2424
        %v2640 = vpop.f32.mrb[0].mxu0
        %v2641 = vadd.f32 0.0, %v2640
        %v2642 = vpop.f32.mrb[0].mxu0
        %2643 = vmatprep.mubr.f32.mxu0 0.0
        %2644 = vmatmul.mubr.f32.gmra.mrb[0].mxu0 %v2427
        %v2645 = vpop.f32.mrb[0].mxu0
        %v2646 = vadd.f32 0.0, %v2645
        %v2647 = vpop.f32.mrb[0].mxu0
        %2648 = vmatprep.mubr.f32.mxu0 0.0
        %2649 = vmatmul.mubr.f32.gmra.mrb[0].mxu0 %v2430
        %v2650 = vpop.f32.mrb[0].mxu0
        %v2651 = vadd.f32 0.0, %v2650
        %v2652 = vpop.f32.mrb[0].mxu0
        %2653 = vmatprep.mubr.f32.mxu0 0.0
        %2654 = vmatmul.mubr.f32.gmra.mrb[0].mxu0 %v2433
        %v2655 = vpop.f32.mrb[0].mxu0
        %v2656 = vadd.f32 0.0, %v2655
        %v2657 = vpop.f32.mrb[0].mxu0
        %2658 = vmatprep.mubr.f32.mxu0 0.0
        %2659 = vmatmul.mubr.f32.gmra.mrb[0].mxu0 %v2436
        %v2660 = vpop.f32.mrb[0].mxu0
        %v2661 = vadd.f32 0.0, %v2660
        %v2662 = vpop.f32.mrb[0].mxu0
        %2663 = vmatprep.mubr.f32.mxu0 0.0
        %2664 = vmatmul.mubr.f32.gmra.mrb[0].mxu0 %v2439
        %v2665 = vpop.f32.mrb[0].mxu0
        %v2666 = vadd.f32 0.0, %v2665
        %v2667 = vpop.f32.mrb[0].mxu0
        %2668 = vmatprep.mubr.f32.mxu0 0.0
        %2669 = vmatmul.mubr.f32.gmra.mrb[0].mxu0 %v2442
        %v2670 = vpop.f32.mrb[0].mxu0
        %v2671 = vadd.f32 0.0, %v2670
        %v2672 = vpop.f32.mrb[0].mxu0
        %2673 = vmatprep.mubr.f32.mxu0 0.0
        %2674 = vmatmul.mubr.f32.gmra.mrb[0].mxu0 %v2445
        %v2675 = vpop.f32.mrb[0].mxu0
        %v2676 = vadd.f32 0.0, %v2675
        %v2677 = vpop.f32.mrb[0].mxu0
        %2678 = vmatprep.mubr.f32.mxu0 0.0
        %2679 = vmatmul.mubr.f32.gmra.mrb[0].mxu0 %v2448
        %v2680 = vpop.f32.mrb[0].mxu0
        %v2681 = vadd.f32 0.0, %v2680
        %v2682 = vpop.f32.mrb[0].mxu0
        %2683 = vmatprep.mubr.f32.mxu0 0.0
        %2684 = vmatmul.mubr.f32.gmra.mrb[0].mxu0 %v2451
        %v2685 = vpop.f32.mrb[0].mxu0
        %v2686 = vadd.f32 0.0, %v2685
        %v2687 = vpop.f32.mrb[0].mxu0
        %2688 = vmatprep.mubr.f32.mxu0 0.0
        %2689 = vmatmul.mubr.f32.gmra.mrb[0].mxu0 %v2454
        %v2690 = vpop.f32.mrb[0].mxu0
        %v2691 = vadd.f32 0.0, %v2690
        %v2692 = vpop.f32.mrb[0].mxu0
        %2693 = vmatprep.mubr.f32.mxu0 0.0
        %2694 = vmatmul.mubr.f32.gmra.mrb[0].mxu0 %v2457
        %v2695 = vpop.f32.mrb[0].mxu0
        %v2696 = vadd.f32 0.0, %v2695
        %v2697 = vpop.f32.mrb[0].mxu0
        %2698 = vmatprep.mubr.f32.mxu0 0.0
        %2699 = vmatmul.mubr.f32.gmra.mrb[0].mxu0 %v2460
        %v2700 = vpop.f32.mrb[0].mxu0
        %v2701 = vadd.f32 0.0, %v2700
        %v2702 = vpop.f32.mrb[0].mxu0
        %2703 = vmatprep.mubr.f32.mxu0 0.0
        %2704 = vmatmul.mubr.f32.gmra.mrb[0].mxu0 %v2463
        %v2705 = vpop.f32.mrb[0].mxu0
        %v2706 = vadd.f32 0.0, %v2705
        %v2707 = vpop.f32.mrb[0].mxu0
        %2708 = vmatprep.mubr.f32.mxu0 0.0
        %2709 = vmatmul.mubr.f32.gmra.mrb[0].mxu0 %v2466
        %v2710 = vpop.f32.mrb[0].mxu0
        %v2711 = vadd.f32 0.0, %v2710
        %v2712 = vpop.f32.mrb[0].mxu0
        %2713 = vmatprep.mubr.f32.mxu0 0.0
        %2714 = vmatmul.mubr.f32.gmra.mrb[0].mxu0 %v2469
        %v2715 = vpop.f32.mrb[0].mxu0
        %v2716 = vadd.f32 0.0, %v2715
        %v2717 = vpop.f32.mrb[0].mxu0
        %2718 = vdwg.mxu0
        %v2719 = vadd.f32 %v2289, %v2541
        %v2720 = vadd.f32 %v2290, %v2546
        %v2721 = vadd.f32 %v2291, %v2551
        %v2722 = vadd.f32 %v2292, %v2556
        %v2723 = vadd.f32 %v2293, %v2561
        %v2724 = vadd.f32 %v2294, %v2566
        %v2725 = vadd.f32 %v2295, %v2571
        %v2726 = vadd.f32 %v2296, %v2576
        %v2727 = vadd.f32 %v2297, %v2581
        %v2728 = vadd.f32 %v2298, %v2586
        %v2729 = vadd.f32 %v2299, %v2591
        %v2730 = vadd.f32 %v2300, %v2596
        %v2731 = vadd.f32 %v2301, %v2601
        %v2732 = vadd.f32 %v2302, %v2606
        %v2733 = vadd.f32 %v2303, %v2611
        %v2734 = vadd.f32 %v2304, %v2616
        %v2735 = vadd.f32 %v2305, %v2621
        %v2736 = vadd.f32 %v2306, %v2626
        %v2737 = vadd.f32 %v2307, %v2631
        %v2738 = vadd.f32 %v2308, %v2636
        %v2739 = vadd.f32 %v2309, %v2641
        %v2740 = vadd.f32 %v2310, %v2646
        %v2741 = vadd.f32 %v2311, %v2651
        %v2742 = vadd.f32 %v2312, %v2656
        %v2743 = vadd.f32 %v2313, %v2661
        %v2744 = vadd.f32 %v2314, %v2666
        %v2745 = vadd.f32 %v2315, %v2671
        %v2746 = vadd.f32 %v2316, %v2676
        %v2747 = vadd.f32 %v2317, %v2681
        %v2748 = vadd.f32 %v2318, %v2686
        %v2749 = vadd.f32 %v2319, %v2691
        %v2750 = vadd.f32 %v2320, %v2696
        %v2751 = vadd.f32 %v2321, %v2701
        %v2752 = vadd.f32 %v2322, %v2706
        %v2753 = vadd.f32 %v2323, %v2711
        %v2754 = vadd.f32 %v2324, %v2716
        %v2755 = vld [vmem:[%s228 + $0x24] sm:$0xff]
        %v2756 = vld [vmem:[%s228 + $0x2c] sm:$0xff]
        %v2757 = vld [vmem:[%s228 + $0x34] sm:$0xff]
        %v2758 = vld [vmem:[%s228 + $0x3c] sm:$0xff]
        %v2759 = vld [vmem:[%s228 + $0x44] sm:$0xff]
        %v2760 = vld [vmem:[%s228 + $0x4c] sm:$0xff]
        %v2761 = vld [vmem:[%s228 + $0x54] sm:$0xff]
        %v2762 = vld [vmem:[%s228 + $0x5c] sm:$0xff]
        %v2763 = vld [vmem:[%s228 + $0x64] sm:$0xff]
        %v2764 = vld [vmem:[%s228 + $0x6c] sm:$0xff]
        %v2765 = vld [vmem:[%s228 + $0x74] sm:$0xff]
        %v2766 = vld [vmem:[%s228 + $0x7c] sm:$0xff]
        %v2767 = vld [vmem:[%s228 + $0x84] sm:$0xff]
        %v2768 = vld [vmem:[%s228 + $0x8c] sm:$0xff]
        %v2769 = vld [vmem:[%s228 + $0x94] sm:$0xff]
        %v2770 = vld [vmem:[%s228 + $0x9c] sm:$0xff]
        %v2771 = vld [vmem:[%s228 + $0xa4] sm:$0xff]
        %v2772 = vld [vmem:[%s228 + $0xac] sm:$0xff]
        %v2773 = vld [vmem:[%s228 + $0xb4] sm:$0xff]
        %v2774 = vld [vmem:[%s228 + $0xbc] sm:$0xff]
        %v2775 = vld [vmem:[%s228 + $0xc4] sm:$0xff]
        %v2776 = vld [vmem:[%s228 + $0xcc] sm:$0xff]
        %v2777 = vld [vmem:[%s228 + $0xd4] sm:$0xff]
        %v2778 = vld [vmem:[%s228 + $0xdc] sm:$0xff]
        %v2779 = vld [vmem:[%s228 + $0xe4] sm:$0xff]
        %v2780 = vld [vmem:[%s228 + $0xec] sm:$0xff]
        %v2781 = vld [vmem:[%s228 + $0xf4] sm:$0xff]
        %v2782 = vld [vmem:[%s228 + $0xfc] sm:$0xff]
        %v2783 = vld [vmem:[%s228 + $0x104] sm:$0xff]
        %v2784 = vld [vmem:[%s228 + $0x10c] sm:$0xff]
        %v2785 = vld [vmem:[%s228 + $0x114] sm:$0xff]
        %v2786 = vld [vmem:[%s228 + $0x11c] sm:$0xff]
        %v2787 = vld [vmem:[%s228 + $0x124] sm:$0xff]
        %v2788 = vld [vmem:[%s228 + $0x12c] sm:$0xff]
        %v2789 = vld [vmem:[%s228 + $0x134] sm:$0xff]
        %v2790 = vld [vmem:[%s228 + $0x13c] sm:$0xff]
        %s2791 = scalar_lea.vmem %s232, 24
        %v2792 = vld [vmem:[%s2791] sm:$0xf]
        %v2794 = vsel %vm321, %v2755, 0
        %v2797 = vsel %vm321, %v2756, 0
        %v2800 = vsel %vm321, %v2757, 0
        %v2803 = vsel %vm321, %v2758, 0
        %v2806 = vsel %vm321, %v2759, 0
        %v2809 = vsel %vm321, %v2760, 0
        %v2812 = vsel %vm321, %v2761, 0
        %v2815 = vsel %vm321, %v2762, 0
        %v2818 = vsel %vm321, %v2763, 0
        %v2821 = vsel %vm321, %v2764, 0
        %v2824 = vsel %vm321, %v2765, 0
        %v2827 = vsel %vm321, %v2766, 0
        %v2830 = vsel %vm321, %v2767, 0
        %v2833 = vsel %vm321, %v2768, 0
        %v2836 = vsel %vm321, %v2769, 0
        %v2839 = vsel %vm321, %v2770, 0
        %v2842 = vsel %vm321, %v2771, 0
        %v2845 = vsel %vm321, %v2772, 0
        %v2848 = vsel %vm321, %v2773, 0
        %v2851 = vsel %vm321, %v2774, 0
        %v2854 = vsel %vm321, %v2775, 0
        %v2857 = vsel %vm321, %v2776, 0
        %v2860 = vsel %vm321, %v2777, 0
        %v2863 = vsel %vm321, %v2778, 0
        %v2866 = vsel %vm321, %v2779, 0
        %v2869 = vsel %vm321, %v2780, 0
        %v2872 = vsel %vm321, %v2781, 0
        %v2875 = vsel %vm321, %v2782, 0
        %v2878 = vsel %vm321, %v2783, 0
        %v2881 = vsel %vm321, %v2784, 0
        %v2884 = vsel %vm321, %v2785, 0
        %v2887 = vsel %vm321, %v2786, 0
        %v2890 = vsel %vm321, %v2787, 0
        %v2893 = vsel %vm321, %v2788, 0
        %v2896 = vsel %vm321, %v2789, 0
        %v2899 = vsel %vm321, %v2790, 0
        %v2902 = vsel %vm430, %v2792, 0
        %2904 = vmatprep.subr.mxu0 0.0
        %2905 = vmatpush1.msra.mxu0 %v2902
        %2906 = vmatprep.subr.mxu0 0.0
        %2907 = vmatpush1.msra.mxu0 0.0
        %2908 = vmatprep.subr.mxu0 0.0
        %2909 = vmatpush1.msra.mxu0 0.0
        %2910 = vmatprep.subr.mxu0 0.0
        %2911 = vmatpush1.msra.mxu0 0.0
        %2912 = vmatprep.subr.mxu0 0.0
        %2913 = vmatpush1.msra.mxu0 0.0
        %2914 = vmatprep.subr.mxu0 0.0
        %2915 = vmatpush1.msra.mxu0 0.0
        %2916 = vmatprep.subr.mxu0 0.0
        %2917 = vmatpush1.msra.mxu0 0.0
        %2918 = vmatprep.subr.mxu0 0.0
        %2919 = vmatpush1.msra.mxu0 0.0
        %2920 = vmatprep.subr.mxu0 0.0
        %2921 = vmatpush1.msra.mxu0 0.0
        %2922 = vmatprep.subr.mxu0 0.0
        %2923 = vmatpush1.msra.mxu0 0.0
        %2924 = vmatprep.subr.mxu0 0.0
        %2925 = vmatpush1.msra.mxu0 0.0
        %2926 = vmatprep.subr.mxu0 0.0
        %2927 = vmatpush1.msra.mxu0 0.0
        %2928 = vmatprep.subr.mxu0 0.0
        %2929 = vmatpush1.msra.mxu0 0.0
        %2930 = vmatprep.subr.mxu0 0.0
        %2931 = vmatpush1.msra.mxu0 0.0
        %2932 = vmatprep.subr.mxu0 0.0
        %2933 = vmatpush1.msra.mxu0 0.0
        %2934 = vmatprep.subr.mxu0 0.0
        %2935 = vmatpush1.msra.mxu0 0.0
        %2936 = vmatprep.subr.mxu0 0.0
        %2937 = vmatpush1.msra.mxu0 0.0
        %2938 = vmatprep.subr.mxu0 0.0
        %2939 = vmatpush1.msra.mxu0 0.0
        %2940 = vmatprep.subr.mxu0 0.0
        %2941 = vmatpush1.msra.mxu0 0.0
        %2942 = vmatprep.subr.mxu0 0.0
        %2943 = vmatpush1.msra.mxu0 0.0
        %2944 = vmatprep.subr.mxu0 0.0
        %2945 = vmatpush1.msra.mxu0 0.0
        %2946 = vmatprep.subr.mxu0 0.0
        %2947 = vmatpush1.msra.mxu0 0.0
        %2948 = vmatprep.subr.mxu0 0.0
        %2949 = vmatpush1.msra.mxu0 0.0
        %2950 = vmatprep.subr.mxu0 0.0
        %2951 = vmatpush1.msra.mxu0 0.0
        %2952 = vmatprep.subr.mxu0 0.0
        %2953 = vmatpush1.msra.mxu0 0.0
        %2954 = vmatprep.subr.mxu0 0.0
        %2955 = vmatpush1.msra.mxu0 0.0
        %2956 = vmatprep.subr.mxu0 0.0
        %2957 = vmatpush1.msra.mxu0 0.0
        %2958 = vmatprep.subr.mxu0 0.0
        %2959 = vmatpush1.msra.mxu0 0.0
        %2960 = vmatprep.subr.mxu0 0.0
        %2961 = vmatpush1.msra.mxu0 0.0
        %2962 = vmatprep.subr.mxu0 0.0
        %2963 = vmatpush1.msra.mxu0 0.0
        %2964 = vmatprep.subr.mxu0 0.0
        %2965 = vmatpush1.msra.mxu0 0.0
        %2966 = vmatprep.subr.mxu0 0.0
        %2967 = vmatpush1.msra.mxu0 0.0
        %2968 = vmatprep.mubr.f32.mxu0 0.0
        %2969 = vmatmul.mubr.f32.gmra.mrb[0].mxu0 %v2794
        %v2970 = vpop.f32.mrb[0].mxu0
        %v2971 = vadd.f32 0.0, %v2970
        %v2972 = vpop.f32.mrb[0].mxu0
        %2973 = vmatprep.mubr.f32.mxu0 0.0
        %2974 = vmatmul.mubr.f32.gmra.mrb[0].mxu0 %v2797
        %v2975 = vpop.f32.mrb[0].mxu0
        %v2976 = vadd.f32 0.0, %v2975
        %v2977 = vpop.f32.mrb[0].mxu0
        %2978 = vmatprep.mubr.f32.mxu0 0.0
        %2979 = vmatmul.mubr.f32.gmra.mrb[0].mxu0 %v2800
        %v2980 = vpop.f32.mrb[0].mxu0
        %v2981 = vadd.f32 0.0, %v2980
        %v2982 = vpop.f32.mrb[0].mxu0
        %2983 = vmatprep.mubr.f32.mxu0 0.0
        %2984 = vmatmul.mubr.f32.gmra.mrb[0].mxu0 %v2803
        %v2985 = vpop.f32.mrb[0].mxu0
        %v2986 = vadd.f32 0.0, %v2985
        %v2987 = vpop.f32.mrb[0].mxu0
        %2988 = vmatprep.mubr.f32.mxu0 0.0
        %2989 = vmatmul.mubr.f32.gmra.mrb[0].mxu0 %v2806
        %v2990 = vpop.f32.mrb[0].mxu0
        %v2991 = vadd.f32 0.0, %v2990
        %v2992 = vpop.f32.mrb[0].mxu0
        %2993 = vmatprep.mubr.f32.mxu0 0.0
        %2994 = vmatmul.mubr.f32.gmra.mrb[0].mxu0 %v2809
        %v2995 = vpop.f32.mrb[0].mxu0
        %v2996 = vadd.f32 0.0, %v2995
        %v2997 = vpop.f32.mrb[0].mxu0
        %2998 = vmatprep.mubr.f32.mxu0 0.0
        %2999 = vmatmul.mubr.f32.gmra.mrb[0].mxu0 %v2812
        %v3000 = vpop.f32.mrb[0].mxu0
        %v3001 = vadd.f32 0.0, %v3000
        %v3002 = vpop.f32.mrb[0].mxu0
        %3003 = vmatprep.mubr.f32.mxu0 0.0
        %3004 = vmatmul.mubr.f32.gmra.mrb[0].mxu0 %v2815
        %v3005 = vpop.f32.mrb[0].mxu0
        %v3006 = vadd.f32 0.0, %v3005
        %v3007 = vpop.f32.mrb[0].mxu0
        %3008 = vmatprep.mubr.f32.mxu0 0.0
        %3009 = vmatmul.mubr.f32.gmra.mrb[0].mxu0 %v2818
        %v3010 = vpop.f32.mrb[0].mxu0
        %v3011 = vadd.f32 0.0, %v3010
        %v3012 = vpop.f32.mrb[0].mxu0
        %3013 = vmatprep.mubr.f32.mxu0 0.0
        %3014 = vmatmul.mubr.f32.gmra.mrb[0].mxu0 %v2821
        %v3015 = vpop.f32.mrb[0].mxu0
        %v3016 = vadd.f32 0.0, %v3015
        %v3017 = vpop.f32.mrb[0].mxu0
        %3018 = vmatprep.mubr.f32.mxu0 0.0
        %3019 = vmatmul.mubr.f32.gmra.mrb[0].mxu0 %v2824
        %v3020 = vpop.f32.mrb[0].mxu0
        %v3021 = vadd.f32 0.0, %v3020
        %v3022 = vpop.f32.mrb[0].mxu0
        %3023 = vmatprep.mubr.f32.mxu0 0.0
        %3024 = vmatmul.mubr.f32.gmra.mrb[0].mxu0 %v2827
        %v3025 = vpop.f32.mrb[0].mxu0
        %v3026 = vadd.f32 0.0, %v3025
        %v3027 = vpop.f32.mrb[0].mxu0
        %3028 = vmatprep.mubr.f32.mxu0 0.0
        %3029 = vmatmul.mubr.f32.gmra.mrb[0].mxu0 %v2830
        %v3030 = vpop.f32.mrb[0].mxu0
        %v3031 = vadd.f32 0.0, %v3030
        %v3032 = vpop.f32.mrb[0].mxu0
        %3033 = vmatprep.mubr.f32.mxu0 0.0
        %3034 = vmatmul.mubr.f32.gmra.mrb[0].mxu0 %v2833
        %v3035 = vpop.f32.mrb[0].mxu0
        %v3036 = vadd.f32 0.0, %v3035
        %v3037 = vpop.f32.mrb[0].mxu0
        %3038 = vmatprep.mubr.f32.mxu0 0.0
        %3039 = vmatmul.mubr.f32.gmra.mrb[0].mxu0 %v2836
        %v3040 = vpop.f32.mrb[0].mxu0
        %v3041 = vadd.f32 0.0, %v3040
        %v3042 = vpop.f32.mrb[0].mxu0
        %3043 = vmatprep.mubr.f32.mxu0 0.0
        %3044 = vmatmul.mubr.f32.gmra.mrb[0].mxu0 %v2839
        %v3045 = vpop.f32.mrb[0].mxu0
        %v3046 = vadd.f32 0.0, %v3045
        %v3047 = vpop.f32.mrb[0].mxu0
        %3048 = vmatprep.mubr.f32.mxu0 0.0
        %3049 = vmatmul.mubr.f32.gmra.mrb[0].mxu0 %v2842
        %v3050 = vpop.f32.mrb[0].mxu0
        %v3051 = vadd.f32 0.0, %v3050
        %v3052 = vpop.f32.mrb[0].mxu0
        %3053 = vmatprep.mubr.f32.mxu0 0.0
        %3054 = vmatmul.mubr.f32.gmra.mrb[0].mxu0 %v2845
        %v3055 = vpop.f32.mrb[0].mxu0
        %v3056 = vadd.f32 0.0, %v3055
        %v3057 = vpop.f32.mrb[0].mxu0
        %3058 = vmatprep.mubr.f32.mxu0 0.0
        %3059 = vmatmul.mubr.f32.gmra.mrb[0].mxu0 %v2848
        %v3060 = vpop.f32.mrb[0].mxu0
        %v3061 = vadd.f32 0.0, %v3060
        %v3062 = vpop.f32.mrb[0].mxu0
        %3063 = vmatprep.mubr.f32.mxu0 0.0
        %3064 = vmatmul.mubr.f32.gmra.mrb[0].mxu0 %v2851
        %v3065 = vpop.f32.mrb[0].mxu0
        %v3066 = vadd.f32 0.0, %v3065
        %v3067 = vpop.f32.mrb[0].mxu0
        %3068 = vmatprep.mubr.f32.mxu0 0.0
        %3069 = vmatmul.mubr.f32.gmra.mrb[0].mxu0 %v2854
        %v3070 = vpop.f32.mrb[0].mxu0
        %v3071 = vadd.f32 0.0, %v3070
        %v3072 = vpop.f32.mrb[0].mxu0
        %3073 = vmatprep.mubr.f32.mxu0 0.0
        %3074 = vmatmul.mubr.f32.gmra.mrb[0].mxu0 %v2857
        %v3075 = vpop.f32.mrb[0].mxu0
        %v3076 = vadd.f32 0.0, %v3075
        %v3077 = vpop.f32.mrb[0].mxu0
        %3078 = vmatprep.mubr.f32.mxu0 0.0
        %3079 = vmatmul.mubr.f32.gmra.mrb[0].mxu0 %v2860
        %v3080 = vpop.f32.mrb[0].mxu0
        %v3081 = vadd.f32 0.0, %v3080
        %v3082 = vpop.f32.mrb[0].mxu0
        %3083 = vmatprep.mubr.f32.mxu0 0.0
        %3084 = vmatmul.mubr.f32.gmra.mrb[0].mxu0 %v2863
        %v3085 = vpop.f32.mrb[0].mxu0
        %v3086 = vadd.f32 0.0, %v3085
        %v3087 = vpop.f32.mrb[0].mxu0
        %3088 = vmatprep.mubr.f32.mxu0 0.0
        %3089 = vmatmul.mubr.f32.gmra.mrb[0].mxu0 %v2866
        %v3090 = vpop.f32.mrb[0].mxu0
        %v3091 = vadd.f32 0.0, %v3090
        %v3092 = vpop.f32.mrb[0].mxu0
        %3093 = vmatprep.mubr.f32.mxu0 0.0
        %3094 = vmatmul.mubr.f32.gmra.mrb[0].mxu0 %v2869
        %v3095 = vpop.f32.mrb[0].mxu0
        %v3096 = vadd.f32 0.0, %v3095
        %v3097 = vpop.f32.mrb[0].mxu0
        %3098 = vmatprep.mubr.f32.mxu0 0.0
        %3099 = vmatmul.mubr.f32.gmra.mrb[0].mxu0 %v2872
        %v3100 = vpop.f32.mrb[0].mxu0
        %v3101 = vadd.f32 0.0, %v3100
        %v3102 = vpop.f32.mrb[0].mxu0
        %3103 = vmatprep.mubr.f32.mxu0 0.0
        %3104 = vmatmul.mubr.f32.gmra.mrb[0].mxu0 %v2875
        %v3105 = vpop.f32.mrb[0].mxu0
        %v3106 = vadd.f32 0.0, %v3105
        %v3107 = vpop.f32.mrb[0].mxu0
        %3108 = vmatprep.mubr.f32.mxu0 0.0
        %3109 = vmatmul.mubr.f32.gmra.mrb[0].mxu0 %v2878
        %v3110 = vpop.f32.mrb[0].mxu0
        %v3111 = vadd.f32 0.0, %v3110
        %v3112 = vpop.f32.mrb[0].mxu0
        %3113 = vmatprep.mubr.f32.mxu0 0.0
        %3114 = vmatmul.mubr.f32.gmra.mrb[0].mxu0 %v2881
        %v3115 = vpop.f32.mrb[0].mxu0
        %v3116 = vadd.f32 0.0, %v3115
        %v3117 = vpop.f32.mrb[0].mxu0
        %3118 = vmatprep.mubr.f32.mxu0 0.0
        %3119 = vmatmul.mubr.f32.gmra.mrb[0].mxu0 %v2884
        %v3120 = vpop.f32.mrb[0].mxu0
        %v3121 = vadd.f32 0.0, %v3120
        %v3122 = vpop.f32.mrb[0].mxu0
        %3123 = vmatprep.mubr.f32.mxu0 0.0
        %3124 = vmatmul.mubr.f32.gmra.mrb[0].mxu0 %v2887
        %v3125 = vpop.f32.mrb[0].mxu0
        %v3126 = vadd.f32 0.0, %v3125
        %v3127 = vpop.f32.mrb[0].mxu0
        %3128 = vmatprep.mubr.f32.mxu0 0.0
        %3129 = vmatmul.mubr.f32.gmra.mrb[0].mxu0 %v2890
        %v3130 = vpop.f32.mrb[0].mxu0
        %v3131 = vadd.f32 0.0, %v3130
        %v3132 = vpop.f32.mrb[0].mxu0
        %3133 = vmatprep.mubr.f32.mxu0 0.0
        %3134 = vmatmul.mubr.f32.gmra.mrb[0].mxu0 %v2893
        %v3135 = vpop.f32.mrb[0].mxu0
        %v3136 = vadd.f32 0.0, %v3135
        %v3137 = vpop.f32.mrb[0].mxu0
        %3138 = vmatprep.mubr.f32.mxu0 0.0
        %3139 = vmatmul.mubr.f32.gmra.mrb[0].mxu0 %v2896
        %v3140 = vpop.f32.mrb[0].mxu0
        %v3141 = vadd.f32 0.0, %v3140
        %v3142 = vpop.f32.mrb[0].mxu0
        %3143 = vmatprep.mubr.f32.mxu0 0.0
        %3144 = vmatmul.mubr.f32.gmra.mrb[0].mxu0 %v2899
        %v3145 = vpop.f32.mrb[0].mxu0
        %v3146 = vadd.f32 0.0, %v3145
        %v3147 = vpop.f32.mrb[0].mxu0
        %3148 = vdwg.mxu0
        %v3149 = vadd.f32 %v2719, %v2971
        %v3150 = vadd.f32 %v2720, %v2976
        %v3151 = vadd.f32 %v2721, %v2981
        %v3152 = vadd.f32 %v2722, %v2986
        %v3153 = vadd.f32 %v2723, %v2991
        %v3154 = vadd.f32 %v2724, %v2996
        %v3155 = vadd.f32 %v2725, %v3001
        %v3156 = vadd.f32 %v2726, %v3006
        %v3157 = vadd.f32 %v2727, %v3011
        %v3158 = vadd.f32 %v2728, %v3016
        %v3159 = vadd.f32 %v2729, %v3021
        %v3160 = vadd.f32 %v2730, %v3026
        %v3161 = vadd.f32 %v2731, %v3031
        %v3162 = vadd.f32 %v2732, %v3036
        %v3163 = vadd.f32 %v2733, %v3041
        %v3164 = vadd.f32 %v2734, %v3046
        %v3165 = vadd.f32 %v2735, %v3051
        %v3166 = vadd.f32 %v2736, %v3056
        %v3167 = vadd.f32 %v2737, %v3061
        %v3168 = vadd.f32 %v2738, %v3066
        %v3169 = vadd.f32 %v2739, %v3071
        %v3170 = vadd.f32 %v2740, %v3076
        %v3171 = vadd.f32 %v2741, %v3081
        %v3172 = vadd.f32 %v2742, %v3086
        %v3173 = vadd.f32 %v2743, %v3091
        %v3174 = vadd.f32 %v2744, %v3096
        %v3175 = vadd.f32 %v2745, %v3101
        %v3176 = vadd.f32 %v2746, %v3106
        %v3177 = vadd.f32 %v2747, %v3111
        %v3178 = vadd.f32 %v2748, %v3116
        %v3179 = vadd.f32 %v2749, %v3121
        %v3180 = vadd.f32 %v2750, %v3126
        %v3181 = vadd.f32 %v2751, %v3131
        %v3182 = vadd.f32 %v2752, %v3136
        %v3183 = vadd.f32 %v2753, %v3141
        %v3184 = vadd.f32 %v2754, %v3146
        %v3185 = vld [vmem:[%s228 + $0x25] sm:$0xff]
        %v3186 = vld [vmem:[%s228 + $0x2d] sm:$0xff]
        %v3187 = vld [vmem:[%s228 + $0x35] sm:$0xff]
        %v3188 = vld [vmem:[%s228 + $0x3d] sm:$0xff]
        %v3189 = vld [vmem:[%s228 + $0x45] sm:$0xff]
        %v3190 = vld [vmem:[%s228 + $0x4d] sm:$0xff]
        %v3191 = vld [vmem:[%s228 + $0x55] sm:$0xff]
        %v3192 = vld [vmem:[%s228 + $0x5d] sm:$0xff]
        %v3193 = vld [vmem:[%s228 + $0x65] sm:$0xff]
        %v3194 = vld [vmem:[%s228 + $0x6d] sm:$0xff]
        %v3195 = vld [vmem:[%s228 + $0x75] sm:$0xff]
        %v3196 = vld [vmem:[%s228 + $0x7d] sm:$0xff]
        %v3197 = vld [vmem:[%s228 + $0x85] sm:$0xff]
        %v3198 = vld [vmem:[%s228 + $0x8d] sm:$0xff]
        %v3199 = vld [vmem:[%s228 + $0x95] sm:$0xff]
        %v3200 = vld [vmem:[%s228 + $0x9d] sm:$0xff]
        %v3201 = vld [vmem:[%s228 + $0xa5] sm:$0xff]
        %v3202 = vld [vmem:[%s228 + $0xad] sm:$0xff]
        %v3203 = vld [vmem:[%s228 + $0xb5] sm:$0xff]
        %v3204 = vld [vmem:[%s228 + $0xbd] sm:$0xff]
        %v3205 = vld [vmem:[%s228 + $0xc5] sm:$0xff]
        %v3206 = vld [vmem:[%s228 + $0xcd] sm:$0xff]
        %v3207 = vld [vmem:[%s228 + $0xd5] sm:$0xff]
        %v3208 = vld [vmem:[%s228 + $0xdd] sm:$0xff]
        %v3209 = vld [vmem:[%s228 + $0xe5] sm:$0xff]
        %v3210 = vld [vmem:[%s228 + $0xed] sm:$0xff]
        %v3211 = vld [vmem:[%s228 + $0xf5] sm:$0xff]
        %v3212 = vld [vmem:[%s228 + $0xfd] sm:$0xff]
        %v3213 = vld [vmem:[%s228 + $0x105] sm:$0xff]
        %v3214 = vld [vmem:[%s228 + $0x10d] sm:$0xff]
        %v3215 = vld [vmem:[%s228 + $0x115] sm:$0xff]
        %v3216 = vld [vmem:[%s228 + $0x11d] sm:$0xff]
        %v3217 = vld [vmem:[%s228 + $0x125] sm:$0xff]
        %v3218 = vld [vmem:[%s228 + $0x12d] sm:$0xff]
        %v3219 = vld [vmem:[%s228 + $0x135] sm:$0xff]
        %v3220 = vld [vmem:[%s228 + $0x13d] sm:$0xff]
        %s3221 = scalar_lea.vmem %s232, 28
        %v3222 = vld [vmem:[%s3221] sm:$0xf]
        %v3224 = vsel %vm321, %v3185, 0
        %v3227 = vsel %vm321, %v3186, 0
        %v3230 = vsel %vm321, %v3187, 0
        %v3233 = vsel %vm321, %v3188, 0
        %v3236 = vsel %vm321, %v3189, 0
        %v3239 = vsel %vm321, %v3190, 0
        %v3242 = vsel %vm321, %v3191, 0
        %v3245 = vsel %vm321, %v3192, 0
        %v3248 = vsel %vm321, %v3193, 0
        %v3251 = vsel %vm321, %v3194, 0
        %v3254 = vsel %vm321, %v3195, 0
        %v3257 = vsel %vm321, %v3196, 0
        %v3260 = vsel %vm321, %v3197, 0
        %v3263 = vsel %vm321, %v3198, 0
        %v3266 = vsel %vm321, %v3199, 0
        %v3269 = vsel %vm321, %v3200, 0
        %v3272 = vsel %vm321, %v3201, 0
        %v3275 = vsel %vm321, %v3202, 0
        %v3278 = vsel %vm321, %v3203, 0
        %v3281 = vsel %vm321, %v3204, 0
        %v3284 = vsel %vm321, %v3205, 0
        %v3287 = vsel %vm321, %v3206, 0
        %v3290 = vsel %vm321, %v3207, 0
        %v3293 = vsel %vm321, %v3208, 0
        %v3296 = vsel %vm321, %v3209, 0
        %v3299 = vsel %vm321, %v3210, 0
        %v3302 = vsel %vm321, %v3211, 0
        %v3305 = vsel %vm321, %v3212, 0
        %v3308 = vsel %vm321, %v3213, 0
        %v3311 = vsel %vm321, %v3214, 0
        %v3314 = vsel %vm321, %v3215, 0
        %v3317 = vsel %vm321, %v3216, 0
        %v3320 = vsel %vm321, %v3217, 0
        %v3323 = vsel %vm321, %v3218, 0
        %v3326 = vsel %vm321, %v3219, 0
        %v3329 = vsel %vm321, %v3220, 0
        %v3332 = vsel %vm430, %v3222, 0
        %3334 = vmatprep.subr.mxu0 0.0
        %3335 = vmatpush1.msra.mxu0 %v3332
        %3336 = vmatprep.subr.mxu0 0.0
        %3337 = vmatpush1.msra.mxu0 0.0
        %3338 = vmatprep.subr.mxu0 0.0
        %3339 = vmatpush1.msra.mxu0 0.0
        %3340 = vmatprep.subr.mxu0 0.0
        %3341 = vmatpush1.msra.mxu0 0.0
        %3342 = vmatprep.subr.mxu0 0.0
        %3343 = vmatpush1.msra.mxu0 0.0
        %3344 = vmatprep.subr.mxu0 0.0
        %3345 = vmatpush1.msra.mxu0 0.0
        %3346 = vmatprep.subr.mxu0 0.0
        %3347 = vmatpush1.msra.mxu0 0.0
        %3348 = vmatprep.subr.mxu0 0.0
        %3349 = vmatpush1.msra.mxu0 0.0
        %3350 = vmatprep.subr.mxu0 0.0
        %3351 = vmatpush1.msra.mxu0 0.0
        %3352 = vmatprep.subr.mxu0 0.0
        %3353 = vmatpush1.msra.mxu0 0.0
        %3354 = vmatprep.subr.mxu0 0.0
        %3355 = vmatpush1.msra.mxu0 0.0
        %3356 = vmatprep.subr.mxu0 0.0
        %3357 = vmatpush1.msra.mxu0 0.0
        %3358 = vmatprep.subr.mxu0 0.0
        %3359 = vmatpush1.msra.mxu0 0.0
        %3360 = vmatprep.subr.mxu0 0.0
        %3361 = vmatpush1.msra.mxu0 0.0
        %3362 = vmatprep.subr.mxu0 0.0
        %3363 = vmatpush1.msra.mxu0 0.0
        %3364 = vmatprep.subr.mxu0 0.0
        %3365 = vmatpush1.msra.mxu0 0.0
        %3366 = vmatprep.subr.mxu0 0.0
        %3367 = vmatpush1.msra.mxu0 0.0
        %3368 = vmatprep.subr.mxu0 0.0
        %3369 = vmatpush1.msra.mxu0 0.0
        %3370 = vmatprep.subr.mxu0 0.0
        %3371 = vmatpush1.msra.mxu0 0.0
        %3372 = vmatprep.subr.mxu0 0.0
        %3373 = vmatpush1.msra.mxu0 0.0
        %3374 = vmatprep.subr.mxu0 0.0
        %3375 = vmatpush1.msra.mxu0 0.0
        %3376 = vmatprep.subr.mxu0 0.0
        %3377 = vmatpush1.msra.mxu0 0.0
        %3378 = vmatprep.subr.mxu0 0.0
        %3379 = vmatpush1.msra.mxu0 0.0
        %3380 = vmatprep.subr.mxu0 0.0
        %3381 = vmatpush1.msra.mxu0 0.0
        %3382 = vmatprep.subr.mxu0 0.0
        %3383 = vmatpush1.msra.mxu0 0.0
        %3384 = vmatprep.subr.mxu0 0.0
        %3385 = vmatpush1.msra.mxu0 0.0
        %3386 = vmatprep.subr.mxu0 0.0
        %3387 = vmatpush1.msra.mxu0 0.0
        %3388 = vmatprep.subr.mxu0 0.0
        %3389 = vmatpush1.msra.mxu0 0.0
        %3390 = vmatprep.subr.mxu0 0.0
        %3391 = vmatpush1.msra.mxu0 0.0
        %3392 = vmatprep.subr.mxu0 0.0
        %3393 = vmatpush1.msra.mxu0 0.0
        %3394 = vmatprep.subr.mxu0 0.0
        %3395 = vmatpush1.msra.mxu0 0.0
        %3396 = vmatprep.subr.mxu0 0.0
        %3397 = vmatpush1.msra.mxu0 0.0
        %3398 = vmatprep.mubr.f32.mxu0 0.0
        %3399 = vmatmul.mubr.f32.gmra.mrb[0].mxu0 %v3224
        %v3400 = vpop.f32.mrb[0].mxu0
        %v3401 = vadd.f32 0.0, %v3400
        %v3402 = vpop.f32.mrb[0].mxu0
        %3403 = vmatprep.mubr.f32.mxu0 0.0
        %3404 = vmatmul.mubr.f32.gmra.mrb[0].mxu0 %v3227
        %v3405 = vpop.f32.mrb[0].mxu0
        %v3406 = vadd.f32 0.0, %v3405
        %v3407 = vpop.f32.mrb[0].mxu0
        %3408 = vmatprep.mubr.f32.mxu0 0.0
        %3409 = vmatmul.mubr.f32.gmra.mrb[0].mxu0 %v3230
        %v3410 = vpop.f32.mrb[0].mxu0
        %v3411 = vadd.f32 0.0, %v3410
        %v3412 = vpop.f32.mrb[0].mxu0
        %3413 = vmatprep.mubr.f32.mxu0 0.0
        %3414 = vmatmul.mubr.f32.gmra.mrb[0].mxu0 %v3233
        %v3415 = vpop.f32.mrb[0].mxu0
        %v3416 = vadd.f32 0.0, %v3415
        %v3417 = vpop.f32.mrb[0].mxu0
        %3418 = vmatprep.mubr.f32.mxu0 0.0
        %3419 = vmatmul.mubr.f32.gmra.mrb[0].mxu0 %v3236
        %v3420 = vpop.f32.mrb[0].mxu0
        %v3421 = vadd.f32 0.0, %v3420
        %v3422 = vpop.f32.mrb[0].mxu0
        %3423 = vmatprep.mubr.f32.mxu0 0.0
        %3424 = vmatmul.mubr.f32.gmra.mrb[0].mxu0 %v3239
        %v3425 = vpop.f32.mrb[0].mxu0
        %v3426 = vadd.f32 0.0, %v3425
        %v3427 = vpop.f32.mrb[0].mxu0
        %3428 = vmatprep.mubr.f32.mxu0 0.0
        %3429 = vmatmul.mubr.f32.gmra.mrb[0].mxu0 %v3242
        %v3430 = vpop.f32.mrb[0].mxu0
        %v3431 = vadd.f32 0.0, %v3430
        %v3432 = vpop.f32.mrb[0].mxu0
        %3433 = vmatprep.mubr.f32.mxu0 0.0
        %3434 = vmatmul.mubr.f32.gmra.mrb[0].mxu0 %v3245
        %v3435 = vpop.f32.mrb[0].mxu0
        %v3436 = vadd.f32 0.0, %v3435
        %v3437 = vpop.f32.mrb[0].mxu0
        %3438 = vmatprep.mubr.f32.mxu0 0.0
        %3439 = vmatmul.mubr.f32.gmra.mrb[0].mxu0 %v3248
        %v3440 = vpop.f32.mrb[0].mxu0
        %v3441 = vadd.f32 0.0, %v3440
        %v3442 = vpop.f32.mrb[0].mxu0
        %3443 = vmatprep.mubr.f32.mxu0 0.0
        %3444 = vmatmul.mubr.f32.gmra.mrb[0].mxu0 %v3251
        %v3445 = vpop.f32.mrb[0].mxu0
        %v3446 = vadd.f32 0.0, %v3445
        %v3447 = vpop.f32.mrb[0].mxu0
        %3448 = vmatprep.mubr.f32.mxu0 0.0
        %3449 = vmatmul.mubr.f32.gmra.mrb[0].mxu0 %v3254
        %v3450 = vpop.f32.mrb[0].mxu0
        %v3451 = vadd.f32 0.0, %v3450
        %v3452 = vpop.f32.mrb[0].mxu0
        %3453 = vmatprep.mubr.f32.mxu0 0.0
        %3454 = vmatmul.mubr.f32.gmra.mrb[0].mxu0 %v3257
        %v3455 = vpop.f32.mrb[0].mxu0
        %v3456 = vadd.f32 0.0, %v3455
        %v3457 = vpop.f32.mrb[0].mxu0
        %3458 = vmatprep.mubr.f32.mxu0 0.0
        %3459 = vmatmul.mubr.f32.gmra.mrb[0].mxu0 %v3260
        %v3460 = vpop.f32.mrb[0].mxu0
        %v3461 = vadd.f32 0.0, %v3460
        %v3462 = vpop.f32.mrb[0].mxu0
        %3463 = vmatprep.mubr.f32.mxu0 0.0
        %3464 = vmatmul.mubr.f32.gmra.mrb[0].mxu0 %v3263
        %v3465 = vpop.f32.mrb[0].mxu0
        %v3466 = vadd.f32 0.0, %v3465
        %v3467 = vpop.f32.mrb[0].mxu0
        %3468 = vmatprep.mubr.f32.mxu0 0.0
        %3469 = vmatmul.mubr.f32.gmra.mrb[0].mxu0 %v3266
        %v3470 = vpop.f32.mrb[0].mxu0
        %v3471 = vadd.f32 0.0, %v3470
        %v3472 = vpop.f32.mrb[0].mxu0
        %3473 = vmatprep.mubr.f32.mxu0 0.0
        %3474 = vmatmul.mubr.f32.gmra.mrb[0].mxu0 %v3269
        %v3475 = vpop.f32.mrb[0].mxu0
        %v3476 = vadd.f32 0.0, %v3475
        %v3477 = vpop.f32.mrb[0].mxu0
        %3478 = vmatprep.mubr.f32.mxu0 0.0
        %3479 = vmatmul.mubr.f32.gmra.mrb[0].mxu0 %v3272
        %v3480 = vpop.f32.mrb[0].mxu0
        %v3481 = vadd.f32 0.0, %v3480
        %v3482 = vpop.f32.mrb[0].mxu0
        %3483 = vmatprep.mubr.f32.mxu0 0.0
        %3484 = vmatmul.mubr.f32.gmra.mrb[0].mxu0 %v3275
        %v3485 = vpop.f32.mrb[0].mxu0
        %v3486 = vadd.f32 0.0, %v3485
        %v3487 = vpop.f32.mrb[0].mxu0
        %3488 = vmatprep.mubr.f32.mxu0 0.0
        %3489 = vmatmul.mubr.f32.gmra.mrb[0].mxu0 %v3278
        %v3490 = vpop.f32.mrb[0].mxu0
        %v3491 = vadd.f32 0.0, %v3490
        %v3492 = vpop.f32.mrb[0].mxu0
        %3493 = vmatprep.mubr.f32.mxu0 0.0
        %3494 = vmatmul.mubr.f32.gmra.mrb[0].mxu0 %v3281
        %v3495 = vpop.f32.mrb[0].mxu0
        %v3496 = vadd.f32 0.0, %v3495
        %v3497 = vpop.f32.mrb[0].mxu0
        %3498 = vmatprep.mubr.f32.mxu0 0.0
        %3499 = vmatmul.mubr.f32.gmra.mrb[0].mxu0 %v3284
        %v3500 = vpop.f32.mrb[0].mxu0
        %v3501 = vadd.f32 0.0, %v3500
        %v3502 = vpop.f32.mrb[0].mxu0
        %3503 = vmatprep.mubr.f32.mxu0 0.0
        %3504 = vmatmul.mubr.f32.gmra.mrb[0].mxu0 %v3287
        %v3505 = vpop.f32.mrb[0].mxu0
        %v3506 = vadd.f32 0.0, %v3505
        %v3507 = vpop.f32.mrb[0].mxu0
        %3508 = vmatprep.mubr.f32.mxu0 0.0
        %3509 = vmatmul.mubr.f32.gmra.mrb[0].mxu0 %v3290
        %v3510 = vpop.f32.mrb[0].mxu0
        %v3511 = vadd.f32 0.0, %v3510
        %v3512 = vpop.f32.mrb[0].mxu0
        %3513 = vmatprep.mubr.f32.mxu0 0.0
        %3514 = vmatmul.mubr.f32.gmra.mrb[0].mxu0 %v3293
        %v3515 = vpop.f32.mrb[0].mxu0
        %v3516 = vadd.f32 0.0, %v3515
        %v3517 = vpop.f32.mrb[0].mxu0
        %3518 = vmatprep.mubr.f32.mxu0 0.0
        %3519 = vmatmul.mubr.f32.gmra.mrb[0].mxu0 %v3296
        %v3520 = vpop.f32.mrb[0].mxu0
        %v3521 = vadd.f32 0.0, %v3520
        %v3522 = vpop.f32.mrb[0].mxu0
        %3523 = vmatprep.mubr.f32.mxu0 0.0
        %3524 = vmatmul.mubr.f32.gmra.mrb[0].mxu0 %v3299
        %v3525 = vpop.f32.mrb[0].mxu0
        %v3526 = vadd.f32 0.0, %v3525
        %v3527 = vpop.f32.mrb[0].mxu0
        %3528 = vmatprep.mubr.f32.mxu0 0.0
        %3529 = vmatmul.mubr.f32.gmra.mrb[0].mxu0 %v3302
        %v3530 = vpop.f32.mrb[0].mxu0
        %v3531 = vadd.f32 0.0, %v3530
        %v3532 = vpop.f32.mrb[0].mxu0
        %3533 = vmatprep.mubr.f32.mxu0 0.0
        %3534 = vmatmul.mubr.f32.gmra.mrb[0].mxu0 %v3305
        %v3535 = vpop.f32.mrb[0].mxu0
        %v3536 = vadd.f32 0.0, %v3535
        %v3537 = vpop.f32.mrb[0].mxu0
        %3538 = vmatprep.mubr.f32.mxu0 0.0
        %3539 = vmatmul.mubr.f32.gmra.mrb[0].mxu0 %v3308
        %v3540 = vpop.f32.mrb[0].mxu0
        %v3541 = vadd.f32 0.0, %v3540
        %v3542 = vpop.f32.mrb[0].mxu0
        %3543 = vmatprep.mubr.f32.mxu0 0.0
        %3544 = vmatmul.mubr.f32.gmra.mrb[0].mxu0 %v3311
        %v3545 = vpop.f32.mrb[0].mxu0
        %v3546 = vadd.f32 0.0, %v3545
        %v3547 = vpop.f32.mrb[0].mxu0
        %3548 = vmatprep.mubr.f32.mxu0 0.0
        %3549 = vmatmul.mubr.f32.gmra.mrb[0].mxu0 %v3314
        %v3550 = vpop.f32.mrb[0].mxu0
        %v3551 = vadd.f32 0.0, %v3550
        %v3552 = vpop.f32.mrb[0].mxu0
        %3553 = vmatprep.mubr.f32.mxu0 0.0
        %3554 = vmatmul.mubr.f32.gmra.mrb[0].mxu0 %v3317
        %v3555 = vpop.f32.mrb[0].mxu0
        %v3556 = vadd.f32 0.0, %v3555
        %v3557 = vpop.f32.mrb[0].mxu0
        %3558 = vmatprep.mubr.f32.mxu0 0.0
        %3559 = vmatmul.mubr.f32.gmra.mrb[0].mxu0 %v3320
        %v3560 = vpop.f32.mrb[0].mxu0
        %v3561 = vadd.f32 0.0, %v3560
        %v3562 = vpop.f32.mrb[0].mxu0
        %3563 = vmatprep.mubr.f32.mxu0 0.0
        %3564 = vmatmul.mubr.f32.gmra.mrb[0].mxu0 %v3323
        %v3565 = vpop.f32.mrb[0].mxu0
        %v3566 = vadd.f32 0.0, %v3565
        %v3567 = vpop.f32.mrb[0].mxu0
        %3568 = vmatprep.mubr.f32.mxu0 0.0
        %3569 = vmatmul.mubr.f32.gmra.mrb[0].mxu0 %v3326
        %v3570 = vpop.f32.mrb[0].mxu0
        %v3571 = vadd.f32 0.0, %v3570
        %v3572 = vpop.f32.mrb[0].mxu0
        %3573 = vmatprep.mubr.f32.mxu0 0.0
        %3574 = vmatmul.mubr.f32.gmra.mrb[0].mxu0 %v3329
        %v3575 = vpop.f32.mrb[0].mxu0
        %v3576 = vadd.f32 0.0, %v3575
        %v3577 = vpop.f32.mrb[0].mxu0
        %3578 = vdwg.mxu0
        %v3579 = vadd.f32 %v3149, %v3401
        %v3580 = vadd.f32 %v3150, %v3406
        %v3581 = vadd.f32 %v3151, %v3411
        %v3582 = vadd.f32 %v3152, %v3416
        %v3583 = vadd.f32 %v3153, %v3421
        %v3584 = vadd.f32 %v3154, %v3426
        %v3585 = vadd.f32 %v3155, %v3431
        %v3586 = vadd.f32 %v3156, %v3436
        %v3587 = vadd.f32 %v3157, %v3441
        %v3588 = vadd.f32 %v3158, %v3446
        %v3589 = vadd.f32 %v3159, %v3451
        %v3590 = vadd.f32 %v3160, %v3456
        %v3591 = vadd.f32 %v3161, %v3461
        %v3592 = vadd.f32 %v3162, %v3466
        %v3593 = vadd.f32 %v3163, %v3471
        %v3594 = vadd.f32 %v3164, %v3476
        %v3595 = vadd.f32 %v3165, %v3481
        %v3596 = vadd.f32 %v3166, %v3486
        %v3597 = vadd.f32 %v3167, %v3491
        %v3598 = vadd.f32 %v3168, %v3496
        %v3599 = vadd.f32 %v3169, %v3501
        %v3600 = vadd.f32 %v3170, %v3506
        %v3601 = vadd.f32 %v3171, %v3511
        %v3602 = vadd.f32 %v3172, %v3516
        %v3603 = vadd.f32 %v3173, %v3521
        %v3604 = vadd.f32 %v3174, %v3526
        %v3605 = vadd.f32 %v3175, %v3531
        %v3606 = vadd.f32 %v3176, %v3536
        %v3607 = vadd.f32 %v3177, %v3541
        %v3608 = vadd.f32 %v3178, %v3546
        %v3609 = vadd.f32 %v3179, %v3551
        %v3610 = vadd.f32 %v3180, %v3556
        %v3611 = vadd.f32 %v3181, %v3561
        %v3612 = vadd.f32 %v3182, %v3566
        %v3613 = vadd.f32 %v3183, %v3571
        %v3614 = vadd.f32 %v3184, %v3576
        %v3615 = vld [vmem:[%s228 + $0x26] sm:$0xff]
        %v3616 = vld [vmem:[%s228 + $0x2e] sm:$0xff]
        %v3617 = vld [vmem:[%s228 + $0x36] sm:$0xff]
        %v3618 = vld [vmem:[%s228 + $0x3e] sm:$0xff]
        %v3619 = vld [vmem:[%s228 + $0x46] sm:$0xff]
        %v3620 = vld [vmem:[%s228 + $0x4e] sm:$0xff]
        %v3621 = vld [vmem:[%s228 + $0x56] sm:$0xff]
        %v3622 = vld [vmem:[%s228 + $0x5e] sm:$0xff]
        %v3623 = vld [vmem:[%s228 + $0x66] sm:$0xff]
        %v3624 = vld [vmem:[%s228 + $0x6e] sm:$0xff]
        %v3625 = vld [vmem:[%s228 + $0x76] sm:$0xff]
        %v3626 = vld [vmem:[%s228 + $0x7e] sm:$0xff]
        %v3627 = vld [vmem:[%s228 + $0x86] sm:$0xff]
        %v3628 = vld [vmem:[%s228 + $0x8e] sm:$0xff]
        %v3629 = vld [vmem:[%s228 + $0x96] sm:$0xff]
        %v3630 = vld [vmem:[%s228 + $0x9e] sm:$0xff]
        %v3631 = vld [vmem:[%s228 + $0xa6] sm:$0xff]
        %v3632 = vld [vmem:[%s228 + $0xae] sm:$0xff]
        %v3633 = vld [vmem:[%s228 + $0xb6] sm:$0xff]
        %v3634 = vld [vmem:[%s228 + $0xbe] sm:$0xff]
        %v3635 = vld [vmem:[%s228 + $0xc6] sm:$0xff]
        %v3636 = vld [vmem:[%s228 + $0xce] sm:$0xff]
        %v3637 = vld [vmem:[%s228 + $0xd6] sm:$0xff]
        %v3638 = vld [vmem:[%s228 + $0xde] sm:$0xff]
        %v3639 = vld [vmem:[%s228 + $0xe6] sm:$0xff]
        %v3640 = vld [vmem:[%s228 + $0xee] sm:$0xff]
        %v3641 = vld [vmem:[%s228 + $0xf6] sm:$0xff]
        %v3642 = vld [vmem:[%s228 + $0xfe] sm:$0xff]
        %v3643 = vld [vmem:[%s228 + $0x106] sm:$0xff]
        %v3644 = vld [vmem:[%s228 + $0x10e] sm:$0xff]
        %v3645 = vld [vmem:[%s228 + $0x116] sm:$0xff]
        %v3646 = vld [vmem:[%s228 + $0x11e] sm:$0xff]
        %v3647 = vld [vmem:[%s228 + $0x126] sm:$0xff]
        %v3648 = vld [vmem:[%s228 + $0x12e] sm:$0xff]
        %v3649 = vld [vmem:[%s228 + $0x136] sm:$0xff]
        %v3650 = vld [vmem:[%s228 + $0x13e] sm:$0xff]
        %s3651 = scalar_lea.vmem %s232, 32
        %v3652 = vld [vmem:[%s3651] sm:$0xf]
        %v3654 = vsel %vm321, %v3615, 0
        %v3657 = vsel %vm321, %v3616, 0
        %v3660 = vsel %vm321, %v3617, 0
        %v3663 = vsel %vm321, %v3618, 0
        %v3666 = vsel %vm321, %v3619, 0
        %v3669 = vsel %vm321, %v3620, 0
        %v3672 = vsel %vm321, %v3621, 0
        %v3675 = vsel %vm321, %v3622, 0
        %v3678 = vsel %vm321, %v3623, 0
        %v3681 = vsel %vm321, %v3624, 0
        %v3684 = vsel %vm321, %v3625, 0
        %v3687 = vsel %vm321, %v3626, 0
        %v3690 = vsel %vm321, %v3627, 0
        %v3693 = vsel %vm321, %v3628, 0
        %v3696 = vsel %vm321, %v3629, 0
        %v3699 = vsel %vm321, %v3630, 0
        %v3702 = vsel %vm321, %v3631, 0
        %v3705 = vsel %vm321, %v3632, 0
        %v3708 = vsel %vm321, %v3633, 0
        %v3711 = vsel %vm321, %v3634, 0
        %v3714 = vsel %vm321, %v3635, 0
        %v3717 = vsel %vm321, %v3636, 0
        %v3720 = vsel %vm321, %v3637, 0
        %v3723 = vsel %vm321, %v3638, 0
        %v3726 = vsel %vm321, %v3639, 0
        %v3729 = vsel %vm321, %v3640, 0
        %v3732 = vsel %vm321, %v3641, 0
        %v3735 = vsel %vm321, %v3642, 0
        %v3738 = vsel %vm321, %v3643, 0
        %v3741 = vsel %vm321, %v3644, 0
        %v3744 = vsel %vm321, %v3645, 0
        %v3747 = vsel %vm321, %v3646, 0
        %v3750 = vsel %vm321, %v3647, 0
        %v3753 = vsel %vm321, %v3648, 0
        %v3756 = vsel %vm321, %v3649, 0
        %v3759 = vsel %vm321, %v3650, 0
        %v3762 = vsel %vm430, %v3652, 0
        %3764 = vmatprep.subr.mxu0 0.0
        %3765 = vmatpush1.msra.mxu0 %v3762
        %3766 = vmatprep.subr.mxu0 0.0
        %3767 = vmatpush1.msra.mxu0 0.0
        %3768 = vmatprep.subr.mxu0 0.0
        %3769 = vmatpush1.msra.mxu0 0.0
        %3770 = vmatprep.subr.mxu0 0.0
        %3771 = vmatpush1.msra.mxu0 0.0
        %3772 = vmatprep.subr.mxu0 0.0
        %3773 = vmatpush1.msra.mxu0 0.0
        %3774 = vmatprep.subr.mxu0 0.0
        %3775 = vmatpush1.msra.mxu0 0.0
        %3776 = vmatprep.subr.mxu0 0.0
        %3777 = vmatpush1.msra.mxu0 0.0
        %3778 = vmatprep.subr.mxu0 0.0
        %3779 = vmatpush1.msra.mxu0 0.0
        %3780 = vmatprep.subr.mxu0 0.0
        %3781 = vmatpush1.msra.mxu0 0.0
        %3782 = vmatprep.subr.mxu0 0.0
        %3783 = vmatpush1.msra.mxu0 0.0
        %3784 = vmatprep.subr.mxu0 0.0
        %3785 = vmatpush1.msra.mxu0 0.0
        %3786 = vmatprep.subr.mxu0 0.0
        %3787 = vmatpush1.msra.mxu0 0.0
        %3788 = vmatprep.subr.mxu0 0.0
        %3789 = vmatpush1.msra.mxu0 0.0
        %3790 = vmatprep.subr.mxu0 0.0
        %3791 = vmatpush1.msra.mxu0 0.0
        %3792 = vmatprep.subr.mxu0 0.0
        %3793 = vmatpush1.msra.mxu0 0.0
        %3794 = vmatprep.subr.mxu0 0.0
        %3795 = vmatpush1.msra.mxu0 0.0
        %3796 = vmatprep.subr.mxu0 0.0
        %3797 = vmatpush1.msra.mxu0 0.0
        %3798 = vmatprep.subr.mxu0 0.0
        %3799 = vmatpush1.msra.mxu0 0.0
        %3800 = vmatprep.subr.mxu0 0.0
        %3801 = vmatpush1.msra.mxu0 0.0
        %3802 = vmatprep.subr.mxu0 0.0
        %3803 = vmatpush1.msra.mxu0 0.0
        %3804 = vmatprep.subr.mxu0 0.0
        %3805 = vmatpush1.msra.mxu0 0.0
        %3806 = vmatprep.subr.mxu0 0.0
        %3807 = vmatpush1.msra.mxu0 0.0
        %3808 = vmatprep.subr.mxu0 0.0
        %3809 = vmatpush1.msra.mxu0 0.0
        %3810 = vmatprep.subr.mxu0 0.0
        %3811 = vmatpush1.msra.mxu0 0.0
        %3812 = vmatprep.subr.mxu0 0.0
        %3813 = vmatpush1.msra.mxu0 0.0
        %3814 = vmatprep.subr.mxu0 0.0
        %3815 = vmatpush1.msra.mxu0 0.0
        %3816 = vmatprep.subr.mxu0 0.0
        %3817 = vmatpush1.msra.mxu0 0.0
        %3818 = vmatprep.subr.mxu0 0.0
        %3819 = vmatpush1.msra.mxu0 0.0
        %3820 = vmatprep.subr.mxu0 0.0
        %3821 = vmatpush1.msra.mxu0 0.0
        %3822 = vmatprep.subr.mxu0 0.0
        %3823 = vmatpush1.msra.mxu0 0.0
        %3824 = vmatprep.subr.mxu0 0.0
        %3825 = vmatpush1.msra.mxu0 0.0
        %3826 = vmatprep.subr.mxu0 0.0
        %3827 = vmatpush1.msra.mxu0 0.0
        %3828 = vmatprep.mubr.f32.mxu0 0.0
        %3829 = vmatmul.mubr.f32.gmra.mrb[0].mxu0 %v3654
        %v3830 = vpop.f32.mrb[0].mxu0
        %v3831 = vadd.f32 0.0, %v3830
        %v3832 = vpop.f32.mrb[0].mxu0
        %3833 = vmatprep.mubr.f32.mxu0 0.0
        %3834 = vmatmul.mubr.f32.gmra.mrb[0].mxu0 %v3657
        %v3835 = vpop.f32.mrb[0].mxu0
        %v3836 = vadd.f32 0.0, %v3835
        %v3837 = vpop.f32.mrb[0].mxu0
        %3838 = vmatprep.mubr.f32.mxu0 0.0
        %3839 = vmatmul.mubr.f32.gmra.mrb[0].mxu0 %v3660
        %v3840 = vpop.f32.mrb[0].mxu0
        %v3841 = vadd.f32 0.0, %v3840
        %v3842 = vpop.f32.mrb[0].mxu0
        %3843 = vmatprep.mubr.f32.mxu0 0.0
        %3844 = vmatmul.mubr.f32.gmra.mrb[0].mxu0 %v3663
        %v3845 = vpop.f32.mrb[0].mxu0
        %v3846 = vadd.f32 0.0, %v3845
        %v3847 = vpop.f32.mrb[0].mxu0
        %3848 = vmatprep.mubr.f32.mxu0 0.0
        %3849 = vmatmul.mubr.f32.gmra.mrb[0].mxu0 %v3666
        %v3850 = vpop.f32.mrb[0].mxu0
        %v3851 = vadd.f32 0.0, %v3850
        %v3852 = vpop.f32.mrb[0].mxu0
        %3853 = vmatprep.mubr.f32.mxu0 0.0
        %3854 = vmatmul.mubr.f32.gmra.mrb[0].mxu0 %v3669
        %v3855 = vpop.f32.mrb[0].mxu0
        %v3856 = vadd.f32 0.0, %v3855
        %v3857 = vpop.f32.mrb[0].mxu0
        %3858 = vmatprep.mubr.f32.mxu0 0.0
        %3859 = vmatmul.mubr.f32.gmra.mrb[0].mxu0 %v3672
        %v3860 = vpop.f32.mrb[0].mxu0
        %v3861 = vadd.f32 0.0, %v3860
        %v3862 = vpop.f32.mrb[0].mxu0
        %3863 = vmatprep.mubr.f32.mxu0 0.0
        %3864 = vmatmul.mubr.f32.gmra.mrb[0].mxu0 %v3675
        %v3865 = vpop.f32.mrb[0].mxu0
        %v3866 = vadd.f32 0.0, %v3865
        %v3867 = vpop.f32.mrb[0].mxu0
        %3868 = vmatprep.mubr.f32.mxu0 0.0
        %3869 = vmatmul.mubr.f32.gmra.mrb[0].mxu0 %v3678
        %v3870 = vpop.f32.mrb[0].mxu0
        %v3871 = vadd.f32 0.0, %v3870
        %v3872 = vpop.f32.mrb[0].mxu0
        %3873 = vmatprep.mubr.f32.mxu0 0.0
        %3874 = vmatmul.mubr.f32.gmra.mrb[0].mxu0 %v3681
        %v3875 = vpop.f32.mrb[0].mxu0
        %v3876 = vadd.f32 0.0, %v3875
        %v3877 = vpop.f32.mrb[0].mxu0
        %3878 = vmatprep.mubr.f32.mxu0 0.0
        %3879 = vmatmul.mubr.f32.gmra.mrb[0].mxu0 %v3684
        %v3880 = vpop.f32.mrb[0].mxu0
        %v3881 = vadd.f32 0.0, %v3880
        %v3882 = vpop.f32.mrb[0].mxu0
        %3883 = vmatprep.mubr.f32.mxu0 0.0
        %3884 = vmatmul.mubr.f32.gmra.mrb[0].mxu0 %v3687
        %v3885 = vpop.f32.mrb[0].mxu0
        %v3886 = vadd.f32 0.0, %v3885
        %v3887 = vpop.f32.mrb[0].mxu0
        %3888 = vmatprep.mubr.f32.mxu0 0.0
        %3889 = vmatmul.mubr.f32.gmra.mrb[0].mxu0 %v3690
        %v3890 = vpop.f32.mrb[0].mxu0
        %v3891 = vadd.f32 0.0, %v3890
        %v3892 = vpop.f32.mrb[0].mxu0
        %3893 = vmatprep.mubr.f32.mxu0 0.0
        %3894 = vmatmul.mubr.f32.gmra.mrb[0].mxu0 %v3693
        %v3895 = vpop.f32.mrb[0].mxu0
        %v3896 = vadd.f32 0.0, %v3895
        %v3897 = vpop.f32.mrb[0].mxu0
        %3898 = vmatprep.mubr.f32.mxu0 0.0
        %3899 = vmatmul.mubr.f32.gmra.mrb[0].mxu0 %v3696
        %v3900 = vpop.f32.mrb[0].mxu0
        %v3901 = vadd.f32 0.0, %v3900
        %v3902 = vpop.f32.mrb[0].mxu0
        %3903 = vmatprep.mubr.f32.mxu0 0.0
        %3904 = vmatmul.mubr.f32.gmra.mrb[0].mxu0 %v3699
        %v3905 = vpop.f32.mrb[0].mxu0
        %v3906 = vadd.f32 0.0, %v3905
        %v3907 = vpop.f32.mrb[0].mxu0
        %3908 = vmatprep.mubr.f32.mxu0 0.0
        %3909 = vmatmul.mubr.f32.gmra.mrb[0].mxu0 %v3702
        %v3910 = vpop.f32.mrb[0].mxu0
        %v3911 = vadd.f32 0.0, %v3910
        %v3912 = vpop.f32.mrb[0].mxu0
        %3913 = vmatprep.mubr.f32.mxu0 0.0
        %3914 = vmatmul.mubr.f32.gmra.mrb[0].mxu0 %v3705
        %v3915 = vpop.f32.mrb[0].mxu0
        %v3916 = vadd.f32 0.0, %v3915
        %v3917 = vpop.f32.mrb[0].mxu0
        %3918 = vmatprep.mubr.f32.mxu0 0.0
        %3919 = vmatmul.mubr.f32.gmra.mrb[0].mxu0 %v3708
        %v3920 = vpop.f32.mrb[0].mxu0
        %v3921 = vadd.f32 0.0, %v3920
        %v3922 = vpop.f32.mrb[0].mxu0
        %3923 = vmatprep.mubr.f32.mxu0 0.0
        %3924 = vmatmul.mubr.f32.gmra.mrb[0].mxu0 %v3711
        %v3925 = vpop.f32.mrb[0].mxu0
        %v3926 = vadd.f32 0.0, %v3925
        %v3927 = vpop.f32.mrb[0].mxu0
        %3928 = vmatprep.mubr.f32.mxu0 0.0
        %3929 = vmatmul.mubr.f32.gmra.mrb[0].mxu0 %v3714
        %v3930 = vpop.f32.mrb[0].mxu0
        %v3931 = vadd.f32 0.0, %v3930
        %v3932 = vpop.f32.mrb[0].mxu0
        %3933 = vmatprep.mubr.f32.mxu0 0.0
        %3934 = vmatmul.mubr.f32.gmra.mrb[0].mxu0 %v3717
        %v3935 = vpop.f32.mrb[0].mxu0
        %v3936 = vadd.f32 0.0, %v3935
        %v3937 = vpop.f32.mrb[0].mxu0
        %3938 = vmatprep.mubr.f32.mxu0 0.0
        %3939 = vmatmul.mubr.f32.gmra.mrb[0].mxu0 %v3720
        %v3940 = vpop.f32.mrb[0].mxu0
        %v3941 = vadd.f32 0.0, %v3940
        %v3942 = vpop.f32.mrb[0].mxu0
        %3943 = vmatprep.mubr.f32.mxu0 0.0
        %3944 = vmatmul.mubr.f32.gmra.mrb[0].mxu0 %v3723
        %v3945 = vpop.f32.mrb[0].mxu0
        %v3946 = vadd.f32 0.0, %v3945
        %v3947 = vpop.f32.mrb[0].mxu0
        %3948 = vmatprep.mubr.f32.mxu0 0.0
        %3949 = vmatmul.mubr.f32.gmra.mrb[0].mxu0 %v3726
        %v3950 = vpop.f32.mrb[0].mxu0
        %v3951 = vadd.f32 0.0, %v3950
        %v3952 = vpop.f32.mrb[0].mxu0
        %3953 = vmatprep.mubr.f32.mxu0 0.0
        %3954 = vmatmul.mubr.f32.gmra.mrb[0].mxu0 %v3729
        %v3955 = vpop.f32.mrb[0].mxu0
        %v3956 = vadd.f32 0.0, %v3955
        %v3957 = vpop.f32.mrb[0].mxu0
        %3958 = vmatprep.mubr.f32.mxu0 0.0
        %3959 = vmatmul.mubr.f32.gmra.mrb[0].mxu0 %v3732
        %v3960 = vpop.f32.mrb[0].mxu0
        %v3961 = vadd.f32 0.0, %v3960
        %v3962 = vpop.f32.mrb[0].mxu0
        %3963 = vmatprep.mubr.f32.mxu0 0.0
        %3964 = vmatmul.mubr.f32.gmra.mrb[0].mxu0 %v3735
        %v3965 = vpop.f32.mrb[0].mxu0
        %v3966 = vadd.f32 0.0, %v3965
        %v3967 = vpop.f32.mrb[0].mxu0
        %3968 = vmatprep.mubr.f32.mxu0 0.0
        %3969 = vmatmul.mubr.f32.gmra.mrb[0].mxu0 %v3738
        %v3970 = vpop.f32.mrb[0].mxu0
        %v3971 = vadd.f32 0.0, %v3970
        %v3972 = vpop.f32.mrb[0].mxu0
        %3973 = vmatprep.mubr.f32.mxu0 0.0
        %3974 = vmatmul.mubr.f32.gmra.mrb[0].mxu0 %v3741
        %v3975 = vpop.f32.mrb[0].mxu0
        %v3976 = vadd.f32 0.0, %v3975
        %v3977 = vpop.f32.mrb[0].mxu0
        %3978 = vmatprep.mubr.f32.mxu0 0.0
        %3979 = vmatmul.mubr.f32.gmra.mrb[0].mxu0 %v3744
        %v3980 = vpop.f32.mrb[0].mxu0
        %v3981 = vadd.f32 0.0, %v3980
        %v3982 = vpop.f32.mrb[0].mxu0
        %3983 = vmatprep.mubr.f32.mxu0 0.0
        %3984 = vmatmul.mubr.f32.gmra.mrb[0].mxu0 %v3747
        %v3985 = vpop.f32.mrb[0].mxu0
        %v3986 = vadd.f32 0.0, %v3985
        %v3987 = vpop.f32.mrb[0].mxu0
        %3988 = vmatprep.mubr.f32.mxu0 0.0
        %3989 = vmatmul.mubr.f32.gmra.mrb[0].mxu0 %v3750
        %v3990 = vpop.f32.mrb[0].mxu0
        %v3991 = vadd.f32 0.0, %v3990
        %v3992 = vpop.f32.mrb[0].mxu0
        %3993 = vmatprep.mubr.f32.mxu0 0.0
        %3994 = vmatmul.mubr.f32.gmra.mrb[0].mxu0 %v3753
        %v3995 = vpop.f32.mrb[0].mxu0
        %v3996 = vadd.f32 0.0, %v3995
        %v3997 = vpop.f32.mrb[0].mxu0
        %3998 = vmatprep.mubr.f32.mxu0 0.0
        %3999 = vmatmul.mubr.f32.gmra.mrb[0].mxu0 %v3756
        %v4000 = vpop.f32.mrb[0].mxu0
        %v4001 = vadd.f32 0.0, %v4000
        %v4002 = vpop.f32.mrb[0].mxu0
        %4003 = vmatprep.mubr.f32.mxu0 0.0
        %4004 = vmatmul.mubr.f32.gmra.mrb[0].mxu0 %v3759
        %v4005 = vpop.f32.mrb[0].mxu0
        %v4006 = vadd.f32 0.0, %v4005
        %v4007 = vpop.f32.mrb[0].mxu0
        %4008 = vdwg.mxu0
        %v4009 = vadd.f32 %v3579, %v3831
        %v4010 = vadd.f32 %v3580, %v3836
        %v4011 = vadd.f32 %v3581, %v3841
        %v4012 = vadd.f32 %v3582, %v3846
        %v4013 = vadd.f32 %v3583, %v3851
        %v4014 = vadd.f32 %v3584, %v3856
        %v4015 = vadd.f32 %v3585, %v3861
        %v4016 = vadd.f32 %v3586, %v3866
        %v4017 = vadd.f32 %v3587, %v3871
        %v4018 = vadd.f32 %v3588, %v3876
        %v4019 = vadd.f32 %v3589, %v3881
        %v4020 = vadd.f32 %v3590, %v3886
        %v4021 = vadd.f32 %v3591, %v3891
        %v4022 = vadd.f32 %v3592, %v3896
        %v4023 = vadd.f32 %v3593, %v3901
        %v4024 = vadd.f32 %v3594, %v3906
        %v4025 = vadd.f32 %v3595, %v3911
        %v4026 = vadd.f32 %v3596, %v3916
        %v4027 = vadd.f32 %v3597, %v3921
        %v4028 = vadd.f32 %v3598, %v3926
        %v4029 = vadd.f32 %v3599, %v3931
        %v4030 = vadd.f32 %v3600, %v3936
        %v4031 = vadd.f32 %v3601, %v3941
        %v4032 = vadd.f32 %v3602, %v3946
        %v4033 = vadd.f32 %v3603, %v3951
        %v4034 = vadd.f32 %v3604, %v3956
        %v4035 = vadd.f32 %v3605, %v3961
        %v4036 = vadd.f32 %v3606, %v3966
        %v4037 = vadd.f32 %v3607, %v3971
        %v4038 = vadd.f32 %v3608, %v3976
        %v4039 = vadd.f32 %v3609, %v3981
        %v4040 = vadd.f32 %v3610, %v3986
        %v4041 = vadd.f32 %v3611, %v3991
        %v4042 = vadd.f32 %v3612, %v3996
        %v4043 = vadd.f32 %v3613, %v4001
        %v4044 = vadd.f32 %v3614, %v4006
        %v4045 = vld [vmem:[#allocation2] sm:$0x1]
        %v4047 = vlaneseq
        %v4048 = vshrl.u32 %v4047, 7
        %v4049 = vsub.s32 0, %v4048
        %v4050 = vrot.slane %v4045, %v4049
        %v4052 = vadd.f32 %v4009, %v4050
        %v4053 = vadd.f32 %v4010, %v4050
        %v4054 = vadd.f32 %v4011, %v4050
        %v4055 = vadd.f32 %v4012, %v4050
        %v4056 = vadd.f32 %v4013, %v4050
        %v4057 = vadd.f32 %v4014, %v4050
        %v4058 = vadd.f32 %v4015, %v4050
        %v4059 = vadd.f32 %v4016, %v4050
        %v4060 = vadd.f32 %v4017, %v4050
        %v4061 = vadd.f32 %v4018, %v4050
        %v4062 = vadd.f32 %v4019, %v4050
        %v4063 = vadd.f32 %v4020, %v4050
        %v4064 = vadd.f32 %v4021, %v4050
        %v4065 = vadd.f32 %v4022, %v4050
        %v4066 = vadd.f32 %v4023, %v4050
        %v4067 = vadd.f32 %v4024, %v4050
        %v4068 = vadd.f32 %v4025, %v4050
        %v4069 = vadd.f32 %v4026, %v4050
        %v4070 = vadd.f32 %v4027, %v4050
        %v4071 = vadd.f32 %v4028, %v4050
        %v4072 = vadd.f32 %v4029, %v4050
        %v4073 = vadd.f32 %v4030, %v4050
        %v4074 = vadd.f32 %v4031, %v4050
        %v4075 = vadd.f32 %v4032, %v4050
        %v4076 = vadd.f32 %v4033, %v4050
        %v4077 = vadd.f32 %v4034, %v4050
        %v4078 = vadd.f32 %v4035, %v4050
        %v4079 = vadd.f32 %v4036, %v4050
        %v4080 = vadd.f32 %v4037, %v4050
        %v4081 = vadd.f32 %v4038, %v4050
        %v4082 = vadd.f32 %v4039, %v4050
        %v4083 = vadd.f32 %v4040, %v4050
        %v4084 = vadd.f32 %v4041, %v4050
        %v4085 = vadd.f32 %v4042, %v4050
        %v4086 = vadd.f32 %v4043, %v4050
        %v4087 = vadd.f32 %v4044, %v4050
        %4088 = vst.msk [vmem:[%s244] sm:$0xff] %vm321, %v4052
        %4089 = vst.msk [vmem:[%s244 + $0x8] sm:$0xff] %vm321, %v4053
        %4090 = vst.msk [vmem:[%s244 + $0x10] sm:$0xff] %vm321, %v4054
        %4091 = vst.msk [vmem:[%s244 + $0x18] sm:$0xff] %vm321, %v4055
        %4092 = vst.msk [vmem:[%s244 + $0x20] sm:$0xff] %vm321, %v4056
        %4093 = vst.msk [vmem:[%s244 + $0x28] sm:$0xff] %vm321, %v4057
        %4094 = vst.msk [vmem:[%s244 + $0x30] sm:$0xff] %vm321, %v4058
        %4095 = vst.msk [vmem:[%s244 + $0x38] sm:$0xff] %vm321, %v4059
        %4096 = vst.msk [vmem:[%s244 + $0x40] sm:$0xff] %vm321, %v4060
        %4097 = vst.msk [vmem:[%s244 + $0x48] sm:$0xff] %vm321, %v4061
        %4098 = vst.msk [vmem:[%s244 + $0x50] sm:$0xff] %vm321, %v4062
        %4099 = vst.msk [vmem:[%s244 + $0x58] sm:$0xff] %vm321, %v4063
        %4100 = vst.msk [vmem:[%s244 + $0x60] sm:$0xff] %vm321, %v4064
        %4101 = vst.msk [vmem:[%s244 + $0x68] sm:$0xff] %vm321, %v4065
        %4102 = vst.msk [vmem:[%s244 + $0x70] sm:$0xff] %vm321, %v4066
        %4103 = vst.msk [vmem:[%s244 + $0x78] sm:$0xff] %vm321, %v4067
        %4104 = vst.msk [vmem:[%s244 + $0x80] sm:$0xff] %vm321, %v4068
        %4105 = vst.msk [vmem:[%s244 + $0x88] sm:$0xff] %vm321, %v4069
        %4106 = vst.msk [vmem:[%s244 + $0x90] sm:$0xff] %vm321, %v4070
        %4107 = vst.msk [vmem:[%s244 + $0x98] sm:$0xff] %vm321, %v4071
        %4108 = vst.msk [vmem:[%s244 + $0xa0] sm:$0xff] %vm321, %v4072
        %4109 = vst.msk [vmem:[%s244 + $0xa8] sm:$0xff] %vm321, %v4073
        %4110 = vst.msk [vmem:[%s244 + $0xb0] sm:$0xff] %vm321, %v4074
        %4111 = vst.msk [vmem:[%s244 + $0xb8] sm:$0xff] %vm321, %v4075
        %4112 = vst.msk [vmem:[%s244 + $0xc0] sm:$0xff] %vm321, %v4076
        %4113 = vst.msk [vmem:[%s244 + $0xc8] sm:$0xff] %vm321, %v4077
        %4114 = vst.msk [vmem:[%s244 + $0xd0] sm:$0xff] %vm321, %v4078
        %4115 = vst.msk [vmem:[%s244 + $0xd8] sm:$0xff] %vm321, %v4079
        %4116 = vst.msk [vmem:[%s244 + $0xe0] sm:$0xff] %vm321, %v4080
        %4117 = vst.msk [vmem:[%s244 + $0xe8] sm:$0xff] %vm321, %v4081
        %4118 = vst.msk [vmem:[%s244 + $0xf0] sm:$0xff] %vm321, %v4082
        %4119 = vst.msk [vmem:[%s244 + $0xf8] sm:$0xff] %vm321, %v4083
        %4120 = vst.msk [vmem:[%s244 + $0x100] sm:$0xff] %vm321, %v4084
        %4121 = vst.msk [vmem:[%s244 + $0x108] sm:$0xff] %vm321, %v4085
        %4122 = vst.msk [vmem:[%s244 + $0x110] sm:$0xff] %vm321, %v4086
        %4123 = vst.msk [vmem:[%s244 + $0x118] sm:$0xff] %vm321, %v4087
        %s4124 = scalar_lea.vmem %s244, 288
        %4125 = vst.msk [vmem:[%s4124] sm:$0xff] %vm321, %v4052
        %4126 = vst.msk [vmem:[%s4124 + $0x8] sm:$0xff] %vm321, %v4053
        %4127 = vst.msk [vmem:[%s4124 + $0x10] sm:$0xff] %vm321, %v4054
        %4128 = vst.msk [vmem:[%s4124 + $0x18] sm:$0xff] %vm321, %v4055
        %4129 = vst.msk [vmem:[%s4124 + $0x20] sm:$0xff] %vm321, %v4056
        %4130 = vst.msk [vmem:[%s4124 + $0x28] sm:$0xff] %vm321, %v4057
        %4131 = vst.msk [vmem:[%s4124 + $0x30] sm:$0xff] %vm321, %v4058
        %4132 = vst.msk [vmem:[%s4124 + $0x38] sm:$0xff] %vm321, %v4059
        %4133 = vst.msk [vmem:[%s4124 + $0x40] sm:$0xff] %vm321, %v4060
        %4134 = vst.msk [vmem:[%s4124 + $0x48] sm:$0xff] %vm321, %v4061
        %4135 = vst.msk [vmem:[%s4124 + $0x50] sm:$0xff] %vm321, %v4062
        %4136 = vst.msk [vmem:[%s4124 + $0x58] sm:$0xff] %vm321, %v4063
        %4137 = vst.msk [vmem:[%s4124 + $0x60] sm:$0xff] %vm321, %v4064
        %4138 = vst.msk [vmem:[%s4124 + $0x68] sm:$0xff] %vm321, %v4065
        %4139 = vst.msk [vmem:[%s4124 + $0x70] sm:$0xff] %vm321, %v4066
        %4140 = vst.msk [vmem:[%s4124 + $0x78] sm:$0xff] %vm321, %v4067
        %4141 = vst.msk [vmem:[%s4124 + $0x80] sm:$0xff] %vm321, %v4068
        %4142 = vst.msk [vmem:[%s4124 + $0x88] sm:$0xff] %vm321, %v4069
        %4143 = vst.msk [vmem:[%s4124 + $0x90] sm:$0xff] %vm321, %v4070
        %4144 = vst.msk [vmem:[%s4124 + $0x98] sm:$0xff] %vm321, %v4071
        %4145 = vst.msk [vmem:[%s4124 + $0xa0] sm:$0xff] %vm321, %v4072
        %4146 = vst.msk [vmem:[%s4124 + $0xa8] sm:$0xff] %vm321, %v4073
        %4147 = vst.msk [vmem:[%s4124 + $0xb0] sm:$0xff] %vm321, %v4074
        %4148 = vst.msk [vmem:[%s4124 + $0xb8] sm:$0xff] %vm321, %v4075
        %4149 = vst.msk [vmem:[%s4124 + $0xc0] sm:$0xff] %vm321, %v4076
        %4150 = vst.msk [vmem:[%s4124 + $0xc8] sm:$0xff] %vm321, %v4077
        %4151 = vst.msk [vmem:[%s4124 + $0xd0] sm:$0xff] %vm321, %v4078
        %4152 = vst.msk [vmem:[%s4124 + $0xd8] sm:$0xff] %vm321, %v4079
        %4153 = vst.msk [vmem:[%s4124 + $0xe0] sm:$0xff] %vm321, %v4080
        %4154 = vst.msk [vmem:[%s4124 + $0xe8] sm:$0xff] %vm321, %v4081
        %4155 = vst.msk [vmem:[%s4124 + $0xf0] sm:$0xff] %vm321, %v4082
        %4156 = vst.msk [vmem:[%s4124 + $0xf8] sm:$0xff] %vm321, %v4083
        %4157 = vst.msk [vmem:[%s4124 + $0x100] sm:$0xff] %vm321, %v4084
        %4158 = vst.msk [vmem:[%s4124 + $0x108] sm:$0xff] %vm321, %v4085
        %4159 = vst.msk [vmem:[%s4124 + $0x110] sm:$0xff] %vm321, %v4086
        %4160 = vst.msk [vmem:[%s4124 + $0x118] sm:$0xff] %vm321, %v4087
        %s4161 = scalar_lea.vmem %s244, 576
        %4162 = vst.msk [vmem:[%s4161] sm:$0xff] %vm321, %v4052
        %4163 = vst.msk [vmem:[%s4161 + $0x8] sm:$0xff] %vm321, %v4053
        %4164 = vst.msk [vmem:[%s4161 + $0x10] sm:$0xff] %vm321, %v4054
        %4165 = vst.msk [vmem:[%s4161 + $0x18] sm:$0xff] %vm321, %v4055
        %4166 = vst.msk [vmem:[%s4161 + $0x20] sm:$0xff] %vm321, %v4056
        %4167 = vst.msk [vmem:[%s4161 + $0x28] sm:$0xff] %vm321, %v4057
        %4168 = vst.msk [vmem:[%s4161 + $0x30] sm:$0xff] %vm321, %v4058
        %4169 = vst.msk [vmem:[%s4161 + $0x38] sm:$0xff] %vm321, %v4059
        %4170 = vst.msk [vmem:[%s4161 + $0x40] sm:$0xff] %vm321, %v4060
        %4171 = vst.msk [vmem:[%s4161 + $0x48] sm:$0xff] %vm321, %v4061
        %4172 = vst.msk [vmem:[%s4161 + $0x50] sm:$0xff] %vm321, %v4062
        %4173 = vst.msk [vmem:[%s4161 + $0x58] sm:$0xff] %vm321, %v4063
        %4174 = vst.msk [vmem:[%s4161 + $0x60] sm:$0xff] %vm321, %v4064
        %4175 = vst.msk [vmem:[%s4161 + $0x68] sm:$0xff] %vm321, %v4065
        %4176 = vst.msk [vmem:[%s4161 + $0x70] sm:$0xff] %vm321, %v4066
        %4177 = vst.msk [vmem:[%s4161 + $0x78] sm:$0xff] %vm321, %v4067
        %4178 = vst.msk [vmem:[%s4161 + $0x80] sm:$0xff] %vm321, %v4068
        %4179 = vst.msk [vmem:[%s4161 + $0x88] sm:$0xff] %vm321, %v4069
        %4180 = vst.msk [vmem:[%s4161 + $0x90] sm:$0xff] %vm321, %v4070
        %4181 = vst.msk [vmem:[%s4161 + $0x98] sm:$0xff] %vm321, %v4071
        %4182 = vst.msk [vmem:[%s4161 + $0xa0] sm:$0xff] %vm321, %v4072
        %4183 = vst.msk [vmem:[%s4161 + $0xa8] sm:$0xff] %vm321, %v4073
        %4184 = vst.msk [vmem:[%s4161 + $0xb0] sm:$0xff] %vm321, %v4074
        %4185 = vst.msk [vmem:[%s4161 + $0xb8] sm:$0xff] %vm321, %v4075
        %4186 = vst.msk [vmem:[%s4161 + $0xc0] sm:$0xff] %vm321, %v4076
        %4187 = vst.msk [vmem:[%s4161 + $0xc8] sm:$0xff] %vm321, %v4077
        %4188 = vst.msk [vmem:[%s4161 + $0xd0] sm:$0xff] %vm321, %v4078
        %4189 = vst.msk [vmem:[%s4161 + $0xd8] sm:$0xff] %vm321, %v4079
        %4190 = vst.msk [vmem:[%s4161 + $0xe0] sm:$0xff] %vm321, %v4080
        %4191 = vst.msk [vmem:[%s4161 + $0xe8] sm:$0xff] %vm321, %v4081
        %4192 = vst.msk [vmem:[%s4161 + $0xf0] sm:$0xff] %vm321, %v4082
        %4193 = vst.msk [vmem:[%s4161 + $0xf8] sm:$0xff] %vm321, %v4083
        %4194 = vst.msk [vmem:[%s4161 + $0x100] sm:$0xff] %vm321, %v4084
        %4195 = vst.msk [vmem:[%s4161 + $0x108] sm:$0xff] %vm321, %v4085
        %4196 = vst.msk [vmem:[%s4161 + $0x110] sm:$0xff] %vm321, %v4086
        %4197 = vst.msk [vmem:[%s4161 + $0x118] sm:$0xff] %vm321, %v4087
        %s4198 = scalar_lea.vmem %s244, 864
        %4199 = vst.msk [vmem:[%s4198] sm:$0xff] %vm321, %v4052
        %4200 = vst.msk [vmem:[%s4198 + $0x8] sm:$0xff] %vm321, %v4053
        %4201 = vst.msk [vmem:[%s4198 + $0x10] sm:$0xff] %vm321, %v4054
        %4202 = vst.msk [vmem:[%s4198 + $0x18] sm:$0xff] %vm321, %v4055
        %4203 = vst.msk [vmem:[%s4198 + $0x20] sm:$0xff] %vm321, %v4056
        %4204 = vst.msk [vmem:[%s4198 + $0x28] sm:$0xff] %vm321, %v4057
        %4205 = vst.msk [vmem:[%s4198 + $0x30] sm:$0xff] %vm321, %v4058
        %4206 = vst.msk [vmem:[%s4198 + $0x38] sm:$0xff] %vm321, %v4059
        %4207 = vst.msk [vmem:[%s4198 + $0x40] sm:$0xff] %vm321, %v4060
        %4208 = vst.msk [vmem:[%s4198 + $0x48] sm:$0xff] %vm321, %v4061
        %4209 = vst.msk [vmem:[%s4198 + $0x50] sm:$0xff] %vm321, %v4062
        %4210 = vst.msk [vmem:[%s4198 + $0x58] sm:$0xff] %vm321, %v4063
        %4211 = vst.msk [vmem:[%s4198 + $0x60] sm:$0xff] %vm321, %v4064
        %4212 = vst.msk [vmem:[%s4198 + $0x68] sm:$0xff] %vm321, %v4065
        %4213 = vst.msk [vmem:[%s4198 + $0x70] sm:$0xff] %vm321, %v4066
        %4214 = vst.msk [vmem:[%s4198 + $0x78] sm:$0xff] %vm321, %v4067
        %4215 = vst.msk [vmem:[%s4198 + $0x80] sm:$0xff] %vm321, %v4068
        %4216 = vst.msk [vmem:[%s4198 + $0x88] sm:$0xff] %vm321, %v4069
        %4217 = vst.msk [vmem:[%s4198 + $0x90] sm:$0xff] %vm321, %v4070
        %4218 = vst.msk [vmem:[%s4198 + $0x98] sm:$0xff] %vm321, %v4071
        %4219 = vst.msk [vmem:[%s4198 + $0xa0] sm:$0xff] %vm321, %v4072
        %4220 = vst.msk [vmem:[%s4198 + $0xa8] sm:$0xff] %vm321, %v4073
        %4221 = vst.msk [vmem:[%s4198 + $0xb0] sm:$0xff] %vm321, %v4074
        %4222 = vst.msk [vmem:[%s4198 + $0xb8] sm:$0xff] %vm321, %v4075
        %4223 = vst.msk [vmem:[%s4198 + $0xc0] sm:$0xff] %vm321, %v4076
        %4224 = vst.msk [vmem:[%s4198 + $0xc8] sm:$0xff] %vm321, %v4077
        %4225 = vst.msk [vmem:[%s4198 + $0xd0] sm:$0xff] %vm321, %v4078
        %4226 = vst.msk [vmem:[%s4198 + $0xd8] sm:$0xff] %vm321, %v4079
        %4227 = vst.msk [vmem:[%s4198 + $0xe0] sm:$0xff] %vm321, %v4080
        %4228 = vst.msk [vmem:[%s4198 + $0xe8] sm:$0xff] %vm321, %v4081
        %4229 = vst.msk [vmem:[%s4198 + $0xf0] sm:$0xff] %vm321, %v4082
        %4230 = vst.msk [vmem:[%s4198 + $0xf8] sm:$0xff] %vm321, %v4083
        %4231 = vst.msk [vmem:[%s4198 + $0x100] sm:$0xff] %vm321, %v4084
        %4232 = vst.msk [vmem:[%s4198 + $0x108] sm:$0xff] %vm321, %v4085
        %4233 = vst.msk [vmem:[%s4198 + $0x110] sm:$0xff] %vm321, %v4086
        %4234 = vst.msk [vmem:[%s4198 + $0x118] sm:$0xff] %vm321, %v4087
        %s4235 = smul.u32 36, %s22
        %p4236 = scmp.lt.s32.totalorder %s20, 1
        %s4237 = scalar_select %p4236, %s20, 1
        %p4238 = scmp.lt.s32.totalorder %s4235, 35
        %s4239 = scalar_select %p4238, %s4235, 35
        %p4240 = scmp.lt.s32.totalorder %s21, 0
        %s4241 = scalar_select %p4240, %s21, 0
        %s4242 = sadd.s32 %s4241, %s4239
        %s4243 = smul.addr %s4237, 144
        %s4244 = sadd.s32 %s4242, %s4243
        %s4245 = smul.addr %s4244, 8
        %s4246 = scalar_lea.vmem %s3, %s4245
        // Predicated region
        $region37: #{tpu_custom_call.1} parent=31 // pred_check
          %p4247 = pneg %p134
        $region38: #{tpu_custom_call.1} parent=31 // pred_check_branch
          %4249 = sbr.rel (%p4247) target = $region40
        $region39: #{tpu_custom_call.1} parent=31 // pred_region
          %s4250 = smul.u32 36, %s22
        $region40: #{tpu_custom_call.1} parent=31 // pred_fallthru
          _
      $region32: #{tpu_custom_call.1} parent=5 // pred_fallthru
        _
      %p4251 = scmp.le.s32.totalorder 2, %s10
      // Predicated region
      $region41: #{tpu_custom_call.1} parent=5 // pred_check
        %p4252 = pneg %p4251
      $region42: #{tpu_custom_call.1} parent=5 // pred_check_branch
        %4254 = sbr.rel (%p4252) target = $region44
      $region43: #{tpu_custom_call.1} parent=5 // pred_region
        %s4255 = ssub.s32 %s10, 2
        // Predicated region
        $region45: #{tpu_custom_call.1} parent=43 // pred_check
          %p4256 = pneg %p140
        $region46: #{tpu_custom_call.1} parent=43 // pred_check_branch
          %4258 = sbr.rel (%p4256) target = $region48
        $region47: #{tpu_custom_call.1} parent=43 // pred_region
          %s4259 = smul.u32 36, %s25
          %p4260 = scmp.lt.s32.totalorder %s23, 1
          %s4261 = scalar_select %p4260, %s23, 1
          %p4262 = scmp.lt.s32.totalorder %s4259, 35
          %s4263 = scalar_select %p4262, %s4259, 35
          %p4264 = scmp.lt.s32.totalorder %s24, 0
          %s4265 = scalar_select %p4264, %s24, 0
          %s4266 = sadd.s32 %s4265, %s4263
          %s4267 = smul.addr %s4261, 144
          %s4268 = sadd.s32 %s4266, %s4267
          %s4269 = smul.addr %s4268, 8
          %s4270 = scalar_lea.vmem %s3, %s4269
        $region48: #{tpu_custom_call.1} parent=43 // pred_fallthru
          _
      $region44: #{tpu_custom_call.1} parent=5 // pred_fallthru
        _
    $region6: #{tpu_custom_call.1} parent=1 // loop_footer
      %s14 = sadd.s32 1, %s10
    $region7: #{tpu_custom_call.1} parent=1 // loop_footer_branch
      %9 = sbr.rel target = $region3
    $region8: #{tpu_custom_call.1} parent=1 // loop_exit
      _
    %4271 = vsyncpa [#allocation3], 1
    %s4272 = scalar_lea.sflag [#allocation3], 1
    %4273 = vsyncpa %s4272, 1

</llo_original>
